<compile_context>
chip_gen: v7x
topology: tpu7x:2x2x1
jax: 0.10.0
libtpu: 0.0.40
codegen_flags: <defaults>
</compile_context>

<pallas_src>
import jax
import jax.numpy as jnp
import numpy as np
from jax.experimental import pallas as pl
from jax.experimental.pallas import tpu as pltpu

# TODO(synk): cfg.NETWORK.LEAKY_VALUE is an external config; fixed to 0.1 here.
LEAKY_SLOPE = 0.1
_K = 3  # kernel_size used by the module


def _make_kernel(H, W, C, P, dilations, slope):
    K = _K
    NB = len(dilations)      # number of dilated branches (4)
    CC = NB * C              # concatenated channel count

    def kernel(x_ref, wbig_ref, bb_ref, wi_ref, bi_ref, out_ref,
               xpad_ref, cat_ref):
        # x_ref   : (1, H, W, C)            one batch element, NHWC
        # wbig_ref: (NB*9*C, NB*C)          block-diagonal branch weights
        # bb_ref  : (1, NB*C)               stacked branch biases
        # wi_ref  : (9*NB*C, C)             fuse conv weight (im2col layout)
        # bi_ref  : (1, C)                  fuse conv bias
        # out_ref : (1, H, W*C)             lane-dense output slab
        # xpad_ref: (1, H+2P, W+2P, C)      VMEM scratch: zero-padded input
        # cat_ref : (1, H+2, W+2, NB*C)     VMEM scratch: 1-padded concat features
        f32 = jnp.float32
        Hp, Wp = H + 2 * P, W + 2 * P

        # ---- zero-pad the input inside VMEM (halo-only zeroing, no wrapper pad) ----
        xpad_ref[:, 0:P, :, :] = jnp.zeros((1, P, Wp, C), f32)
        xpad_ref[:, Hp - P:Hp, :, :] = jnp.zeros((1, P, Wp, C), f32)
        xpad_ref[:, :, 0:P, :] = jnp.zeros((1, Hp, P, C), f32)
        xpad_ref[:, :, Wp - P:Wp, :] = jnp.zeros((1, Hp, P, C), f32)
        xpad_ref[:, P:P + H, P:P + W, :] = x_ref[...]

        # ---- all 4 dilated 3x3 branches in ONE block-diagonal im2col matmul ----
        # LHS column order: branch-major, then (kh, kw) row-major, then channel,
        # matching the block-diagonal weight built in the wrapper.
        pieces = []
        for d in dilations:
            for kh in range(K):
                for kw in range(K):
                    oh = P - d + kh * d          # static offsets into padded input
                    ow = P - d + kw * d
                    pieces.append(xpad_ref[:, oh:oh + H, ow:ow + W, :])
        patches = jnp.concatenate(pieces, axis=-1)             # (1, H, W, NB*9*C)
        patches = patches.reshape(H * W, NB * K * K * C)
        feat = jnp.dot(patches, wbig_ref[...],
                       preferred_element_type=jnp.float32)     # (H*W, NB*C)
        feat = feat + bb_ref[...]
        feat = jnp.maximum(feat, slope * feat)                  # LeakyReLU

        # ---- concat buffer: zero only the 1-pixel halo, one aligned interior write --
        Hc, Wc = H + 2, W + 2
        cat_ref[:, 0:1, :, :] = jnp.zeros((1, 1, Wc, CC), f32)
        cat_ref[:, Hc - 1:Hc, :, :] = jnp.zeros((1, 1, Wc, CC), f32)
        cat_ref[:, :, 0:1, :] = jnp.zeros((1, Hc, 1, CC), f32)
        cat_ref[:, :, Wc - 1:Wc, :] = jnp.zeros((1, Hc, 1, CC), f32)
        cat_ref[:, 1:1 + H, 1:1 + W, :] = feat.reshape(1, H, W, CC)

        # ---- fuse conv (3x3, pad 1) over concatenated features: ONE matmul ----
        fpieces = []
        for kh in range(K):
            for kw in range(K):
                fpieces.append(cat_ref[:, kh:kh + H, kw:kw + W, :])
        fpatches = jnp.concatenate(fpieces, axis=-1)            # (1, H, W, 9*NB*C)
        fpatches = fpatches.reshape(H * W, K * K * CC)
        out2d = jnp.dot(fpatches, wi_ref[...],
                        preferred_element_type=jnp.float32)     # (H*W, C)

        # ---- bias + residual (residual read back from the padded VMEM copy) ----
        resid = xpad_ref[:, P:P + H, P:P + W, :].reshape(H * W, C)
        out2d = out2d + bi_ref[...] + resid

        # ---- lane-dense store: present the result as an (H, W*C) slab ----
        out3 = out2d.reshape(H, W, C)
        slab = jnp.concatenate([out3[:, w, :] for w in range(W)], axis=-1)  # (H, W*C)
        out_ref[...] = slab[None]

    return kernel


def msdilate_block_pallas(x_nchw, wb, bb, wi, bi, dilations, slope=LEAKY_SLOPE):
    """x_nchw: (N, C, H, W) f32. Returns (N, C, H, W) f32."""
    N, C, H, W = x_nchw.shape
    K = _K
    NB = len(dilations)
    P = max(dilations)  # padding = (k-1)//2 * dilation = dilation for k=3

    x_nhwc = jnp.transpose(x_nchw, (0, 2, 3, 1)).astype(jnp.float32)

    # Block-diagonal branch weight: branch b occupies rows [b*9C, (b+1)*9C) and output
    # columns [b*C, (b+1)*C), so one matmul yields the concatenated branch features.
    w_big = jnp.zeros((NB * K * K * C, NB * C), jnp.float32)
    for b in range(NB):
        w_big = w_big.at[b * K * K * C:(b + 1) * K * K * C,
                         b * C:(b + 1) * C].set(wb[b].reshape(K * K * C, C))
    bb2 = bb.reshape(1, NB * C).astype(jnp.float32)
    wi2 = wi.reshape(K * K * NB * C, C).astype(jnp.float32)
    bi2 = bi.reshape(1, C).astype(jnp.float32)

    kernel = _make_kernel(H, W, C, P, tuple(dilations), slope)

    out_slab = pl.pallas_call(
        kernel,
        out_shape=jax.ShapeDtypeStruct((N, H, W * C), jnp.float32),
        grid=(N,),
        in_specs=[
            pl.BlockSpec((1, H, W, C), lambda n: (n, 0, 0, 0)),
            pl.BlockSpec((NB * K * K * C, NB * C), lambda n: (0, 0)),
            pl.BlockSpec((1, NB * C), lambda n: (0, 0)),
            pl.BlockSpec((K * K * NB * C, C), lambda n: (0, 0)),
            pl.BlockSpec((1, C), lambda n: (0, 0)),
        ],
        out_specs=pl.BlockSpec((1, H, W * C), lambda n: (n, 0, 0)),
        scratch_shapes=[
            pltpu.VMEM((1, H + 2 * P, W + 2 * P, C), jnp.float32),
            pltpu.VMEM((1, H + 2, W + 2, NB * C), jnp.float32),
        ],
        compiler_params=pltpu.CompilerParams(
            dimension_semantics=("parallel",)),
    )(x_nhwc, w_big, bb2, wi2, bi2)

    out_nhwc = out_slab.reshape(N, H, W, C)
    return jnp.transpose(out_nhwc, (0, 3, 1, 2))


def msdilate_block_ref(x_nchw, wb, bb, wi, bi, dilations, slope=LEAKY_SLOPE):
    """Pure-JAX reference using lax.conv_general_dilated (NHWC/HWIO)."""
    dn = ("NHWC", "HWIO", "NHWC")
    x = jnp.transpose(x_nchw, (0, 2, 3, 1)).astype(jnp.float32)
    outs = []
    for b, d in enumerate(dilations):
        y = jax.lax.conv_general_dilated(
            x, wb[b], window_strides=(1, 1), padding=[(d, d), (d, d)],
            rhs_dilation=(d, d), dimension_numbers=dn)
        y = y + bb[b][None, None, None, :]
        y = jnp.where(y >= 0, y, slope * y)
        outs.append(y)
    cat = jnp.concatenate(outs, axis=-1)
    out = jax.lax.conv_general_dilated(
        cat, wi, window_strides=(1, 1), padding=[(1, 1), (1, 1)],
        dimension_numbers=dn) + bi[None, None, None, :] + x
    return jnp.transpose(out, (0, 3, 1, 2))


if __name__ == "__main__":
    # Small shapes consistent with the module: batch=2, channels=4, spatial=16x16
    N, C, H, W = 2, 4, 16, 16
    K = 3
    dilations = (1, 2, 3, 4)

    key = jax.random.PRNGKey(0)
    k_x, k_wb, k_bb, k_wi, k_bi = jax.random.split(key, 5)

    x = jax.random.normal(k_x, (N, C, H, W), dtype=jnp.float32)

    # Deterministic synthetic parameters (HWIO layout for the kernel/reference).
    wb = jax.random.normal(k_wb, (4, K, K, C, C), dtype=jnp.float32) * 0.1   # branch convs
    bb = jax.random.normal(k_bb, (4, C), dtype=jnp.float32) * 0.1            # branch biases
    wi = jax.random.normal(k_wi, (K, K, 4 * C, C), dtype=jnp.float32) * 0.1  # fuse conv (4C -> C)
    bi = jax.random.normal(k_bi, (C,), dtype=jnp.float32) * 0.1              # fuse bias

    out = msdilate_block_pallas(x, wb, bb, wi, bi, dilations)
    out = jax.block_until_ready(out)

    ref = msdilate_block_ref(x, wb, bb, wi, bi, dilations)
    np.testing.assert_allclose(np.asarray(out), np.asarray(ref), rtol=5e-4, atol=5e-4)

    print("KERNEL_OK")
</pallas_src>

<mosaic_0001>
module attributes {stable_mosaic.version = 11 : i64} {
  func.func @kernel(%arg0: i32, %arg1: memref<1x16x16x4xf32, #tpu.memory_space<vmem>>, %arg2: memref<144x16xf32, #tpu.memory_space<vmem>>, %arg3: memref<1x16xf32, #tpu.memory_space<vmem>>, %arg4: memref<144x4xf32, #tpu.memory_space<vmem>>, %arg5: memref<1x4xf32, #tpu.memory_space<vmem>>, %arg6: memref<1x16x64xf32, #tpu.memory_space<vmem>>, %arg7: memref<1x24x24x4xf32, #tpu.memory_space<vmem>>, %arg8: memref<1x18x18x16xf32, #tpu.memory_space<vmem>>) attributes {dimension_semantics = [#tpu.dimension_semantics<parallel>], iteration_bounds = array<i64: 2>, scalar_prefetch = 0 : i64, scratch_operands = 2 : i64, tpu.core_type = #tpu.core_type<tc>, window_params = [{transform_indices = @transform_0, window_bounds = array<i64: 1, 16, 16, 4>}, {pipeline_mode = #tpu.pipeline_mode<synchronous>, transform_indices = @transform_1, window_bounds = array<i64: 144, 16>}, {pipeline_mode = #tpu.pipeline_mode<synchronous>, transform_indices = @transform_2, window_bounds = array<i64: 1, 16>}, {pipeline_mode = #tpu.pipeline_mode<synchronous>, transform_indices = @transform_3, window_bounds = array<i64: 144, 4>}, {pipeline_mode = #tpu.pipeline_mode<synchronous>, transform_indices = @transform_4, window_bounds = array<i64: 1, 4>}, {transform_indices = @transform_5, window_bounds = array<i64: 1, 16, 64>}]} {
    %cst = arith.constant 0.000000e+00 : f32
    %0 = vector.broadcast %cst : f32 to vector<1x4x24x4xf32>
    %c0 = arith.constant 0 : index
    %c0_0 = arith.constant 0 : index
    %c0_1 = arith.constant 0 : index
    %c0_2 = arith.constant 0 : index
    %1 = vector.load %arg7[%c0, %c0_0, %c0_1, %c0_2] : memref<1x24x24x4xf32, #tpu.memory_space<vmem>>, vector<1x4x24x4xf32>
    tpu.vector_store %arg7[%c0, %c0_0, %c0_1, %c0_2], %0 {strides = array<i32>} : memref<1x24x24x4xf32, #tpu.memory_space<vmem>>, vector<1x4x24x4xf32>,
    %cst_3 = arith.constant 0.000000e+00 : f32
    %2 = vector.broadcast %cst_3 : f32 to vector<1x4x24x4xf32>
    %c0_4 = arith.constant 0 : index
    %c20 = arith.constant 20 : index
    %c0_5 = arith.constant 0 : index
    %c0_6 = arith.constant 0 : index
    %3 = vector.load %arg7[%c0_4, %c20, %c0_5, %c0_6] : memref<1x24x24x4xf32, #tpu.memory_space<vmem>>, vector<1x4x24x4xf32>
    tpu.vector_store %arg7[%c0_4, %c20, %c0_5, %c0_6], %2 {strides = array<i32>} : memref<1x24x24x4xf32, #tpu.memory_space<vmem>>, vector<1x4x24x4xf32>,
    %cst_7 = arith.constant 0.000000e+00 : f32
    %4 = vector.broadcast %cst_7 : f32 to vector<1x24x4x4xf32>
    %c0_8 = arith.constant 0 : index
    %c0_9 = arith.constant 0 : index
    %c0_10 = arith.constant 0 : index
    %c0_11 = arith.constant 0 : index
    %5 = vector.load %arg7[%c0_8, %c0_9, %c0_10, %c0_11] : memref<1x24x24x4xf32, #tpu.memory_space<vmem>>, vector<1x24x4x4xf32>
    tpu.vector_store %arg7[%c0_8, %c0_9, %c0_10, %c0_11], %4 {strides = array<i32>} : memref<1x24x24x4xf32, #tpu.memory_space<vmem>>, vector<1x24x4x4xf32>,
    %cst_12 = arith.constant 0.000000e+00 : f32
    %6 = vector.broadcast %cst_12 : f32 to vector<1x24x4x4xf32>
    %c0_13 = arith.constant 0 : index
    %c0_14 = arith.constant 0 : index
    %c20_15 = arith.constant 20 : index
    %c0_16 = arith.constant 0 : index
    %7 = vector.load %arg7[%c0_13, %c0_14, %c20_15, %c0_16] : memref<1x24x24x4xf32, #tpu.memory_space<vmem>>, vector<1x24x4x4xf32>
    tpu.vector_store %arg7[%c0_13, %c0_14, %c20_15, %c0_16], %6 {strides = array<i32>} : memref<1x24x24x4xf32, #tpu.memory_space<vmem>>, vector<1x24x4x4xf32>,
    %c0_17 = arith.constant 0 : index
    %c0_18 = arith.constant 0 : index
    %c0_19 = arith.constant 0 : index
    %c0_20 = arith.constant 0 : index
    %8 = vector.load %arg1[%c0_17, %c0_18, %c0_19, %c0_20] : memref<1x16x16x4xf32, #tpu.memory_space<vmem>>, vector<1x16x16x4xf32>
    %c0_21 = arith.constant 0 : index
    %c4 = arith.constant 4 : index
    %c4_22 = arith.constant 4 : index
    %c0_23 = arith.constant 0 : index
    %9 = vector.load %arg7[%c0_21, %c4, %c4_22, %c0_23] : memref<1x24x24x4xf32, #tpu.memory_space<vmem>>, vector<1x16x16x4xf32>
    tpu.vector_store %arg7[%c0_21, %c4, %c4_22, %c0_23], %8 {strides = array<i32>} : memref<1x24x24x4xf32, #tpu.memory_space<vmem>>, vector<1x16x16x4xf32>,
    %c0_24 = arith.constant 0 : index
    %c3 = arith.constant 3 : index
    %c3_25 = arith.constant 3 : index
    %c0_26 = arith.constant 0 : index
    %10 = vector.load %arg7[%c0_24, %c3, %c3_25, %c0_26] : memref<1x24x24x4xf32, #tpu.memory_space<vmem>>, vector<1x16x16x4xf32>
    %c0_27 = arith.constant 0 : index
    %c3_28 = arith.constant 3 : index
    %c4_29 = arith.constant 4 : index
    %c0_30 = arith.constant 0 : index
    %11 = vector.load %arg7[%c0_27, %c3_28, %c4_29, %c0_30] : memref<1x24x24x4xf32, #tpu.memory_space<vmem>>, vector<1x16x16x4xf32>
    %c0_31 = arith.constant 0 : index
    %c3_32 = arith.constant 3 : index
    %c5 = arith.constant 5 : index
    %c0_33 = arith.constant 0 : index
    %12 = vector.load %arg7[%c0_31, %c3_32, %c5, %c0_33] : memref<1x24x24x4xf32, #tpu.memory_space<vmem>>, vector<1x16x16x4xf32>
    %c0_34 = arith.constant 0 : index
    %c4_35 = arith.constant 4 : index
    %c3_36 = arith.constant 3 : index
    %c0_37 = arith.constant 0 : index
    %13 = vector.load %arg7[%c0_34, %c4_35, %c3_36, %c0_37] : memref<1x24x24x4xf32, #tpu.memory_space<vmem>>, vector<1x16x16x4xf32>
    %c0_38 = arith.constant 0 : index
    %c4_39 = arith.constant 4 : index
    %c4_40 = arith.constant 4 : index
    %c0_41 = arith.constant 0 : index
    %14 = vector.load %arg7[%c0_38, %c4_39, %c4_40, %c0_41] : memref<1x24x24x4xf32, #tpu.memory_space<vmem>>, vector<1x16x16x4xf32>
    %c0_42 = arith.constant 0 : index
    %c4_43 = arith.constant 4 : index
    %c5_44 = arith.constant 5 : index
    %c0_45 = arith.constant 0 : index
    %15 = vector.load %arg7[%c0_42, %c4_43, %c5_44, %c0_45] : memref<1x24x24x4xf32, #tpu.memory_space<vmem>>, vector<1x16x16x4xf32>
    %c0_46 = arith.constant 0 : index
    %c5_47 = arith.constant 5 : index
    %c3_48 = arith.constant 3 : index
    %c0_49 = arith.constant 0 : index
    %16 = vector.load %arg7[%c0_46, %c5_47, %c3_48, %c0_49] : memref<1x24x24x4xf32, #tpu.memory_space<vmem>>, vector<1x16x16x4xf32>
    %c0_50 = arith.constant 0 : index
    %c5_51 = arith.constant 5 : index
    %c4_52 = arith.constant 4 : index
    %c0_53 = arith.constant 0 : index
    %17 = vector.load %arg7[%c0_50, %c5_51, %c4_52, %c0_53] : memref<1x24x24x4xf32, #tpu.memory_space<vmem>>, vector<1x16x16x4xf32>
    %c0_54 = arith.constant 0 : index
    %c5_55 = arith.constant 5 : index
    %c5_56 = arith.constant 5 : index
    %c0_57 = arith.constant 0 : index
    %18 = vector.load %arg7[%c0_54, %c5_55, %c5_56, %c0_57] : memref<1x24x24x4xf32, #tpu.memory_space<vmem>>, vector<1x16x16x4xf32>
    %c0_58 = arith.constant 0 : index
    %c2 = arith.constant 2 : index
    %c2_59 = arith.constant 2 : index
    %c0_60 = arith.constant 0 : index
    %19 = vector.load %arg7[%c0_58, %c2, %c2_59, %c0_60] : memref<1x24x24x4xf32, #tpu.memory_space<vmem>>, vector<1x16x16x4xf32>
    %c0_61 = arith.constant 0 : index
    %c2_62 = arith.constant 2 : index
    %c4_63 = arith.constant 4 : index
    %c0_64 = arith.constant 0 : index
    %20 = vector.load %arg7[%c0_61, %c2_62, %c4_63, %c0_64] : memref<1x24x24x4xf32, #tpu.memory_space<vmem>>, vector<1x16x16x4xf32>
    %c0_65 = arith.constant 0 : index
    %c2_66 = arith.constant 2 : index
    %c6 = arith.constant 6 : index
    %c0_67 = arith.constant 0 : index
    %21 = vector.load %arg7[%c0_65, %c2_66, %c6, %c0_67] : memref<1x24x24x4xf32, #tpu.memory_space<vmem>>, vector<1x16x16x4xf32>
    %c0_68 = arith.constant 0 : index
    %c4_69 = arith.constant 4 : index
    %c2_70 = arith.constant 2 : index
    %c0_71 = arith.constant 0 : index
    %22 = vector.load %arg7[%c0_68, %c4_69, %c2_70, %c0_71] : memref<1x24x24x4xf32, #tpu.memory_space<vmem>>, vector<1x16x16x4xf32>
    %c0_72 = arith.constant 0 : index
    %c4_73 = arith.constant 4 : index
    %c4_74 = arith.constant 4 : index
    %c0_75 = arith.constant 0 : index
    %23 = vector.load %arg7[%c0_72, %c4_73, %c4_74, %c0_75] : memref<1x24x24x4xf32, #tpu.memory_space<vmem>>, vector<1x16x16x4xf32>
    %c0_76 = arith.constant 0 : index
    %c4_77 = arith.constant 4 : index
    %c6_78 = arith.constant 6 : index
    %c0_79 = arith.constant 0 : index
    %24 = vector.load %arg7[%c0_76, %c4_77, %c6_78, %c0_79] : memref<1x24x24x4xf32, #tpu.memory_space<vmem>>, vector<1x16x16x4xf32>
    %c0_80 = arith.constant 0 : index
    %c6_81 = arith.constant 6 : index
    %c2_82 = arith.constant 2 : index
    %c0_83 = arith.constant 0 : index
    %25 = vector.load %arg7[%c0_80, %c6_81, %c2_82, %c0_83] : memref<1x24x24x4xf32, #tpu.memory_space<vmem>>, vector<1x16x16x4xf32>
    %c0_84 = arith.constant 0 : index
    %c6_85 = arith.constant 6 : index
    %c4_86 = arith.constant 4 : index
    %c0_87 = arith.constant 0 : index
    %26 = vector.load %arg7[%c0_84, %c6_85, %c4_86, %c0_87] : memref<1x24x24x4xf32, #tpu.memory_space<vmem>>, vector<1x16x16x4xf32>
    %c0_88 = arith.constant 0 : index
    %c6_89 = arith.constant 6 : index
    %c6_90 = arith.constant 6 : index
    %c0_91 = arith.constant 0 : index
    %27 = vector.load %arg7[%c0_88, %c6_89, %c6_90, %c0_91] : memref<1x24x24x4xf32, #tpu.memory_space<vmem>>, vector<1x16x16x4xf32>
    %c0_92 = arith.constant 0 : index
    %c1 = arith.constant 1 : index
    %c1_93 = arith.constant 1 : index
    %c0_94 = arith.constant 0 : index
    %28 = vector.load %arg7[%c0_92, %c1, %c1_93, %c0_94] : memref<1x24x24x4xf32, #tpu.memory_space<vmem>>, vector<1x16x16x4xf32>
    %c0_95 = arith.constant 0 : index
    %c1_96 = arith.constant 1 : index
    %c4_97 = arith.constant 4 : index
    %c0_98 = arith.constant 0 : index
    %29 = vector.load %arg7[%c0_95, %c1_96, %c4_97, %c0_98] : memref<1x24x24x4xf32, #tpu.memory_space<vmem>>, vector<1x16x16x4xf32>
    %c0_99 = arith.constant 0 : index
    %c1_100 = arith.constant 1 : index
    %c7 = arith.constant 7 : index
    %c0_101 = arith.constant 0 : index
    %30 = vector.load %arg7[%c0_99, %c1_100, %c7, %c0_101] : memref<1x24x24x4xf32, #tpu.memory_space<vmem>>, vector<1x16x16x4xf32>
    %c0_102 = arith.constant 0 : index
    %c4_103 = arith.constant 4 : index
    %c1_104 = arith.constant 1 : index
    %c0_105 = arith.constant 0 : index
    %31 = vector.load %arg7[%c0_102, %c4_103, %c1_104, %c0_105] : memref<1x24x24x4xf32, #tpu.memory_space<vmem>>, vector<1x16x16x4xf32>
    %c0_106 = arith.constant 0 : index
    %c4_107 = arith.constant 4 : index
    %c4_108 = arith.constant 4 : index
    %c0_109 = arith.constant 0 : index
    %32 = vector.load %arg7[%c0_106, %c4_107, %c4_108, %c0_109] : memref<1x24x24x4xf32, #tpu.memory_space<vmem>>, vector<1x16x16x4xf32>
    %c0_110 = arith.constant 0 : index
    %c4_111 = arith.constant 4 : index
    %c7_112 = arith.constant 7 : index
    %c0_113 = arith.constant 0 : index
    %33 = vector.load %arg7[%c0_110, %c4_111, %c7_112, %c0_113] : memref<1x24x24x4xf32, #tpu.memory_space<vmem>>, vector<1x16x16x4xf32>
    %c0_114 = arith.constant 0 : index
    %c7_115 = arith.constant 7 : index
    %c1_116 = arith.constant 1 : index
    %c0_117 = arith.constant 0 : index
    %34 = vector.load %arg7[%c0_114, %c7_115, %c1_116, %c0_117] : memref<1x24x24x4xf32, #tpu.memory_space<vmem>>, vector<1x16x16x4xf32>
    %c0_118 = arith.constant 0 : index
    %c7_119 = arith.constant 7 : index
    %c4_120 = arith.constant 4 : index
    %c0_121 = arith.constant 0 : index
    %35 = vector.load %arg7[%c0_118, %c7_119, %c4_120, %c0_121] : memref<1x24x24x4xf32, #tpu.memory_space<vmem>>, vector<1x16x16x4xf32>
    %c0_122 = arith.constant 0 : index
    %c7_123 = arith.constant 7 : index
    %c7_124 = arith.constant 7 : index
    %c0_125 = arith.constant 0 : index
    %36 = vector.load %arg7[%c0_122, %c7_123, %c7_124, %c0_125] : memref<1x24x24x4xf32, #tpu.memory_space<vmem>>, vector<1x16x16x4xf32>
    %c0_126 = arith.constant 0 : index
    %c0_127 = arith.constant 0 : index
    %c0_128 = arith.constant 0 : index
    %c0_129 = arith.constant 0 : index
    %37 = vector.load %arg7[%c0_126, %c0_127, %c0_128, %c0_129] : memref<1x24x24x4xf32, #tpu.memory_space<vmem>>, vector<1x16x16x4xf32>
    %c0_130 = arith.constant 0 : index
    %c0_131 = arith.constant 0 : index
    %c4_132 = arith.constant 4 : index
    %c0_133 = arith.constant 0 : index
    %38 = vector.load %arg7[%c0_130, %c0_131, %c4_132, %c0_133] : memref<1x24x24x4xf32, #tpu.memory_space<vmem>>, vector<1x16x16x4xf32>
    %c0_134 = arith.constant 0 : index
    %c0_135 = arith.constant 0 : index
    %c8 = arith.constant 8 : index
    %c0_136 = arith.constant 0 : index
    %39 = vector.load %arg7[%c0_134, %c0_135, %c8, %c0_136] : memref<1x24x24x4xf32, #tpu.memory_space<vmem>>, vector<1x16x16x4xf32>
    %c0_137 = arith.constant 0 : index
    %c4_138 = arith.constant 4 : index
    %c0_139 = arith.constant 0 : index
    %c0_140 = arith.constant 0 : index
    %40 = vector.load %arg7[%c0_137, %c4_138, %c0_139, %c0_140] : memref<1x24x24x4xf32, #tpu.memory_space<vmem>>, vector<1x16x16x4xf32>
    %c0_141 = arith.constant 0 : index
    %c4_142 = arith.constant 4 : index
    %c4_143 = arith.constant 4 : index
    %c0_144 = arith.constant 0 : index
    %41 = vector.load %arg7[%c0_141, %c4_142, %c4_143, %c0_144] : memref<1x24x24x4xf32, #tpu.memory_space<vmem>>, vector<1x16x16x4xf32>
    %c0_145 = arith.constant 0 : index
    %c4_146 = arith.constant 4 : index
    %c8_147 = arith.constant 8 : index
    %c0_148 = arith.constant 0 : index
    %42 = vector.load %arg7[%c0_145, %c4_146, %c8_147, %c0_148] : memref<1x24x24x4xf32, #tpu.memory_space<vmem>>, vector<1x16x16x4xf32>
    %c0_149 = arith.constant 0 : index
    %c8_150 = arith.constant 8 : index
    %c0_151 = arith.constant 0 : index
    %c0_152 = arith.constant 0 : index
    %43 = vector.load %arg7[%c0_149, %c8_150, %c0_151, %c0_152] : memref<1x24x24x4xf32, #tpu.memory_space<vmem>>, vector<1x16x16x4xf32>
    %c0_153 = arith.constant 0 : index
    %c8_154 = arith.constant 8 : index
    %c4_155 = arith.constant 4 : index
    %c0_156 = arith.constant 0 : index
    %44 = vector.load %arg7[%c0_153, %c8_154, %c4_155, %c0_156] : memref<1x24x24x4xf32, #tpu.memory_space<vmem>>, vector<1x16x16x4xf32>
    %c0_157 = arith.constant 0 : index
    %c8_158 = arith.constant 8 : index
    %c8_159 = arith.constant 8 : index
    %c0_160 = arith.constant 0 : index
    %45 = vector.load %arg7[%c0_157, %c8_158, %c8_159, %c0_160] : memref<1x24x24x4xf32, #tpu.memory_space<vmem>>, vector<1x16x16x4xf32>
    %46 = tpu.concatenate %10, %11, %12, %13, %14, %15, %16, %17, %18, %19, %20, %21, %22, %23, %24, %25 in 3 : vector<1x16x16x4xf32>, vector<1x16x16x4xf32>, vector<1x16x16x4xf32>, vector<1x16x16x4xf32>, vector<1x16x16x4xf32>, vector<1x16x16x4xf32>, vector<1x16x16x4xf32>, vector<1x16x16x4xf32>, vector<1x16x16x4xf32>, vector<1x16x16x4xf32>, vector<1x16x16x4xf32>, vector<1x16x16x4xf32>, vector<1x16x16x4xf32>, vector<1x16x16x4xf32>, vector<1x16x16x4xf32>, vector<1x16x16x4xf32> -> vector<1x16x16x64xf32>
    %47 = tpu.concatenate %26, %27, %28, %29, %30, %31, %32, %33, %34, %35, %36, %37, %38, %39, %40, %41 in 3 : vector<1x16x16x4xf32>, vector<1x16x16x4xf32>, vector<1x16x16x4xf32>, vector<1x16x16x4xf32>, vector<1x16x16x4xf32>, vector<1x16x16x4xf32>, vector<1x16x16x4xf32>, vector<1x16x16x4xf32>, vector<1x16x16x4xf32>, vector<1x16x16x4xf32>, vector<1x16x16x4xf32>, vector<1x16x16x4xf32>, vector<1x16x16x4xf32>, vector<1x16x16x4xf32>, vector<1x16x16x4xf32>, vector<1x16x16x4xf32> -> vector<1x16x16x64xf32>
    %48 = tpu.concatenate %42, %43, %44, %45 in 3 : vector<1x16x16x4xf32>, vector<1x16x16x4xf32>, vector<1x16x16x4xf32>, vector<1x16x16x4xf32> -> vector<1x16x16x16xf32>
    %49 = tpu.concatenate %46, %47, %48 in 3 : vector<1x16x16x64xf32>, vector<1x16x16x64xf32>, vector<1x16x16x16xf32> -> vector<1x16x16x144xf32>
    %50 = vector.shape_cast %49 : vector<1x16x16x144xf32> to vector<256x144xf32>
    %c0_161 = arith.constant 0 : index
    %c0_162 = arith.constant 0 : index
    %51 = vector.load %arg2[%c0_161, %c0_162] : memref<144x16xf32, #tpu.memory_space<vmem>>, vector<144x16xf32>
    %cst_163 = arith.constant dense<0.000000e+00> : vector<256x16xf32>
    %52 = tpu.matmul %50, %51, %cst_163 {dimension_numbers = #tpu.dot_dimension_numbers<[1], [0], [0], [1], [0, 0, 1, 1], [], []>} : vector<256x144xf32>, vector<144x16xf32>, vector<256x16xf32> -> vector<256x16xf32>
    %c0_164 = arith.constant 0 : index
    %c0_165 = arith.constant 0 : index
    %53 = vector.load %arg3[%c0_164, %c0_165] : memref<1x16xf32, #tpu.memory_space<vmem>>, vector<1x16xf32>
    %54 = vector.broadcast %53 : vector<1x16xf32> to vector<256x16xf32>
    %55 = arith.addf %52, %54 : vector<256x16xf32>
    %cst_166 = arith.constant 1.000000e-01 : f32
    %56 = vector.broadcast %cst_166 : f32 to vector<256x16xf32>
    %57 = arith.mulf %56, %55 : vector<256x16xf32>
    %58 = arith.maximumf %55, %57 : vector<256x16xf32>
    %cst_167 = arith.constant 0.000000e+00 : f32
    %59 = vector.broadcast %cst_167 : f32 to vector<1x1x18x16xf32>
    %c0_168 = arith.constant 0 : index
    %c0_169 = arith.constant 0 : index
    %c0_170 = arith.constant 0 : index
    %c0_171 = arith.constant 0 : index
    %60 = vector.load %arg8[%c0_168, %c0_169, %c0_170, %c0_171] : memref<1x18x18x16xf32, #tpu.memory_space<vmem>>, vector<1x1x18x16xf32>
    tpu.vector_store %arg8[%c0_168, %c0_169, %c0_170, %c0_171], %59 {strides = array<i32>} : memref<1x18x18x16xf32, #tpu.memory_space<vmem>>, vector<1x1x18x16xf32>,
    %cst_172 = arith.constant 0.000000e+00 : f32
    %61 = vector.broadcast %cst_172 : f32 to vector<1x1x18x16xf32>
    %c0_173 = arith.constant 0 : index
    %c17 = arith.constant 17 : index
    %c0_174 = arith.constant 0 : index
    %c0_175 = arith.constant 0 : index
    %62 = vector.load %arg8[%c0_173, %c17, %c0_174, %c0_175] : memref<1x18x18x16xf32, #tpu.memory_space<vmem>>, vector<1x1x18x16xf32>
    tpu.vector_store %arg8[%c0_173, %c17, %c0_174, %c0_175], %61 {strides = array<i32>} : memref<1x18x18x16xf32, #tpu.memory_space<vmem>>, vector<1x1x18x16xf32>,
    %cst_176 = arith.constant 0.000000e+00 : f32
    %63 = vector.broadcast %cst_176 : f32 to vector<1x18x1x16xf32>
    %c0_177 = arith.constant 0 : index
    %c0_178 = arith.constant 0 : index
    %c0_179 = arith.constant 0 : index
    %c0_180 = arith.constant 0 : index
    %64 = vector.load %arg8[%c0_177, %c0_178, %c0_179, %c0_180] : memref<1x18x18x16xf32, #tpu.memory_space<vmem>>, vector<1x18x1x16xf32>
    tpu.vector_store %arg8[%c0_177, %c0_178, %c0_179, %c0_180], %63 {strides = array<i32>} : memref<1x18x18x16xf32, #tpu.memory_space<vmem>>, vector<1x18x1x16xf32>,
    %cst_181 = arith.constant 0.000000e+00 : f32
    %65 = vector.broadcast %cst_181 : f32 to vector<1x18x1x16xf32>
    %c0_182 = arith.constant 0 : index
    %c0_183 = arith.constant 0 : index
    %c17_184 = arith.constant 17 : index
    %c0_185 = arith.constant 0 : index
    %66 = vector.load %arg8[%c0_182, %c0_183, %c17_184, %c0_185] : memref<1x18x18x16xf32, #tpu.memory_space<vmem>>, vector<1x18x1x16xf32>
    tpu.vector_store %arg8[%c0_182, %c0_183, %c17_184, %c0_185], %65 {strides = array<i32>} : memref<1x18x18x16xf32, #tpu.memory_space<vmem>>, vector<1x18x1x16xf32>,
    %67 = vector.shape_cast %58 : vector<256x16xf32> to vector<1x16x16x16xf32>
    %c0_186 = arith.constant 0 : index
    %c1_187 = arith.constant 1 : index
    %c1_188 = arith.constant 1 : index
    %c0_189 = arith.constant 0 : index
    %68 = vector.load %arg8[%c0_186, %c1_187, %c1_188, %c0_189] : memref<1x18x18x16xf32, #tpu.memory_space<vmem>>, vector<1x16x16x16xf32>
    tpu.vector_store %arg8[%c0_186, %c1_187, %c1_188, %c0_189], %67 {strides = array<i32>} : memref<1x18x18x16xf32, #tpu.memory_space<vmem>>, vector<1x16x16x16xf32>,
    %c0_190 = arith.constant 0 : index
    %c0_191 = arith.constant 0 : index
    %c0_192 = arith.constant 0 : index
    %c0_193 = arith.constant 0 : index
    %69 = vector.load %arg8[%c0_190, %c0_191, %c0_192, %c0_193] : memref<1x18x18x16xf32, #tpu.memory_space<vmem>>, vector<1x16x16x16xf32>
    %c0_194 = arith.constant 0 : index
    %c0_195 = arith.constant 0 : index
    %c1_196 = arith.constant 1 : index
    %c0_197 = arith.constant 0 : index
    %70 = vector.load %arg8[%c0_194, %c0_195, %c1_196, %c0_197] : memref<1x18x18x16xf32, #tpu.memory_space<vmem>>, vector<1x16x16x16xf32>
    %c0_198 = arith.constant 0 : index
    %c0_199 = arith.constant 0 : index
    %c2_200 = arith.constant 2 : index
    %c0_201 = arith.constant 0 : index
    %71 = vector.load %arg8[%c0_198, %c0_199, %c2_200, %c0_201] : memref<1x18x18x16xf32, #tpu.memory_space<vmem>>, vector<1x16x16x16xf32>
    %c0_202 = arith.constant 0 : index
    %c1_203 = arith.constant 1 : index
    %c0_204 = arith.constant 0 : index
    %c0_205 = arith.constant 0 : index
    %72 = vector.load %arg8[%c0_202, %c1_203, %c0_204, %c0_205] : memref<1x18x18x16xf32, #tpu.memory_space<vmem>>, vector<1x16x16x16xf32>
    %c0_206 = arith.constant 0 : index
    %c1_207 = arith.constant 1 : index
    %c1_208 = arith.constant 1 : index
    %c0_209 = arith.constant 0 : index
    %73 = vector.load %arg8[%c0_206, %c1_207, %c1_208, %c0_209] : memref<1x18x18x16xf32, #tpu.memory_space<vmem>>, vector<1x16x16x16xf32>
    %c0_210 = arith.constant 0 : index
    %c1_211 = arith.constant 1 : index
    %c2_212 = arith.constant 2 : index
    %c0_213 = arith.constant 0 : index
    %74 = vector.load %arg8[%c0_210, %c1_211, %c2_212, %c0_213] : memref<1x18x18x16xf32, #tpu.memory_space<vmem>>, vector<1x16x16x16xf32>
    %c0_214 = arith.constant 0 : index
    %c2_215 = arith.constant 2 : index
    %c0_216 = arith.constant 0 : index
    %c0_217 = arith.constant 0 : index
    %75 = vector.load %arg8[%c0_214, %c2_215, %c0_216, %c0_217] : memref<1x18x18x16xf32, #tpu.memory_space<vmem>>, vector<1x16x16x16xf32>
    %c0_218 = arith.constant 0 : index
    %c2_219 = arith.constant 2 : index
    %c1_220 = arith.constant 1 : index
    %c0_221 = arith.constant 0 : index
    %76 = vector.load %arg8[%c0_218, %c2_219, %c1_220, %c0_221] : memref<1x18x18x16xf32, #tpu.memory_space<vmem>>, vector<1x16x16x16xf32>
    %c0_222 = arith.constant 0 : index
    %c2_223 = arith.constant 2 : index
    %c2_224 = arith.constant 2 : index
    %c0_225 = arith.constant 0 : index
    %77 = vector.load %arg8[%c0_222, %c2_223, %c2_224, %c0_225] : memref<1x18x18x16xf32, #tpu.memory_space<vmem>>, vector<1x16x16x16xf32>
    %78 = tpu.concatenate %69, %70, %71, %72, %73, %74, %75, %76, %77 in 3 : vector<1x16x16x16xf32>, vector<1x16x16x16xf32>, vector<1x16x16x16xf32>, vector<1x16x16x16xf32>, vector<1x16x16x16xf32>, vector<1x16x16x16xf32>, vector<1x16x16x16xf32>, vector<1x16x16x16xf32>, vector<1x16x16x16xf32> -> vector<1x16x16x144xf32>
    %79 = vector.shape_cast %78 : vector<1x16x16x144xf32> to vector<256x144xf32>
    %c0_226 = arith.constant 0 : index
    %c0_227 = arith.constant 0 : index
    %80 = vector.load %arg4[%c0_226, %c0_227] : memref<144x4xf32, #tpu.memory_space<vmem>>, vector<144x4xf32>
    %cst_228 = arith.constant dense<0.000000e+00> : vector<256x4xf32>
    %81 = tpu.matmul %79, %80, %cst_228 {dimension_numbers = #tpu.dot_dimension_numbers<[1], [0], [0], [1], [0, 0, 1, 1], [], []>} : vector<256x144xf32>, vector<144x4xf32>, vector<256x4xf32> -> vector<256x4xf32>
    %c0_229 = arith.constant 0 : index
    %c4_230 = arith.constant 4 : index
    %c4_231 = arith.constant 4 : index
    %c0_232 = arith.constant 0 : index
    %82 = vector.load %arg7[%c0_229, %c4_230, %c4_231, %c0_232] : memref<1x24x24x4xf32, #tpu.memory_space<vmem>>, vector<1x16x16x4xf32>
    %83 = vector.shape_cast %82 : vector<1x16x16x4xf32> to vector<256x4xf32>
    %c0_233 = arith.constant 0 : index
    %c0_234 = arith.constant 0 : index
    %84 = vector.load %arg5[%c0_233, %c0_234] : memref<1x4xf32, #tpu.memory_space<vmem>>, vector<1x4xf32>
    %85 = vector.broadcast %84 : vector<1x4xf32> to vector<256x4xf32>
    %86 = arith.addf %81, %85 : vector<256x4xf32>
    %87 = arith.addf %86, %83 : vector<256x4xf32>
    %88 = vector.shape_cast %87 : vector<256x4xf32> to vector<16x16x4xf32>
    %89 = vector.extract_strided_slice %88 {offsets = [0, 0, 0], sizes = [16, 1, 4], strides = [1, 1, 1]} : vector<16x16x4xf32> to vector<16x1x4xf32>
    %90 = vector.shape_cast %89 : vector<16x1x4xf32> to vector<16x4xf32>
    %91 = vector.extract_strided_slice %88 {offsets = [0, 1, 0], sizes = [16, 1, 4], strides = [1, 1, 1]} : vector<16x16x4xf32> to vector<16x1x4xf32>
    %92 = vector.shape_cast %91 : vector<16x1x4xf32> to vector<16x4xf32>
    %93 = vector.extract_strided_slice %88 {offsets = [0, 2, 0], sizes = [16, 1, 4], strides = [1, 1, 1]} : vector<16x16x4xf32> to vector<16x1x4xf32>
    %94 = vector.shape_cast %93 : vector<16x1x4xf32> to vector<16x4xf32>
    %95 = vector.extract_strided_slice %88 {offsets = [0, 3, 0], sizes = [16, 1, 4], strides = [1, 1, 1]} : vector<16x16x4xf32> to vector<16x1x4xf32>
    %96 = vector.shape_cast %95 : vector<16x1x4xf32> to vector<16x4xf32>
    %97 = vector.extract_strided_slice %88 {offsets = [0, 4, 0], sizes = [16, 1, 4], strides = [1, 1, 1]} : vector<16x16x4xf32> to vector<16x1x4xf32>
    %98 = vector.shape_cast %97 : vector<16x1x4xf32> to vector<16x4xf32>
    %99 = vector.extract_strided_slice %88 {offsets = [0, 5, 0], sizes = [16, 1, 4], strides = [1, 1, 1]} : vector<16x16x4xf32> to vector<16x1x4xf32>
    %100 = vector.shape_cast %99 : vector<16x1x4xf32> to vector<16x4xf32>
    %101 = vector.extract_strided_slice %88 {offsets = [0, 6, 0], sizes = [16, 1, 4], strides = [1, 1, 1]} : vector<16x16x4xf32> to vector<16x1x4xf32>
    %102 = vector.shape_cast %101 : vector<16x1x4xf32> to vector<16x4xf32>
    %103 = vector.extract_strided_slice %88 {offsets = [0, 7, 0], sizes = [16, 1, 4], strides = [1, 1, 1]} : vector<16x16x4xf32> to vector<16x1x4xf32>
    %104 = vector.shape_cast %103 : vector<16x1x4xf32> to vector<16x4xf32>
    %105 = vector.extract_strided_slice %88 {offsets = [0, 8, 0], sizes = [16, 1, 4], strides = [1, 1, 1]} : vector<16x16x4xf32> to vector<16x1x4xf32>
    %106 = vector.shape_cast %105 : vector<16x1x4xf32> to vector<16x4xf32>
    %107 = vector.extract_strided_slice %88 {offsets = [0, 9, 0], sizes = [16, 1, 4], strides = [1, 1, 1]} : vector<16x16x4xf32> to vector<16x1x4xf32>
    %108 = vector.shape_cast %107 : vector<16x1x4xf32> to vector<16x4xf32>
    %109 = vector.extract_strided_slice %88 {offsets = [0, 10, 0], sizes = [16, 1, 4], strides = [1, 1, 1]} : vector<16x16x4xf32> to vector<16x1x4xf32>
    %110 = vector.shape_cast %109 : vector<16x1x4xf32> to vector<16x4xf32>
    %111 = vector.extract_strided_slice %88 {offsets = [0, 11, 0], sizes = [16, 1, 4], strides = [1, 1, 1]} : vector<16x16x4xf32> to vector<16x1x4xf32>
    %112 = vector.shape_cast %111 : vector<16x1x4xf32> to vector<16x4xf32>
    %113 = vector.extract_strided_slice %88 {offsets = [0, 12, 0], sizes = [16, 1, 4], strides = [1, 1, 1]} : vector<16x16x4xf32> to vector<16x1x4xf32>
    %114 = vector.shape_cast %113 : vector<16x1x4xf32> to vector<16x4xf32>
    %115 = vector.extract_strided_slice %88 {offsets = [0, 13, 0], sizes = [16, 1, 4], strides = [1, 1, 1]} : vector<16x16x4xf32> to vector<16x1x4xf32>
    %116 = vector.shape_cast %115 : vector<16x1x4xf32> to vector<16x4xf32>
    %117 = vector.extract_strided_slice %88 {offsets = [0, 14, 0], sizes = [16, 1, 4], strides = [1, 1, 1]} : vector<16x16x4xf32> to vector<16x1x4xf32>
    %118 = vector.shape_cast %117 : vector<16x1x4xf32> to vector<16x4xf32>
    %119 = vector.extract_strided_slice %88 {offsets = [0, 15, 0], sizes = [16, 1, 4], strides = [1, 1, 1]} : vector<16x16x4xf32> to vector<16x1x4xf32>
    %120 = vector.shape_cast %119 : vector<16x1x4xf32> to vector<16x4xf32>
    %121 = tpu.concatenate %90, %92, %94, %96, %98, %100, %102, %104, %106, %108, %110, %112, %114, %116, %118, %120 in 1 : vector<16x4xf32>, vector<16x4xf32>, vector<16x4xf32>, vector<16x4xf32>, vector<16x4xf32>, vector<16x4xf32>, vector<16x4xf32>, vector<16x4xf32>, vector<16x4xf32>, vector<16x4xf32>, vector<16x4xf32>, vector<16x4xf32>, vector<16x4xf32>, vector<16x4xf32>, vector<16x4xf32>, vector<16x4xf32> -> vector<16x64xf32>
    %122 = vector.shape_cast %121 : vector<16x64xf32> to vector<1x16x64xf32>
    %c0_235 = arith.constant 0 : index
    %c0_236 = arith.constant 0 : index
    %c0_237 = arith.constant 0 : index
    %123 = vector.load %arg6[%c0_235, %c0_236, %c0_237] : memref<1x16x64xf32, #tpu.memory_space<vmem>>, vector<1x16x64xf32>
    tpu.vector_store %arg6[%c0_235, %c0_236, %c0_237], %122 {strides = array<i32>} : memref<1x16x64xf32, #tpu.memory_space<vmem>>, vector<1x16x64xf32>,
    return
  }
  func.func @transform_0(%arg0: i32) -> (i32, i32, i32, i32) {
    %c0_i32 = arith.constant 0 : i32
    %c0_i32_0 = arith.constant 0 : i32
    %c0_i32_1 = arith.constant 0 : i32
    %c0_i32_2 = arith.constant 0 : i32
    return %arg0, %c0_i32, %c0_i32_0, %c0_i32_1 : i32, i32, i32, i32
  }
  func.func @transform_1(%arg0: i32) -> (i32, i32) {
    %c0_i32 = arith.constant 0 : i32
    %c0_i32_0 = arith.constant 0 : i32
    %c0_i32_1 = arith.constant 0 : i32
    return %c0_i32, %c0_i32_0 : i32, i32
  }
  func.func @transform_2(%arg0: i32) -> (i32, i32) {
    %c0_i32 = arith.constant 0 : i32
    %c0_i32_0 = arith.constant 0 : i32
    %c0_i32_1 = arith.constant 0 : i32
    return %c0_i32, %c0_i32_0 : i32, i32
  }
  func.func @transform_3(%arg0: i32) -> (i32, i32) {
    %c0_i32 = arith.constant 0 : i32
    %c0_i32_0 = arith.constant 0 : i32
    %c0_i32_1 = arith.constant 0 : i32
    return %c0_i32, %c0_i32_0 : i32, i32
  }
  func.func @transform_4(%arg0: i32) -> (i32, i32) {
    %c0_i32 = arith.constant 0 : i32
    %c0_i32_0 = arith.constant 0 : i32
    %c0_i32_1 = arith.constant 0 : i32
    return %c0_i32, %c0_i32_0 : i32, i32
  }
  func.func @transform_5(%arg0: i32) -> (i32, i32, i32) {
    %c0_i32 = arith.constant 0 : i32
    %c0_i32_0 = arith.constant 0 : i32
    %c0_i32_1 = arith.constant 0 : i32
    return %arg0, %c0_i32, %c0_i32_0 : i32, i32, i32
  }
}

</mosaic_0001>

<llo_original>
// kernel: tpu_custom_call.1
$region0: #{tpu_custom_call.1}
  #allocation0 [shape = 'u32[]', space=smem, size = 0x4, offset = 0x4, fixed_abs, tag = 'smem constant byte address 0x4 - core index']
  #allocation1 [shape = 'u32[144,128]{1,0:T(1,128)}', space=vmem, size = 0x12000, scoped, tag = 'internal scratch']
  #allocation2 [shape = 'f32[1,24,24,4]{3,2,1,0:T(8,128)}', space=vmem, size = 0x48000, scoped, tag = 'scratch operand']
  #allocation3 [shape = 'f32[1,18,18,16]{3,2,1,0:T(8,128)}', space=vmem, size = 0x36000, scoped, tag = 'scratch operand']
  %s0 = inlined_call_operand.vmem [shape: f32[2,16,16,4], index: 0, kind: input, shape index: {}]
  %s1 = inlined_call_operand.vmem [shape: f32[144,16], index: 1, kind: input, shape index: {}]
  %s2 = inlined_call_operand.vmem [shape: f32[1,16], index: 2, kind: input, shape index: {}]
  %s3 = inlined_call_operand.vmem [shape: f32[144,4], index: 3, kind: input, shape index: {}]
  %s4 = inlined_call_operand.vmem [shape: f32[1,4], index: 4, kind: input, shape index: {}]
  %s5 = inlined_call_operand.hbm [shape: f32[2,16,64], index: 5, kind: output, shape index: {}]
  %s6 = sld [smem:[#allocation0]]
  $region53: #{tpu_custom_call.1} parent=0
    _
  %s8 = ssub.s32 1, %s6
  %s9 = scalar_select 0, %s8, %s6
  $region1: #{tpu_custom_call.1} parent=0
    #allocation4 [shape = 'u8[16384]{0}', space=vmem, size = 0x4000, scoped, tag = 'output window, operand 0']
    #allocation5 [shape = 's32[2]{0}', space=sflag, size = 0x8, scoped, tag = 'scoped memory for tpu_custom_call.1']
    %10 = vsyncpa [#allocation5], 0
    %s11 = scalar_lea.sflag [#allocation5], 1
    %12 = vsyncpa %s11, 0
    loop: start=0, step=1, limit=4
    $region2: #{tpu_custom_call.1} parent=1 // loop_pre_header
      _
    $region3: #{tpu_custom_call.1} parent=1 // loop_header
      %s14 = sphi 0, %s18
      %p15 = scmp.ge.s32.totalorder %s14, 4
      %s24 = sphi 0, %s26
      %s27 = sphi 0, %s24
      %s28 = sphi 0, %s27
      %s44 = sphi 0, %s28
      %s48 = sphi 0, %s48
      %s50 = sphi 0, %s48
      %s51 = sphi 0, %s50
      %s65 = sphi 0, %s51
      %s69 = sphi 0, %s69
      %s71 = sphi 0, %s69
      %s72 = sphi 0, %s71
      %s86 = sphi 0, %s72
      %s90 = sphi 0, %s90
      %s92 = sphi 0, %s90
      %s93 = sphi 0, %s92
      %s107 = sphi 0, %s93
      %s111 = sphi 0, %s111
      %s113 = sphi 0, %s111
      %s114 = sphi 0, %s113
      %s128 = sphi 0, %s114
      %s134 = sphi 0, %s136
      %s137 = sphi 0, %s134
      %s138 = sphi 0, %s137
      %s154 = sphi 0, %s138
    $region4: #{tpu_custom_call.1} parent=1 // loop_header_branch
      %17 = sbr.rel (%p15) target = $region8
    $region5: #{tpu_custom_call.1} parent=1 // loop_body
      %s19 = ssub.s32 %s14, 1
      %s20 = ssub.s32 %s14, 2
      %s21 = sadd.s32 %s14, 1
      %s22 = ssub.s32 %s14, %s21
      %p23 = scmp.eq.s32.totalorder %s22, 0
      %s25 = sadd.s32 %s24, 1
      %s26 = scalar_select %p23, %s24, %s25
      %p29 = pneg %p23
      %p30 = scmp.eq.s32.totalorder %s14, 1
      %p31 = por %p29, %p30
      %p32 = scmp.ne.s32.totalorder %s24, %s27
      %p33 = scmp.eq.s32.totalorder %s14, 0
      %p34 = por %p32, %p33
      %p35 = scmp.ne.s32.totalorder %s24, %s27
      %p36 = scmp.eq.s32.totalorder %s19, 1
      %p37 = por %p35, %p36
      %p38 = scmp.ne.s32.totalorder %s27, %s28
      %p39 = scmp.eq.s32.totalorder %s19, 0
      %p40 = por %p38, %p39
      %p41 = scmp.ne.s32.totalorder %s27, %s28
      %p42 = scmp.eq.s32.totalorder %s20, 1
      %p43 = por %p41, %p42
      %p45 = scmp.ne.s32.totalorder %s28, %s44
      %p46 = scmp.eq.s32.totalorder %s20, 0
      %p47 = por %p45, %p46
      %s49 = sadd.s32 %s48, 1
      %p52 = scmp.eq.s32.totalorder %s14, 1
      %p53 = scmp.ne.s32.totalorder %s48, %s50
      %p54 = scmp.eq.s32.totalorder %s14, 0
      %p55 = por %p53, %p54
      %p56 = scmp.ne.s32.totalorder %s48, %s50
      %p57 = scmp.eq.s32.totalorder %s19, 1
      %p58 = por %p56, %p57
      %p59 = scmp.ne.s32.totalorder %s50, %s51
      %p60 = scmp.eq.s32.totalorder %s19, 0
      %p61 = por %p59, %p60
      %p62 = scmp.ne.s32.totalorder %s50, %s51
      %p63 = scmp.eq.s32.totalorder %s20, 1
      %p64 = por %p62, %p63
      %p66 = scmp.ne.s32.totalorder %s51, %s65
      %p67 = scmp.eq.s32.totalorder %s20, 0
      %p68 = por %p66, %p67
      %s70 = sadd.s32 %s69, 1
      %p73 = scmp.eq.s32.totalorder %s14, 1
      %p74 = scmp.ne.s32.totalorder %s69, %s71
      %p75 = scmp.eq.s32.totalorder %s14, 0
      %p76 = por %p74, %p75
      %p77 = scmp.ne.s32.totalorder %s69, %s71
      %p78 = scmp.eq.s32.totalorder %s19, 1
      %p79 = por %p77, %p78
      %p80 = scmp.ne.s32.totalorder %s71, %s72
      %p81 = scmp.eq.s32.totalorder %s19, 0
      %p82 = por %p80, %p81
      %p83 = scmp.ne.s32.totalorder %s71, %s72
      %p84 = scmp.eq.s32.totalorder %s20, 1
      %p85 = por %p83, %p84
      %p87 = scmp.ne.s32.totalorder %s72, %s86
      %p88 = scmp.eq.s32.totalorder %s20, 0
      %p89 = por %p87, %p88
      %s91 = sadd.s32 %s90, 1
      %p94 = scmp.eq.s32.totalorder %s14, 1
      %p95 = scmp.ne.s32.totalorder %s90, %s92
      %p96 = scmp.eq.s32.totalorder %s14, 0
      %p97 = por %p95, %p96
      %p98 = scmp.ne.s32.totalorder %s90, %s92
      %p99 = scmp.eq.s32.totalorder %s19, 1
      %p100 = por %p98, %p99
      %p101 = scmp.ne.s32.totalorder %s92, %s93
      %p102 = scmp.eq.s32.totalorder %s19, 0
      %p103 = por %p101, %p102
      %p104 = scmp.ne.s32.totalorder %s92, %s93
      %p105 = scmp.eq.s32.totalorder %s20, 1
      %p106 = por %p104, %p105
      %p108 = scmp.ne.s32.totalorder %s93, %s107
      %p109 = scmp.eq.s32.totalorder %s20, 0
      %p110 = por %p108, %p109
      %s112 = sadd.s32 %s111, 1
      %p115 = scmp.eq.s32.totalorder %s14, 1
      %p116 = scmp.ne.s32.totalorder %s111, %s113
      %p117 = scmp.eq.s32.totalorder %s14, 0
      %p118 = por %p116, %p117
      %p119 = scmp.ne.s32.totalorder %s111, %s113
      %p120 = scmp.eq.s32.totalorder %s19, 1
      %p121 = por %p119, %p120
      %p122 = scmp.ne.s32.totalorder %s113, %s114
      %p123 = scmp.eq.s32.totalorder %s19, 0
      %p124 = por %p122, %p123
      %p125 = scmp.ne.s32.totalorder %s113, %s114
      %p126 = scmp.eq.s32.totalorder %s20, 1
      %p127 = por %p125, %p126
      %p129 = scmp.ne.s32.totalorder %s114, %s128
      %p130 = scmp.eq.s32.totalorder %s20, 0
      %p131 = por %p129, %p130
      %s132 = ssub.s32 %s14, %s21
      %p133 = scmp.eq.s32.totalorder %s132, 0
      %s135 = sadd.s32 %s134, 1
      %s136 = scalar_select %p133, %s134, %s135
      %p139 = pneg %p133
      %p140 = scmp.eq.s32.totalorder %s14, 1
      %p141 = por %p139, %p140
      %p142 = scmp.ne.s32.totalorder %s134, %s137
      %p143 = scmp.eq.s32.totalorder %s14, 0
      %p144 = por %p142, %p143
      %p145 = scmp.ne.s32.totalorder %s134, %s137
      %p146 = scmp.eq.s32.totalorder %s19, 1
      %p147 = por %p145, %p146
      %p148 = scmp.ne.s32.totalorder %s137, %s138
      %p149 = scmp.eq.s32.totalorder %s19, 0
      %p150 = por %p148, %p149
      %p151 = scmp.ne.s32.totalorder %s137, %s138
      %p152 = scmp.eq.s32.totalorder %s20, 1
      %p153 = por %p151, %p152
      %p155 = scmp.ne.s32.totalorder %s138, %s154
      %p156 = scmp.eq.s32.totalorder %s20, 0
      %p157 = por %p155, %p156
      %p158 = scmp.le.s32.totalorder 1, %s14
      %p159 = scmp.lt.s32.totalorder %s14, 3
      %p160 = pnand %p158, %p159
      %p161 = pneg %p160
      // Predicated region
      $region9: #{tpu_custom_call.1} parent=5 // pred_check
        _
      $region10: #{tpu_custom_call.1} parent=5 // pred_check_branch
        %163 = sbr.rel (%p160) target = $region12
      $region11: #{tpu_custom_call.1} parent=5 // pred_region
        %s164 = ssub.s32 %s14, 1
        // Predicated region
        $region13: #{tpu_custom_call.1} parent=11 // pred_check
          %p165 = pneg %p61
        $region14: #{tpu_custom_call.1} parent=11 // pred_check_branch
          %167 = sbr.rel (%p165) target = $region16
        $region15: #{tpu_custom_call.1} parent=11 // pred_region
          _
        $region16: #{tpu_custom_call.1} parent=11 // pred_fallthru
          _
        // Predicated region
        $region17: #{tpu_custom_call.1} parent=11 // pred_check
          %p168 = pneg %p82
        $region18: #{tpu_custom_call.1} parent=11 // pred_check_branch
          %170 = sbr.rel (%p168) target = $region20
        $region19: #{tpu_custom_call.1} parent=11 // pred_region
          _
        $region20: #{tpu_custom_call.1} parent=11 // pred_fallthru
          _
        // Predicated region
        $region21: #{tpu_custom_call.1} parent=11 // pred_check
          %p171 = pneg %p103
        $region22: #{tpu_custom_call.1} parent=11 // pred_check_branch
          %173 = sbr.rel (%p171) target = $region24
        $region23: #{tpu_custom_call.1} parent=11 // pred_region
          _
        $region24: #{tpu_custom_call.1} parent=11 // pred_fallthru
          _
        // Predicated region
        $region25: #{tpu_custom_call.1} parent=11 // pred_check
          %p174 = pneg %p124
        $region26: #{tpu_custom_call.1} parent=11 // pred_check_branch
          %176 = sbr.rel (%p174) target = $region28
        $region27: #{tpu_custom_call.1} parent=11 // pred_region
          _
        $region28: #{tpu_custom_call.1} parent=11 // pred_fallthru
          _
      $region12: #{tpu_custom_call.1} parent=5 // pred_fallthru
        _
      %p177 = scmp.lt.s32.totalorder %s14, 2
      // Predicated region
      $region29: #{tpu_custom_call.1} parent=5 // pred_check
        %p178 = pneg %p177
      $region30: #{tpu_custom_call.1} parent=5 // pred_check_branch
        %180 = sbr.rel (%p178) target = $region32
      $region31: #{tpu_custom_call.1} parent=5 // pred_region
        // Predicated region
        $region33: #{tpu_custom_call.1} parent=31 // pred_check
          %p181 = pneg %p34
        $region34: #{tpu_custom_call.1} parent=31 // pred_check_branch
          %183 = sbr.rel (%p181) target = $region36
        $region35: #{tpu_custom_call.1} parent=31 // pred_region
          %p184 = scmp.lt.s32.totalorder %s14, 1
          %s185 = scalar_select %p184, %s14, 1
          %s186 = smul.addr %s185, 32
          %s187 = smul.addr %s186, 8
          %s188 = scalar_lea.vmem %s0, %s187
        $region36: #{tpu_custom_call.1} parent=31 // pred_fallthru
          _
      $region32: #{tpu_custom_call.1} parent=5 // pred_fallthru
        _
      %p189 = scmp.le.s32.totalorder 1, %s14
      %p190 = scmp.lt.s32.totalorder %s14, 3
      %p191 = pnand %p189, %p190
      %p192 = pneg %p191
      // Predicated region
      $region37: #{tpu_custom_call.1} parent=5 // pred_check
        _
      $region38: #{tpu_custom_call.1} parent=5 // pred_check_branch
        %194 = sbr.rel (%p191) target = $region40
      $region39: #{tpu_custom_call.1} parent=5 // pred_region
        %s195 = ssub.s32 %s14, 1
        %p196 = scmp.lt.s32.totalorder %s19, 1
        %s197 = scalar_select %p196, %s19, 1
        %s198 = smul.addr %s197, 32
        %s199 = smul.addr %s198, 8
        %s200 = scalar_lea.vmem %s0, %s199
        %p201 = pneg %p40
        %p202 = pneg %p37
        %p203 = pneg %p61
        %p204 = pneg %p58
        %p205 = pneg %p82
        %p206 = pneg %p79
        %p207 = pneg %p103
        %p208 = pneg %p100
        %p209 = pneg %p124
        %p210 = pneg %p121
        %p211 = pneg %p150
        %p212 = pneg %p147
        %s213 = sand.u32 %s137, 1
        %s214 = scalar_lea.sflag [#allocation5], %s213
        %s215 = sand.u32 %s137, 1
        %s216 = smul.addr %s215, 16
        %s217 = scalar_lea.vmem [#allocation4], %s216
        %p218 = scmp.lt.s32.totalorder %s19, 1
        %s219 = scalar_select %p218, %s19, 1
        %s220 = smul.addr %s219, 32
        %s221 = smul.addr %s220, 8
        %s222 = scalar_lea.vmem %s0, %s221
        %vm223 = vcmask 31744
        %224 = vst.msk [vmem:[#allocation2] sm:$0xff] %vm223, 0.0
        %225 = vst.msk [vmem:[#allocation2 + $0x8] sm:$0xff] %vm223, 0.0
        %226 = vst.msk [vmem:[#allocation2 + $0x10] sm:$0xff] %vm223, 0.0
        %227 = vst.msk [vmem:[#allocation2 + $0x18] sm:$0xff] %vm223, 0.0
        %228 = vst.msk [vmem:[#allocation2 + $0x20] sm:$0xff] %vm223, 0.0
        %229 = vst.msk [vmem:[#allocation2 + $0x28] sm:$0xff] %vm223, 0.0
        %230 = vst.msk [vmem:[#allocation2 + $0x30] sm:$0xff] %vm223, 0.0
        %231 = vst.msk [vmem:[#allocation2 + $0x38] sm:$0xff] %vm223, 0.0
        %232 = vst.msk [vmem:[#allocation2 + $0x40] sm:$0xff] %vm223, 0.0
        %233 = vst.msk [vmem:[#allocation2 + $0x48] sm:$0xff] %vm223, 0.0
        %234 = vst.msk [vmem:[#allocation2 + $0x50] sm:$0xff] %vm223, 0.0
        %235 = vst.msk [vmem:[#allocation2 + $0x58] sm:$0xff] %vm223, 0.0
        %s236 = scalar_lea.vmem [#allocation2], 480
        %237 = vst.msk [vmem:[%s236] sm:$0xff] %vm223, 0.0
        %238 = vst.msk [vmem:[%s236 + $0x8] sm:$0xff] %vm223, 0.0
        %239 = vst.msk [vmem:[%s236 + $0x10] sm:$0xff] %vm223, 0.0
        %240 = vst.msk [vmem:[%s236 + $0x18] sm:$0xff] %vm223, 0.0
        %241 = vst.msk [vmem:[%s236 + $0x20] sm:$0xff] %vm223, 0.0
        %242 = vst.msk [vmem:[%s236 + $0x28] sm:$0xff] %vm223, 0.0
        %243 = vst.msk [vmem:[%s236 + $0x30] sm:$0xff] %vm223, 0.0
        %244 = vst.msk [vmem:[%s236 + $0x38] sm:$0xff] %vm223, 0.0
        %245 = vst.msk [vmem:[%s236 + $0x40] sm:$0xff] %vm223, 0.0
        %246 = vst.msk [vmem:[%s236 + $0x48] sm:$0xff] %vm223, 0.0
        %247 = vst.msk [vmem:[%s236 + $0x50] sm:$0xff] %vm223, 0.0
        %248 = vst.msk [vmem:[%s236 + $0x58] sm:$0xff] %vm223, 0.0
        %vm249 = vcmask 27648
        %250 = vst.msk [vmem:[#allocation2] sm:$0xf] %vm249, 0.0
        %251 = vst.msk [vmem:[#allocation2 + $0x18] sm:$0xf] %vm249, 0.0
        %252 = vst.msk [vmem:[#allocation2 + $0x30] sm:$0xf] %vm249, 0.0
        %253 = vst.msk [vmem:[#allocation2 + $0x48] sm:$0xf] %vm249, 0.0
        %254 = vst.msk [vmem:[#allocation2 + $0x60] sm:$0xf] %vm249, 0.0
        %255 = vst.msk [vmem:[#allocation2 + $0x78] sm:$0xf] %vm249, 0.0
        %256 = vst.msk [vmem:[#allocation2 + $0x90] sm:$0xf] %vm249, 0.0
        %257 = vst.msk [vmem:[#allocation2 + $0xa8] sm:$0xf] %vm249, 0.0
        %258 = vst.msk [vmem:[#allocation2 + $0xc0] sm:$0xf] %vm249, 0.0
        %259 = vst.msk [vmem:[#allocation2 + $0xd8] sm:$0xf] %vm249, 0.0
        %260 = vst.msk [vmem:[#allocation2 + $0xf0] sm:$0xf] %vm249, 0.0
        %261 = vst.msk [vmem:[#allocation2 + $0x108] sm:$0xf] %vm249, 0.0
        %262 = vst.msk [vmem:[#allocation2 + $0x120] sm:$0xf] %vm249, 0.0
        %263 = vst.msk [vmem:[#allocation2 + $0x138] sm:$0xf] %vm249, 0.0
        %264 = vst.msk [vmem:[#allocation2 + $0x150] sm:$0xf] %vm249, 0.0
        %265 = vst.msk [vmem:[#allocation2 + $0x168] sm:$0xf] %vm249, 0.0
        %266 = vst.msk [vmem:[#allocation2 + $0x180] sm:$0xf] %vm249, 0.0
        %267 = vst.msk [vmem:[#allocation2 + $0x198] sm:$0xf] %vm249, 0.0
        %268 = vst.msk [vmem:[#allocation2 + $0x1b0] sm:$0xf] %vm249, 0.0
        %269 = vst.msk [vmem:[#allocation2 + $0x1c8] sm:$0xf] %vm249, 0.0
        %270 = vst.msk [vmem:[#allocation2 + $0x1e0] sm:$0xf] %vm249, 0.0
        %271 = vst.msk [vmem:[#allocation2 + $0x1f8] sm:$0xf] %vm249, 0.0
        %272 = vst.msk [vmem:[#allocation2 + $0x210] sm:$0xf] %vm249, 0.0
        %273 = vst.msk [vmem:[#allocation2 + $0x228] sm:$0xf] %vm249, 0.0
        %274 = vst.msk [vmem:[#allocation2 + $0x14] sm:$0xf] %vm249, 0.0
        %275 = vst.msk [vmem:[#allocation2 + $0x2c] sm:$0xf] %vm249, 0.0
        %276 = vst.msk [vmem:[#allocation2 + $0x44] sm:$0xf] %vm249, 0.0
        %277 = vst.msk [vmem:[#allocation2 + $0x5c] sm:$0xf] %vm249, 0.0
        %278 = vst.msk [vmem:[#allocation2 + $0x74] sm:$0xf] %vm249, 0.0
        %279 = vst.msk [vmem:[#allocation2 + $0x8c] sm:$0xf] %vm249, 0.0
        %280 = vst.msk [vmem:[#allocation2 + $0xa4] sm:$0xf] %vm249, 0.0
        %281 = vst.msk [vmem:[#allocation2 + $0xbc] sm:$0xf] %vm249, 0.0
        %282 = vst.msk [vmem:[#allocation2 + $0xd4] sm:$0xf] %vm249, 0.0
        %283 = vst.msk [vmem:[#allocation2 + $0xec] sm:$0xf] %vm249, 0.0
        %284 = vst.msk [vmem:[#allocation2 + $0x104] sm:$0xf] %vm249, 0.0
        %285 = vst.msk [vmem:[#allocation2 + $0x11c] sm:$0xf] %vm249, 0.0
        %286 = vst.msk [vmem:[#allocation2 + $0x134] sm:$0xf] %vm249, 0.0
        %287 = vst.msk [vmem:[#allocation2 + $0x14c] sm:$0xf] %vm249, 0.0
        %288 = vst.msk [vmem:[#allocation2 + $0x164] sm:$0xf] %vm249, 0.0
        %289 = vst.msk [vmem:[#allocation2 + $0x17c] sm:$0xf] %vm249, 0.0
        %290 = vst.msk [vmem:[#allocation2 + $0x194] sm:$0xf] %vm249, 0.0
        %291 = vst.msk [vmem:[#allocation2 + $0x1ac] sm:$0xf] %vm249, 0.0
        %292 = vst.msk [vmem:[#allocation2 + $0x1c4] sm:$0xf] %vm249, 0.0
        %293 = vst.msk [vmem:[#allocation2 + $0x1dc] sm:$0xf] %vm249, 0.0
        %294 = vst.msk [vmem:[#allocation2 + $0x1f4] sm:$0xf] %vm249, 0.0
        %295 = vst.msk [vmem:[#allocation2 + $0x20c] sm:$0xf] %vm249, 0.0
        %296 = vst.msk [vmem:[#allocation2 + $0x224] sm:$0xf] %vm249, 0.0
        %297 = vst.msk [vmem:[#allocation2 + $0x23c] sm:$0xf] %vm249, 0.0
        %v298 = vld [vmem:[%s222] sm:$0xff]
        %v299 = vld [vmem:[%s222 + $0x8] sm:$0xff]
        %v300 = vld [vmem:[%s222 + $0x10] sm:$0xff]
        %v301 = vld [vmem:[%s222 + $0x18] sm:$0xff]
        %v302 = vld [vmem:[%s222 + $0x20] sm:$0xff]
        %v303 = vld [vmem:[%s222 + $0x28] sm:$0xff]
        %v304 = vld [vmem:[%s222 + $0x30] sm:$0xff]
        %v305 = vld [vmem:[%s222 + $0x38] sm:$0xff]
        %v306 = vld [vmem:[%s222 + $0x40] sm:$0xff]
        %v307 = vld [vmem:[%s222 + $0x48] sm:$0xff]
        %v308 = vld [vmem:[%s222 + $0x50] sm:$0xff]
        %v309 = vld [vmem:[%s222 + $0x58] sm:$0xff]
        %v310 = vld [vmem:[%s222 + $0x60] sm:$0xff]
        %v311 = vld [vmem:[%s222 + $0x68] sm:$0xff]
        %v312 = vld [vmem:[%s222 + $0x70] sm:$0xff]
        %v313 = vld [vmem:[%s222 + $0x78] sm:$0xff]
        %v314 = vld [vmem:[%s222 + $0x80] sm:$0xff]
        %v315 = vld [vmem:[%s222 + $0x88] sm:$0xff]
        %v316 = vld [vmem:[%s222 + $0x90] sm:$0xff]
        %v317 = vld [vmem:[%s222 + $0x98] sm:$0xff]
        %v318 = vld [vmem:[%s222 + $0xa0] sm:$0xff]
        %v319 = vld [vmem:[%s222 + $0xa8] sm:$0xff]
        %v320 = vld [vmem:[%s222 + $0xb0] sm:$0xff]
        %v321 = vld [vmem:[%s222 + $0xb8] sm:$0xff]
        %v322 = vld [vmem:[%s222 + $0xc0] sm:$0xff]
        %v323 = vld [vmem:[%s222 + $0xc8] sm:$0xff]
        %v324 = vld [vmem:[%s222 + $0xd0] sm:$0xff]
        %v325 = vld [vmem:[%s222 + $0xd8] sm:$0xff]
        %v326 = vld [vmem:[%s222 + $0xe0] sm:$0xff]
        %v327 = vld [vmem:[%s222 + $0xe8] sm:$0xff]
        %v328 = vld [vmem:[%s222 + $0xf0] sm:$0xff]
        %v329 = vld [vmem:[%s222 + $0xf8] sm:$0xff]
        %s330 = scalar_lea.vmem [#allocation2], 96
        %331 = vst.msk [vmem:[%s330 + $0x4] sm:$0xff] %vm223, %v298
        %332 = vst.msk [vmem:[%s330 + $0xc] sm:$0xff] %vm223, %v299
        %333 = vst.msk [vmem:[%s330 + $0x1c] sm:$0xff] %vm223, %v300
        %334 = vst.msk [vmem:[%s330 + $0x24] sm:$0xff] %vm223, %v301
        %335 = vst.msk [vmem:[%s330 + $0x34] sm:$0xff] %vm223, %v302
        %336 = vst.msk [vmem:[%s330 + $0x3c] sm:$0xff] %vm223, %v303
        %337 = vst.msk [vmem:[%s330 + $0x4c] sm:$0xff] %vm223, %v304
        %338 = vst.msk [vmem:[%s330 + $0x54] sm:$0xff] %vm223, %v305
        %339 = vst.msk [vmem:[%s330 + $0x64] sm:$0xff] %vm223, %v306
        %340 = vst.msk [vmem:[%s330 + $0x6c] sm:$0xff] %vm223, %v307
        %341 = vst.msk [vmem:[%s330 + $0x7c] sm:$0xff] %vm223, %v308
        %342 = vst.msk [vmem:[%s330 + $0x84] sm:$0xff] %vm223, %v309
        %343 = vst.msk [vmem:[%s330 + $0x94] sm:$0xff] %vm223, %v310
        %344 = vst.msk [vmem:[%s330 + $0x9c] sm:$0xff] %vm223, %v311
        %345 = vst.msk [vmem:[%s330 + $0xac] sm:$0xff] %vm223, %v312
        %346 = vst.msk [vmem:[%s330 + $0xb4] sm:$0xff] %vm223, %v313
        %347 = vst.msk [vmem:[%s330 + $0xc4] sm:$0xff] %vm223, %v314
        %348 = vst.msk [vmem:[%s330 + $0xcc] sm:$0xff] %vm223, %v315
        %349 = vst.msk [vmem:[%s330 + $0xdc] sm:$0xff] %vm223, %v316
        %350 = vst.msk [vmem:[%s330 + $0xe4] sm:$0xff] %vm223, %v317
        %351 = vst.msk [vmem:[%s330 + $0xf4] sm:$0xff] %vm223, %v318
        %352 = vst.msk [vmem:[%s330 + $0xfc] sm:$0xff] %vm223, %v319
        %353 = vst.msk [vmem:[%s330 + $0x10c] sm:$0xff] %vm223, %v320
        %354 = vst.msk [vmem:[%s330 + $0x114] sm:$0xff] %vm223, %v321
        %355 = vst.msk [vmem:[%s330 + $0x124] sm:$0xff] %vm223, %v322
        %356 = vst.msk [vmem:[%s330 + $0x12c] sm:$0xff] %vm223, %v323
        %357 = vst.msk [vmem:[%s330 + $0x13c] sm:$0xff] %vm223, %v324
        %358 = vst.msk [vmem:[%s330 + $0x144] sm:$0xff] %vm223, %v325
        %359 = vst.msk [vmem:[%s330 + $0x154] sm:$0xff] %vm223, %v326
        %360 = vst.msk [vmem:[%s330 + $0x15c] sm:$0xff] %vm223, %v327
        %361 = vst.msk [vmem:[%s330 + $0x16c] sm:$0xff] %vm223, %v328
        %362 = vst.msk [vmem:[%s330 + $0x174] sm:$0xff] %vm223, %v329
        %s363 = scalar_lea.vmem [#allocation2], 72
        %v364 = vld [vmem:[%s363 + $0x3] sm:$0xff]
        %v365 = vld [vmem:[%s363 + $0xb] sm:$0xff]
        %v366 = vld [vmem:[%s363 + $0x1b] sm:$0xff]
        %v367 = vld [vmem:[%s363 + $0x23] sm:$0xff]
        %v368 = vld [vmem:[%s363 + $0x33] sm:$0xff]
        %v369 = vld [vmem:[%s363 + $0x3b] sm:$0xff]
        %v370 = vld [vmem:[%s363 + $0x4b] sm:$0xff]
        %v371 = vld [vmem:[%s363 + $0x53] sm:$0xff]
        %v372 = vld [vmem:[%s363 + $0x63] sm:$0xff]
        %v373 = vld [vmem:[%s363 + $0x6b] sm:$0xff]
        %v374 = vld [vmem:[%s363 + $0x7b] sm:$0xff]
        %v375 = vld [vmem:[%s363 + $0x83] sm:$0xff]
        %v376 = vld [vmem:[%s363 + $0x93] sm:$0xff]
        %v377 = vld [vmem:[%s363 + $0x9b] sm:$0xff]
        %v378 = vld [vmem:[%s363 + $0xab] sm:$0xff]
        %v379 = vld [vmem:[%s363 + $0xb3] sm:$0xff]
        %v380 = vld [vmem:[%s363 + $0xc3] sm:$0xff]
        %v381 = vld [vmem:[%s363 + $0xcb] sm:$0xff]
        %v382 = vld [vmem:[%s363 + $0xdb] sm:$0xff]
        %v383 = vld [vmem:[%s363 + $0xe3] sm:$0xff]
        %v384 = vld [vmem:[%s363 + $0xf3] sm:$0xff]
        %v385 = vld [vmem:[%s363 + $0xfb] sm:$0xff]
        %v386 = vld [vmem:[%s363 + $0x10b] sm:$0xff]
        %v387 = vld [vmem:[%s363 + $0x113] sm:$0xff]
        %v388 = vld [vmem:[%s363 + $0x123] sm:$0xff]
        %v389 = vld [vmem:[%s363 + $0x12b] sm:$0xff]
        %v390 = vld [vmem:[%s363 + $0x13b] sm:$0xff]
        %v391 = vld [vmem:[%s363 + $0x143] sm:$0xff]
        %v392 = vld [vmem:[%s363 + $0x153] sm:$0xff]
        %v393 = vld [vmem:[%s363 + $0x15b] sm:$0xff]
        %v394 = vld [vmem:[%s363 + $0x16b] sm:$0xff]
        %v395 = vld [vmem:[%s363 + $0x173] sm:$0xff]
        %v396 = vld [vmem:[%s363 + $0x4] sm:$0xff]
        %v397 = vld [vmem:[%s363 + $0xc] sm:$0xff]
        %v398 = vld [vmem:[%s363 + $0x1c] sm:$0xff]
        %v399 = vld [vmem:[%s363 + $0x24] sm:$0xff]
        %v400 = vld [vmem:[%s363 + $0x34] sm:$0xff]
        %v401 = vld [vmem:[%s363 + $0x3c] sm:$0xff]
        %v402 = vld [vmem:[%s363 + $0x4c] sm:$0xff]
        %v403 = vld [vmem:[%s363 + $0x54] sm:$0xff]
        %v404 = vld [vmem:[%s363 + $0x64] sm:$0xff]
        %v405 = vld [vmem:[%s363 + $0x6c] sm:$0xff]
        %v406 = vld [vmem:[%s363 + $0x7c] sm:$0xff]
        %v407 = vld [vmem:[%s363 + $0x84] sm:$0xff]
        %v408 = vld [vmem:[%s363 + $0x94] sm:$0xff]
        %v409 = vld [vmem:[%s363 + $0x9c] sm:$0xff]
        %v410 = vld [vmem:[%s363 + $0xac] sm:$0xff]
        %v411 = vld [vmem:[%s363 + $0xb4] sm:$0xff]
        %v412 = vld [vmem:[%s363 + $0xc4] sm:$0xff]
        %v413 = vld [vmem:[%s363 + $0xcc] sm:$0xff]
        %v414 = vld [vmem:[%s363 + $0xdc] sm:$0xff]
        %v415 = vld [vmem:[%s363 + $0xe4] sm:$0xff]
        %v416 = vld [vmem:[%s363 + $0xf4] sm:$0xff]
        %v417 = vld [vmem:[%s363 + $0xfc] sm:$0xff]
        %v418 = vld [vmem:[%s363 + $0x10c] sm:$0xff]
        %v419 = vld [vmem:[%s363 + $0x114] sm:$0xff]
        %v420 = vld [vmem:[%s363 + $0x124] sm:$0xff]
        %v421 = vld [vmem:[%s363 + $0x12c] sm:$0xff]
        %v422 = vld [vmem:[%s363 + $0x13c] sm:$0xff]
        %v423 = vld [vmem:[%s363 + $0x144] sm:$0xff]
        %v424 = vld [vmem:[%s363 + $0x154] sm:$0xff]
        %v425 = vld [vmem:[%s363 + $0x15c] sm:$0xff]
        %v426 = vld [vmem:[%s363 + $0x16c] sm:$0xff]
        %v427 = vld [vmem:[%s363 + $0x174] sm:$0xff]
        %v428 = vld [vmem:[%s363 + $0x5] sm:$0xff]
        %v429 = vld [vmem:[%s363 + $0xd] sm:$0xff]
        %v430 = vld [vmem:[%s363 + $0x1d] sm:$0xff]
        %v431 = vld [vmem:[%s363 + $0x25] sm:$0xff]
        %v432 = vld [vmem:[%s363 + $0x35] sm:$0xff]
        %v433 = vld [vmem:[%s363 + $0x3d] sm:$0xff]
        %v434 = vld [vmem:[%s363 + $0x4d] sm:$0xff]
        %v435 = vld [vmem:[%s363 + $0x55] sm:$0xff]
        %v436 = vld [vmem:[%s363 + $0x65] sm:$0xff]
        %v437 = vld [vmem:[%s363 + $0x6d] sm:$0xff]
        %v438 = vld [vmem:[%s363 + $0x7d] sm:$0xff]
        %v439 = vld [vmem:[%s363 + $0x85] sm:$0xff]
        %v440 = vld [vmem:[%s363 + $0x95] sm:$0xff]
        %v441 = vld [vmem:[%s363 + $0x9d] sm:$0xff]
        %v442 = vld [vmem:[%s363 + $0xad] sm:$0xff]
        %v443 = vld [vmem:[%s363 + $0xb5] sm:$0xff]
        %v444 = vld [vmem:[%s363 + $0xc5] sm:$0xff]
        %v445 = vld [vmem:[%s363 + $0xcd] sm:$0xff]
        %v446 = vld [vmem:[%s363 + $0xdd] sm:$0xff]
        %v447 = vld [vmem:[%s363 + $0xe5] sm:$0xff]
        %v448 = vld [vmem:[%s363 + $0xf5] sm:$0xff]
        %v449 = vld [vmem:[%s363 + $0xfd] sm:$0xff]
        %v450 = vld [vmem:[%s363 + $0x10d] sm:$0xff]
        %v451 = vld [vmem:[%s363 + $0x115] sm:$0xff]
        %v452 = vld [vmem:[%s363 + $0x125] sm:$0xff]
        %v453 = vld [vmem:[%s363 + $0x12d] sm:$0xff]
        %v454 = vld [vmem:[%s363 + $0x13d] sm:$0xff]
        %v455 = vld [vmem:[%s363 + $0x145] sm:$0xff]
        %v456 = vld [vmem:[%s363 + $0x155] sm:$0xff]
        %v457 = vld [vmem:[%s363 + $0x15d] sm:$0xff]
        %v458 = vld [vmem:[%s363 + $0x16d] sm:$0xff]
        %v459 = vld [vmem:[%s363 + $0x175] sm:$0xff]
        %v460 = vld [vmem:[%s330 + $0x3] sm:$0xff]
        %v461 = vld [vmem:[%s330 + $0xb] sm:$0xff]
        %v462 = vld [vmem:[%s330 + $0x1b] sm:$0xff]
        %v463 = vld [vmem:[%s330 + $0x23] sm:$0xff]
        %v464 = vld [vmem:[%s330 + $0x33] sm:$0xff]
        %v465 = vld [vmem:[%s330 + $0x3b] sm:$0xff]
        %v466 = vld [vmem:[%s330 + $0x4b] sm:$0xff]
        %v467 = vld [vmem:[%s330 + $0x53] sm:$0xff]
        %v468 = vld [vmem:[%s330 + $0x63] sm:$0xff]
        %v469 = vld [vmem:[%s330 + $0x6b] sm:$0xff]
        %v470 = vld [vmem:[%s330 + $0x7b] sm:$0xff]
        %v471 = vld [vmem:[%s330 + $0x83] sm:$0xff]
        %v472 = vld [vmem:[%s330 + $0x93] sm:$0xff]
        %v473 = vld [vmem:[%s330 + $0x9b] sm:$0xff]
        %v474 = vld [vmem:[%s330 + $0xab] sm:$0xff]
        %v475 = vld [vmem:[%s330 + $0xb3] sm:$0xff]
        %v476 = vld [vmem:[%s330 + $0xc3] sm:$0xff]
        %v477 = vld [vmem:[%s330 + $0xcb] sm:$0xff]
        %v478 = vld [vmem:[%s330 + $0xdb] sm:$0xff]
        %v479 = vld [vmem:[%s330 + $0xe3] sm:$0xff]
        %v480 = vld [vmem:[%s330 + $0xf3] sm:$0xff]
        %v481 = vld [vmem:[%s330 + $0xfb] sm:$0xff]
        %v482 = vld [vmem:[%s330 + $0x10b] sm:$0xff]
        %v483 = vld [vmem:[%s330 + $0x113] sm:$0xff]
        %v484 = vld [vmem:[%s330 + $0x123] sm:$0xff]
        %v485 = vld [vmem:[%s330 + $0x12b] sm:$0xff]
        %v486 = vld [vmem:[%s330 + $0x13b] sm:$0xff]
        %v487 = vld [vmem:[%s330 + $0x143] sm:$0xff]
        %v488 = vld [vmem:[%s330 + $0x153] sm:$0xff]
        %v489 = vld [vmem:[%s330 + $0x15b] sm:$0xff]
        %v490 = vld [vmem:[%s330 + $0x16b] sm:$0xff]
        %v491 = vld [vmem:[%s330 + $0x173] sm:$0xff]
        %v492 = vld [vmem:[%s330 + $0x4] sm:$0xff]
        %v493 = vld [vmem:[%s330 + $0xc] sm:$0xff]
        %v494 = vld [vmem:[%s330 + $0x1c] sm:$0xff]
        %v495 = vld [vmem:[%s330 + $0x24] sm:$0xff]
        %v496 = vld [vmem:[%s330 + $0x34] sm:$0xff]
        %v497 = vld [vmem:[%s330 + $0x3c] sm:$0xff]
        %v498 = vld [vmem:[%s330 + $0x4c] sm:$0xff]
        %v499 = vld [vmem:[%s330 + $0x54] sm:$0xff]
        %v500 = vld [vmem:[%s330 + $0x64] sm:$0xff]
        %v501 = vld [vmem:[%s330 + $0x6c] sm:$0xff]
        %v502 = vld [vmem:[%s330 + $0x7c] sm:$0xff]
        %v503 = vld [vmem:[%s330 + $0x84] sm:$0xff]
        %v504 = vld [vmem:[%s330 + $0x94] sm:$0xff]
        %v505 = vld [vmem:[%s330 + $0x9c] sm:$0xff]
        %v506 = vld [vmem:[%s330 + $0xac] sm:$0xff]
        %v507 = vld [vmem:[%s330 + $0xb4] sm:$0xff]
        %v508 = vld [vmem:[%s330 + $0xc4] sm:$0xff]
        %v509 = vld [vmem:[%s330 + $0xcc] sm:$0xff]
        %v510 = vld [vmem:[%s330 + $0xdc] sm:$0xff]
        %v511 = vld [vmem:[%s330 + $0xe4] sm:$0xff]
        %v512 = vld [vmem:[%s330 + $0xf4] sm:$0xff]
        %v513 = vld [vmem:[%s330 + $0xfc] sm:$0xff]
        %v514 = vld [vmem:[%s330 + $0x10c] sm:$0xff]
        %v515 = vld [vmem:[%s330 + $0x114] sm:$0xff]
        %v516 = vld [vmem:[%s330 + $0x124] sm:$0xff]
        %v517 = vld [vmem:[%s330 + $0x12c] sm:$0xff]
        %v518 = vld [vmem:[%s330 + $0x13c] sm:$0xff]
        %v519 = vld [vmem:[%s330 + $0x144] sm:$0xff]
        %v520 = vld [vmem:[%s330 + $0x154] sm:$0xff]
        %v521 = vld [vmem:[%s330 + $0x15c] sm:$0xff]
        %v522 = vld [vmem:[%s330 + $0x16c] sm:$0xff]
        %v523 = vld [vmem:[%s330 + $0x174] sm:$0xff]
        %v524 = vld [vmem:[%s330 + $0x5] sm:$0xff]
        %v525 = vld [vmem:[%s330 + $0xd] sm:$0xff]
        %v526 = vld [vmem:[%s330 + $0x1d] sm:$0xff]
        %v527 = vld [vmem:[%s330 + $0x25] sm:$0xff]
        %v528 = vld [vmem:[%s330 + $0x35] sm:$0xff]
        %v529 = vld [vmem:[%s330 + $0x3d] sm:$0xff]
        %v530 = vld [vmem:[%s330 + $0x4d] sm:$0xff]
        %v531 = vld [vmem:[%s330 + $0x55] sm:$0xff]
        %v532 = vld [vmem:[%s330 + $0x65] sm:$0xff]
        %v533 = vld [vmem:[%s330 + $0x6d] sm:$0xff]
        %v534 = vld [vmem:[%s330 + $0x7d] sm:$0xff]
        %v535 = vld [vmem:[%s330 + $0x85] sm:$0xff]
        %v536 = vld [vmem:[%s330 + $0x95] sm:$0xff]
        %v537 = vld [vmem:[%s330 + $0x9d] sm:$0xff]
        %v538 = vld [vmem:[%s330 + $0xad] sm:$0xff]
        %v539 = vld [vmem:[%s330 + $0xb5] sm:$0xff]
        %v540 = vld [vmem:[%s330 + $0xc5] sm:$0xff]
        %v541 = vld [vmem:[%s330 + $0xcd] sm:$0xff]
        %v542 = vld [vmem:[%s330 + $0xdd] sm:$0xff]
        %v543 = vld [vmem:[%s330 + $0xe5] sm:$0xff]
        %v544 = vld [vmem:[%s330 + $0xf5] sm:$0xff]
        %v545 = vld [vmem:[%s330 + $0xfd] sm:$0xff]
        %v546 = vld [vmem:[%s330 + $0x10d] sm:$0xff]
        %v547 = vld [vmem:[%s330 + $0x115] sm:$0xff]
        %v548 = vld [vmem:[%s330 + $0x125] sm:$0xff]
        %v549 = vld [vmem:[%s330 + $0x12d] sm:$0xff]
        %v550 = vld [vmem:[%s330 + $0x13d] sm:$0xff]
        %v551 = vld [vmem:[%s330 + $0x145] sm:$0xff]
        %v552 = vld [vmem:[%s330 + $0x155] sm:$0xff]
        %v553 = vld [vmem:[%s330 + $0x15d] sm:$0xff]
        %v554 = vld [vmem:[%s330 + $0x16d] sm:$0xff]
        %v555 = vld [vmem:[%s330 + $0x175] sm:$0xff]
        %s556 = scalar_lea.vmem [#allocation2], 120
        %v557 = vld [vmem:[%s556 + $0x3] sm:$0xff]
        %v558 = vld [vmem:[%s556 + $0xb] sm:$0xff]
        %v559 = vld [vmem:[%s556 + $0x1b] sm:$0xff]
        %v560 = vld [vmem:[%s556 + $0x23] sm:$0xff]
        %v561 = vld [vmem:[%s556 + $0x33] sm:$0xff]
        %v562 = vld [vmem:[%s556 + $0x3b] sm:$0xff]
        %v563 = vld [vmem:[%s556 + $0x4b] sm:$0xff]
        %v564 = vld [vmem:[%s556 + $0x53] sm:$0xff]
        %v565 = vld [vmem:[%s556 + $0x63] sm:$0xff]
        %v566 = vld [vmem:[%s556 + $0x6b] sm:$0xff]
        %v567 = vld [vmem:[%s556 + $0x7b] sm:$0xff]
        %v568 = vld [vmem:[%s556 + $0x83] sm:$0xff]
        %v569 = vld [vmem:[%s556 + $0x93] sm:$0xff]
        %v570 = vld [vmem:[%s556 + $0x9b] sm:$0xff]
        %v571 = vld [vmem:[%s556 + $0xab] sm:$0xff]
        %v572 = vld [vmem:[%s556 + $0xb3] sm:$0xff]
        %v573 = vld [vmem:[%s556 + $0xc3] sm:$0xff]
        %v574 = vld [vmem:[%s556 + $0xcb] sm:$0xff]
        %v575 = vld [vmem:[%s556 + $0xdb] sm:$0xff]
        %v576 = vld [vmem:[%s556 + $0xe3] sm:$0xff]
        %v577 = vld [vmem:[%s556 + $0xf3] sm:$0xff]
        %v578 = vld [vmem:[%s556 + $0xfb] sm:$0xff]
        %v579 = vld [vmem:[%s556 + $0x10b] sm:$0xff]
        %v580 = vld [vmem:[%s556 + $0x113] sm:$0xff]
        %v581 = vld [vmem:[%s556 + $0x123] sm:$0xff]
        %v582 = vld [vmem:[%s556 + $0x12b] sm:$0xff]
        %v583 = vld [vmem:[%s556 + $0x13b] sm:$0xff]
        %v584 = vld [vmem:[%s556 + $0x143] sm:$0xff]
        %v585 = vld [vmem:[%s556 + $0x153] sm:$0xff]
        %v586 = vld [vmem:[%s556 + $0x15b] sm:$0xff]
        %v587 = vld [vmem:[%s556 + $0x16b] sm:$0xff]
        %v588 = vld [vmem:[%s556 + $0x173] sm:$0xff]
        %v589 = vld [vmem:[%s556 + $0x4] sm:$0xff]
        %v590 = vld [vmem:[%s556 + $0xc] sm:$0xff]
        %v591 = vld [vmem:[%s556 + $0x1c] sm:$0xff]
        %v592 = vld [vmem:[%s556 + $0x24] sm:$0xff]
        %v593 = vld [vmem:[%s556 + $0x34] sm:$0xff]
        %v594 = vld [vmem:[%s556 + $0x3c] sm:$0xff]
        %v595 = vld [vmem:[%s556 + $0x4c] sm:$0xff]
        %v596 = vld [vmem:[%s556 + $0x54] sm:$0xff]
        %v597 = vld [vmem:[%s556 + $0x64] sm:$0xff]
        %v598 = vld [vmem:[%s556 + $0x6c] sm:$0xff]
        %v599 = vld [vmem:[%s556 + $0x7c] sm:$0xff]
        %v600 = vld [vmem:[%s556 + $0x84] sm:$0xff]
        %v601 = vld [vmem:[%s556 + $0x94] sm:$0xff]
        %v602 = vld [vmem:[%s556 + $0x9c] sm:$0xff]
        %v603 = vld [vmem:[%s556 + $0xac] sm:$0xff]
        %v604 = vld [vmem:[%s556 + $0xb4] sm:$0xff]
        %v605 = vld [vmem:[%s556 + $0xc4] sm:$0xff]
        %v606 = vld [vmem:[%s556 + $0xcc] sm:$0xff]
        %v607 = vld [vmem:[%s556 + $0xdc] sm:$0xff]
        %v608 = vld [vmem:[%s556 + $0xe4] sm:$0xff]
        %v609 = vld [vmem:[%s556 + $0xf4] sm:$0xff]
        %v610 = vld [vmem:[%s556 + $0xfc] sm:$0xff]
        %v611 = vld [vmem:[%s556 + $0x10c] sm:$0xff]
        %v612 = vld [vmem:[%s556 + $0x114] sm:$0xff]
        %v613 = vld [vmem:[%s556 + $0x124] sm:$0xff]
        %v614 = vld [vmem:[%s556 + $0x12c] sm:$0xff]
        %v615 = vld [vmem:[%s556 + $0x13c] sm:$0xff]
        %v616 = vld [vmem:[%s556 + $0x144] sm:$0xff]
        %v617 = vld [vmem:[%s556 + $0x154] sm:$0xff]
        %v618 = vld [vmem:[%s556 + $0x15c] sm:$0xff]
        %v619 = vld [vmem:[%s556 + $0x16c] sm:$0xff]
        %v620 = vld [vmem:[%s556 + $0x174] sm:$0xff]
        %v621 = vld [vmem:[%s556 + $0x5] sm:$0xff]
        %v622 = vld [vmem:[%s556 + $0xd] sm:$0xff]
        %v623 = vld [vmem:[%s556 + $0x1d] sm:$0xff]
        %v624 = vld [vmem:[%s556 + $0x25] sm:$0xff]
        %v625 = vld [vmem:[%s556 + $0x35] sm:$0xff]
        %v626 = vld [vmem:[%s556 + $0x3d] sm:$0xff]
        %v627 = vld [vmem:[%s556 + $0x4d] sm:$0xff]
        %v628 = vld [vmem:[%s556 + $0x55] sm:$0xff]
        %v629 = vld [vmem:[%s556 + $0x65] sm:$0xff]
        %v630 = vld [vmem:[%s556 + $0x6d] sm:$0xff]
        %v631 = vld [vmem:[%s556 + $0x7d] sm:$0xff]
        %v632 = vld [vmem:[%s556 + $0x85] sm:$0xff]
        %v633 = vld [vmem:[%s556 + $0x95] sm:$0xff]
        %v634 = vld [vmem:[%s556 + $0x9d] sm:$0xff]
        %v635 = vld [vmem:[%s556 + $0xad] sm:$0xff]
        %v636 = vld [vmem:[%s556 + $0xb5] sm:$0xff]
        %v637 = vld [vmem:[%s556 + $0xc5] sm:$0xff]
        %v638 = vld [vmem:[%s556 + $0xcd] sm:$0xff]
        %v639 = vld [vmem:[%s556 + $0xdd] sm:$0xff]
        %v640 = vld [vmem:[%s556 + $0xe5] sm:$0xff]
        %v641 = vld [vmem:[%s556 + $0xf5] sm:$0xff]
        %v642 = vld [vmem:[%s556 + $0xfd] sm:$0xff]
        %v643 = vld [vmem:[%s556 + $0x10d] sm:$0xff]
        %v644 = vld [vmem:[%s556 + $0x115] sm:$0xff]
        %v645 = vld [vmem:[%s556 + $0x125] sm:$0xff]
        %v646 = vld [vmem:[%s556 + $0x12d] sm:$0xff]
        %v647 = vld [vmem:[%s556 + $0x13d] sm:$0xff]
        %v648 = vld [vmem:[%s556 + $0x145] sm:$0xff]
        %v649 = vld [vmem:[%s556 + $0x155] sm:$0xff]
        %v650 = vld [vmem:[%s556 + $0x15d] sm:$0xff]
        %v651 = vld [vmem:[%s556 + $0x16d] sm:$0xff]
        %v652 = vld [vmem:[%s556 + $0x175] sm:$0xff]
        %s653 = scalar_lea.vmem [#allocation2], 48
        %v654 = vld [vmem:[%s653 + $0x2] sm:$0xff]
        %v655 = vld [vmem:[%s653 + $0xa] sm:$0xff]
        %v656 = vld [vmem:[%s653 + $0x1a] sm:$0xff]
        %v657 = vld [vmem:[%s653 + $0x22] sm:$0xff]
        %v658 = vld [vmem:[%s653 + $0x32] sm:$0xff]
        %v659 = vld [vmem:[%s653 + $0x3a] sm:$0xff]
        %v660 = vld [vmem:[%s653 + $0x4a] sm:$0xff]
        %v661 = vld [vmem:[%s653 + $0x52] sm:$0xff]
        %v662 = vld [vmem:[%s653 + $0x62] sm:$0xff]
        %v663 = vld [vmem:[%s653 + $0x6a] sm:$0xff]
        %v664 = vld [vmem:[%s653 + $0x7a] sm:$0xff]
        %v665 = vld [vmem:[%s653 + $0x82] sm:$0xff]
        %v666 = vld [vmem:[%s653 + $0x92] sm:$0xff]
        %v667 = vld [vmem:[%s653 + $0x9a] sm:$0xff]
        %v668 = vld [vmem:[%s653 + $0xaa] sm:$0xff]
        %v669 = vld [vmem:[%s653 + $0xb2] sm:$0xff]
        %v670 = vld [vmem:[%s653 + $0xc2] sm:$0xff]
        %v671 = vld [vmem:[%s653 + $0xca] sm:$0xff]
        %v672 = vld [vmem:[%s653 + $0xda] sm:$0xff]
        %v673 = vld [vmem:[%s653 + $0xe2] sm:$0xff]
        %v674 = vld [vmem:[%s653 + $0xf2] sm:$0xff]
        %v675 = vld [vmem:[%s653 + $0xfa] sm:$0xff]
        %v676 = vld [vmem:[%s653 + $0x10a] sm:$0xff]
        %v677 = vld [vmem:[%s653 + $0x112] sm:$0xff]
        %v678 = vld [vmem:[%s653 + $0x122] sm:$0xff]
        %v679 = vld [vmem:[%s653 + $0x12a] sm:$0xff]
        %v680 = vld [vmem:[%s653 + $0x13a] sm:$0xff]
        %v681 = vld [vmem:[%s653 + $0x142] sm:$0xff]
        %v682 = vld [vmem:[%s653 + $0x152] sm:$0xff]
        %v683 = vld [vmem:[%s653 + $0x15a] sm:$0xff]
        %v684 = vld [vmem:[%s653 + $0x16a] sm:$0xff]
        %v685 = vld [vmem:[%s653 + $0x172] sm:$0xff]
        %v686 = vld [vmem:[%s653 + $0x4] sm:$0xff]
        %v687 = vld [vmem:[%s653 + $0xc] sm:$0xff]
        %v688 = vld [vmem:[%s653 + $0x1c] sm:$0xff]
        %v689 = vld [vmem:[%s653 + $0x24] sm:$0xff]
        %v690 = vld [vmem:[%s653 + $0x34] sm:$0xff]
        %v691 = vld [vmem:[%s653 + $0x3c] sm:$0xff]
        %v692 = vld [vmem:[%s653 + $0x4c] sm:$0xff]
        %v693 = vld [vmem:[%s653 + $0x54] sm:$0xff]
        %v694 = vld [vmem:[%s653 + $0x64] sm:$0xff]
        %v695 = vld [vmem:[%s653 + $0x6c] sm:$0xff]
        %v696 = vld [vmem:[%s653 + $0x7c] sm:$0xff]
        %v697 = vld [vmem:[%s653 + $0x84] sm:$0xff]
        %v698 = vld [vmem:[%s653 + $0x94] sm:$0xff]
        %v699 = vld [vmem:[%s653 + $0x9c] sm:$0xff]
        %v700 = vld [vmem:[%s653 + $0xac] sm:$0xff]
        %v701 = vld [vmem:[%s653 + $0xb4] sm:$0xff]
        %v702 = vld [vmem:[%s653 + $0xc4] sm:$0xff]
        %v703 = vld [vmem:[%s653 + $0xcc] sm:$0xff]
        %v704 = vld [vmem:[%s653 + $0xdc] sm:$0xff]
        %v705 = vld [vmem:[%s653 + $0xe4] sm:$0xff]
        %v706 = vld [vmem:[%s653 + $0xf4] sm:$0xff]
        %v707 = vld [vmem:[%s653 + $0xfc] sm:$0xff]
        %v708 = vld [vmem:[%s653 + $0x10c] sm:$0xff]
        %v709 = vld [vmem:[%s653 + $0x114] sm:$0xff]
        %v710 = vld [vmem:[%s653 + $0x124] sm:$0xff]
        %v711 = vld [vmem:[%s653 + $0x12c] sm:$0xff]
        %v712 = vld [vmem:[%s653 + $0x13c] sm:$0xff]
        %v713 = vld [vmem:[%s653 + $0x144] sm:$0xff]
        %v714 = vld [vmem:[%s653 + $0x154] sm:$0xff]
        %v715 = vld [vmem:[%s653 + $0x15c] sm:$0xff]
        %v716 = vld [vmem:[%s653 + $0x16c] sm:$0xff]
        %v717 = vld [vmem:[%s653 + $0x174] sm:$0xff]
        %v718 = vld [vmem:[%s653 + $0x6] sm:$0xff]
        %v719 = vld [vmem:[%s653 + $0xe] sm:$0xff]
        %v720 = vld [vmem:[%s653 + $0x1e] sm:$0xff]
        %v721 = vld [vmem:[%s653 + $0x26] sm:$0xff]
        %v722 = vld [vmem:[%s653 + $0x36] sm:$0xff]
        %v723 = vld [vmem:[%s653 + $0x3e] sm:$0xff]
        %v724 = vld [vmem:[%s653 + $0x4e] sm:$0xff]
        %v725 = vld [vmem:[%s653 + $0x56] sm:$0xff]
        %v726 = vld [vmem:[%s653 + $0x66] sm:$0xff]
        %v727 = vld [vmem:[%s653 + $0x6e] sm:$0xff]
        %v728 = vld [vmem:[%s653 + $0x7e] sm:$0xff]
        %v729 = vld [vmem:[%s653 + $0x86] sm:$0xff]
        %v730 = vld [vmem:[%s653 + $0x96] sm:$0xff]
        %v731 = vld [vmem:[%s653 + $0x9e] sm:$0xff]
        %v732 = vld [vmem:[%s653 + $0xae] sm:$0xff]
        %v733 = vld [vmem:[%s653 + $0xb6] sm:$0xff]
        %v734 = vld [vmem:[%s653 + $0xc6] sm:$0xff]
        %v735 = vld [vmem:[%s653 + $0xce] sm:$0xff]
        %v736 = vld [vmem:[%s653 + $0xde] sm:$0xff]
        %v737 = vld [vmem:[%s653 + $0xe6] sm:$0xff]
        %v738 = vld [vmem:[%s653 + $0xf6] sm:$0xff]
        %v739 = vld [vmem:[%s653 + $0xfe] sm:$0xff]
        %v740 = vld [vmem:[%s653 + $0x10e] sm:$0xff]
        %v741 = vld [vmem:[%s653 + $0x116] sm:$0xff]
        %v742 = vld [vmem:[%s653 + $0x126] sm:$0xff]
        %v743 = vld [vmem:[%s653 + $0x12e] sm:$0xff]
        %v744 = vld [vmem:[%s653 + $0x13e] sm:$0xff]
        %v745 = vld [vmem:[%s653 + $0x146] sm:$0xff]
        %v746 = vld [vmem:[%s653 + $0x156] sm:$0xff]
        %v747 = vld [vmem:[%s653 + $0x15e] sm:$0xff]
        %v748 = vld [vmem:[%s653 + $0x16e] sm:$0xff]
        %v749 = vld [vmem:[%s653 + $0x176] sm:$0xff]
        %v750 = vld [vmem:[%s330 + $0x2] sm:$0xff]
        %v751 = vld [vmem:[%s330 + $0xa] sm:$0xff]
        %v752 = vld [vmem:[%s330 + $0x1a] sm:$0xff]
        %v753 = vld [vmem:[%s330 + $0x22] sm:$0xff]
        %v754 = vld [vmem:[%s330 + $0x32] sm:$0xff]
        %v755 = vld [vmem:[%s330 + $0x3a] sm:$0xff]
        %v756 = vld [vmem:[%s330 + $0x4a] sm:$0xff]
        %v757 = vld [vmem:[%s330 + $0x52] sm:$0xff]
        %v758 = vld [vmem:[%s330 + $0x62] sm:$0xff]
        %v759 = vld [vmem:[%s330 + $0x6a] sm:$0xff]
        %v760 = vld [vmem:[%s330 + $0x7a] sm:$0xff]
        %v761 = vld [vmem:[%s330 + $0x82] sm:$0xff]
        %v762 = vld [vmem:[%s330 + $0x92] sm:$0xff]
        %v763 = vld [vmem:[%s330 + $0x9a] sm:$0xff]
        %v764 = vld [vmem:[%s330 + $0xaa] sm:$0xff]
        %v765 = vld [vmem:[%s330 + $0xb2] sm:$0xff]
        %v766 = vld [vmem:[%s330 + $0xc2] sm:$0xff]
        %v767 = vld [vmem:[%s330 + $0xca] sm:$0xff]
        %v768 = vld [vmem:[%s330 + $0xda] sm:$0xff]
        %v769 = vld [vmem:[%s330 + $0xe2] sm:$0xff]
        %v770 = vld [vmem:[%s330 + $0xf2] sm:$0xff]
        %v771 = vld [vmem:[%s330 + $0xfa] sm:$0xff]
        %v772 = vld [vmem:[%s330 + $0x10a] sm:$0xff]
        %v773 = vld [vmem:[%s330 + $0x112] sm:$0xff]
        %v774 = vld [vmem:[%s330 + $0x122] sm:$0xff]
        %v775 = vld [vmem:[%s330 + $0x12a] sm:$0xff]
        %v776 = vld [vmem:[%s330 + $0x13a] sm:$0xff]
        %v777 = vld [vmem:[%s330 + $0x142] sm:$0xff]
        %v778 = vld [vmem:[%s330 + $0x152] sm:$0xff]
        %v779 = vld [vmem:[%s330 + $0x15a] sm:$0xff]
        %v780 = vld [vmem:[%s330 + $0x16a] sm:$0xff]
        %v781 = vld [vmem:[%s330 + $0x172] sm:$0xff]
        %v782 = vld [vmem:[%s330 + $0x6] sm:$0xff]
        %v783 = vld [vmem:[%s330 + $0xe] sm:$0xff]
        %v784 = vld [vmem:[%s330 + $0x1e] sm:$0xff]
        %v785 = vld [vmem:[%s330 + $0x26] sm:$0xff]
        %v786 = vld [vmem:[%s330 + $0x36] sm:$0xff]
        %v787 = vld [vmem:[%s330 + $0x3e] sm:$0xff]
        %v788 = vld [vmem:[%s330 + $0x4e] sm:$0xff]
        %v789 = vld [vmem:[%s330 + $0x56] sm:$0xff]
        %v790 = vld [vmem:[%s330 + $0x66] sm:$0xff]
        %v791 = vld [vmem:[%s330 + $0x6e] sm:$0xff]
        %v792 = vld [vmem:[%s330 + $0x7e] sm:$0xff]
        %v793 = vld [vmem:[%s330 + $0x86] sm:$0xff]
        %v794 = vld [vmem:[%s330 + $0x96] sm:$0xff]
        %v795 = vld [vmem:[%s330 + $0x9e] sm:$0xff]
        %v796 = vld [vmem:[%s330 + $0xae] sm:$0xff]
        %v797 = vld [vmem:[%s330 + $0xb6] sm:$0xff]
        %v798 = vld [vmem:[%s330 + $0xc6] sm:$0xff]
        %v799 = vld [vmem:[%s330 + $0xce] sm:$0xff]
        %v800 = vld [vmem:[%s330 + $0xde] sm:$0xff]
        %v801 = vld [vmem:[%s330 + $0xe6] sm:$0xff]
        %v802 = vld [vmem:[%s330 + $0xf6] sm:$0xff]
        %v803 = vld [vmem:[%s330 + $0xfe] sm:$0xff]
        %v804 = vld [vmem:[%s330 + $0x10e] sm:$0xff]
        %v805 = vld [vmem:[%s330 + $0x116] sm:$0xff]
        %v806 = vld [vmem:[%s330 + $0x126] sm:$0xff]
        %v807 = vld [vmem:[%s330 + $0x12e] sm:$0xff]
        %v808 = vld [vmem:[%s330 + $0x13e] sm:$0xff]
        %v809 = vld [vmem:[%s330 + $0x146] sm:$0xff]
        %v810 = vld [vmem:[%s330 + $0x156] sm:$0xff]
        %v811 = vld [vmem:[%s330 + $0x15e] sm:$0xff]
        %v812 = vld [vmem:[%s330 + $0x16e] sm:$0xff]
        %v813 = vld [vmem:[%s330 + $0x176] sm:$0xff]
        %s814 = scalar_lea.vmem [#allocation2], 144
        %v815 = vld [vmem:[%s814 + $0x2] sm:$0xff]
        %v816 = vld [vmem:[%s814 + $0xa] sm:$0xff]
        %v817 = vld [vmem:[%s814 + $0x1a] sm:$0xff]
        %v818 = vld [vmem:[%s814 + $0x22] sm:$0xff]
        %v819 = vld [vmem:[%s814 + $0x32] sm:$0xff]
        %v820 = vld [vmem:[%s814 + $0x3a] sm:$0xff]
        %v821 = vld [vmem:[%s814 + $0x4a] sm:$0xff]
        %v822 = vld [vmem:[%s814 + $0x52] sm:$0xff]
        %v823 = vld [vmem:[%s814 + $0x62] sm:$0xff]
        %v824 = vld [vmem:[%s814 + $0x6a] sm:$0xff]
        %v825 = vld [vmem:[%s814 + $0x7a] sm:$0xff]
        %v826 = vld [vmem:[%s814 + $0x82] sm:$0xff]
        %v827 = vld [vmem:[%s814 + $0x92] sm:$0xff]
        %v828 = vld [vmem:[%s814 + $0x9a] sm:$0xff]
        %v829 = vld [vmem:[%s814 + $0xaa] sm:$0xff]
        %v830 = vld [vmem:[%s814 + $0xb2] sm:$0xff]
        %v831 = vld [vmem:[%s814 + $0xc2] sm:$0xff]
        %v832 = vld [vmem:[%s814 + $0xca] sm:$0xff]
        %v833 = vld [vmem:[%s814 + $0xda] sm:$0xff]
        %v834 = vld [vmem:[%s814 + $0xe2] sm:$0xff]
        %v835 = vld [vmem:[%s814 + $0xf2] sm:$0xff]
        %v836 = vld [vmem:[%s814 + $0xfa] sm:$0xff]
        %v837 = vld [vmem:[%s814 + $0x10a] sm:$0xff]
        %v838 = vld [vmem:[%s814 + $0x112] sm:$0xff]
        %v839 = vld [vmem:[%s814 + $0x122] sm:$0xff]
        %v840 = vld [vmem:[%s814 + $0x12a] sm:$0xff]
        %v841 = vld [vmem:[%s814 + $0x13a] sm:$0xff]
        %v842 = vld [vmem:[%s814 + $0x142] sm:$0xff]
        %v843 = vld [vmem:[%s814 + $0x152] sm:$0xff]
        %v844 = vld [vmem:[%s814 + $0x15a] sm:$0xff]
        %v845 = vld [vmem:[%s814 + $0x16a] sm:$0xff]
        %v846 = vld [vmem:[%s814 + $0x172] sm:$0xff]
        %v847 = vld [vmem:[%s814 + $0x4] sm:$0xff]
        %v848 = vld [vmem:[%s814 + $0xc] sm:$0xff]
        %v849 = vld [vmem:[%s814 + $0x1c] sm:$0xff]
        %v850 = vld [vmem:[%s814 + $0x24] sm:$0xff]
        %v851 = vld [vmem:[%s814 + $0x34] sm:$0xff]
        %v852 = vld [vmem:[%s814 + $0x3c] sm:$0xff]
        %v853 = vld [vmem:[%s814 + $0x4c] sm:$0xff]
        %v854 = vld [vmem:[%s814 + $0x54] sm:$0xff]
        %v855 = vld [vmem:[%s814 + $0x64] sm:$0xff]
        %v856 = vld [vmem:[%s814 + $0x6c] sm:$0xff]
        %v857 = vld [vmem:[%s814 + $0x7c] sm:$0xff]
        %v858 = vld [vmem:[%s814 + $0x84] sm:$0xff]
        %v859 = vld [vmem:[%s814 + $0x94] sm:$0xff]
        %v860 = vld [vmem:[%s814 + $0x9c] sm:$0xff]
        %v861 = vld [vmem:[%s814 + $0xac] sm:$0xff]
        %v862 = vld [vmem:[%s814 + $0xb4] sm:$0xff]
        %v863 = vld [vmem:[%s814 + $0xc4] sm:$0xff]
        %v864 = vld [vmem:[%s814 + $0xcc] sm:$0xff]
        %v865 = vld [vmem:[%s814 + $0xdc] sm:$0xff]
        %v866 = vld [vmem:[%s814 + $0xe4] sm:$0xff]
        %v867 = vld [vmem:[%s814 + $0xf4] sm:$0xff]
        %v868 = vld [vmem:[%s814 + $0xfc] sm:$0xff]
        %v869 = vld [vmem:[%s814 + $0x10c] sm:$0xff]
        %v870 = vld [vmem:[%s814 + $0x114] sm:$0xff]
        %v871 = vld [vmem:[%s814 + $0x124] sm:$0xff]
        %v872 = vld [vmem:[%s814 + $0x12c] sm:$0xff]
        %v873 = vld [vmem:[%s814 + $0x13c] sm:$0xff]
        %v874 = vld [vmem:[%s814 + $0x144] sm:$0xff]
        %v875 = vld [vmem:[%s814 + $0x154] sm:$0xff]
        %v876 = vld [vmem:[%s814 + $0x15c] sm:$0xff]
        %v877 = vld [vmem:[%s814 + $0x16c] sm:$0xff]
        %v878 = vld [vmem:[%s814 + $0x174] sm:$0xff]
        %v879 = vld [vmem:[%s814 + $0x6] sm:$0xff]
        %v880 = vld [vmem:[%s814 + $0xe] sm:$0xff]
        %v881 = vld [vmem:[%s814 + $0x1e] sm:$0xff]
        %v882 = vld [vmem:[%s814 + $0x26] sm:$0xff]
        %v883 = vld [vmem:[%s814 + $0x36] sm:$0xff]
        %v884 = vld [vmem:[%s814 + $0x3e] sm:$0xff]
        %v885 = vld [vmem:[%s814 + $0x4e] sm:$0xff]
        %v886 = vld [vmem:[%s814 + $0x56] sm:$0xff]
        %v887 = vld [vmem:[%s814 + $0x66] sm:$0xff]
        %v888 = vld [vmem:[%s814 + $0x6e] sm:$0xff]
        %v889 = vld [vmem:[%s814 + $0x7e] sm:$0xff]
        %v890 = vld [vmem:[%s814 + $0x86] sm:$0xff]
        %v891 = vld [vmem:[%s814 + $0x96] sm:$0xff]
        %v892 = vld [vmem:[%s814 + $0x9e] sm:$0xff]
        %v893 = vld [vmem:[%s814 + $0xae] sm:$0xff]
        %v894 = vld [vmem:[%s814 + $0xb6] sm:$0xff]
        %v895 = vld [vmem:[%s814 + $0xc6] sm:$0xff]
        %v896 = vld [vmem:[%s814 + $0xce] sm:$0xff]
        %v897 = vld [vmem:[%s814 + $0xde] sm:$0xff]
        %v898 = vld [vmem:[%s814 + $0xe6] sm:$0xff]
        %v899 = vld [vmem:[%s814 + $0xf6] sm:$0xff]
        %v900 = vld [vmem:[%s814 + $0xfe] sm:$0xff]
        %v901 = vld [vmem:[%s814 + $0x10e] sm:$0xff]
        %v902 = vld [vmem:[%s814 + $0x116] sm:$0xff]
        %v903 = vld [vmem:[%s814 + $0x126] sm:$0xff]
        %v904 = vld [vmem:[%s814 + $0x12e] sm:$0xff]
        %v905 = vld [vmem:[%s814 + $0x13e] sm:$0xff]
        %v906 = vld [vmem:[%s814 + $0x146] sm:$0xff]
        %v907 = vld [vmem:[%s814 + $0x156] sm:$0xff]
        %v908 = vld [vmem:[%s814 + $0x15e] sm:$0xff]
        %v909 = vld [vmem:[%s814 + $0x16e] sm:$0xff]
        %v910 = vld [vmem:[%s814 + $0x176] sm:$0xff]
        %s911 = scalar_lea.vmem [#allocation2], 24
        %v912 = vld [vmem:[%s911 + $0x1] sm:$0xff]
        %v913 = vld [vmem:[%s911 + $0x9] sm:$0xff]
        %v914 = vld [vmem:[%s911 + $0x19] sm:$0xff]
        %v915 = vld [vmem:[%s911 + $0x21] sm:$0xff]
        %v916 = vld [vmem:[%s911 + $0x31] sm:$0xff]
        %v917 = vld [vmem:[%s911 + $0x39] sm:$0xff]
        %v918 = vld [vmem:[%s911 + $0x49] sm:$0xff]
        %v919 = vld [vmem:[%s911 + $0x51] sm:$0xff]
        %v920 = vld [vmem:[%s911 + $0x61] sm:$0xff]
        %v921 = vld [vmem:[%s911 + $0x69] sm:$0xff]
        %v922 = vld [vmem:[%s911 + $0x79] sm:$0xff]
        %v923 = vld [vmem:[%s911 + $0x81] sm:$0xff]
        %v924 = vld [vmem:[%s911 + $0x91] sm:$0xff]
        %v925 = vld [vmem:[%s911 + $0x99] sm:$0xff]
        %v926 = vld [vmem:[%s911 + $0xa9] sm:$0xff]
        %v927 = vld [vmem:[%s911 + $0xb1] sm:$0xff]
        %v928 = vld [vmem:[%s911 + $0xc1] sm:$0xff]
        %v929 = vld [vmem:[%s911 + $0xc9] sm:$0xff]
        %v930 = vld [vmem:[%s911 + $0xd9] sm:$0xff]
        %v931 = vld [vmem:[%s911 + $0xe1] sm:$0xff]
        %v932 = vld [vmem:[%s911 + $0xf1] sm:$0xff]
        %v933 = vld [vmem:[%s911 + $0xf9] sm:$0xff]
        %v934 = vld [vmem:[%s911 + $0x109] sm:$0xff]
        %v935 = vld [vmem:[%s911 + $0x111] sm:$0xff]
        %v936 = vld [vmem:[%s911 + $0x121] sm:$0xff]
        %v937 = vld [vmem:[%s911 + $0x129] sm:$0xff]
        %v938 = vld [vmem:[%s911 + $0x139] sm:$0xff]
        %v939 = vld [vmem:[%s911 + $0x141] sm:$0xff]
        %v940 = vld [vmem:[%s911 + $0x151] sm:$0xff]
        %v941 = vld [vmem:[%s911 + $0x159] sm:$0xff]
        %v942 = vld [vmem:[%s911 + $0x169] sm:$0xff]
        %v943 = vld [vmem:[%s911 + $0x171] sm:$0xff]
        %v944 = vld [vmem:[%s911 + $0x4] sm:$0xff]
        %v945 = vld [vmem:[%s911 + $0xc] sm:$0xff]
        %v946 = vld [vmem:[%s911 + $0x1c] sm:$0xff]
        %v947 = vld [vmem:[%s911 + $0x24] sm:$0xff]
        %v948 = vld [vmem:[%s911 + $0x34] sm:$0xff]
        %v949 = vld [vmem:[%s911 + $0x3c] sm:$0xff]
        %v950 = vld [vmem:[%s911 + $0x4c] sm:$0xff]
        %v951 = vld [vmem:[%s911 + $0x54] sm:$0xff]
        %v952 = vld [vmem:[%s911 + $0x64] sm:$0xff]
        %v953 = vld [vmem:[%s911 + $0x6c] sm:$0xff]
        %v954 = vld [vmem:[%s911 + $0x7c] sm:$0xff]
        %v955 = vld [vmem:[%s911 + $0x84] sm:$0xff]
        %v956 = vld [vmem:[%s911 + $0x94] sm:$0xff]
        %v957 = vld [vmem:[%s911 + $0x9c] sm:$0xff]
        %v958 = vld [vmem:[%s911 + $0xac] sm:$0xff]
        %v959 = vld [vmem:[%s911 + $0xb4] sm:$0xff]
        %v960 = vld [vmem:[%s911 + $0xc4] sm:$0xff]
        %v961 = vld [vmem:[%s911 + $0xcc] sm:$0xff]
        %v962 = vld [vmem:[%s911 + $0xdc] sm:$0xff]
        %v963 = vld [vmem:[%s911 + $0xe4] sm:$0xff]
        %v964 = vld [vmem:[%s911 + $0xf4] sm:$0xff]
        %v965 = vld [vmem:[%s911 + $0xfc] sm:$0xff]
        %v966 = vld [vmem:[%s911 + $0x10c] sm:$0xff]
        %v967 = vld [vmem:[%s911 + $0x114] sm:$0xff]
        %v968 = vld [vmem:[%s911 + $0x124] sm:$0xff]
        %v969 = vld [vmem:[%s911 + $0x12c] sm:$0xff]
        %v970 = vld [vmem:[%s911 + $0x13c] sm:$0xff]
        %v971 = vld [vmem:[%s911 + $0x144] sm:$0xff]
        %v972 = vld [vmem:[%s911 + $0x154] sm:$0xff]
        %v973 = vld [vmem:[%s911 + $0x15c] sm:$0xff]
        %v974 = vld [vmem:[%s911 + $0x16c] sm:$0xff]
        %v975 = vld [vmem:[%s911 + $0x174] sm:$0xff]
        %v976 = vld [vmem:[%s911 + $0x7] sm:$0xff]
        %v977 = vld [vmem:[%s911 + $0xf] sm:$0xff]
        %v978 = vld [vmem:[%s911 + $0x1f] sm:$0xff]
        %v979 = vld [vmem:[%s911 + $0x27] sm:$0xff]
        %v980 = vld [vmem:[%s911 + $0x37] sm:$0xff]
        %v981 = vld [vmem:[%s911 + $0x3f] sm:$0xff]
        %v982 = vld [vmem:[%s911 + $0x4f] sm:$0xff]
        %v983 = vld [vmem:[%s911 + $0x57] sm:$0xff]
        %v984 = vld [vmem:[%s911 + $0x67] sm:$0xff]
        %v985 = vld [vmem:[%s911 + $0x6f] sm:$0xff]
        %v986 = vld [vmem:[%s911 + $0x7f] sm:$0xff]
        %v987 = vld [vmem:[%s911 + $0x87] sm:$0xff]
        %v988 = vld [vmem:[%s911 + $0x97] sm:$0xff]
        %v989 = vld [vmem:[%s911 + $0x9f] sm:$0xff]
        %v990 = vld [vmem:[%s911 + $0xaf] sm:$0xff]
        %v991 = vld [vmem:[%s911 + $0xb7] sm:$0xff]
        %v992 = vld [vmem:[%s911 + $0xc7] sm:$0xff]
        %v993 = vld [vmem:[%s911 + $0xcf] sm:$0xff]
        %v994 = vld [vmem:[%s911 + $0xdf] sm:$0xff]
        %v995 = vld [vmem:[%s911 + $0xe7] sm:$0xff]
        %v996 = vld [vmem:[%s911 + $0xf7] sm:$0xff]
        %v997 = vld [vmem:[%s911 + $0xff] sm:$0xff]
        %v998 = vld [vmem:[%s911 + $0x10f] sm:$0xff]
        %v999 = vld [vmem:[%s911 + $0x117] sm:$0xff]
        %v1000 = vld [vmem:[%s911 + $0x127] sm:$0xff]
        %v1001 = vld [vmem:[%s911 + $0x12f] sm:$0xff]
        %v1002 = vld [vmem:[%s911 + $0x13f] sm:$0xff]
        %v1003 = vld [vmem:[%s911 + $0x147] sm:$0xff]
        %v1004 = vld [vmem:[%s911 + $0x157] sm:$0xff]
        %v1005 = vld [vmem:[%s911 + $0x15f] sm:$0xff]
        %v1006 = vld [vmem:[%s911 + $0x16f] sm:$0xff]
        %v1007 = vld [vmem:[%s911 + $0x177] sm:$0xff]
        %v1008 = vld [vmem:[%s330 + $0x1] sm:$0xff]
        %v1009 = vld [vmem:[%s330 + $0x9] sm:$0xff]
        %v1010 = vld [vmem:[%s330 + $0x19] sm:$0xff]
        %v1011 = vld [vmem:[%s330 + $0x21] sm:$0xff]
        %v1012 = vld [vmem:[%s330 + $0x31] sm:$0xff]
        %v1013 = vld [vmem:[%s330 + $0x39] sm:$0xff]
        %v1014 = vld [vmem:[%s330 + $0x49] sm:$0xff]
        %v1015 = vld [vmem:[%s330 + $0x51] sm:$0xff]
        %v1016 = vld [vmem:[%s330 + $0x61] sm:$0xff]
        %v1017 = vld [vmem:[%s330 + $0x69] sm:$0xff]
        %v1018 = vld [vmem:[%s330 + $0x79] sm:$0xff]
        %v1019 = vld [vmem:[%s330 + $0x81] sm:$0xff]
        %v1020 = vld [vmem:[%s330 + $0x91] sm:$0xff]
        %v1021 = vld [vmem:[%s330 + $0x99] sm:$0xff]
        %v1022 = vld [vmem:[%s330 + $0xa9] sm:$0xff]
        %v1023 = vld [vmem:[%s330 + $0xb1] sm:$0xff]
        %v1024 = vld [vmem:[%s330 + $0xc1] sm:$0xff]
        %v1025 = vld [vmem:[%s330 + $0xc9] sm:$0xff]
        %v1026 = vld [vmem:[%s330 + $0xd9] sm:$0xff]
        %v1027 = vld [vmem:[%s330 + $0xe1] sm:$0xff]
        %v1028 = vld [vmem:[%s330 + $0xf1] sm:$0xff]
        %v1029 = vld [vmem:[%s330 + $0xf9] sm:$0xff]
        %v1030 = vld [vmem:[%s330 + $0x109] sm:$0xff]
        %v1031 = vld [vmem:[%s330 + $0x111] sm:$0xff]
        %v1032 = vld [vmem:[%s330 + $0x121] sm:$0xff]
        %v1033 = vld [vmem:[%s330 + $0x129] sm:$0xff]
        %v1034 = vld [vmem:[%s330 + $0x139] sm:$0xff]
        %v1035 = vld [vmem:[%s330 + $0x141] sm:$0xff]
        %v1036 = vld [vmem:[%s330 + $0x151] sm:$0xff]
        %v1037 = vld [vmem:[%s330 + $0x159] sm:$0xff]
        %v1038 = vld [vmem:[%s330 + $0x169] sm:$0xff]
        %v1039 = vld [vmem:[%s330 + $0x171] sm:$0xff]
        %v1040 = vld [vmem:[%s330 + $0x7] sm:$0xff]
        %v1041 = vld [vmem:[%s330 + $0xf] sm:$0xff]
        %v1042 = vld [vmem:[%s330 + $0x1f] sm:$0xff]
        %v1043 = vld [vmem:[%s330 + $0x27] sm:$0xff]
        %v1044 = vld [vmem:[%s330 + $0x37] sm:$0xff]
        %v1045 = vld [vmem:[%s330 + $0x3f] sm:$0xff]
        %v1046 = vld [vmem:[%s330 + $0x4f] sm:$0xff]
        %v1047 = vld [vmem:[%s330 + $0x57] sm:$0xff]
        %v1048 = vld [vmem:[%s330 + $0x67] sm:$0xff]
        %v1049 = vld [vmem:[%s330 + $0x6f] sm:$0xff]
        %v1050 = vld [vmem:[%s330 + $0x7f] sm:$0xff]
        %v1051 = vld [vmem:[%s330 + $0x87] sm:$0xff]
        %v1052 = vld [vmem:[%s330 + $0x97] sm:$0xff]
        %v1053 = vld [vmem:[%s330 + $0x9f] sm:$0xff]
        %v1054 = vld [vmem:[%s330 + $0xaf] sm:$0xff]
        %v1055 = vld [vmem:[%s330 + $0xb7] sm:$0xff]
        %v1056 = vld [vmem:[%s330 + $0xc7] sm:$0xff]
        %v1057 = vld [vmem:[%s330 + $0xcf] sm:$0xff]
        %v1058 = vld [vmem:[%s330 + $0xdf] sm:$0xff]
        %v1059 = vld [vmem:[%s330 + $0xe7] sm:$0xff]
        %v1060 = vld [vmem:[%s330 + $0xf7] sm:$0xff]
        %v1061 = vld [vmem:[%s330 + $0xff] sm:$0xff]
        %v1062 = vld [vmem:[%s330 + $0x10f] sm:$0xff]
        %v1063 = vld [vmem:[%s330 + $0x117] sm:$0xff]
        %v1064 = vld [vmem:[%s330 + $0x127] sm:$0xff]
        %v1065 = vld [vmem:[%s330 + $0x12f] sm:$0xff]
        %v1066 = vld [vmem:[%s330 + $0x13f] sm:$0xff]
        %v1067 = vld [vmem:[%s330 + $0x147] sm:$0xff]
        %v1068 = vld [vmem:[%s330 + $0x157] sm:$0xff]
        %v1069 = vld [vmem:[%s330 + $0x15f] sm:$0xff]
        %v1070 = vld [vmem:[%s330 + $0x16f] sm:$0xff]
        %v1071 = vld [vmem:[%s330 + $0x177] sm:$0xff]
        %s1072 = scalar_lea.vmem [#allocation2], 168
        %v1073 = vld [vmem:[%s1072 + $0x1] sm:$0xff]
        %v1074 = vld [vmem:[%s1072 + $0x9] sm:$0xff]
        %v1075 = vld [vmem:[%s1072 + $0x19] sm:$0xff]
        %v1076 = vld [vmem:[%s1072 + $0x21] sm:$0xff]
        %v1077 = vld [vmem:[%s1072 + $0x31] sm:$0xff]
        %v1078 = vld [vmem:[%s1072 + $0x39] sm:$0xff]
        %v1079 = vld [vmem:[%s1072 + $0x49] sm:$0xff]
        %v1080 = vld [vmem:[%s1072 + $0x51] sm:$0xff]
        %v1081 = vld [vmem:[%s1072 + $0x61] sm:$0xff]
        %v1082 = vld [vmem:[%s1072 + $0x69] sm:$0xff]
        %v1083 = vld [vmem:[%s1072 + $0x79] sm:$0xff]
        %v1084 = vld [vmem:[%s1072 + $0x81] sm:$0xff]
        %v1085 = vld [vmem:[%s1072 + $0x91] sm:$0xff]
        %v1086 = vld [vmem:[%s1072 + $0x99] sm:$0xff]
        %v1087 = vld [vmem:[%s1072 + $0xa9] sm:$0xff]
        %v1088 = vld [vmem:[%s1072 + $0xb1] sm:$0xff]
        %v1089 = vld [vmem:[%s1072 + $0xc1] sm:$0xff]
        %v1090 = vld [vmem:[%s1072 + $0xc9] sm:$0xff]
        %v1091 = vld [vmem:[%s1072 + $0xd9] sm:$0xff]
        %v1092 = vld [vmem:[%s1072 + $0xe1] sm:$0xff]
        %v1093 = vld [vmem:[%s1072 + $0xf1] sm:$0xff]
        %v1094 = vld [vmem:[%s1072 + $0xf9] sm:$0xff]
        %v1095 = vld [vmem:[%s1072 + $0x109] sm:$0xff]
        %v1096 = vld [vmem:[%s1072 + $0x111] sm:$0xff]
        %v1097 = vld [vmem:[%s1072 + $0x121] sm:$0xff]
        %v1098 = vld [vmem:[%s1072 + $0x129] sm:$0xff]
        %v1099 = vld [vmem:[%s1072 + $0x139] sm:$0xff]
        %v1100 = vld [vmem:[%s1072 + $0x141] sm:$0xff]
        %v1101 = vld [vmem:[%s1072 + $0x151] sm:$0xff]
        %v1102 = vld [vmem:[%s1072 + $0x159] sm:$0xff]
        %v1103 = vld [vmem:[%s1072 + $0x169] sm:$0xff]
        %v1104 = vld [vmem:[%s1072 + $0x171] sm:$0xff]
        %v1105 = vld [vmem:[%s1072 + $0x4] sm:$0xff]
        %v1106 = vld [vmem:[%s1072 + $0xc] sm:$0xff]
        %v1107 = vld [vmem:[%s1072 + $0x1c] sm:$0xff]
        %v1108 = vld [vmem:[%s1072 + $0x24] sm:$0xff]
        %v1109 = vld [vmem:[%s1072 + $0x34] sm:$0xff]
        %v1110 = vld [vmem:[%s1072 + $0x3c] sm:$0xff]
        %v1111 = vld [vmem:[%s1072 + $0x4c] sm:$0xff]
        %v1112 = vld [vmem:[%s1072 + $0x54] sm:$0xff]
        %v1113 = vld [vmem:[%s1072 + $0x64] sm:$0xff]
        %v1114 = vld [vmem:[%s1072 + $0x6c] sm:$0xff]
        %v1115 = vld [vmem:[%s1072 + $0x7c] sm:$0xff]
        %v1116 = vld [vmem:[%s1072 + $0x84] sm:$0xff]
        %v1117 = vld [vmem:[%s1072 + $0x94] sm:$0xff]
        %v1118 = vld [vmem:[%s1072 + $0x9c] sm:$0xff]
        %v1119 = vld [vmem:[%s1072 + $0xac] sm:$0xff]
        %v1120 = vld [vmem:[%s1072 + $0xb4] sm:$0xff]
        %v1121 = vld [vmem:[%s1072 + $0xc4] sm:$0xff]
        %v1122 = vld [vmem:[%s1072 + $0xcc] sm:$0xff]
        %v1123 = vld [vmem:[%s1072 + $0xdc] sm:$0xff]
        %v1124 = vld [vmem:[%s1072 + $0xe4] sm:$0xff]
        %v1125 = vld [vmem:[%s1072 + $0xf4] sm:$0xff]
        %v1126 = vld [vmem:[%s1072 + $0xfc] sm:$0xff]
        %v1127 = vld [vmem:[%s1072 + $0x10c] sm:$0xff]
        %v1128 = vld [vmem:[%s1072 + $0x114] sm:$0xff]
        %v1129 = vld [vmem:[%s1072 + $0x124] sm:$0xff]
        %v1130 = vld [vmem:[%s1072 + $0x12c] sm:$0xff]
        %v1131 = vld [vmem:[%s1072 + $0x13c] sm:$0xff]
        %v1132 = vld [vmem:[%s1072 + $0x144] sm:$0xff]
        %v1133 = vld [vmem:[%s1072 + $0x154] sm:$0xff]
        %v1134 = vld [vmem:[%s1072 + $0x15c] sm:$0xff]
        %v1135 = vld [vmem:[%s1072 + $0x16c] sm:$0xff]
        %v1136 = vld [vmem:[%s1072 + $0x174] sm:$0xff]
        %v1137 = vld [vmem:[%s1072 + $0x7] sm:$0xff]
        %v1138 = vld [vmem:[%s1072 + $0xf] sm:$0xff]
        %v1139 = vld [vmem:[%s1072 + $0x1f] sm:$0xff]
        %v1140 = vld [vmem:[%s1072 + $0x27] sm:$0xff]
        %v1141 = vld [vmem:[%s1072 + $0x37] sm:$0xff]
        %v1142 = vld [vmem:[%s1072 + $0x3f] sm:$0xff]
        %v1143 = vld [vmem:[%s1072 + $0x4f] sm:$0xff]
        %v1144 = vld [vmem:[%s1072 + $0x57] sm:$0xff]
        %v1145 = vld [vmem:[%s1072 + $0x67] sm:$0xff]
        %v1146 = vld [vmem:[%s1072 + $0x6f] sm:$0xff]
        %v1147 = vld [vmem:[%s1072 + $0x7f] sm:$0xff]
        %v1148 = vld [vmem:[%s1072 + $0x87] sm:$0xff]
        %v1149 = vld [vmem:[%s1072 + $0x97] sm:$0xff]
        %v1150 = vld [vmem:[%s1072 + $0x9f] sm:$0xff]
        %v1151 = vld [vmem:[%s1072 + $0xaf] sm:$0xff]
        %v1152 = vld [vmem:[%s1072 + $0xb7] sm:$0xff]
        %v1153 = vld [vmem:[%s1072 + $0xc7] sm:$0xff]
        %v1154 = vld [vmem:[%s1072 + $0xcf] sm:$0xff]
        %v1155 = vld [vmem:[%s1072 + $0xdf] sm:$0xff]
        %v1156 = vld [vmem:[%s1072 + $0xe7] sm:$0xff]
        %v1157 = vld [vmem:[%s1072 + $0xf7] sm:$0xff]
        %v1158 = vld [vmem:[%s1072 + $0xff] sm:$0xff]
        %v1159 = vld [vmem:[%s1072 + $0x10f] sm:$0xff]
        %v1160 = vld [vmem:[%s1072 + $0x117] sm:$0xff]
        %v1161 = vld [vmem:[%s1072 + $0x127] sm:$0xff]
        %v1162 = vld [vmem:[%s1072 + $0x12f] sm:$0xff]
        %v1163 = vld [vmem:[%s1072 + $0x13f] sm:$0xff]
        %v1164 = vld [vmem:[%s1072 + $0x147] sm:$0xff]
        %v1165 = vld [vmem:[%s1072 + $0x157] sm:$0xff]
        %v1166 = vld [vmem:[%s1072 + $0x15f] sm:$0xff]
        %v1167 = vld [vmem:[%s1072 + $0x16f] sm:$0xff]
        %v1168 = vld [vmem:[%s1072 + $0x177] sm:$0xff]
        %v1169 = vld [vmem:[#allocation2] sm:$0xff]
        %v1170 = vld [vmem:[#allocation2 + $0x8] sm:$0xff]
        %v1171 = vld [vmem:[#allocation2 + $0x18] sm:$0xff]
        %v1172 = vld [vmem:[#allocation2 + $0x20] sm:$0xff]
        %v1173 = vld [vmem:[#allocation2 + $0x30] sm:$0xff]
        %v1174 = vld [vmem:[#allocation2 + $0x38] sm:$0xff]
        %v1175 = vld [vmem:[#allocation2 + $0x48] sm:$0xff]
        %v1176 = vld [vmem:[#allocation2 + $0x50] sm:$0xff]
        %v1177 = vld [vmem:[#allocation2 + $0x60] sm:$0xff]
        %v1178 = vld [vmem:[#allocation2 + $0x68] sm:$0xff]
        %v1179 = vld [vmem:[#allocation2 + $0x78] sm:$0xff]
        %v1180 = vld [vmem:[#allocation2 + $0x80] sm:$0xff]
        %v1181 = vld [vmem:[#allocation2 + $0x90] sm:$0xff]
        %v1182 = vld [vmem:[#allocation2 + $0x98] sm:$0xff]
        %v1183 = vld [vmem:[#allocation2 + $0xa8] sm:$0xff]
        %v1184 = vld [vmem:[#allocation2 + $0xb0] sm:$0xff]
        %v1185 = vld [vmem:[#allocation2 + $0xc0] sm:$0xff]
        %v1186 = vld [vmem:[#allocation2 + $0xc8] sm:$0xff]
        %v1187 = vld [vmem:[#allocation2 + $0xd8] sm:$0xff]
        %v1188 = vld [vmem:[#allocation2 + $0xe0] sm:$0xff]
        %v1189 = vld [vmem:[#allocation2 + $0xf0] sm:$0xff]
        %v1190 = vld [vmem:[#allocation2 + $0xf8] sm:$0xff]
        %v1191 = vld [vmem:[#allocation2 + $0x108] sm:$0xff]
        %v1192 = vld [vmem:[#allocation2 + $0x110] sm:$0xff]
        %v1193 = vld [vmem:[#allocation2 + $0x120] sm:$0xff]
        %v1194 = vld [vmem:[#allocation2 + $0x128] sm:$0xff]
        %v1195 = vld [vmem:[#allocation2 + $0x138] sm:$0xff]
        %v1196 = vld [vmem:[#allocation2 + $0x140] sm:$0xff]
        %v1197 = vld [vmem:[#allocation2 + $0x150] sm:$0xff]
        %v1198 = vld [vmem:[#allocation2 + $0x158] sm:$0xff]
        %v1199 = vld [vmem:[#allocation2 + $0x168] sm:$0xff]
        %v1200 = vld [vmem:[#allocation2 + $0x170] sm:$0xff]
        %v1201 = vld [vmem:[#allocation2 + $0x4] sm:$0xff]
        %v1202 = vld [vmem:[#allocation2 + $0xc] sm:$0xff]
        %v1203 = vld [vmem:[#allocation2 + $0x1c] sm:$0xff]
        %v1204 = vld [vmem:[#allocation2 + $0x24] sm:$0xff]
        %v1205 = vld [vmem:[#allocation2 + $0x34] sm:$0xff]
        %v1206 = vld [vmem:[#allocation2 + $0x3c] sm:$0xff]
        %v1207 = vld [vmem:[#allocation2 + $0x4c] sm:$0xff]
        %v1208 = vld [vmem:[#allocation2 + $0x54] sm:$0xff]
        %v1209 = vld [vmem:[#allocation2 + $0x64] sm:$0xff]
        %v1210 = vld [vmem:[#allocation2 + $0x6c] sm:$0xff]
        %v1211 = vld [vmem:[#allocation2 + $0x7c] sm:$0xff]
        %v1212 = vld [vmem:[#allocation2 + $0x84] sm:$0xff]
        %v1213 = vld [vmem:[#allocation2 + $0x94] sm:$0xff]
        %v1214 = vld [vmem:[#allocation2 + $0x9c] sm:$0xff]
        %v1215 = vld [vmem:[#allocation2 + $0xac] sm:$0xff]
        %v1216 = vld [vmem:[#allocation2 + $0xb4] sm:$0xff]
        %v1217 = vld [vmem:[#allocation2 + $0xc4] sm:$0xff]
        %v1218 = vld [vmem:[#allocation2 + $0xcc] sm:$0xff]
        %v1219 = vld [vmem:[#allocation2 + $0xdc] sm:$0xff]
        %v1220 = vld [vmem:[#allocation2 + $0xe4] sm:$0xff]
        %v1221 = vld [vmem:[#allocation2 + $0xf4] sm:$0xff]
        %v1222 = vld [vmem:[#allocation2 + $0xfc] sm:$0xff]
        %v1223 = vld [vmem:[#allocation2 + $0x10c] sm:$0xff]
        %v1224 = vld [vmem:[#allocation2 + $0x114] sm:$0xff]
        %v1225 = vld [vmem:[#allocation2 + $0x124] sm:$0xff]
        %v1226 = vld [vmem:[#allocation2 + $0x12c] sm:$0xff]
        %v1227 = vld [vmem:[#allocation2 + $0x13c] sm:$0xff]
        %v1228 = vld [vmem:[#allocation2 + $0x144] sm:$0xff]
        %v1229 = vld [vmem:[#allocation2 + $0x154] sm:$0xff]
        %v1230 = vld [vmem:[#allocation2 + $0x15c] sm:$0xff]
        %v1231 = vld [vmem:[#allocation2 + $0x16c] sm:$0xff]
        %v1232 = vld [vmem:[#allocation2 + $0x174] sm:$0xff]
        %v1233 = vld [vmem:[#allocation2 + $0x10] sm:$0xff]
        %v1234 = vld [vmem:[#allocation2 + $0x28] sm:$0xff]
        %v1235 = vld [vmem:[#allocation2 + $0x40] sm:$0xff]
        %v1236 = vld [vmem:[#allocation2 + $0x58] sm:$0xff]
        %v1237 = vld [vmem:[#allocation2 + $0x70] sm:$0xff]
        %v1238 = vld [vmem:[#allocation2 + $0x88] sm:$0xff]
        %v1239 = vld [vmem:[#allocation2 + $0xa0] sm:$0xff]
        %v1240 = vld [vmem:[#allocation2 + $0xb8] sm:$0xff]
        %v1241 = vld [vmem:[#allocation2 + $0xd0] sm:$0xff]
        %v1242 = vld [vmem:[#allocation2 + $0xe8] sm:$0xff]
        %v1243 = vld [vmem:[#allocation2 + $0x100] sm:$0xff]
        %v1244 = vld [vmem:[#allocation2 + $0x118] sm:$0xff]
        %v1245 = vld [vmem:[#allocation2 + $0x130] sm:$0xff]
        %v1246 = vld [vmem:[#allocation2 + $0x148] sm:$0xff]
        %v1247 = vld [vmem:[#allocation2 + $0x160] sm:$0xff]
        %v1248 = vld [vmem:[#allocation2 + $0x178] sm:$0xff]
        %v1249 = vld [vmem:[%s330] sm:$0xff]
        %v1250 = vld [vmem:[%s330 + $0x8] sm:$0xff]
        %v1251 = vld [vmem:[%s330 + $0x18] sm:$0xff]
        %v1252 = vld [vmem:[%s330 + $0x20] sm:$0xff]
        %v1253 = vld [vmem:[%s330 + $0x30] sm:$0xff]
        %v1254 = vld [vmem:[%s330 + $0x38] sm:$0xff]
        %v1255 = vld [vmem:[%s330 + $0x48] sm:$0xff]
        %v1256 = vld [vmem:[%s330 + $0x50] sm:$0xff]
        %v1257 = vld [vmem:[%s330 + $0x60] sm:$0xff]
        %v1258 = vld [vmem:[%s330 + $0x68] sm:$0xff]
        %v1259 = vld [vmem:[%s330 + $0x78] sm:$0xff]
        %v1260 = vld [vmem:[%s330 + $0x80] sm:$0xff]
        %v1261 = vld [vmem:[%s330 + $0x90] sm:$0xff]
        %v1262 = vld [vmem:[%s330 + $0x98] sm:$0xff]
        %v1263 = vld [vmem:[%s330 + $0xa8] sm:$0xff]
        %v1264 = vld [vmem:[%s330 + $0xb0] sm:$0xff]
        %v1265 = vld [vmem:[%s330 + $0xc0] sm:$0xff]
        %v1266 = vld [vmem:[%s330 + $0xc8] sm:$0xff]
        %v1267 = vld [vmem:[%s330 + $0xd8] sm:$0xff]
        %v1268 = vld [vmem:[%s330 + $0xe0] sm:$0xff]
        %v1269 = vld [vmem:[%s330 + $0xf0] sm:$0xff]
        %v1270 = vld [vmem:[%s330 + $0xf8] sm:$0xff]
        %v1271 = vld [vmem:[%s330 + $0x108] sm:$0xff]
        %v1272 = vld [vmem:[%s330 + $0x110] sm:$0xff]
        %v1273 = vld [vmem:[%s330 + $0x120] sm:$0xff]
        %v1274 = vld [vmem:[%s330 + $0x128] sm:$0xff]
        %v1275 = vld [vmem:[%s330 + $0x138] sm:$0xff]
        %v1276 = vld [vmem:[%s330 + $0x140] sm:$0xff]
        %v1277 = vld [vmem:[%s330 + $0x150] sm:$0xff]
        %v1278 = vld [vmem:[%s330 + $0x158] sm:$0xff]
        %v1279 = vld [vmem:[%s330 + $0x168] sm:$0xff]
        %v1280 = vld [vmem:[%s330 + $0x170] sm:$0xff]
        %v1281 = vld [vmem:[%s330 + $0x10] sm:$0xff]
        %v1282 = vld [vmem:[%s330 + $0x28] sm:$0xff]
        %v1283 = vld [vmem:[%s330 + $0x40] sm:$0xff]
        %v1284 = vld [vmem:[%s330 + $0x58] sm:$0xff]
        %v1285 = vld [vmem:[%s330 + $0x70] sm:$0xff]
        %v1286 = vld [vmem:[%s330 + $0x88] sm:$0xff]
        %v1287 = vld [vmem:[%s330 + $0xa0] sm:$0xff]
        %v1288 = vld [vmem:[%s330 + $0xb8] sm:$0xff]
        %v1289 = vld [vmem:[%s330 + $0xd0] sm:$0xff]
        %v1290 = vld [vmem:[%s330 + $0xe8] sm:$0xff]
        %v1291 = vld [vmem:[%s330 + $0x100] sm:$0xff]
        %v1292 = vld [vmem:[%s330 + $0x118] sm:$0xff]
        %v1293 = vld [vmem:[%s330 + $0x130] sm:$0xff]
        %v1294 = vld [vmem:[%s330 + $0x148] sm:$0xff]
        %v1295 = vld [vmem:[%s330 + $0x160] sm:$0xff]
        %v1296 = vld [vmem:[%s330 + $0x178] sm:$0xff]
        %s1297 = scalar_lea.vmem [#allocation2], 192
        %v1298 = vld [vmem:[%s1297] sm:$0xff]
        %v1299 = vld [vmem:[%s1297 + $0x8] sm:$0xff]
        %v1300 = vld [vmem:[%s1297 + $0x18] sm:$0xff]
        %v1301 = vld [vmem:[%s1297 + $0x20] sm:$0xff]
        %v1302 = vld [vmem:[%s1297 + $0x30] sm:$0xff]
        %v1303 = vld [vmem:[%s1297 + $0x38] sm:$0xff]
        %v1304 = vld [vmem:[%s1297 + $0x48] sm:$0xff]
        %v1305 = vld [vmem:[%s1297 + $0x50] sm:$0xff]
        %v1306 = vld [vmem:[%s1297 + $0x60] sm:$0xff]
        %v1307 = vld [vmem:[%s1297 + $0x68] sm:$0xff]
        %v1308 = vld [vmem:[%s1297 + $0x78] sm:$0xff]
        %v1309 = vld [vmem:[%s1297 + $0x80] sm:$0xff]
        %v1310 = vld [vmem:[%s1297 + $0x90] sm:$0xff]
        %v1311 = vld [vmem:[%s1297 + $0x98] sm:$0xff]
        %v1312 = vld [vmem:[%s1297 + $0xa8] sm:$0xff]
        %v1313 = vld [vmem:[%s1297 + $0xb0] sm:$0xff]
        %v1314 = vld [vmem:[%s1297 + $0xc0] sm:$0xff]
        %v1315 = vld [vmem:[%s1297 + $0xc8] sm:$0xff]
        %v1316 = vld [vmem:[%s1297 + $0xd8] sm:$0xff]
        %v1317 = vld [vmem:[%s1297 + $0xe0] sm:$0xff]
        %v1318 = vld [vmem:[%s1297 + $0xf0] sm:$0xff]
        %v1319 = vld [vmem:[%s1297 + $0xf8] sm:$0xff]
        %v1320 = vld [vmem:[%s1297 + $0x108] sm:$0xff]
        %v1321 = vld [vmem:[%s1297 + $0x110] sm:$0xff]
        %v1322 = vld [vmem:[%s1297 + $0x120] sm:$0xff]
        %v1323 = vld [vmem:[%s1297 + $0x128] sm:$0xff]
        %v1324 = vld [vmem:[%s1297 + $0x138] sm:$0xff]
        %v1325 = vld [vmem:[%s1297 + $0x140] sm:$0xff]
        %v1326 = vld [vmem:[%s1297 + $0x150] sm:$0xff]
        %v1327 = vld [vmem:[%s1297 + $0x158] sm:$0xff]
        %v1328 = vld [vmem:[%s1297 + $0x168] sm:$0xff]
        %v1329 = vld [vmem:[%s1297 + $0x170] sm:$0xff]
        %v1330 = vld [vmem:[%s1297 + $0x4] sm:$0xff]
        %v1331 = vld [vmem:[%s1297 + $0xc] sm:$0xff]
        %v1332 = vld [vmem:[%s1297 + $0x1c] sm:$0xff]
        %v1333 = vld [vmem:[%s1297 + $0x24] sm:$0xff]
        %v1334 = vld [vmem:[%s1297 + $0x34] sm:$0xff]
        %v1335 = vld [vmem:[%s1297 + $0x3c] sm:$0xff]
        %v1336 = vld [vmem:[%s1297 + $0x4c] sm:$0xff]
        %v1337 = vld [vmem:[%s1297 + $0x54] sm:$0xff]
        %v1338 = vld [vmem:[%s1297 + $0x64] sm:$0xff]
        %v1339 = vld [vmem:[%s1297 + $0x6c] sm:$0xff]
        %v1340 = vld [vmem:[%s1297 + $0x7c] sm:$0xff]
        %v1341 = vld [vmem:[%s1297 + $0x84] sm:$0xff]
        %v1342 = vld [vmem:[%s1297 + $0x94] sm:$0xff]
        %v1343 = vld [vmem:[%s1297 + $0x9c] sm:$0xff]
        %v1344 = vld [vmem:[%s1297 + $0xac] sm:$0xff]
        %v1345 = vld [vmem:[%s1297 + $0xb4] sm:$0xff]
        %v1346 = vld [vmem:[%s1297 + $0xc4] sm:$0xff]
        %v1347 = vld [vmem:[%s1297 + $0xcc] sm:$0xff]
        %v1348 = vld [vmem:[%s1297 + $0xdc] sm:$0xff]
        %v1349 = vld [vmem:[%s1297 + $0xe4] sm:$0xff]
        %v1350 = vld [vmem:[%s1297 + $0xf4] sm:$0xff]
        %v1351 = vld [vmem:[%s1297 + $0xfc] sm:$0xff]
        %v1352 = vld [vmem:[%s1297 + $0x10c] sm:$0xff]
        %v1353 = vld [vmem:[%s1297 + $0x114] sm:$0xff]
        %v1354 = vld [vmem:[%s1297 + $0x124] sm:$0xff]
        %v1355 = vld [vmem:[%s1297 + $0x12c] sm:$0xff]
        %v1356 = vld [vmem:[%s1297 + $0x13c] sm:$0xff]
        %v1357 = vld [vmem:[%s1297 + $0x144] sm:$0xff]
        %v1358 = vld [vmem:[%s1297 + $0x154] sm:$0xff]
        %v1359 = vld [vmem:[%s1297 + $0x15c] sm:$0xff]
        %v1360 = vld [vmem:[%s1297 + $0x16c] sm:$0xff]
        %v1361 = vld [vmem:[%s1297 + $0x174] sm:$0xff]
        %v1362 = vld [vmem:[%s1297 + $0x10] sm:$0xff]
        %v1363 = vld [vmem:[%s1297 + $0x28] sm:$0xff]
        %v1364 = vld [vmem:[%s1297 + $0x40] sm:$0xff]
        %v1365 = vld [vmem:[%s1297 + $0x58] sm:$0xff]
        %v1366 = vld [vmem:[%s1297 + $0x70] sm:$0xff]
        %v1367 = vld [vmem:[%s1297 + $0x88] sm:$0xff]
        %v1368 = vld [vmem:[%s1297 + $0xa0] sm:$0xff]
        %v1369 = vld [vmem:[%s1297 + $0xb8] sm:$0xff]
        %v1370 = vld [vmem:[%s1297 + $0xd0] sm:$0xff]
        %v1371 = vld [vmem:[%s1297 + $0xe8] sm:$0xff]
        %v1372 = vld [vmem:[%s1297 + $0x100] sm:$0xff]
        %v1373 = vld [vmem:[%s1297 + $0x118] sm:$0xff]
        %v1374 = vld [vmem:[%s1297 + $0x130] sm:$0xff]
        %v1375 = vld [vmem:[%s1297 + $0x148] sm:$0xff]
        %v1376 = vld [vmem:[%s1297 + $0x160] sm:$0xff]
        %v1377 = vld [vmem:[%s1297 + $0x178] sm:$0xff]
        %1410 = vrot.lane.b32.xlu0 %v396, 4
        %v1411 = vpop.permute.xlu0 %1410
        %1412 = vrot.lane.b32.xlu0 %v397, 4
        %v1413 = vpop.permute.xlu0 %1412
        %1414 = vrot.lane.b32.xlu0 %v398, 4
        %v1415 = vpop.permute.xlu0 %1414
        %1416 = vrot.lane.b32.xlu0 %v399, 4
        %v1417 = vpop.permute.xlu0 %1416
        %1418 = vrot.lane.b32.xlu0 %v400, 4
        %v1419 = vpop.permute.xlu0 %1418
        %1420 = vrot.lane.b32.xlu0 %v401, 4
        %v1421 = vpop.permute.xlu0 %1420
        %1422 = vrot.lane.b32.xlu0 %v402, 4
        %v1423 = vpop.permute.xlu0 %1422
        %1424 = vrot.lane.b32.xlu0 %v403, 4
        %v1425 = vpop.permute.xlu0 %1424
        %1426 = vrot.lane.b32.xlu0 %v404, 4
        %v1427 = vpop.permute.xlu0 %1426
        %1428 = vrot.lane.b32.xlu0 %v405, 4
        %v1429 = vpop.permute.xlu0 %1428
        %1430 = vrot.lane.b32.xlu0 %v406, 4
        %v1431 = vpop.permute.xlu0 %1430
        %1432 = vrot.lane.b32.xlu0 %v407, 4
        %v1433 = vpop.permute.xlu0 %1432
        %1434 = vrot.lane.b32.xlu0 %v408, 4
        %v1435 = vpop.permute.xlu0 %1434
        %1436 = vrot.lane.b32.xlu0 %v409, 4
        %v1437 = vpop.permute.xlu0 %1436
        %1438 = vrot.lane.b32.xlu0 %v410, 4
        %v1439 = vpop.permute.xlu0 %1438
        %1440 = vrot.lane.b32.xlu0 %v411, 4
        %v1441 = vpop.permute.xlu0 %1440
        %1442 = vrot.lane.b32.xlu0 %v412, 4
        %v1443 = vpop.permute.xlu0 %1442
        %1444 = vrot.lane.b32.xlu0 %v413, 4
        %v1445 = vpop.permute.xlu0 %1444
        %1446 = vrot.lane.b32.xlu0 %v414, 4
        %v1447 = vpop.permute.xlu0 %1446
        %1448 = vrot.lane.b32.xlu0 %v415, 4
        %v1449 = vpop.permute.xlu0 %1448
        %1450 = vrot.lane.b32.xlu0 %v416, 4
        %v1451 = vpop.permute.xlu0 %1450
        %1452 = vrot.lane.b32.xlu0 %v417, 4
        %v1453 = vpop.permute.xlu0 %1452
        %1454 = vrot.lane.b32.xlu0 %v418, 4
        %v1455 = vpop.permute.xlu0 %1454
        %1456 = vrot.lane.b32.xlu0 %v419, 4
        %v1457 = vpop.permute.xlu0 %1456
        %1458 = vrot.lane.b32.xlu0 %v420, 4
        %v1459 = vpop.permute.xlu0 %1458
        %1460 = vrot.lane.b32.xlu0 %v421, 4
        %v1461 = vpop.permute.xlu0 %1460
        %1462 = vrot.lane.b32.xlu0 %v422, 4
        %v1463 = vpop.permute.xlu0 %1462
        %1464 = vrot.lane.b32.xlu0 %v423, 4
        %v1465 = vpop.permute.xlu0 %1464
        %1466 = vrot.lane.b32.xlu0 %v424, 4
        %v1467 = vpop.permute.xlu0 %1466
        %1468 = vrot.lane.b32.xlu0 %v425, 4
        %v1469 = vpop.permute.xlu0 %1468
        %1470 = vrot.lane.b32.xlu0 %v426, 4
        %v1471 = vpop.permute.xlu0 %1470
        %1472 = vrot.lane.b32.xlu0 %v427, 4
        %v1473 = vpop.permute.xlu0 %1472
        %1538 = vrot.lane.b32.xlu0 %v428, 8
        %v1539 = vpop.permute.xlu0 %1538
        %1540 = vrot.lane.b32.xlu0 %v429, 8
        %v1541 = vpop.permute.xlu0 %1540
        %1542 = vrot.lane.b32.xlu0 %v430, 8
        %v1543 = vpop.permute.xlu0 %1542
        %1544 = vrot.lane.b32.xlu0 %v431, 8
        %v1545 = vpop.permute.xlu0 %1544
        %1546 = vrot.lane.b32.xlu0 %v432, 8
        %v1547 = vpop.permute.xlu0 %1546
        %1548 = vrot.lane.b32.xlu0 %v433, 8
        %v1549 = vpop.permute.xlu0 %1548
        %1550 = vrot.lane.b32.xlu0 %v434, 8
        %v1551 = vpop.permute.xlu0 %1550
        %1552 = vrot.lane.b32.xlu0 %v435, 8
        %v1553 = vpop.permute.xlu0 %1552
        %1554 = vrot.lane.b32.xlu0 %v436, 8
        %v1555 = vpop.permute.xlu0 %1554
        %1556 = vrot.lane.b32.xlu0 %v437, 8
        %v1557 = vpop.permute.xlu0 %1556
        %1558 = vrot.lane.b32.xlu0 %v438, 8
        %v1559 = vpop.permute.xlu0 %1558
        %1560 = vrot.lane.b32.xlu0 %v439, 8
        %v1561 = vpop.permute.xlu0 %1560
        %1562 = vrot.lane.b32.xlu0 %v440, 8
        %v1563 = vpop.permute.xlu0 %1562
        %1564 = vrot.lane.b32.xlu0 %v441, 8
        %v1565 = vpop.permute.xlu0 %1564
        %1566 = vrot.lane.b32.xlu0 %v442, 8
        %v1567 = vpop.permute.xlu0 %1566
        %1568 = vrot.lane.b32.xlu0 %v443, 8
        %v1569 = vpop.permute.xlu0 %1568
        %1570 = vrot.lane.b32.xlu0 %v444, 8
        %v1571 = vpop.permute.xlu0 %1570
        %1572 = vrot.lane.b32.xlu0 %v445, 8
        %v1573 = vpop.permute.xlu0 %1572
        %1574 = vrot.lane.b32.xlu0 %v446, 8
        %v1575 = vpop.permute.xlu0 %1574
        %1576 = vrot.lane.b32.xlu0 %v447, 8
        %v1577 = vpop.permute.xlu0 %1576
        %1578 = vrot.lane.b32.xlu0 %v448, 8
        %v1579 = vpop.permute.xlu0 %1578
        %1580 = vrot.lane.b32.xlu0 %v449, 8
        %v1581 = vpop.permute.xlu0 %1580
        %1582 = vrot.lane.b32.xlu0 %v450, 8
        %v1583 = vpop.permute.xlu0 %1582
        %1584 = vrot.lane.b32.xlu0 %v451, 8
        %v1585 = vpop.permute.xlu0 %1584
        %1586 = vrot.lane.b32.xlu0 %v452, 8
        %v1587 = vpop.permute.xlu0 %1586
        %1588 = vrot.lane.b32.xlu0 %v453, 8
        %v1589 = vpop.permute.xlu0 %1588
        %1590 = vrot.lane.b32.xlu0 %v454, 8
        %v1591 = vpop.permute.xlu0 %1590
        %1592 = vrot.lane.b32.xlu0 %v455, 8
        %v1593 = vpop.permute.xlu0 %1592
        %1594 = vrot.lane.b32.xlu0 %v456, 8
        %v1595 = vpop.permute.xlu0 %1594
        %1596 = vrot.lane.b32.xlu0 %v457, 8
        %v1597 = vpop.permute.xlu0 %1596
        %1598 = vrot.lane.b32.xlu0 %v458, 8
        %v1599 = vpop.permute.xlu0 %1598
        %1600 = vrot.lane.b32.xlu0 %v459, 8
        %v1601 = vpop.permute.xlu0 %1600
        %1666 = vrot.lane.b32.xlu0 %v460, 12
        %v1667 = vpop.permute.xlu0 %1666
        %1668 = vrot.lane.b32.xlu0 %v461, 12
        %v1669 = vpop.permute.xlu0 %1668
        %1670 = vrot.lane.b32.xlu0 %v462, 12
        %v1671 = vpop.permute.xlu0 %1670
        %1672 = vrot.lane.b32.xlu0 %v463, 12
        %v1673 = vpop.permute.xlu0 %1672
        %1674 = vrot.lane.b32.xlu0 %v464, 12
        %v1675 = vpop.permute.xlu0 %1674
        %1676 = vrot.lane.b32.xlu0 %v465, 12
        %v1677 = vpop.permute.xlu0 %1676
        %1678 = vrot.lane.b32.xlu0 %v466, 12
        %v1679 = vpop.permute.xlu0 %1678
        %1680 = vrot.lane.b32.xlu0 %v467, 12
        %v1681 = vpop.permute.xlu0 %1680
        %1682 = vrot.lane.b32.xlu0 %v468, 12
        %v1683 = vpop.permute.xlu0 %1682
        %1684 = vrot.lane.b32.xlu0 %v469, 12
        %v1685 = vpop.permute.xlu0 %1684
        %1686 = vrot.lane.b32.xlu0 %v470, 12
        %v1687 = vpop.permute.xlu0 %1686
        %1688 = vrot.lane.b32.xlu0 %v471, 12
        %v1689 = vpop.permute.xlu0 %1688
        %1690 = vrot.lane.b32.xlu0 %v472, 12
        %v1691 = vpop.permute.xlu0 %1690
        %1692 = vrot.lane.b32.xlu0 %v473, 12
        %v1693 = vpop.permute.xlu0 %1692
        %1694 = vrot.lane.b32.xlu0 %v474, 12
        %v1695 = vpop.permute.xlu0 %1694
        %1696 = vrot.lane.b32.xlu0 %v475, 12
        %v1697 = vpop.permute.xlu0 %1696
        %1698 = vrot.lane.b32.xlu0 %v476, 12
        %v1699 = vpop.permute.xlu0 %1698
        %1700 = vrot.lane.b32.xlu0 %v477, 12
        %v1701 = vpop.permute.xlu0 %1700
        %1702 = vrot.lane.b32.xlu0 %v478, 12
        %v1703 = vpop.permute.xlu0 %1702
        %1704 = vrot.lane.b32.xlu0 %v479, 12
        %v1705 = vpop.permute.xlu0 %1704
        %1706 = vrot.lane.b32.xlu0 %v480, 12
        %v1707 = vpop.permute.xlu0 %1706
        %1708 = vrot.lane.b32.xlu0 %v481, 12
        %v1709 = vpop.permute.xlu0 %1708
        %1710 = vrot.lane.b32.xlu0 %v482, 12
        %v1711 = vpop.permute.xlu0 %1710
        %1712 = vrot.lane.b32.xlu0 %v483, 12
        %v1713 = vpop.permute.xlu0 %1712
        %1714 = vrot.lane.b32.xlu0 %v484, 12
        %v1715 = vpop.permute.xlu0 %1714
        %1716 = vrot.lane.b32.xlu0 %v485, 12
        %v1717 = vpop.permute.xlu0 %1716
        %1718 = vrot.lane.b32.xlu0 %v486, 12
        %v1719 = vpop.permute.xlu0 %1718
        %1720 = vrot.lane.b32.xlu0 %v487, 12
        %v1721 = vpop.permute.xlu0 %1720
        %1722 = vrot.lane.b32.xlu0 %v488, 12
        %v1723 = vpop.permute.xlu0 %1722
        %1724 = vrot.lane.b32.xlu0 %v489, 12
        %v1725 = vpop.permute.xlu0 %1724
        %1726 = vrot.lane.b32.xlu0 %v490, 12
        %v1727 = vpop.permute.xlu0 %1726
        %1728 = vrot.lane.b32.xlu0 %v491, 12
        %v1729 = vpop.permute.xlu0 %1728
        %1794 = vrot.lane.b32.xlu0 %v492, 16
        %v1795 = vpop.permute.xlu0 %1794
        %1796 = vrot.lane.b32.xlu0 %v493, 16
        %v1797 = vpop.permute.xlu0 %1796
        %1798 = vrot.lane.b32.xlu0 %v494, 16
        %v1799 = vpop.permute.xlu0 %1798
        %1800 = vrot.lane.b32.xlu0 %v495, 16
        %v1801 = vpop.permute.xlu0 %1800
        %1802 = vrot.lane.b32.xlu0 %v496, 16
        %v1803 = vpop.permute.xlu0 %1802
        %1804 = vrot.lane.b32.xlu0 %v497, 16
        %v1805 = vpop.permute.xlu0 %1804
        %1806 = vrot.lane.b32.xlu0 %v498, 16
        %v1807 = vpop.permute.xlu0 %1806
        %1808 = vrot.lane.b32.xlu0 %v499, 16
        %v1809 = vpop.permute.xlu0 %1808
        %1810 = vrot.lane.b32.xlu0 %v500, 16
        %v1811 = vpop.permute.xlu0 %1810
        %1812 = vrot.lane.b32.xlu0 %v501, 16
        %v1813 = vpop.permute.xlu0 %1812
        %1814 = vrot.lane.b32.xlu0 %v502, 16
        %v1815 = vpop.permute.xlu0 %1814
        %1816 = vrot.lane.b32.xlu0 %v503, 16
        %v1817 = vpop.permute.xlu0 %1816
        %1818 = vrot.lane.b32.xlu0 %v504, 16
        %v1819 = vpop.permute.xlu0 %1818
        %1820 = vrot.lane.b32.xlu0 %v505, 16
        %v1821 = vpop.permute.xlu0 %1820
        %1822 = vrot.lane.b32.xlu0 %v506, 16
        %v1823 = vpop.permute.xlu0 %1822
        %1824 = vrot.lane.b32.xlu0 %v507, 16
        %v1825 = vpop.permute.xlu0 %1824
        %1826 = vrot.lane.b32.xlu0 %v508, 16
        %v1827 = vpop.permute.xlu0 %1826
        %1828 = vrot.lane.b32.xlu0 %v509, 16
        %v1829 = vpop.permute.xlu0 %1828
        %1830 = vrot.lane.b32.xlu0 %v510, 16
        %v1831 = vpop.permute.xlu0 %1830
        %1832 = vrot.lane.b32.xlu0 %v511, 16
        %v1833 = vpop.permute.xlu0 %1832
        %1834 = vrot.lane.b32.xlu0 %v512, 16
        %v1835 = vpop.permute.xlu0 %1834
        %1836 = vrot.lane.b32.xlu0 %v513, 16
        %v1837 = vpop.permute.xlu0 %1836
        %1838 = vrot.lane.b32.xlu0 %v514, 16
        %v1839 = vpop.permute.xlu0 %1838
        %1840 = vrot.lane.b32.xlu0 %v515, 16
        %v1841 = vpop.permute.xlu0 %1840
        %1842 = vrot.lane.b32.xlu0 %v516, 16
        %v1843 = vpop.permute.xlu0 %1842
        %1844 = vrot.lane.b32.xlu0 %v517, 16
        %v1845 = vpop.permute.xlu0 %1844
        %1846 = vrot.lane.b32.xlu0 %v518, 16
        %v1847 = vpop.permute.xlu0 %1846
        %1848 = vrot.lane.b32.xlu0 %v519, 16
        %v1849 = vpop.permute.xlu0 %1848
        %1850 = vrot.lane.b32.xlu0 %v520, 16
        %v1851 = vpop.permute.xlu0 %1850
        %1852 = vrot.lane.b32.xlu0 %v521, 16
        %v1853 = vpop.permute.xlu0 %1852
        %1854 = vrot.lane.b32.xlu0 %v522, 16
        %v1855 = vpop.permute.xlu0 %1854
        %1856 = vrot.lane.b32.xlu0 %v523, 16
        %v1857 = vpop.permute.xlu0 %1856
        %1922 = vrot.lane.b32.xlu0 %v524, 20
        %v1923 = vpop.permute.xlu0 %1922
        %1924 = vrot.lane.b32.xlu0 %v525, 20
        %v1925 = vpop.permute.xlu0 %1924
        %1926 = vrot.lane.b32.xlu0 %v526, 20
        %v1927 = vpop.permute.xlu0 %1926
        %1928 = vrot.lane.b32.xlu0 %v527, 20
        %v1929 = vpop.permute.xlu0 %1928
        %1930 = vrot.lane.b32.xlu0 %v528, 20
        %v1931 = vpop.permute.xlu0 %1930
        %1932 = vrot.lane.b32.xlu0 %v529, 20
        %v1933 = vpop.permute.xlu0 %1932
        %1934 = vrot.lane.b32.xlu0 %v530, 20
        %v1935 = vpop.permute.xlu0 %1934
        %1936 = vrot.lane.b32.xlu0 %v531, 20
        %v1937 = vpop.permute.xlu0 %1936
        %1938 = vrot.lane.b32.xlu0 %v532, 20
        %v1939 = vpop.permute.xlu0 %1938
        %1940 = vrot.lane.b32.xlu0 %v533, 20
        %v1941 = vpop.permute.xlu0 %1940
        %1942 = vrot.lane.b32.xlu0 %v534, 20
        %v1943 = vpop.permute.xlu0 %1942
        %1944 = vrot.lane.b32.xlu0 %v535, 20
        %v1945 = vpop.permute.xlu0 %1944
        %1946 = vrot.lane.b32.xlu0 %v536, 20
        %v1947 = vpop.permute.xlu0 %1946
        %1948 = vrot.lane.b32.xlu0 %v537, 20
        %v1949 = vpop.permute.xlu0 %1948
        %1950 = vrot.lane.b32.xlu0 %v538, 20
        %v1951 = vpop.permute.xlu0 %1950
        %1952 = vrot.lane.b32.xlu0 %v539, 20
        %v1953 = vpop.permute.xlu0 %1952
        %1954 = vrot.lane.b32.xlu0 %v540, 20
        %v1955 = vpop.permute.xlu0 %1954
        %1956 = vrot.lane.b32.xlu0 %v541, 20
        %v1957 = vpop.permute.xlu0 %1956
        %1958 = vrot.lane.b32.xlu0 %v542, 20
        %v1959 = vpop.permute.xlu0 %1958
        %1960 = vrot.lane.b32.xlu0 %v543, 20
        %v1961 = vpop.permute.xlu0 %1960
        %1962 = vrot.lane.b32.xlu0 %v544, 20
        %v1963 = vpop.permute.xlu0 %1962
        %1964 = vrot.lane.b32.xlu0 %v545, 20
        %v1965 = vpop.permute.xlu0 %1964
        %1966 = vrot.lane.b32.xlu0 %v546, 20
        %v1967 = vpop.permute.xlu0 %1966
        %1968 = vrot.lane.b32.xlu0 %v547, 20
        %v1969 = vpop.permute.xlu0 %1968
        %1970 = vrot.lane.b32.xlu0 %v548, 20
        %v1971 = vpop.permute.xlu0 %1970
        %1972 = vrot.lane.b32.xlu0 %v549, 20
        %v1973 = vpop.permute.xlu0 %1972
        %1974 = vrot.lane.b32.xlu0 %v550, 20
        %v1975 = vpop.permute.xlu0 %1974
        %1976 = vrot.lane.b32.xlu0 %v551, 20
        %v1977 = vpop.permute.xlu0 %1976
        %1978 = vrot.lane.b32.xlu0 %v552, 20
        %v1979 = vpop.permute.xlu0 %1978
        %1980 = vrot.lane.b32.xlu0 %v553, 20
        %v1981 = vpop.permute.xlu0 %1980
        %1982 = vrot.lane.b32.xlu0 %v554, 20
        %v1983 = vpop.permute.xlu0 %1982
        %1984 = vrot.lane.b32.xlu0 %v555, 20
        %v1985 = vpop.permute.xlu0 %1984
        %2050 = vrot.lane.b32.xlu0 %v557, 24
        %v2051 = vpop.permute.xlu0 %2050
        %2052 = vrot.lane.b32.xlu0 %v558, 24
        %v2053 = vpop.permute.xlu0 %2052
        %2054 = vrot.lane.b32.xlu0 %v559, 24
        %v2055 = vpop.permute.xlu0 %2054
        %2056 = vrot.lane.b32.xlu0 %v560, 24
        %v2057 = vpop.permute.xlu0 %2056
        %2058 = vrot.lane.b32.xlu0 %v561, 24
        %v2059 = vpop.permute.xlu0 %2058
        %2060 = vrot.lane.b32.xlu0 %v562, 24
        %v2061 = vpop.permute.xlu0 %2060
        %2062 = vrot.lane.b32.xlu0 %v563, 24
        %v2063 = vpop.permute.xlu0 %2062
        %2064 = vrot.lane.b32.xlu0 %v564, 24
        %v2065 = vpop.permute.xlu0 %2064
        %2066 = vrot.lane.b32.xlu0 %v565, 24
        %v2067 = vpop.permute.xlu0 %2066
        %2068 = vrot.lane.b32.xlu0 %v566, 24
        %v2069 = vpop.permute.xlu0 %2068
        %2070 = vrot.lane.b32.xlu0 %v567, 24
        %v2071 = vpop.permute.xlu0 %2070
        %2072 = vrot.lane.b32.xlu0 %v568, 24
        %v2073 = vpop.permute.xlu0 %2072
        %2074 = vrot.lane.b32.xlu0 %v569, 24
        %v2075 = vpop.permute.xlu0 %2074
        %2076 = vrot.lane.b32.xlu0 %v570, 24
        %v2077 = vpop.permute.xlu0 %2076
        %2078 = vrot.lane.b32.xlu0 %v571, 24
        %v2079 = vpop.permute.xlu0 %2078
        %2080 = vrot.lane.b32.xlu0 %v572, 24
        %v2081 = vpop.permute.xlu0 %2080
        %2082 = vrot.lane.b32.xlu0 %v573, 24
        %v2083 = vpop.permute.xlu0 %2082
        %2084 = vrot.lane.b32.xlu0 %v574, 24
        %v2085 = vpop.permute.xlu0 %2084
        %2086 = vrot.lane.b32.xlu0 %v575, 24
        %v2087 = vpop.permute.xlu0 %2086
        %2088 = vrot.lane.b32.xlu0 %v576, 24
        %v2089 = vpop.permute.xlu0 %2088
        %2090 = vrot.lane.b32.xlu0 %v577, 24
        %v2091 = vpop.permute.xlu0 %2090
        %2092 = vrot.lane.b32.xlu0 %v578, 24
        %v2093 = vpop.permute.xlu0 %2092
        %2094 = vrot.lane.b32.xlu0 %v579, 24
        %v2095 = vpop.permute.xlu0 %2094
        %2096 = vrot.lane.b32.xlu0 %v580, 24
        %v2097 = vpop.permute.xlu0 %2096
        %2098 = vrot.lane.b32.xlu0 %v581, 24
        %v2099 = vpop.permute.xlu0 %2098
        %2100 = vrot.lane.b32.xlu0 %v582, 24
        %v2101 = vpop.permute.xlu0 %2100
        %2102 = vrot.lane.b32.xlu0 %v583, 24
        %v2103 = vpop.permute.xlu0 %2102
        %2104 = vrot.lane.b32.xlu0 %v584, 24
        %v2105 = vpop.permute.xlu0 %2104
        %2106 = vrot.lane.b32.xlu0 %v585, 24
        %v2107 = vpop.permute.xlu0 %2106
        %2108 = vrot.lane.b32.xlu0 %v586, 24
        %v2109 = vpop.permute.xlu0 %2108
        %2110 = vrot.lane.b32.xlu0 %v587, 24
        %v2111 = vpop.permute.xlu0 %2110
        %2112 = vrot.lane.b32.xlu0 %v588, 24
        %v2113 = vpop.permute.xlu0 %2112
        %2178 = vrot.lane.b32.xlu0 %v589, 28
        %v2179 = vpop.permute.xlu0 %2178
        %2180 = vrot.lane.b32.xlu0 %v590, 28
        %v2181 = vpop.permute.xlu0 %2180
        %2182 = vrot.lane.b32.xlu0 %v591, 28
        %v2183 = vpop.permute.xlu0 %2182
        %2184 = vrot.lane.b32.xlu0 %v592, 28
        %v2185 = vpop.permute.xlu0 %2184
        %2186 = vrot.lane.b32.xlu0 %v593, 28
        %v2187 = vpop.permute.xlu0 %2186
        %2188 = vrot.lane.b32.xlu0 %v594, 28
        %v2189 = vpop.permute.xlu0 %2188
        %2190 = vrot.lane.b32.xlu0 %v595, 28
        %v2191 = vpop.permute.xlu0 %2190
        %2192 = vrot.lane.b32.xlu0 %v596, 28
        %v2193 = vpop.permute.xlu0 %2192
        %2194 = vrot.lane.b32.xlu0 %v597, 28
        %v2195 = vpop.permute.xlu0 %2194
        %2196 = vrot.lane.b32.xlu0 %v598, 28
        %v2197 = vpop.permute.xlu0 %2196
        %2198 = vrot.lane.b32.xlu0 %v599, 28
        %v2199 = vpop.permute.xlu0 %2198
        %2200 = vrot.lane.b32.xlu0 %v600, 28
        %v2201 = vpop.permute.xlu0 %2200
        %2202 = vrot.lane.b32.xlu0 %v601, 28
        %v2203 = vpop.permute.xlu0 %2202
        %2204 = vrot.lane.b32.xlu0 %v602, 28
        %v2205 = vpop.permute.xlu0 %2204
        %2206 = vrot.lane.b32.xlu0 %v603, 28
        %v2207 = vpop.permute.xlu0 %2206
        %2208 = vrot.lane.b32.xlu0 %v604, 28
        %v2209 = vpop.permute.xlu0 %2208
        %2210 = vrot.lane.b32.xlu0 %v605, 28
        %v2211 = vpop.permute.xlu0 %2210
        %2212 = vrot.lane.b32.xlu0 %v606, 28
        %v2213 = vpop.permute.xlu0 %2212
        %2214 = vrot.lane.b32.xlu0 %v607, 28
        %v2215 = vpop.permute.xlu0 %2214
        %2216 = vrot.lane.b32.xlu0 %v608, 28
        %v2217 = vpop.permute.xlu0 %2216
        %2218 = vrot.lane.b32.xlu0 %v609, 28
        %v2219 = vpop.permute.xlu0 %2218
        %2220 = vrot.lane.b32.xlu0 %v610, 28
        %v2221 = vpop.permute.xlu0 %2220
        %2222 = vrot.lane.b32.xlu0 %v611, 28
        %v2223 = vpop.permute.xlu0 %2222
        %2224 = vrot.lane.b32.xlu0 %v612, 28
        %v2225 = vpop.permute.xlu0 %2224
        %2226 = vrot.lane.b32.xlu0 %v613, 28
        %v2227 = vpop.permute.xlu0 %2226
        %2228 = vrot.lane.b32.xlu0 %v614, 28
        %v2229 = vpop.permute.xlu0 %2228
        %2230 = vrot.lane.b32.xlu0 %v615, 28
        %v2231 = vpop.permute.xlu0 %2230
        %2232 = vrot.lane.b32.xlu0 %v616, 28
        %v2233 = vpop.permute.xlu0 %2232
        %2234 = vrot.lane.b32.xlu0 %v617, 28
        %v2235 = vpop.permute.xlu0 %2234
        %2236 = vrot.lane.b32.xlu0 %v618, 28
        %v2237 = vpop.permute.xlu0 %2236
        %2238 = vrot.lane.b32.xlu0 %v619, 28
        %v2239 = vpop.permute.xlu0 %2238
        %2240 = vrot.lane.b32.xlu0 %v620, 28
        %v2241 = vpop.permute.xlu0 %2240
        %2306 = vrot.lane.b32.xlu0 %v621, 32
        %v2307 = vpop.permute.xlu0 %2306
        %2308 = vrot.lane.b32.xlu0 %v622, 32
        %v2309 = vpop.permute.xlu0 %2308
        %2310 = vrot.lane.b32.xlu0 %v623, 32
        %v2311 = vpop.permute.xlu0 %2310
        %2312 = vrot.lane.b32.xlu0 %v624, 32
        %v2313 = vpop.permute.xlu0 %2312
        %2314 = vrot.lane.b32.xlu0 %v625, 32
        %v2315 = vpop.permute.xlu0 %2314
        %2316 = vrot.lane.b32.xlu0 %v626, 32
        %v2317 = vpop.permute.xlu0 %2316
        %2318 = vrot.lane.b32.xlu0 %v627, 32
        %v2319 = vpop.permute.xlu0 %2318
        %2320 = vrot.lane.b32.xlu0 %v628, 32
        %v2321 = vpop.permute.xlu0 %2320
        %2322 = vrot.lane.b32.xlu0 %v629, 32
        %v2323 = vpop.permute.xlu0 %2322
        %2324 = vrot.lane.b32.xlu0 %v630, 32
        %v2325 = vpop.permute.xlu0 %2324
        %2326 = vrot.lane.b32.xlu0 %v631, 32
        %v2327 = vpop.permute.xlu0 %2326
        %2328 = vrot.lane.b32.xlu0 %v632, 32
        %v2329 = vpop.permute.xlu0 %2328
        %2330 = vrot.lane.b32.xlu0 %v633, 32
        %v2331 = vpop.permute.xlu0 %2330
        %2332 = vrot.lane.b32.xlu0 %v634, 32
        %v2333 = vpop.permute.xlu0 %2332
        %2334 = vrot.lane.b32.xlu0 %v635, 32
        %v2335 = vpop.permute.xlu0 %2334
        %2336 = vrot.lane.b32.xlu0 %v636, 32
        %v2337 = vpop.permute.xlu0 %2336
        %2338 = vrot.lane.b32.xlu0 %v637, 32
        %v2339 = vpop.permute.xlu0 %2338
        %2340 = vrot.lane.b32.xlu0 %v638, 32
        %v2341 = vpop.permute.xlu0 %2340
        %2342 = vrot.lane.b32.xlu0 %v639, 32
        %v2343 = vpop.permute.xlu0 %2342
        %2344 = vrot.lane.b32.xlu0 %v640, 32
        %v2345 = vpop.permute.xlu0 %2344
        %2346 = vrot.lane.b32.xlu0 %v641, 32
        %v2347 = vpop.permute.xlu0 %2346
        %2348 = vrot.lane.b32.xlu0 %v642, 32
        %v2349 = vpop.permute.xlu0 %2348
        %2350 = vrot.lane.b32.xlu0 %v643, 32
        %v2351 = vpop.permute.xlu0 %2350
        %2352 = vrot.lane.b32.xlu0 %v644, 32
        %v2353 = vpop.permute.xlu0 %2352
        %2354 = vrot.lane.b32.xlu0 %v645, 32
        %v2355 = vpop.permute.xlu0 %2354
        %2356 = vrot.lane.b32.xlu0 %v646, 32
        %v2357 = vpop.permute.xlu0 %2356
        %2358 = vrot.lane.b32.xlu0 %v647, 32
        %v2359 = vpop.permute.xlu0 %2358
        %2360 = vrot.lane.b32.xlu0 %v648, 32
        %v2361 = vpop.permute.xlu0 %2360
        %2362 = vrot.lane.b32.xlu0 %v649, 32
        %v2363 = vpop.permute.xlu0 %2362
        %2364 = vrot.lane.b32.xlu0 %v650, 32
        %v2365 = vpop.permute.xlu0 %2364
        %2366 = vrot.lane.b32.xlu0 %v651, 32
        %v2367 = vpop.permute.xlu0 %2366
        %2368 = vrot.lane.b32.xlu0 %v652, 32
        %v2369 = vpop.permute.xlu0 %2368
        %2434 = vrot.lane.b32.xlu0 %v654, 36
        %v2435 = vpop.permute.xlu0 %2434
        %2436 = vrot.lane.b32.xlu0 %v655, 36
        %v2437 = vpop.permute.xlu0 %2436
        %2438 = vrot.lane.b32.xlu0 %v656, 36
        %v2439 = vpop.permute.xlu0 %2438
        %2440 = vrot.lane.b32.xlu0 %v657, 36
        %v2441 = vpop.permute.xlu0 %2440
        %2442 = vrot.lane.b32.xlu0 %v658, 36
        %v2443 = vpop.permute.xlu0 %2442
        %2444 = vrot.lane.b32.xlu0 %v659, 36
        %v2445 = vpop.permute.xlu0 %2444
        %2446 = vrot.lane.b32.xlu0 %v660, 36
        %v2447 = vpop.permute.xlu0 %2446
        %2448 = vrot.lane.b32.xlu0 %v661, 36
        %v2449 = vpop.permute.xlu0 %2448
        %2450 = vrot.lane.b32.xlu0 %v662, 36
        %v2451 = vpop.permute.xlu0 %2450
        %2452 = vrot.lane.b32.xlu0 %v663, 36
        %v2453 = vpop.permute.xlu0 %2452
        %2454 = vrot.lane.b32.xlu0 %v664, 36
        %v2455 = vpop.permute.xlu0 %2454
        %2456 = vrot.lane.b32.xlu0 %v665, 36
        %v2457 = vpop.permute.xlu0 %2456
        %2458 = vrot.lane.b32.xlu0 %v666, 36
        %v2459 = vpop.permute.xlu0 %2458
        %2460 = vrot.lane.b32.xlu0 %v667, 36
        %v2461 = vpop.permute.xlu0 %2460
        %2462 = vrot.lane.b32.xlu0 %v668, 36
        %v2463 = vpop.permute.xlu0 %2462
        %2464 = vrot.lane.b32.xlu0 %v669, 36
        %v2465 = vpop.permute.xlu0 %2464
        %2466 = vrot.lane.b32.xlu0 %v670, 36
        %v2467 = vpop.permute.xlu0 %2466
        %2468 = vrot.lane.b32.xlu0 %v671, 36
        %v2469 = vpop.permute.xlu0 %2468
        %2470 = vrot.lane.b32.xlu0 %v672, 36
        %v2471 = vpop.permute.xlu0 %2470
        %2472 = vrot.lane.b32.xlu0 %v673, 36
        %v2473 = vpop.permute.xlu0 %2472
        %2474 = vrot.lane.b32.xlu0 %v674, 36
        %v2475 = vpop.permute.xlu0 %2474
        %2476 = vrot.lane.b32.xlu0 %v675, 36
        %v2477 = vpop.permute.xlu0 %2476
        %2478 = vrot.lane.b32.xlu0 %v676, 36
        %v2479 = vpop.permute.xlu0 %2478
        %2480 = vrot.lane.b32.xlu0 %v677, 36
        %v2481 = vpop.permute.xlu0 %2480
        %2482 = vrot.lane.b32.xlu0 %v678, 36
        %v2483 = vpop.permute.xlu0 %2482
        %2484 = vrot.lane.b32.xlu0 %v679, 36
        %v2485 = vpop.permute.xlu0 %2484
        %2486 = vrot.lane.b32.xlu0 %v680, 36
        %v2487 = vpop.permute.xlu0 %2486
        %2488 = vrot.lane.b32.xlu0 %v681, 36
        %v2489 = vpop.permute.xlu0 %2488
        %2490 = vrot.lane.b32.xlu0 %v682, 36
        %v2491 = vpop.permute.xlu0 %2490
        %2492 = vrot.lane.b32.xlu0 %v683, 36
        %v2493 = vpop.permute.xlu0 %2492
        %2494 = vrot.lane.b32.xlu0 %v684, 36
        %v2495 = vpop.permute.xlu0 %2494
        %2496 = vrot.lane.b32.xlu0 %v685, 36
        %v2497 = vpop.permute.xlu0 %2496
        %2562 = vrot.lane.b32.xlu0 %v686, 40
        %v2563 = vpop.permute.xlu0 %2562
        %2564 = vrot.lane.b32.xlu0 %v687, 40
        %v2565 = vpop.permute.xlu0 %2564
        %2566 = vrot.lane.b32.xlu0 %v688, 40
        %v2567 = vpop.permute.xlu0 %2566
        %2568 = vrot.lane.b32.xlu0 %v689, 40
        %v2569 = vpop.permute.xlu0 %2568
        %2570 = vrot.lane.b32.xlu0 %v690, 40
        %v2571 = vpop.permute.xlu0 %2570
        %2572 = vrot.lane.b32.xlu0 %v691, 40
        %v2573 = vpop.permute.xlu0 %2572
        %2574 = vrot.lane.b32.xlu0 %v692, 40
        %v2575 = vpop.permute.xlu0 %2574
        %2576 = vrot.lane.b32.xlu0 %v693, 40
        %v2577 = vpop.permute.xlu0 %2576
        %2578 = vrot.lane.b32.xlu0 %v694, 40
        %v2579 = vpop.permute.xlu0 %2578
        %2580 = vrot.lane.b32.xlu0 %v695, 40
        %v2581 = vpop.permute.xlu0 %2580
        %2582 = vrot.lane.b32.xlu0 %v696, 40
        %v2583 = vpop.permute.xlu0 %2582
        %2584 = vrot.lane.b32.xlu0 %v697, 40
        %v2585 = vpop.permute.xlu0 %2584
        %2586 = vrot.lane.b32.xlu0 %v698, 40
        %v2587 = vpop.permute.xlu0 %2586
        %2588 = vrot.lane.b32.xlu0 %v699, 40
        %v2589 = vpop.permute.xlu0 %2588
        %2590 = vrot.lane.b32.xlu0 %v700, 40
        %v2591 = vpop.permute.xlu0 %2590
        %2592 = vrot.lane.b32.xlu0 %v701, 40
        %v2593 = vpop.permute.xlu0 %2592
        %2594 = vrot.lane.b32.xlu0 %v702, 40
        %v2595 = vpop.permute.xlu0 %2594
        %2596 = vrot.lane.b32.xlu0 %v703, 40
        %v2597 = vpop.permute.xlu0 %2596
        %2598 = vrot.lane.b32.xlu0 %v704, 40
        %v2599 = vpop.permute.xlu0 %2598
        %2600 = vrot.lane.b32.xlu0 %v705, 40
        %v2601 = vpop.permute.xlu0 %2600
        %2602 = vrot.lane.b32.xlu0 %v706, 40
        %v2603 = vpop.permute.xlu0 %2602
        %2604 = vrot.lane.b32.xlu0 %v707, 40
        %v2605 = vpop.permute.xlu0 %2604
        %2606 = vrot.lane.b32.xlu0 %v708, 40
        %v2607 = vpop.permute.xlu0 %2606
        %2608 = vrot.lane.b32.xlu0 %v709, 40
        %v2609 = vpop.permute.xlu0 %2608
        %2610 = vrot.lane.b32.xlu0 %v710, 40
        %v2611 = vpop.permute.xlu0 %2610
        %2612 = vrot.lane.b32.xlu0 %v711, 40
        %v2613 = vpop.permute.xlu0 %2612
        %2614 = vrot.lane.b32.xlu0 %v712, 40
        %v2615 = vpop.permute.xlu0 %2614
        %2616 = vrot.lane.b32.xlu0 %v713, 40
        %v2617 = vpop.permute.xlu0 %2616
        %2618 = vrot.lane.b32.xlu0 %v714, 40
        %v2619 = vpop.permute.xlu0 %2618
        %2620 = vrot.lane.b32.xlu0 %v715, 40
        %v2621 = vpop.permute.xlu0 %2620
        %2622 = vrot.lane.b32.xlu0 %v716, 40
        %v2623 = vpop.permute.xlu0 %2622
        %2624 = vrot.lane.b32.xlu0 %v717, 40
        %v2625 = vpop.permute.xlu0 %2624
        %2690 = vrot.lane.b32.xlu0 %v718, 44
        %v2691 = vpop.permute.xlu0 %2690
        %2692 = vrot.lane.b32.xlu0 %v719, 44
        %v2693 = vpop.permute.xlu0 %2692
        %2694 = vrot.lane.b32.xlu0 %v720, 44
        %v2695 = vpop.permute.xlu0 %2694
        %2696 = vrot.lane.b32.xlu0 %v721, 44
        %v2697 = vpop.permute.xlu0 %2696
        %2698 = vrot.lane.b32.xlu0 %v722, 44
        %v2699 = vpop.permute.xlu0 %2698
        %2700 = vrot.lane.b32.xlu0 %v723, 44
        %v2701 = vpop.permute.xlu0 %2700
        %2702 = vrot.lane.b32.xlu0 %v724, 44
        %v2703 = vpop.permute.xlu0 %2702
        %2704 = vrot.lane.b32.xlu0 %v725, 44
        %v2705 = vpop.permute.xlu0 %2704
        %2706 = vrot.lane.b32.xlu0 %v726, 44
        %v2707 = vpop.permute.xlu0 %2706
        %2708 = vrot.lane.b32.xlu0 %v727, 44
        %v2709 = vpop.permute.xlu0 %2708
        %2710 = vrot.lane.b32.xlu0 %v728, 44
        %v2711 = vpop.permute.xlu0 %2710
        %2712 = vrot.lane.b32.xlu0 %v729, 44
        %v2713 = vpop.permute.xlu0 %2712
        %2714 = vrot.lane.b32.xlu0 %v730, 44
        %v2715 = vpop.permute.xlu0 %2714
        %2716 = vrot.lane.b32.xlu0 %v731, 44
        %v2717 = vpop.permute.xlu0 %2716
        %2718 = vrot.lane.b32.xlu0 %v732, 44
        %v2719 = vpop.permute.xlu0 %2718
        %2720 = vrot.lane.b32.xlu0 %v733, 44
        %v2721 = vpop.permute.xlu0 %2720
        %2722 = vrot.lane.b32.xlu0 %v734, 44
        %v2723 = vpop.permute.xlu0 %2722
        %2724 = vrot.lane.b32.xlu0 %v735, 44
        %v2725 = vpop.permute.xlu0 %2724
        %2726 = vrot.lane.b32.xlu0 %v736, 44
        %v2727 = vpop.permute.xlu0 %2726
        %2728 = vrot.lane.b32.xlu0 %v737, 44
        %v2729 = vpop.permute.xlu0 %2728
        %2730 = vrot.lane.b32.xlu0 %v738, 44
        %v2731 = vpop.permute.xlu0 %2730
        %2732 = vrot.lane.b32.xlu0 %v739, 44
        %v2733 = vpop.permute.xlu0 %2732
        %2734 = vrot.lane.b32.xlu0 %v740, 44
        %v2735 = vpop.permute.xlu0 %2734
        %2736 = vrot.lane.b32.xlu0 %v741, 44
        %v2737 = vpop.permute.xlu0 %2736
        %2738 = vrot.lane.b32.xlu0 %v742, 44
        %v2739 = vpop.permute.xlu0 %2738
        %2740 = vrot.lane.b32.xlu0 %v743, 44
        %v2741 = vpop.permute.xlu0 %2740
        %2742 = vrot.lane.b32.xlu0 %v744, 44
        %v2743 = vpop.permute.xlu0 %2742
        %2744 = vrot.lane.b32.xlu0 %v745, 44
        %v2745 = vpop.permute.xlu0 %2744
        %2746 = vrot.lane.b32.xlu0 %v746, 44
        %v2747 = vpop.permute.xlu0 %2746
        %2748 = vrot.lane.b32.xlu0 %v747, 44
        %v2749 = vpop.permute.xlu0 %2748
        %2750 = vrot.lane.b32.xlu0 %v748, 44
        %v2751 = vpop.permute.xlu0 %2750
        %2752 = vrot.lane.b32.xlu0 %v749, 44
        %v2753 = vpop.permute.xlu0 %2752
        %2818 = vrot.lane.b32.xlu0 %v750, 48
        %v2819 = vpop.permute.xlu0 %2818
        %2820 = vrot.lane.b32.xlu0 %v751, 48
        %v2821 = vpop.permute.xlu0 %2820
        %2822 = vrot.lane.b32.xlu0 %v752, 48
        %v2823 = vpop.permute.xlu0 %2822
        %2824 = vrot.lane.b32.xlu0 %v753, 48
        %v2825 = vpop.permute.xlu0 %2824
        %2826 = vrot.lane.b32.xlu0 %v754, 48
        %v2827 = vpop.permute.xlu0 %2826
        %2828 = vrot.lane.b32.xlu0 %v755, 48
        %v2829 = vpop.permute.xlu0 %2828
        %2830 = vrot.lane.b32.xlu0 %v756, 48
        %v2831 = vpop.permute.xlu0 %2830
        %2832 = vrot.lane.b32.xlu0 %v757, 48
        %v2833 = vpop.permute.xlu0 %2832
        %2834 = vrot.lane.b32.xlu0 %v758, 48
        %v2835 = vpop.permute.xlu0 %2834
        %2836 = vrot.lane.b32.xlu0 %v759, 48
        %v2837 = vpop.permute.xlu0 %2836
        %2838 = vrot.lane.b32.xlu0 %v760, 48
        %v2839 = vpop.permute.xlu0 %2838
        %2840 = vrot.lane.b32.xlu0 %v761, 48
        %v2841 = vpop.permute.xlu0 %2840
        %2842 = vrot.lane.b32.xlu0 %v762, 48
        %v2843 = vpop.permute.xlu0 %2842
        %2844 = vrot.lane.b32.xlu0 %v763, 48
        %v2845 = vpop.permute.xlu0 %2844
        %2846 = vrot.lane.b32.xlu0 %v764, 48
        %v2847 = vpop.permute.xlu0 %2846
        %2848 = vrot.lane.b32.xlu0 %v765, 48
        %v2849 = vpop.permute.xlu0 %2848
        %2850 = vrot.lane.b32.xlu0 %v766, 48
        %v2851 = vpop.permute.xlu0 %2850
        %2852 = vrot.lane.b32.xlu0 %v767, 48
        %v2853 = vpop.permute.xlu0 %2852
        %2854 = vrot.lane.b32.xlu0 %v768, 48
        %v2855 = vpop.permute.xlu0 %2854
        %2856 = vrot.lane.b32.xlu0 %v769, 48
        %v2857 = vpop.permute.xlu0 %2856
        %2858 = vrot.lane.b32.xlu0 %v770, 48
        %v2859 = vpop.permute.xlu0 %2858
        %2860 = vrot.lane.b32.xlu0 %v771, 48
        %v2861 = vpop.permute.xlu0 %2860
        %2862 = vrot.lane.b32.xlu0 %v772, 48
        %v2863 = vpop.permute.xlu0 %2862
        %2864 = vrot.lane.b32.xlu0 %v773, 48
        %v2865 = vpop.permute.xlu0 %2864
        %2866 = vrot.lane.b32.xlu0 %v774, 48
        %v2867 = vpop.permute.xlu0 %2866
        %2868 = vrot.lane.b32.xlu0 %v775, 48
        %v2869 = vpop.permute.xlu0 %2868
        %2870 = vrot.lane.b32.xlu0 %v776, 48
        %v2871 = vpop.permute.xlu0 %2870
        %2872 = vrot.lane.b32.xlu0 %v777, 48
        %v2873 = vpop.permute.xlu0 %2872
        %2874 = vrot.lane.b32.xlu0 %v778, 48
        %v2875 = vpop.permute.xlu0 %2874
        %2876 = vrot.lane.b32.xlu0 %v779, 48
        %v2877 = vpop.permute.xlu0 %2876
        %2878 = vrot.lane.b32.xlu0 %v780, 48
        %v2879 = vpop.permute.xlu0 %2878
        %2880 = vrot.lane.b32.xlu0 %v781, 48
        %v2881 = vpop.permute.xlu0 %2880
        %2914 = vrot.lane.b32.xlu0 %v492, 52
        %v2915 = vpop.permute.xlu0 %2914
        %2916 = vrot.lane.b32.xlu0 %v493, 52
        %v2917 = vpop.permute.xlu0 %2916
        %2918 = vrot.lane.b32.xlu0 %v494, 52
        %v2919 = vpop.permute.xlu0 %2918
        %2920 = vrot.lane.b32.xlu0 %v495, 52
        %v2921 = vpop.permute.xlu0 %2920
        %2922 = vrot.lane.b32.xlu0 %v496, 52
        %v2923 = vpop.permute.xlu0 %2922
        %2924 = vrot.lane.b32.xlu0 %v497, 52
        %v2925 = vpop.permute.xlu0 %2924
        %2926 = vrot.lane.b32.xlu0 %v498, 52
        %v2927 = vpop.permute.xlu0 %2926
        %2928 = vrot.lane.b32.xlu0 %v499, 52
        %v2929 = vpop.permute.xlu0 %2928
        %2930 = vrot.lane.b32.xlu0 %v500, 52
        %v2931 = vpop.permute.xlu0 %2930
        %2932 = vrot.lane.b32.xlu0 %v501, 52
        %v2933 = vpop.permute.xlu0 %2932
        %2934 = vrot.lane.b32.xlu0 %v502, 52
        %v2935 = vpop.permute.xlu0 %2934
        %2936 = vrot.lane.b32.xlu0 %v503, 52
        %v2937 = vpop.permute.xlu0 %2936
        %2938 = vrot.lane.b32.xlu0 %v504, 52
        %v2939 = vpop.permute.xlu0 %2938
        %2940 = vrot.lane.b32.xlu0 %v505, 52
        %v2941 = vpop.permute.xlu0 %2940
        %2942 = vrot.lane.b32.xlu0 %v506, 52
        %v2943 = vpop.permute.xlu0 %2942
        %2944 = vrot.lane.b32.xlu0 %v507, 52
        %v2945 = vpop.permute.xlu0 %2944
        %2946 = vrot.lane.b32.xlu0 %v508, 52
        %v2947 = vpop.permute.xlu0 %2946
        %2948 = vrot.lane.b32.xlu0 %v509, 52
        %v2949 = vpop.permute.xlu0 %2948
        %2950 = vrot.lane.b32.xlu0 %v510, 52
        %v2951 = vpop.permute.xlu0 %2950
        %2952 = vrot.lane.b32.xlu0 %v511, 52
        %v2953 = vpop.permute.xlu0 %2952
        %2954 = vrot.lane.b32.xlu0 %v512, 52
        %v2955 = vpop.permute.xlu0 %2954
        %2956 = vrot.lane.b32.xlu0 %v513, 52
        %v2957 = vpop.permute.xlu0 %2956
        %2958 = vrot.lane.b32.xlu0 %v514, 52
        %v2959 = vpop.permute.xlu0 %2958
        %2960 = vrot.lane.b32.xlu0 %v515, 52
        %v2961 = vpop.permute.xlu0 %2960
        %2962 = vrot.lane.b32.xlu0 %v516, 52
        %v2963 = vpop.permute.xlu0 %2962
        %2964 = vrot.lane.b32.xlu0 %v517, 52
        %v2965 = vpop.permute.xlu0 %2964
        %2966 = vrot.lane.b32.xlu0 %v518, 52
        %v2967 = vpop.permute.xlu0 %2966
        %2968 = vrot.lane.b32.xlu0 %v519, 52
        %v2969 = vpop.permute.xlu0 %2968
        %2970 = vrot.lane.b32.xlu0 %v520, 52
        %v2971 = vpop.permute.xlu0 %2970
        %2972 = vrot.lane.b32.xlu0 %v521, 52
        %v2973 = vpop.permute.xlu0 %2972
        %2974 = vrot.lane.b32.xlu0 %v522, 52
        %v2975 = vpop.permute.xlu0 %2974
        %2976 = vrot.lane.b32.xlu0 %v523, 52
        %v2977 = vpop.permute.xlu0 %2976
        %3042 = vrot.lane.b32.xlu0 %v782, 56
        %v3043 = vpop.permute.xlu0 %3042
        %3044 = vrot.lane.b32.xlu0 %v783, 56
        %v3045 = vpop.permute.xlu0 %3044
        %3046 = vrot.lane.b32.xlu0 %v784, 56
        %v3047 = vpop.permute.xlu0 %3046
        %3048 = vrot.lane.b32.xlu0 %v785, 56
        %v3049 = vpop.permute.xlu0 %3048
        %3050 = vrot.lane.b32.xlu0 %v786, 56
        %v3051 = vpop.permute.xlu0 %3050
        %3052 = vrot.lane.b32.xlu0 %v787, 56
        %v3053 = vpop.permute.xlu0 %3052
        %3054 = vrot.lane.b32.xlu0 %v788, 56
        %v3055 = vpop.permute.xlu0 %3054
        %3056 = vrot.lane.b32.xlu0 %v789, 56
        %v3057 = vpop.permute.xlu0 %3056
        %3058 = vrot.lane.b32.xlu0 %v790, 56
        %v3059 = vpop.permute.xlu0 %3058
        %3060 = vrot.lane.b32.xlu0 %v791, 56
        %v3061 = vpop.permute.xlu0 %3060
        %3062 = vrot.lane.b32.xlu0 %v792, 56
        %v3063 = vpop.permute.xlu0 %3062
        %3064 = vrot.lane.b32.xlu0 %v793, 56
        %v3065 = vpop.permute.xlu0 %3064
        %3066 = vrot.lane.b32.xlu0 %v794, 56
        %v3067 = vpop.permute.xlu0 %3066
        %3068 = vrot.lane.b32.xlu0 %v795, 56
        %v3069 = vpop.permute.xlu0 %3068
        %3070 = vrot.lane.b32.xlu0 %v796, 56
        %v3071 = vpop.permute.xlu0 %3070
        %3072 = vrot.lane.b32.xlu0 %v797, 56
        %v3073 = vpop.permute.xlu0 %3072
        %3074 = vrot.lane.b32.xlu0 %v798, 56
        %v3075 = vpop.permute.xlu0 %3074
        %3076 = vrot.lane.b32.xlu0 %v799, 56
        %v3077 = vpop.permute.xlu0 %3076
        %3078 = vrot.lane.b32.xlu0 %v800, 56
        %v3079 = vpop.permute.xlu0 %3078
        %3080 = vrot.lane.b32.xlu0 %v801, 56
        %v3081 = vpop.permute.xlu0 %3080
        %3082 = vrot.lane.b32.xlu0 %v802, 56
        %v3083 = vpop.permute.xlu0 %3082
        %3084 = vrot.lane.b32.xlu0 %v803, 56
        %v3085 = vpop.permute.xlu0 %3084
        %3086 = vrot.lane.b32.xlu0 %v804, 56
        %v3087 = vpop.permute.xlu0 %3086
        %3088 = vrot.lane.b32.xlu0 %v805, 56
        %v3089 = vpop.permute.xlu0 %3088
        %3090 = vrot.lane.b32.xlu0 %v806, 56
        %v3091 = vpop.permute.xlu0 %3090
        %3092 = vrot.lane.b32.xlu0 %v807, 56
        %v3093 = vpop.permute.xlu0 %3092
        %3094 = vrot.lane.b32.xlu0 %v808, 56
        %v3095 = vpop.permute.xlu0 %3094
        %3096 = vrot.lane.b32.xlu0 %v809, 56
        %v3097 = vpop.permute.xlu0 %3096
        %3098 = vrot.lane.b32.xlu0 %v810, 56
        %v3099 = vpop.permute.xlu0 %3098
        %3100 = vrot.lane.b32.xlu0 %v811, 56
        %v3101 = vpop.permute.xlu0 %3100
        %3102 = vrot.lane.b32.xlu0 %v812, 56
        %v3103 = vpop.permute.xlu0 %3102
        %3104 = vrot.lane.b32.xlu0 %v813, 56
        %v3105 = vpop.permute.xlu0 %3104
        %3170 = vrot.lane.b32.xlu0 %v815, 60
        %v3171 = vpop.permute.xlu0 %3170
        %3172 = vrot.lane.b32.xlu0 %v816, 60
        %v3173 = vpop.permute.xlu0 %3172
        %3174 = vrot.lane.b32.xlu0 %v817, 60
        %v3175 = vpop.permute.xlu0 %3174
        %3176 = vrot.lane.b32.xlu0 %v818, 60
        %v3177 = vpop.permute.xlu0 %3176
        %3178 = vrot.lane.b32.xlu0 %v819, 60
        %v3179 = vpop.permute.xlu0 %3178
        %3180 = vrot.lane.b32.xlu0 %v820, 60
        %v3181 = vpop.permute.xlu0 %3180
        %3182 = vrot.lane.b32.xlu0 %v821, 60
        %v3183 = vpop.permute.xlu0 %3182
        %3184 = vrot.lane.b32.xlu0 %v822, 60
        %v3185 = vpop.permute.xlu0 %3184
        %3186 = vrot.lane.b32.xlu0 %v823, 60
        %v3187 = vpop.permute.xlu0 %3186
        %3188 = vrot.lane.b32.xlu0 %v824, 60
        %v3189 = vpop.permute.xlu0 %3188
        %3190 = vrot.lane.b32.xlu0 %v825, 60
        %v3191 = vpop.permute.xlu0 %3190
        %3192 = vrot.lane.b32.xlu0 %v826, 60
        %v3193 = vpop.permute.xlu0 %3192
        %3194 = vrot.lane.b32.xlu0 %v827, 60
        %v3195 = vpop.permute.xlu0 %3194
        %3196 = vrot.lane.b32.xlu0 %v828, 60
        %v3197 = vpop.permute.xlu0 %3196
        %3198 = vrot.lane.b32.xlu0 %v829, 60
        %v3199 = vpop.permute.xlu0 %3198
        %3200 = vrot.lane.b32.xlu0 %v830, 60
        %v3201 = vpop.permute.xlu0 %3200
        %3202 = vrot.lane.b32.xlu0 %v831, 60
        %v3203 = vpop.permute.xlu0 %3202
        %3204 = vrot.lane.b32.xlu0 %v832, 60
        %v3205 = vpop.permute.xlu0 %3204
        %3206 = vrot.lane.b32.xlu0 %v833, 60
        %v3207 = vpop.permute.xlu0 %3206
        %3208 = vrot.lane.b32.xlu0 %v834, 60
        %v3209 = vpop.permute.xlu0 %3208
        %3210 = vrot.lane.b32.xlu0 %v835, 60
        %v3211 = vpop.permute.xlu0 %3210
        %3212 = vrot.lane.b32.xlu0 %v836, 60
        %v3213 = vpop.permute.xlu0 %3212
        %3214 = vrot.lane.b32.xlu0 %v837, 60
        %v3215 = vpop.permute.xlu0 %3214
        %3216 = vrot.lane.b32.xlu0 %v838, 60
        %v3217 = vpop.permute.xlu0 %3216
        %3218 = vrot.lane.b32.xlu0 %v839, 60
        %v3219 = vpop.permute.xlu0 %3218
        %3220 = vrot.lane.b32.xlu0 %v840, 60
        %v3221 = vpop.permute.xlu0 %3220
        %3222 = vrot.lane.b32.xlu0 %v841, 60
        %v3223 = vpop.permute.xlu0 %3222
        %3224 = vrot.lane.b32.xlu0 %v842, 60
        %v3225 = vpop.permute.xlu0 %3224
        %3226 = vrot.lane.b32.xlu0 %v843, 60
        %v3227 = vpop.permute.xlu0 %3226
        %3228 = vrot.lane.b32.xlu0 %v844, 60
        %v3229 = vpop.permute.xlu0 %3228
        %3230 = vrot.lane.b32.xlu0 %v845, 60
        %v3231 = vpop.permute.xlu0 %3230
        %3232 = vrot.lane.b32.xlu0 %v846, 60
        %v3233 = vpop.permute.xlu0 %3232
        %v3266 = vsel %vm223, %v364, %v1411
        %v3267 = vsel %vm223, %v365, %v1413
        %v3268 = vsel %vm223, %v366, %v1415
        %v3269 = vsel %vm223, %v367, %v1417
        %v3270 = vsel %vm223, %v368, %v1419
        %v3271 = vsel %vm223, %v369, %v1421
        %v3272 = vsel %vm223, %v370, %v1423
        %v3273 = vsel %vm223, %v371, %v1425
        %v3274 = vsel %vm223, %v372, %v1427
        %v3275 = vsel %vm223, %v373, %v1429
        %v3276 = vsel %vm223, %v374, %v1431
        %v3277 = vsel %vm223, %v375, %v1433
        %v3278 = vsel %vm223, %v376, %v1435
        %v3279 = vsel %vm223, %v377, %v1437
        %v3280 = vsel %vm223, %v378, %v1439
        %v3281 = vsel %vm223, %v379, %v1441
        %v3282 = vsel %vm223, %v380, %v1443
        %v3283 = vsel %vm223, %v381, %v1445
        %v3284 = vsel %vm223, %v382, %v1447
        %v3285 = vsel %vm223, %v383, %v1449
        %v3286 = vsel %vm223, %v384, %v1451
        %v3287 = vsel %vm223, %v385, %v1453
        %v3288 = vsel %vm223, %v386, %v1455
        %v3289 = vsel %vm223, %v387, %v1457
        %v3290 = vsel %vm223, %v388, %v1459
        %v3291 = vsel %vm223, %v389, %v1461
        %v3292 = vsel %vm223, %v390, %v1463
        %v3293 = vsel %vm223, %v391, %v1465
        %v3294 = vsel %vm223, %v392, %v1467
        %v3295 = vsel %vm223, %v393, %v1469
        %v3296 = vsel %vm223, %v394, %v1471
        %v3297 = vsel %vm223, %v395, %v1473
        %vm3298 = vcmask 64512
        %v3299 = vsel %vm3298, %v3266, %v1539
        %v3300 = vsel %vm3298, %v3267, %v1541
        %v3301 = vsel %vm3298, %v3268, %v1543
        %v3302 = vsel %vm3298, %v3269, %v1545
        %v3303 = vsel %vm3298, %v3270, %v1547
        %v3304 = vsel %vm3298, %v3271, %v1549
        %v3305 = vsel %vm3298, %v3272, %v1551
        %v3306 = vsel %vm3298, %v3273, %v1553
        %v3307 = vsel %vm3298, %v3274, %v1555
        %v3308 = vsel %vm3298, %v3275, %v1557
        %v3309 = vsel %vm3298, %v3276, %v1559
        %v3310 = vsel %vm3298, %v3277, %v1561
        %v3311 = vsel %vm3298, %v3278, %v1563
        %v3312 = vsel %vm3298, %v3279, %v1565
        %v3313 = vsel %vm3298, %v3280, %v1567
        %v3314 = vsel %vm3298, %v3281, %v1569
        %v3315 = vsel %vm3298, %v3282, %v1571
        %v3316 = vsel %vm3298, %v3283, %v1573
        %v3317 = vsel %vm3298, %v3284, %v1575
        %v3318 = vsel %vm3298, %v3285, %v1577
        %v3319 = vsel %vm3298, %v3286, %v1579
        %v3320 = vsel %vm3298, %v3287, %v1581
        %v3321 = vsel %vm3298, %v3288, %v1583
        %v3322 = vsel %vm3298, %v3289, %v1585
        %v3323 = vsel %vm3298, %v3290, %v1587
        %v3324 = vsel %vm3298, %v3291, %v1589
        %v3325 = vsel %vm3298, %v3292, %v1591
        %v3326 = vsel %vm3298, %v3293, %v1593
        %v3327 = vsel %vm3298, %v3294, %v1595
        %v3328 = vsel %vm3298, %v3295, %v1597
        %v3329 = vsel %vm3298, %v3296, %v1599
        %v3330 = vsel %vm3298, %v3297, %v1601
        %vm3331 = vcmask 97280
        %v3332 = vsel %vm3331, %v3299, %v1667
        %v3333 = vsel %vm3331, %v3300, %v1669
        %v3334 = vsel %vm3331, %v3301, %v1671
        %v3335 = vsel %vm3331, %v3302, %v1673
        %v3336 = vsel %vm3331, %v3303, %v1675
        %v3337 = vsel %vm3331, %v3304, %v1677
        %v3338 = vsel %vm3331, %v3305, %v1679
        %v3339 = vsel %vm3331, %v3306, %v1681
        %v3340 = vsel %vm3331, %v3307, %v1683
        %v3341 = vsel %vm3331, %v3308, %v1685
        %v3342 = vsel %vm3331, %v3309, %v1687
        %v3343 = vsel %vm3331, %v3310, %v1689
        %v3344 = vsel %vm3331, %v3311, %v1691
        %v3345 = vsel %vm3331, %v3312, %v1693
        %v3346 = vsel %vm3331, %v3313, %v1695
        %v3347 = vsel %vm3331, %v3314, %v1697
        %v3348 = vsel %vm3331, %v3315, %v1699
        %v3349 = vsel %vm3331, %v3316, %v1701
        %v3350 = vsel %vm3331, %v3317, %v1703
        %v3351 = vsel %vm3331, %v3318, %v1705
        %v3352 = vsel %vm3331, %v3319, %v1707
        %v3353 = vsel %vm3331, %v3320, %v1709
        %v3354 = vsel %vm3331, %v3321, %v1711
        %v3355 = vsel %vm3331, %v3322, %v1713
        %v3356 = vsel %vm3331, %v3323, %v1715
        %v3357 = vsel %vm3331, %v3324, %v1717
        %v3358 = vsel %vm3331, %v3325, %v1719
        %v3359 = vsel %vm3331, %v3326, %v1721
        %v3360 = vsel %vm3331, %v3327, %v1723
        %v3361 = vsel %vm3331, %v3328, %v1725
        %v3362 = vsel %vm3331, %v3329, %v1727
        %v3363 = vsel %vm3331, %v3330, %v1729
        %vm3364 = vcmask 130048
        %v3365 = vsel %vm3364, %v3332, %v1795
        %v3366 = vsel %vm3364, %v3333, %v1797
        %v3367 = vsel %vm3364, %v3334, %v1799
        %v3368 = vsel %vm3364, %v3335, %v1801
        %v3369 = vsel %vm3364, %v3336, %v1803
        %v3370 = vsel %vm3364, %v3337, %v1805
        %v3371 = vsel %vm3364, %v3338, %v1807
        %v3372 = vsel %vm3364, %v3339, %v1809
        %v3373 = vsel %vm3364, %v3340, %v1811
        %v3374 = vsel %vm3364, %v3341, %v1813
        %v3375 = vsel %vm3364, %v3342, %v1815
        %v3376 = vsel %vm3364, %v3343, %v1817
        %v3377 = vsel %vm3364, %v3344, %v1819
        %v3378 = vsel %vm3364, %v3345, %v1821
        %v3379 = vsel %vm3364, %v3346, %v1823
        %v3380 = vsel %vm3364, %v3347, %v1825
        %v3381 = vsel %vm3364, %v3348, %v1827
        %v3382 = vsel %vm3364, %v3349, %v1829
        %v3383 = vsel %vm3364, %v3350, %v1831
        %v3384 = vsel %vm3364, %v3351, %v1833
        %v3385 = vsel %vm3364, %v3352, %v1835
        %v3386 = vsel %vm3364, %v3353, %v1837
        %v3387 = vsel %vm3364, %v3354, %v1839
        %v3388 = vsel %vm3364, %v3355, %v1841
        %v3389 = vsel %vm3364, %v3356, %v1843
        %v3390 = vsel %vm3364, %v3357, %v1845
        %v3391 = vsel %vm3364, %v3358, %v1847
        %v3392 = vsel %vm3364, %v3359, %v1849
        %v3393 = vsel %vm3364, %v3360, %v1851
        %v3394 = vsel %vm3364, %v3361, %v1853
        %v3395 = vsel %vm3364, %v3362, %v1855
        %v3396 = vsel %vm3364, %v3363, %v1857
        %vm3397 = vcmask 162816
        %v3398 = vsel %vm3397, %v3365, %v1923
        %v3399 = vsel %vm3397, %v3366, %v1925
        %v3400 = vsel %vm3397, %v3367, %v1927
        %v3401 = vsel %vm3397, %v3368, %v1929
        %v3402 = vsel %vm3397, %v3369, %v1931
        %v3403 = vsel %vm3397, %v3370, %v1933
        %v3404 = vsel %vm3397, %v3371, %v1935
        %v3405 = vsel %vm3397, %v3372, %v1937
        %v3406 = vsel %vm3397, %v3373, %v1939
        %v3407 = vsel %vm3397, %v3374, %v1941
        %v3408 = vsel %vm3397, %v3375, %v1943
        %v3409 = vsel %vm3397, %v3376, %v1945
        %v3410 = vsel %vm3397, %v3377, %v1947
        %v3411 = vsel %vm3397, %v3378, %v1949
        %v3412 = vsel %vm3397, %v3379, %v1951
        %v3413 = vsel %vm3397, %v3380, %v1953
        %v3414 = vsel %vm3397, %v3381, %v1955
        %v3415 = vsel %vm3397, %v3382, %v1957
        %v3416 = vsel %vm3397, %v3383, %v1959
        %v3417 = vsel %vm3397, %v3384, %v1961
        %v3418 = vsel %vm3397, %v3385, %v1963
        %v3419 = vsel %vm3397, %v3386, %v1965
        %v3420 = vsel %vm3397, %v3387, %v1967
        %v3421 = vsel %vm3397, %v3388, %v1969
        %v3422 = vsel %vm3397, %v3389, %v1971
        %v3423 = vsel %vm3397, %v3390, %v1973
        %v3424 = vsel %vm3397, %v3391, %v1975
        %v3425 = vsel %vm3397, %v3392, %v1977
        %v3426 = vsel %vm3397, %v3393, %v1979
        %v3427 = vsel %vm3397, %v3394, %v1981
        %v3428 = vsel %vm3397, %v3395, %v1983
        %v3429 = vsel %vm3397, %v3396, %v1985
        %vm3430 = vcmask 195584
        %v3431 = vsel %vm3430, %v3398, %v2051
        %v3432 = vsel %vm3430, %v3399, %v2053
        %v3433 = vsel %vm3430, %v3400, %v2055
        %v3434 = vsel %vm3430, %v3401, %v2057
        %v3435 = vsel %vm3430, %v3402, %v2059
        %v3436 = vsel %vm3430, %v3403, %v2061
        %v3437 = vsel %vm3430, %v3404, %v2063
        %v3438 = vsel %vm3430, %v3405, %v2065
        %v3439 = vsel %vm3430, %v3406, %v2067
        %v3440 = vsel %vm3430, %v3407, %v2069
        %v3441 = vsel %vm3430, %v3408, %v2071
        %v3442 = vsel %vm3430, %v3409, %v2073
        %v3443 = vsel %vm3430, %v3410, %v2075
        %v3444 = vsel %vm3430, %v3411, %v2077
        %v3445 = vsel %vm3430, %v3412, %v2079
        %v3446 = vsel %vm3430, %v3413, %v2081
        %v3447 = vsel %vm3430, %v3414, %v2083
        %v3448 = vsel %vm3430, %v3415, %v2085
        %v3449 = vsel %vm3430, %v3416, %v2087
        %v3450 = vsel %vm3430, %v3417, %v2089
        %v3451 = vsel %vm3430, %v3418, %v2091
        %v3452 = vsel %vm3430, %v3419, %v2093
        %v3453 = vsel %vm3430, %v3420, %v2095
        %v3454 = vsel %vm3430, %v3421, %v2097
        %v3455 = vsel %vm3430, %v3422, %v2099
        %v3456 = vsel %vm3430, %v3423, %v2101
        %v3457 = vsel %vm3430, %v3424, %v2103
        %v3458 = vsel %vm3430, %v3425, %v2105
        %v3459 = vsel %vm3430, %v3426, %v2107
        %v3460 = vsel %vm3430, %v3427, %v2109
        %v3461 = vsel %vm3430, %v3428, %v2111
        %v3462 = vsel %vm3430, %v3429, %v2113
        %vm3463 = vcmask 228352
        %v3464 = vsel %vm3463, %v3431, %v2179
        %v3465 = vsel %vm3463, %v3432, %v2181
        %v3466 = vsel %vm3463, %v3433, %v2183
        %v3467 = vsel %vm3463, %v3434, %v2185
        %v3468 = vsel %vm3463, %v3435, %v2187
        %v3469 = vsel %vm3463, %v3436, %v2189
        %v3470 = vsel %vm3463, %v3437, %v2191
        %v3471 = vsel %vm3463, %v3438, %v2193
        %v3472 = vsel %vm3463, %v3439, %v2195
        %v3473 = vsel %vm3463, %v3440, %v2197
        %v3474 = vsel %vm3463, %v3441, %v2199
        %v3475 = vsel %vm3463, %v3442, %v2201
        %v3476 = vsel %vm3463, %v3443, %v2203
        %v3477 = vsel %vm3463, %v3444, %v2205
        %v3478 = vsel %vm3463, %v3445, %v2207
        %v3479 = vsel %vm3463, %v3446, %v2209
        %v3480 = vsel %vm3463, %v3447, %v2211
        %v3481 = vsel %vm3463, %v3448, %v2213
        %v3482 = vsel %vm3463, %v3449, %v2215
        %v3483 = vsel %vm3463, %v3450, %v2217
        %v3484 = vsel %vm3463, %v3451, %v2219
        %v3485 = vsel %vm3463, %v3452, %v2221
        %v3486 = vsel %vm3463, %v3453, %v2223
        %v3487 = vsel %vm3463, %v3454, %v2225
        %v3488 = vsel %vm3463, %v3455, %v2227
        %v3489 = vsel %vm3463, %v3456, %v2229
        %v3490 = vsel %vm3463, %v3457, %v2231
        %v3491 = vsel %vm3463, %v3458, %v2233
        %v3492 = vsel %vm3463, %v3459, %v2235
        %v3493 = vsel %vm3463, %v3460, %v2237
        %v3494 = vsel %vm3463, %v3461, %v2239
        %v3495 = vsel %vm3463, %v3462, %v2241
        %vm3496 = vcmask 261120
        %v3497 = vsel %vm3496, %v3464, %v2307
        %v3498 = vsel %vm3496, %v3465, %v2309
        %v3499 = vsel %vm3496, %v3466, %v2311
        %v3500 = vsel %vm3496, %v3467, %v2313
        %v3501 = vsel %vm3496, %v3468, %v2315
        %v3502 = vsel %vm3496, %v3469, %v2317
        %v3503 = vsel %vm3496, %v3470, %v2319
        %v3504 = vsel %vm3496, %v3471, %v2321
        %v3505 = vsel %vm3496, %v3472, %v2323
        %v3506 = vsel %vm3496, %v3473, %v2325
        %v3507 = vsel %vm3496, %v3474, %v2327
        %v3508 = vsel %vm3496, %v3475, %v2329
        %v3509 = vsel %vm3496, %v3476, %v2331
        %v3510 = vsel %vm3496, %v3477, %v2333
        %v3511 = vsel %vm3496, %v3478, %v2335
        %v3512 = vsel %vm3496, %v3479, %v2337
        %v3513 = vsel %vm3496, %v3480, %v2339
        %v3514 = vsel %vm3496, %v3481, %v2341
        %v3515 = vsel %vm3496, %v3482, %v2343
        %v3516 = vsel %vm3496, %v3483, %v2345
        %v3517 = vsel %vm3496, %v3484, %v2347
        %v3518 = vsel %vm3496, %v3485, %v2349
        %v3519 = vsel %vm3496, %v3486, %v2351
        %v3520 = vsel %vm3496, %v3487, %v2353
        %v3521 = vsel %vm3496, %v3488, %v2355
        %v3522 = vsel %vm3496, %v3489, %v2357
        %v3523 = vsel %vm3496, %v3490, %v2359
        %v3524 = vsel %vm3496, %v3491, %v2361
        %v3525 = vsel %vm3496, %v3492, %v2363
        %v3526 = vsel %vm3496, %v3493, %v2365
        %v3527 = vsel %vm3496, %v3494, %v2367
        %v3528 = vsel %vm3496, %v3495, %v2369
        %vm3529 = vcmask 293888
        %v3530 = vsel %vm3529, %v3497, %v2435
        %v3531 = vsel %vm3529, %v3498, %v2437
        %v3532 = vsel %vm3529, %v3499, %v2439
        %v3533 = vsel %vm3529, %v3500, %v2441
        %v3534 = vsel %vm3529, %v3501, %v2443
        %v3535 = vsel %vm3529, %v3502, %v2445
        %v3536 = vsel %vm3529, %v3503, %v2447
        %v3537 = vsel %vm3529, %v3504, %v2449
        %v3538 = vsel %vm3529, %v3505, %v2451
        %v3539 = vsel %vm3529, %v3506, %v2453
        %v3540 = vsel %vm3529, %v3507, %v2455
        %v3541 = vsel %vm3529, %v3508, %v2457
        %v3542 = vsel %vm3529, %v3509, %v2459
        %v3543 = vsel %vm3529, %v3510, %v2461
        %v3544 = vsel %vm3529, %v3511, %v2463
        %v3545 = vsel %vm3529, %v3512, %v2465
        %v3546 = vsel %vm3529, %v3513, %v2467
        %v3547 = vsel %vm3529, %v3514, %v2469
        %v3548 = vsel %vm3529, %v3515, %v2471
        %v3549 = vsel %vm3529, %v3516, %v2473
        %v3550 = vsel %vm3529, %v3517, %v2475
        %v3551 = vsel %vm3529, %v3518, %v2477
        %v3552 = vsel %vm3529, %v3519, %v2479
        %v3553 = vsel %vm3529, %v3520, %v2481
        %v3554 = vsel %vm3529, %v3521, %v2483
        %v3555 = vsel %vm3529, %v3522, %v2485
        %v3556 = vsel %vm3529, %v3523, %v2487
        %v3557 = vsel %vm3529, %v3524, %v2489
        %v3558 = vsel %vm3529, %v3525, %v2491
        %v3559 = vsel %vm3529, %v3526, %v2493
        %v3560 = vsel %vm3529, %v3527, %v2495
        %v3561 = vsel %vm3529, %v3528, %v2497
        %vm3562 = vcmask 326656
        %v3563 = vsel %vm3562, %v3530, %v2563
        %v3564 = vsel %vm3562, %v3531, %v2565
        %v3565 = vsel %vm3562, %v3532, %v2567
        %v3566 = vsel %vm3562, %v3533, %v2569
        %v3567 = vsel %vm3562, %v3534, %v2571
        %v3568 = vsel %vm3562, %v3535, %v2573
        %v3569 = vsel %vm3562, %v3536, %v2575
        %v3570 = vsel %vm3562, %v3537, %v2577
        %v3571 = vsel %vm3562, %v3538, %v2579
        %v3572 = vsel %vm3562, %v3539, %v2581
        %v3573 = vsel %vm3562, %v3540, %v2583
        %v3574 = vsel %vm3562, %v3541, %v2585
        %v3575 = vsel %vm3562, %v3542, %v2587
        %v3576 = vsel %vm3562, %v3543, %v2589
        %v3577 = vsel %vm3562, %v3544, %v2591
        %v3578 = vsel %vm3562, %v3545, %v2593
        %v3579 = vsel %vm3562, %v3546, %v2595
        %v3580 = vsel %vm3562, %v3547, %v2597
        %v3581 = vsel %vm3562, %v3548, %v2599
        %v3582 = vsel %vm3562, %v3549, %v2601
        %v3583 = vsel %vm3562, %v3550, %v2603
        %v3584 = vsel %vm3562, %v3551, %v2605
        %v3585 = vsel %vm3562, %v3552, %v2607
        %v3586 = vsel %vm3562, %v3553, %v2609
        %v3587 = vsel %vm3562, %v3554, %v2611
        %v3588 = vsel %vm3562, %v3555, %v2613
        %v3589 = vsel %vm3562, %v3556, %v2615
        %v3590 = vsel %vm3562, %v3557, %v2617
        %v3591 = vsel %vm3562, %v3558, %v2619
        %v3592 = vsel %vm3562, %v3559, %v2621
        %v3593 = vsel %vm3562, %v3560, %v2623
        %v3594 = vsel %vm3562, %v3561, %v2625
        %vm3595 = vcmask 359424
        %v3596 = vsel %vm3595, %v3563, %v2691
        %v3597 = vsel %vm3595, %v3564, %v2693
        %v3598 = vsel %vm3595, %v3565, %v2695
        %v3599 = vsel %vm3595, %v3566, %v2697
        %v3600 = vsel %vm3595, %v3567, %v2699
        %v3601 = vsel %vm3595, %v3568, %v2701
        %v3602 = vsel %vm3595, %v3569, %v2703
        %v3603 = vsel %vm3595, %v3570, %v2705
        %v3604 = vsel %vm3595, %v3571, %v2707
        %v3605 = vsel %vm3595, %v3572, %v2709
        %v3606 = vsel %vm3595, %v3573, %v2711
        %v3607 = vsel %vm3595, %v3574, %v2713
        %v3608 = vsel %vm3595, %v3575, %v2715
        %v3609 = vsel %vm3595, %v3576, %v2717
        %v3610 = vsel %vm3595, %v3577, %v2719
        %v3611 = vsel %vm3595, %v3578, %v2721
        %v3612 = vsel %vm3595, %v3579, %v2723
        %v3613 = vsel %vm3595, %v3580, %v2725
        %v3614 = vsel %vm3595, %v3581, %v2727
        %v3615 = vsel %vm3595, %v3582, %v2729
        %v3616 = vsel %vm3595, %v3583, %v2731
        %v3617 = vsel %vm3595, %v3584, %v2733
        %v3618 = vsel %vm3595, %v3585, %v2735
        %v3619 = vsel %vm3595, %v3586, %v2737
        %v3620 = vsel %vm3595, %v3587, %v2739
        %v3621 = vsel %vm3595, %v3588, %v2741
        %v3622 = vsel %vm3595, %v3589, %v2743
        %v3623 = vsel %vm3595, %v3590, %v2745
        %v3624 = vsel %vm3595, %v3591, %v2747
        %v3625 = vsel %vm3595, %v3592, %v2749
        %v3626 = vsel %vm3595, %v3593, %v2751
        %v3627 = vsel %vm3595, %v3594, %v2753
        %vm3628 = vcmask 392192
        %v3629 = vsel %vm3628, %v3596, %v2819
        %v3630 = vsel %vm3628, %v3597, %v2821
        %v3631 = vsel %vm3628, %v3598, %v2823
        %v3632 = vsel %vm3628, %v3599, %v2825
        %v3633 = vsel %vm3628, %v3600, %v2827
        %v3634 = vsel %vm3628, %v3601, %v2829
        %v3635 = vsel %vm3628, %v3602, %v2831
        %v3636 = vsel %vm3628, %v3603, %v2833
        %v3637 = vsel %vm3628, %v3604, %v2835
        %v3638 = vsel %vm3628, %v3605, %v2837
        %v3639 = vsel %vm3628, %v3606, %v2839
        %v3640 = vsel %vm3628, %v3607, %v2841
        %v3641 = vsel %vm3628, %v3608, %v2843
        %v3642 = vsel %vm3628, %v3609, %v2845
        %v3643 = vsel %vm3628, %v3610, %v2847
        %v3644 = vsel %vm3628, %v3611, %v2849
        %v3645 = vsel %vm3628, %v3612, %v2851
        %v3646 = vsel %vm3628, %v3613, %v2853
        %v3647 = vsel %vm3628, %v3614, %v2855
        %v3648 = vsel %vm3628, %v3615, %v2857
        %v3649 = vsel %vm3628, %v3616, %v2859
        %v3650 = vsel %vm3628, %v3617, %v2861
        %v3651 = vsel %vm3628, %v3618, %v2863
        %v3652 = vsel %vm3628, %v3619, %v2865
        %v3653 = vsel %vm3628, %v3620, %v2867
        %v3654 = vsel %vm3628, %v3621, %v2869
        %v3655 = vsel %vm3628, %v3622, %v2871
        %v3656 = vsel %vm3628, %v3623, %v2873
        %v3657 = vsel %vm3628, %v3624, %v2875
        %v3658 = vsel %vm3628, %v3625, %v2877
        %v3659 = vsel %vm3628, %v3626, %v2879
        %v3660 = vsel %vm3628, %v3627, %v2881
        %vm3661 = vcmask 424960
        %v3662 = vsel %vm3661, %v3629, %v2915
        %v3663 = vsel %vm3661, %v3630, %v2917
        %v3664 = vsel %vm3661, %v3631, %v2919
        %v3665 = vsel %vm3661, %v3632, %v2921
        %v3666 = vsel %vm3661, %v3633, %v2923
        %v3667 = vsel %vm3661, %v3634, %v2925
        %v3668 = vsel %vm3661, %v3635, %v2927
        %v3669 = vsel %vm3661, %v3636, %v2929
        %v3670 = vsel %vm3661, %v3637, %v2931
        %v3671 = vsel %vm3661, %v3638, %v2933
        %v3672 = vsel %vm3661, %v3639, %v2935
        %v3673 = vsel %vm3661, %v3640, %v2937
        %v3674 = vsel %vm3661, %v3641, %v2939
        %v3675 = vsel %vm3661, %v3642, %v2941
        %v3676 = vsel %vm3661, %v3643, %v2943
        %v3677 = vsel %vm3661, %v3644, %v2945
        %v3678 = vsel %vm3661, %v3645, %v2947
        %v3679 = vsel %vm3661, %v3646, %v2949
        %v3680 = vsel %vm3661, %v3647, %v2951
        %v3681 = vsel %vm3661, %v3648, %v2953
        %v3682 = vsel %vm3661, %v3649, %v2955
        %v3683 = vsel %vm3661, %v3650, %v2957
        %v3684 = vsel %vm3661, %v3651, %v2959
        %v3685 = vsel %vm3661, %v3652, %v2961
        %v3686 = vsel %vm3661, %v3653, %v2963
        %v3687 = vsel %vm3661, %v3654, %v2965
        %v3688 = vsel %vm3661, %v3655, %v2967
        %v3689 = vsel %vm3661, %v3656, %v2969
        %v3690 = vsel %vm3661, %v3657, %v2971
        %v3691 = vsel %vm3661, %v3658, %v2973
        %v3692 = vsel %vm3661, %v3659, %v2975
        %v3693 = vsel %vm3661, %v3660, %v2977
        %vm3694 = vcmask 457728
        %v3695 = vsel %vm3694, %v3662, %v3043
        %v3696 = vsel %vm3694, %v3663, %v3045
        %v3697 = vsel %vm3694, %v3664, %v3047
        %v3698 = vsel %vm3694, %v3665, %v3049
        %v3699 = vsel %vm3694, %v3666, %v3051
        %v3700 = vsel %vm3694, %v3667, %v3053
        %v3701 = vsel %vm3694, %v3668, %v3055
        %v3702 = vsel %vm3694, %v3669, %v3057
        %v3703 = vsel %vm3694, %v3670, %v3059
        %v3704 = vsel %vm3694, %v3671, %v3061
        %v3705 = vsel %vm3694, %v3672, %v3063
        %v3706 = vsel %vm3694, %v3673, %v3065
        %v3707 = vsel %vm3694, %v3674, %v3067
        %v3708 = vsel %vm3694, %v3675, %v3069
        %v3709 = vsel %vm3694, %v3676, %v3071
        %v3710 = vsel %vm3694, %v3677, %v3073
        %v3711 = vsel %vm3694, %v3678, %v3075
        %v3712 = vsel %vm3694, %v3679, %v3077
        %v3713 = vsel %vm3694, %v3680, %v3079
        %v3714 = vsel %vm3694, %v3681, %v3081
        %v3715 = vsel %vm3694, %v3682, %v3083
        %v3716 = vsel %vm3694, %v3683, %v3085
        %v3717 = vsel %vm3694, %v3684, %v3087
        %v3718 = vsel %vm3694, %v3685, %v3089
        %v3719 = vsel %vm3694, %v3686, %v3091
        %v3720 = vsel %vm3694, %v3687, %v3093
        %v3721 = vsel %vm3694, %v3688, %v3095
        %v3722 = vsel %vm3694, %v3689, %v3097
        %v3723 = vsel %vm3694, %v3690, %v3099
        %v3724 = vsel %vm3694, %v3691, %v3101
        %v3725 = vsel %vm3694, %v3692, %v3103
        %v3726 = vsel %vm3694, %v3693, %v3105
        %vm3727 = vcmask 490496
        %v3728 = vsel %vm3727, %v3695, %v3171
        %v3729 = vsel %vm3727, %v3696, %v3173
        %v3730 = vsel %vm3727, %v3697, %v3175
        %v3731 = vsel %vm3727, %v3698, %v3177
        %v3732 = vsel %vm3727, %v3699, %v3179
        %v3733 = vsel %vm3727, %v3700, %v3181
        %v3734 = vsel %vm3727, %v3701, %v3183
        %v3735 = vsel %vm3727, %v3702, %v3185
        %v3736 = vsel %vm3727, %v3703, %v3187
        %v3737 = vsel %vm3727, %v3704, %v3189
        %v3738 = vsel %vm3727, %v3705, %v3191
        %v3739 = vsel %vm3727, %v3706, %v3193
        %v3740 = vsel %vm3727, %v3707, %v3195
        %v3741 = vsel %vm3727, %v3708, %v3197
        %v3742 = vsel %vm3727, %v3709, %v3199
        %v3743 = vsel %vm3727, %v3710, %v3201
        %v3744 = vsel %vm3727, %v3711, %v3203
        %v3745 = vsel %vm3727, %v3712, %v3205
        %v3746 = vsel %vm3727, %v3713, %v3207
        %v3747 = vsel %vm3727, %v3714, %v3209
        %v3748 = vsel %vm3727, %v3715, %v3211
        %v3749 = vsel %vm3727, %v3716, %v3213
        %v3750 = vsel %vm3727, %v3717, %v3215
        %v3751 = vsel %vm3727, %v3718, %v3217
        %v3752 = vsel %vm3727, %v3719, %v3219
        %v3753 = vsel %vm3727, %v3720, %v3221
        %v3754 = vsel %vm3727, %v3721, %v3223
        %v3755 = vsel %vm3727, %v3722, %v3225
        %v3756 = vsel %vm3727, %v3723, %v3227
        %v3757 = vsel %vm3727, %v3724, %v3229
        %v3758 = vsel %vm3727, %v3725, %v3231
        %v3759 = vsel %vm3727, %v3726, %v3233
        %3792 = vrot.lane.b32.xlu0 %v879, 4
        %v3793 = vpop.permute.xlu0 %3792
        %3794 = vrot.lane.b32.xlu0 %v880, 4
        %v3795 = vpop.permute.xlu0 %3794
        %3796 = vrot.lane.b32.xlu0 %v881, 4
        %v3797 = vpop.permute.xlu0 %3796
        %3798 = vrot.lane.b32.xlu0 %v882, 4
        %v3799 = vpop.permute.xlu0 %3798
        %3800 = vrot.lane.b32.xlu0 %v883, 4
        %v3801 = vpop.permute.xlu0 %3800
        %3802 = vrot.lane.b32.xlu0 %v884, 4
        %v3803 = vpop.permute.xlu0 %3802
        %3804 = vrot.lane.b32.xlu0 %v885, 4
        %v3805 = vpop.permute.xlu0 %3804
        %3806 = vrot.lane.b32.xlu0 %v886, 4
        %v3807 = vpop.permute.xlu0 %3806
        %3808 = vrot.lane.b32.xlu0 %v887, 4
        %v3809 = vpop.permute.xlu0 %3808
        %3810 = vrot.lane.b32.xlu0 %v888, 4
        %v3811 = vpop.permute.xlu0 %3810
        %3812 = vrot.lane.b32.xlu0 %v889, 4
        %v3813 = vpop.permute.xlu0 %3812
        %3814 = vrot.lane.b32.xlu0 %v890, 4
        %v3815 = vpop.permute.xlu0 %3814
        %3816 = vrot.lane.b32.xlu0 %v891, 4
        %v3817 = vpop.permute.xlu0 %3816
        %3818 = vrot.lane.b32.xlu0 %v892, 4
        %v3819 = vpop.permute.xlu0 %3818
        %3820 = vrot.lane.b32.xlu0 %v893, 4
        %v3821 = vpop.permute.xlu0 %3820
        %3822 = vrot.lane.b32.xlu0 %v894, 4
        %v3823 = vpop.permute.xlu0 %3822
        %3824 = vrot.lane.b32.xlu0 %v895, 4
        %v3825 = vpop.permute.xlu0 %3824
        %3826 = vrot.lane.b32.xlu0 %v896, 4
        %v3827 = vpop.permute.xlu0 %3826
        %3828 = vrot.lane.b32.xlu0 %v897, 4
        %v3829 = vpop.permute.xlu0 %3828
        %3830 = vrot.lane.b32.xlu0 %v898, 4
        %v3831 = vpop.permute.xlu0 %3830
        %3832 = vrot.lane.b32.xlu0 %v899, 4
        %v3833 = vpop.permute.xlu0 %3832
        %3834 = vrot.lane.b32.xlu0 %v900, 4
        %v3835 = vpop.permute.xlu0 %3834
        %3836 = vrot.lane.b32.xlu0 %v901, 4
        %v3837 = vpop.permute.xlu0 %3836
        %3838 = vrot.lane.b32.xlu0 %v902, 4
        %v3839 = vpop.permute.xlu0 %3838
        %3840 = vrot.lane.b32.xlu0 %v903, 4
        %v3841 = vpop.permute.xlu0 %3840
        %3842 = vrot.lane.b32.xlu0 %v904, 4
        %v3843 = vpop.permute.xlu0 %3842
        %3844 = vrot.lane.b32.xlu0 %v905, 4
        %v3845 = vpop.permute.xlu0 %3844
        %3846 = vrot.lane.b32.xlu0 %v906, 4
        %v3847 = vpop.permute.xlu0 %3846
        %3848 = vrot.lane.b32.xlu0 %v907, 4
        %v3849 = vpop.permute.xlu0 %3848
        %3850 = vrot.lane.b32.xlu0 %v908, 4
        %v3851 = vpop.permute.xlu0 %3850
        %3852 = vrot.lane.b32.xlu0 %v909, 4
        %v3853 = vpop.permute.xlu0 %3852
        %3854 = vrot.lane.b32.xlu0 %v910, 4
        %v3855 = vpop.permute.xlu0 %3854
        %3920 = vrot.lane.b32.xlu0 %v912, 8
        %v3921 = vpop.permute.xlu0 %3920
        %3922 = vrot.lane.b32.xlu0 %v913, 8
        %v3923 = vpop.permute.xlu0 %3922
        %3924 = vrot.lane.b32.xlu0 %v914, 8
        %v3925 = vpop.permute.xlu0 %3924
        %3926 = vrot.lane.b32.xlu0 %v915, 8
        %v3927 = vpop.permute.xlu0 %3926
        %3928 = vrot.lane.b32.xlu0 %v916, 8
        %v3929 = vpop.permute.xlu0 %3928
        %3930 = vrot.lane.b32.xlu0 %v917, 8
        %v3931 = vpop.permute.xlu0 %3930
        %3932 = vrot.lane.b32.xlu0 %v918, 8
        %v3933 = vpop.permute.xlu0 %3932
        %3934 = vrot.lane.b32.xlu0 %v919, 8
        %v3935 = vpop.permute.xlu0 %3934
        %3936 = vrot.lane.b32.xlu0 %v920, 8
        %v3937 = vpop.permute.xlu0 %3936
        %3938 = vrot.lane.b32.xlu0 %v921, 8
        %v3939 = vpop.permute.xlu0 %3938
        %3940 = vrot.lane.b32.xlu0 %v922, 8
        %v3941 = vpop.permute.xlu0 %3940
        %3942 = vrot.lane.b32.xlu0 %v923, 8
        %v3943 = vpop.permute.xlu0 %3942
        %3944 = vrot.lane.b32.xlu0 %v924, 8
        %v3945 = vpop.permute.xlu0 %3944
        %3946 = vrot.lane.b32.xlu0 %v925, 8
        %v3947 = vpop.permute.xlu0 %3946
        %3948 = vrot.lane.b32.xlu0 %v926, 8
        %v3949 = vpop.permute.xlu0 %3948
        %3950 = vrot.lane.b32.xlu0 %v927, 8
        %v3951 = vpop.permute.xlu0 %3950
        %3952 = vrot.lane.b32.xlu0 %v928, 8
        %v3953 = vpop.permute.xlu0 %3952
        %3954 = vrot.lane.b32.xlu0 %v929, 8
        %v3955 = vpop.permute.xlu0 %3954
        %3956 = vrot.lane.b32.xlu0 %v930, 8
        %v3957 = vpop.permute.xlu0 %3956
        %3958 = vrot.lane.b32.xlu0 %v931, 8
        %v3959 = vpop.permute.xlu0 %3958
        %3960 = vrot.lane.b32.xlu0 %v932, 8
        %v3961 = vpop.permute.xlu0 %3960
        %3962 = vrot.lane.b32.xlu0 %v933, 8
        %v3963 = vpop.permute.xlu0 %3962
        %3964 = vrot.lane.b32.xlu0 %v934, 8
        %v3965 = vpop.permute.xlu0 %3964
        %3966 = vrot.lane.b32.xlu0 %v935, 8
        %v3967 = vpop.permute.xlu0 %3966
        %3968 = vrot.lane.b32.xlu0 %v936, 8
        %v3969 = vpop.permute.xlu0 %3968
        %3970 = vrot.lane.b32.xlu0 %v937, 8
        %v3971 = vpop.permute.xlu0 %3970
        %3972 = vrot.lane.b32.xlu0 %v938, 8
        %v3973 = vpop.permute.xlu0 %3972
        %3974 = vrot.lane.b32.xlu0 %v939, 8
        %v3975 = vpop.permute.xlu0 %3974
        %3976 = vrot.lane.b32.xlu0 %v940, 8
        %v3977 = vpop.permute.xlu0 %3976
        %3978 = vrot.lane.b32.xlu0 %v941, 8
        %v3979 = vpop.permute.xlu0 %3978
        %3980 = vrot.lane.b32.xlu0 %v942, 8
        %v3981 = vpop.permute.xlu0 %3980
        %3982 = vrot.lane.b32.xlu0 %v943, 8
        %v3983 = vpop.permute.xlu0 %3982
        %4048 = vrot.lane.b32.xlu0 %v944, 12
        %v4049 = vpop.permute.xlu0 %4048
        %4050 = vrot.lane.b32.xlu0 %v945, 12
        %v4051 = vpop.permute.xlu0 %4050
        %4052 = vrot.lane.b32.xlu0 %v946, 12
        %v4053 = vpop.permute.xlu0 %4052
        %4054 = vrot.lane.b32.xlu0 %v947, 12
        %v4055 = vpop.permute.xlu0 %4054
        %4056 = vrot.lane.b32.xlu0 %v948, 12
        %v4057 = vpop.permute.xlu0 %4056
        %4058 = vrot.lane.b32.xlu0 %v949, 12
        %v4059 = vpop.permute.xlu0 %4058
        %4060 = vrot.lane.b32.xlu0 %v950, 12
        %v4061 = vpop.permute.xlu0 %4060
        %4062 = vrot.lane.b32.xlu0 %v951, 12
        %v4063 = vpop.permute.xlu0 %4062
        %4064 = vrot.lane.b32.xlu0 %v952, 12
        %v4065 = vpop.permute.xlu0 %4064
        %4066 = vrot.lane.b32.xlu0 %v953, 12
        %v4067 = vpop.permute.xlu0 %4066
        %4068 = vrot.lane.b32.xlu0 %v954, 12
        %v4069 = vpop.permute.xlu0 %4068
        %4070 = vrot.lane.b32.xlu0 %v955, 12
        %v4071 = vpop.permute.xlu0 %4070
        %4072 = vrot.lane.b32.xlu0 %v956, 12
        %v4073 = vpop.permute.xlu0 %4072
        %4074 = vrot.lane.b32.xlu0 %v957, 12
        %v4075 = vpop.permute.xlu0 %4074
        %4076 = vrot.lane.b32.xlu0 %v958, 12
        %v4077 = vpop.permute.xlu0 %4076
        %4078 = vrot.lane.b32.xlu0 %v959, 12
        %v4079 = vpop.permute.xlu0 %4078
        %4080 = vrot.lane.b32.xlu0 %v960, 12
        %v4081 = vpop.permute.xlu0 %4080
        %4082 = vrot.lane.b32.xlu0 %v961, 12
        %v4083 = vpop.permute.xlu0 %4082
        %4084 = vrot.lane.b32.xlu0 %v962, 12
        %v4085 = vpop.permute.xlu0 %4084
        %4086 = vrot.lane.b32.xlu0 %v963, 12
        %v4087 = vpop.permute.xlu0 %4086
        %4088 = vrot.lane.b32.xlu0 %v964, 12
        %v4089 = vpop.permute.xlu0 %4088
        %4090 = vrot.lane.b32.xlu0 %v965, 12
        %v4091 = vpop.permute.xlu0 %4090
        %4092 = vrot.lane.b32.xlu0 %v966, 12
        %v4093 = vpop.permute.xlu0 %4092
        %4094 = vrot.lane.b32.xlu0 %v967, 12
        %v4095 = vpop.permute.xlu0 %4094
        %4096 = vrot.lane.b32.xlu0 %v968, 12
        %v4097 = vpop.permute.xlu0 %4096
        %4098 = vrot.lane.b32.xlu0 %v969, 12
        %v4099 = vpop.permute.xlu0 %4098
        %4100 = vrot.lane.b32.xlu0 %v970, 12
        %v4101 = vpop.permute.xlu0 %4100
        %4102 = vrot.lane.b32.xlu0 %v971, 12
        %v4103 = vpop.permute.xlu0 %4102
        %4104 = vrot.lane.b32.xlu0 %v972, 12
        %v4105 = vpop.permute.xlu0 %4104
        %4106 = vrot.lane.b32.xlu0 %v973, 12
        %v4107 = vpop.permute.xlu0 %4106
        %4108 = vrot.lane.b32.xlu0 %v974, 12
        %v4109 = vpop.permute.xlu0 %4108
        %4110 = vrot.lane.b32.xlu0 %v975, 12
        %v4111 = vpop.permute.xlu0 %4110
        %4176 = vrot.lane.b32.xlu0 %v976, 16
        %v4177 = vpop.permute.xlu0 %4176
        %4178 = vrot.lane.b32.xlu0 %v977, 16
        %v4179 = vpop.permute.xlu0 %4178
        %4180 = vrot.lane.b32.xlu0 %v978, 16
        %v4181 = vpop.permute.xlu0 %4180
        %4182 = vrot.lane.b32.xlu0 %v979, 16
        %v4183 = vpop.permute.xlu0 %4182
        %4184 = vrot.lane.b32.xlu0 %v980, 16
        %v4185 = vpop.permute.xlu0 %4184
        %4186 = vrot.lane.b32.xlu0 %v981, 16
        %v4187 = vpop.permute.xlu0 %4186
        %4188 = vrot.lane.b32.xlu0 %v982, 16
        %v4189 = vpop.permute.xlu0 %4188
        %4190 = vrot.lane.b32.xlu0 %v983, 16
        %v4191 = vpop.permute.xlu0 %4190
        %4192 = vrot.lane.b32.xlu0 %v984, 16
        %v4193 = vpop.permute.xlu0 %4192
        %4194 = vrot.lane.b32.xlu0 %v985, 16
        %v4195 = vpop.permute.xlu0 %4194
        %4196 = vrot.lane.b32.xlu0 %v986, 16
        %v4197 = vpop.permute.xlu0 %4196
        %4198 = vrot.lane.b32.xlu0 %v987, 16
        %v4199 = vpop.permute.xlu0 %4198
        %4200 = vrot.lane.b32.xlu0 %v988, 16
        %v4201 = vpop.permute.xlu0 %4200
        %4202 = vrot.lane.b32.xlu0 %v989, 16
        %v4203 = vpop.permute.xlu0 %4202
        %4204 = vrot.lane.b32.xlu0 %v990, 16
        %v4205 = vpop.permute.xlu0 %4204
        %4206 = vrot.lane.b32.xlu0 %v991, 16
        %v4207 = vpop.permute.xlu0 %4206
        %4208 = vrot.lane.b32.xlu0 %v992, 16
        %v4209 = vpop.permute.xlu0 %4208
        %4210 = vrot.lane.b32.xlu0 %v993, 16
        %v4211 = vpop.permute.xlu0 %4210
        %4212 = vrot.lane.b32.xlu0 %v994, 16
        %v4213 = vpop.permute.xlu0 %4212
        %4214 = vrot.lane.b32.xlu0 %v995, 16
        %v4215 = vpop.permute.xlu0 %4214
        %4216 = vrot.lane.b32.xlu0 %v996, 16
        %v4217 = vpop.permute.xlu0 %4216
        %4218 = vrot.lane.b32.xlu0 %v997, 16
        %v4219 = vpop.permute.xlu0 %4218
        %4220 = vrot.lane.b32.xlu0 %v998, 16
        %v4221 = vpop.permute.xlu0 %4220
        %4222 = vrot.lane.b32.xlu0 %v999, 16
        %v4223 = vpop.permute.xlu0 %4222
        %4224 = vrot.lane.b32.xlu0 %v1000, 16
        %v4225 = vpop.permute.xlu0 %4224
        %4226 = vrot.lane.b32.xlu0 %v1001, 16
        %v4227 = vpop.permute.xlu0 %4226
        %4228 = vrot.lane.b32.xlu0 %v1002, 16
        %v4229 = vpop.permute.xlu0 %4228
        %4230 = vrot.lane.b32.xlu0 %v1003, 16
        %v4231 = vpop.permute.xlu0 %4230
        %4232 = vrot.lane.b32.xlu0 %v1004, 16
        %v4233 = vpop.permute.xlu0 %4232
        %4234 = vrot.lane.b32.xlu0 %v1005, 16
        %v4235 = vpop.permute.xlu0 %4234
        %4236 = vrot.lane.b32.xlu0 %v1006, 16
        %v4237 = vpop.permute.xlu0 %4236
        %4238 = vrot.lane.b32.xlu0 %v1007, 16
        %v4239 = vpop.permute.xlu0 %4238
        %4304 = vrot.lane.b32.xlu0 %v1008, 20
        %v4305 = vpop.permute.xlu0 %4304
        %4306 = vrot.lane.b32.xlu0 %v1009, 20
        %v4307 = vpop.permute.xlu0 %4306
        %4308 = vrot.lane.b32.xlu0 %v1010, 20
        %v4309 = vpop.permute.xlu0 %4308
        %4310 = vrot.lane.b32.xlu0 %v1011, 20
        %v4311 = vpop.permute.xlu0 %4310
        %4312 = vrot.lane.b32.xlu0 %v1012, 20
        %v4313 = vpop.permute.xlu0 %4312
        %4314 = vrot.lane.b32.xlu0 %v1013, 20
        %v4315 = vpop.permute.xlu0 %4314
        %4316 = vrot.lane.b32.xlu0 %v1014, 20
        %v4317 = vpop.permute.xlu0 %4316
        %4318 = vrot.lane.b32.xlu0 %v1015, 20
        %v4319 = vpop.permute.xlu0 %4318
        %4320 = vrot.lane.b32.xlu0 %v1016, 20
        %v4321 = vpop.permute.xlu0 %4320
        %4322 = vrot.lane.b32.xlu0 %v1017, 20
        %v4323 = vpop.permute.xlu0 %4322
        %4324 = vrot.lane.b32.xlu0 %v1018, 20
        %v4325 = vpop.permute.xlu0 %4324
        %4326 = vrot.lane.b32.xlu0 %v1019, 20
        %v4327 = vpop.permute.xlu0 %4326
        %4328 = vrot.lane.b32.xlu0 %v1020, 20
        %v4329 = vpop.permute.xlu0 %4328
        %4330 = vrot.lane.b32.xlu0 %v1021, 20
        %v4331 = vpop.permute.xlu0 %4330
        %4332 = vrot.lane.b32.xlu0 %v1022, 20
        %v4333 = vpop.permute.xlu0 %4332
        %4334 = vrot.lane.b32.xlu0 %v1023, 20
        %v4335 = vpop.permute.xlu0 %4334
        %4336 = vrot.lane.b32.xlu0 %v1024, 20
        %v4337 = vpop.permute.xlu0 %4336
        %4338 = vrot.lane.b32.xlu0 %v1025, 20
        %v4339 = vpop.permute.xlu0 %4338
        %4340 = vrot.lane.b32.xlu0 %v1026, 20
        %v4341 = vpop.permute.xlu0 %4340
        %4342 = vrot.lane.b32.xlu0 %v1027, 20
        %v4343 = vpop.permute.xlu0 %4342
        %4344 = vrot.lane.b32.xlu0 %v1028, 20
        %v4345 = vpop.permute.xlu0 %4344
        %4346 = vrot.lane.b32.xlu0 %v1029, 20
        %v4347 = vpop.permute.xlu0 %4346
        %4348 = vrot.lane.b32.xlu0 %v1030, 20
        %v4349 = vpop.permute.xlu0 %4348
        %4350 = vrot.lane.b32.xlu0 %v1031, 20
        %v4351 = vpop.permute.xlu0 %4350
        %4352 = vrot.lane.b32.xlu0 %v1032, 20
        %v4353 = vpop.permute.xlu0 %4352
        %4354 = vrot.lane.b32.xlu0 %v1033, 20
        %v4355 = vpop.permute.xlu0 %4354
        %4356 = vrot.lane.b32.xlu0 %v1034, 20
        %v4357 = vpop.permute.xlu0 %4356
        %4358 = vrot.lane.b32.xlu0 %v1035, 20
        %v4359 = vpop.permute.xlu0 %4358
        %4360 = vrot.lane.b32.xlu0 %v1036, 20
        %v4361 = vpop.permute.xlu0 %4360
        %4362 = vrot.lane.b32.xlu0 %v1037, 20
        %v4363 = vpop.permute.xlu0 %4362
        %4364 = vrot.lane.b32.xlu0 %v1038, 20
        %v4365 = vpop.permute.xlu0 %4364
        %4366 = vrot.lane.b32.xlu0 %v1039, 20
        %v4367 = vpop.permute.xlu0 %4366
        %4400 = vrot.lane.b32.xlu0 %v492, 24
        %v4401 = vpop.permute.xlu0 %4400
        %4402 = vrot.lane.b32.xlu0 %v493, 24
        %v4403 = vpop.permute.xlu0 %4402
        %4404 = vrot.lane.b32.xlu0 %v494, 24
        %v4405 = vpop.permute.xlu0 %4404
        %4406 = vrot.lane.b32.xlu0 %v495, 24
        %v4407 = vpop.permute.xlu0 %4406
        %4408 = vrot.lane.b32.xlu0 %v496, 24
        %v4409 = vpop.permute.xlu0 %4408
        %4410 = vrot.lane.b32.xlu0 %v497, 24
        %v4411 = vpop.permute.xlu0 %4410
        %4412 = vrot.lane.b32.xlu0 %v498, 24
        %v4413 = vpop.permute.xlu0 %4412
        %4414 = vrot.lane.b32.xlu0 %v499, 24
        %v4415 = vpop.permute.xlu0 %4414
        %4416 = vrot.lane.b32.xlu0 %v500, 24
        %v4417 = vpop.permute.xlu0 %4416
        %4418 = vrot.lane.b32.xlu0 %v501, 24
        %v4419 = vpop.permute.xlu0 %4418
        %4420 = vrot.lane.b32.xlu0 %v502, 24
        %v4421 = vpop.permute.xlu0 %4420
        %4422 = vrot.lane.b32.xlu0 %v503, 24
        %v4423 = vpop.permute.xlu0 %4422
        %4424 = vrot.lane.b32.xlu0 %v504, 24
        %v4425 = vpop.permute.xlu0 %4424
        %4426 = vrot.lane.b32.xlu0 %v505, 24
        %v4427 = vpop.permute.xlu0 %4426
        %4428 = vrot.lane.b32.xlu0 %v506, 24
        %v4429 = vpop.permute.xlu0 %4428
        %4430 = vrot.lane.b32.xlu0 %v507, 24
        %v4431 = vpop.permute.xlu0 %4430
        %4432 = vrot.lane.b32.xlu0 %v508, 24
        %v4433 = vpop.permute.xlu0 %4432
        %4434 = vrot.lane.b32.xlu0 %v509, 24
        %v4435 = vpop.permute.xlu0 %4434
        %4436 = vrot.lane.b32.xlu0 %v510, 24
        %v4437 = vpop.permute.xlu0 %4436
        %4438 = vrot.lane.b32.xlu0 %v511, 24
        %v4439 = vpop.permute.xlu0 %4438
        %4440 = vrot.lane.b32.xlu0 %v512, 24
        %v4441 = vpop.permute.xlu0 %4440
        %4442 = vrot.lane.b32.xlu0 %v513, 24
        %v4443 = vpop.permute.xlu0 %4442
        %4444 = vrot.lane.b32.xlu0 %v514, 24
        %v4445 = vpop.permute.xlu0 %4444
        %4446 = vrot.lane.b32.xlu0 %v515, 24
        %v4447 = vpop.permute.xlu0 %4446
        %4448 = vrot.lane.b32.xlu0 %v516, 24
        %v4449 = vpop.permute.xlu0 %4448
        %4450 = vrot.lane.b32.xlu0 %v517, 24
        %v4451 = vpop.permute.xlu0 %4450
        %4452 = vrot.lane.b32.xlu0 %v518, 24
        %v4453 = vpop.permute.xlu0 %4452
        %4454 = vrot.lane.b32.xlu0 %v519, 24
        %v4455 = vpop.permute.xlu0 %4454
        %4456 = vrot.lane.b32.xlu0 %v520, 24
        %v4457 = vpop.permute.xlu0 %4456
        %4458 = vrot.lane.b32.xlu0 %v521, 24
        %v4459 = vpop.permute.xlu0 %4458
        %4460 = vrot.lane.b32.xlu0 %v522, 24
        %v4461 = vpop.permute.xlu0 %4460
        %4462 = vrot.lane.b32.xlu0 %v523, 24
        %v4463 = vpop.permute.xlu0 %4462
        %4528 = vrot.lane.b32.xlu0 %v1040, 28
        %v4529 = vpop.permute.xlu0 %4528
        %4530 = vrot.lane.b32.xlu0 %v1041, 28
        %v4531 = vpop.permute.xlu0 %4530
        %4532 = vrot.lane.b32.xlu0 %v1042, 28
        %v4533 = vpop.permute.xlu0 %4532
        %4534 = vrot.lane.b32.xlu0 %v1043, 28
        %v4535 = vpop.permute.xlu0 %4534
        %4536 = vrot.lane.b32.xlu0 %v1044, 28
        %v4537 = vpop.permute.xlu0 %4536
        %4538 = vrot.lane.b32.xlu0 %v1045, 28
        %v4539 = vpop.permute.xlu0 %4538
        %4540 = vrot.lane.b32.xlu0 %v1046, 28
        %v4541 = vpop.permute.xlu0 %4540
        %4542 = vrot.lane.b32.xlu0 %v1047, 28
        %v4543 = vpop.permute.xlu0 %4542
        %4544 = vrot.lane.b32.xlu0 %v1048, 28
        %v4545 = vpop.permute.xlu0 %4544
        %4546 = vrot.lane.b32.xlu0 %v1049, 28
        %v4547 = vpop.permute.xlu0 %4546
        %4548 = vrot.lane.b32.xlu0 %v1050, 28
        %v4549 = vpop.permute.xlu0 %4548
        %4550 = vrot.lane.b32.xlu0 %v1051, 28
        %v4551 = vpop.permute.xlu0 %4550
        %4552 = vrot.lane.b32.xlu0 %v1052, 28
        %v4553 = vpop.permute.xlu0 %4552
        %4554 = vrot.lane.b32.xlu0 %v1053, 28
        %v4555 = vpop.permute.xlu0 %4554
        %4556 = vrot.lane.b32.xlu0 %v1054, 28
        %v4557 = vpop.permute.xlu0 %4556
        %4558 = vrot.lane.b32.xlu0 %v1055, 28
        %v4559 = vpop.permute.xlu0 %4558
        %4560 = vrot.lane.b32.xlu0 %v1056, 28
        %v4561 = vpop.permute.xlu0 %4560
        %4562 = vrot.lane.b32.xlu0 %v1057, 28
        %v4563 = vpop.permute.xlu0 %4562
        %4564 = vrot.lane.b32.xlu0 %v1058, 28
        %v4565 = vpop.permute.xlu0 %4564
        %4566 = vrot.lane.b32.xlu0 %v1059, 28
        %v4567 = vpop.permute.xlu0 %4566
        %4568 = vrot.lane.b32.xlu0 %v1060, 28
        %v4569 = vpop.permute.xlu0 %4568
        %4570 = vrot.lane.b32.xlu0 %v1061, 28
        %v4571 = vpop.permute.xlu0 %4570
        %4572 = vrot.lane.b32.xlu0 %v1062, 28
        %v4573 = vpop.permute.xlu0 %4572
        %4574 = vrot.lane.b32.xlu0 %v1063, 28
        %v4575 = vpop.permute.xlu0 %4574
        %4576 = vrot.lane.b32.xlu0 %v1064, 28
        %v4577 = vpop.permute.xlu0 %4576
        %4578 = vrot.lane.b32.xlu0 %v1065, 28
        %v4579 = vpop.permute.xlu0 %4578
        %4580 = vrot.lane.b32.xlu0 %v1066, 28
        %v4581 = vpop.permute.xlu0 %4580
        %4582 = vrot.lane.b32.xlu0 %v1067, 28
        %v4583 = vpop.permute.xlu0 %4582
        %4584 = vrot.lane.b32.xlu0 %v1068, 28
        %v4585 = vpop.permute.xlu0 %4584
        %4586 = vrot.lane.b32.xlu0 %v1069, 28
        %v4587 = vpop.permute.xlu0 %4586
        %4588 = vrot.lane.b32.xlu0 %v1070, 28
        %v4589 = vpop.permute.xlu0 %4588
        %4590 = vrot.lane.b32.xlu0 %v1071, 28
        %v4591 = vpop.permute.xlu0 %4590
        %4656 = vrot.lane.b32.xlu0 %v1073, 32
        %v4657 = vpop.permute.xlu0 %4656
        %4658 = vrot.lane.b32.xlu0 %v1074, 32
        %v4659 = vpop.permute.xlu0 %4658
        %4660 = vrot.lane.b32.xlu0 %v1075, 32
        %v4661 = vpop.permute.xlu0 %4660
        %4662 = vrot.lane.b32.xlu0 %v1076, 32
        %v4663 = vpop.permute.xlu0 %4662
        %4664 = vrot.lane.b32.xlu0 %v1077, 32
        %v4665 = vpop.permute.xlu0 %4664
        %4666 = vrot.lane.b32.xlu0 %v1078, 32
        %v4667 = vpop.permute.xlu0 %4666
        %4668 = vrot.lane.b32.xlu0 %v1079, 32
        %v4669 = vpop.permute.xlu0 %4668
        %4670 = vrot.lane.b32.xlu0 %v1080, 32
        %v4671 = vpop.permute.xlu0 %4670
        %4672 = vrot.lane.b32.xlu0 %v1081, 32
        %v4673 = vpop.permute.xlu0 %4672
        %4674 = vrot.lane.b32.xlu0 %v1082, 32
        %v4675 = vpop.permute.xlu0 %4674
        %4676 = vrot.lane.b32.xlu0 %v1083, 32
        %v4677 = vpop.permute.xlu0 %4676
        %4678 = vrot.lane.b32.xlu0 %v1084, 32
        %v4679 = vpop.permute.xlu0 %4678
        %4680 = vrot.lane.b32.xlu0 %v1085, 32
        %v4681 = vpop.permute.xlu0 %4680
        %4682 = vrot.lane.b32.xlu0 %v1086, 32
        %v4683 = vpop.permute.xlu0 %4682
        %4684 = vrot.lane.b32.xlu0 %v1087, 32
        %v4685 = vpop.permute.xlu0 %4684
        %4686 = vrot.lane.b32.xlu0 %v1088, 32
        %v4687 = vpop.permute.xlu0 %4686
        %4688 = vrot.lane.b32.xlu0 %v1089, 32
        %v4689 = vpop.permute.xlu0 %4688
        %4690 = vrot.lane.b32.xlu0 %v1090, 32
        %v4691 = vpop.permute.xlu0 %4690
        %4692 = vrot.lane.b32.xlu0 %v1091, 32
        %v4693 = vpop.permute.xlu0 %4692
        %4694 = vrot.lane.b32.xlu0 %v1092, 32
        %v4695 = vpop.permute.xlu0 %4694
        %4696 = vrot.lane.b32.xlu0 %v1093, 32
        %v4697 = vpop.permute.xlu0 %4696
        %4698 = vrot.lane.b32.xlu0 %v1094, 32
        %v4699 = vpop.permute.xlu0 %4698
        %4700 = vrot.lane.b32.xlu0 %v1095, 32
        %v4701 = vpop.permute.xlu0 %4700
        %4702 = vrot.lane.b32.xlu0 %v1096, 32
        %v4703 = vpop.permute.xlu0 %4702
        %4704 = vrot.lane.b32.xlu0 %v1097, 32
        %v4705 = vpop.permute.xlu0 %4704
        %4706 = vrot.lane.b32.xlu0 %v1098, 32
        %v4707 = vpop.permute.xlu0 %4706
        %4708 = vrot.lane.b32.xlu0 %v1099, 32
        %v4709 = vpop.permute.xlu0 %4708
        %4710 = vrot.lane.b32.xlu0 %v1100, 32
        %v4711 = vpop.permute.xlu0 %4710
        %4712 = vrot.lane.b32.xlu0 %v1101, 32
        %v4713 = vpop.permute.xlu0 %4712
        %4714 = vrot.lane.b32.xlu0 %v1102, 32
        %v4715 = vpop.permute.xlu0 %4714
        %4716 = vrot.lane.b32.xlu0 %v1103, 32
        %v4717 = vpop.permute.xlu0 %4716
        %4718 = vrot.lane.b32.xlu0 %v1104, 32
        %v4719 = vpop.permute.xlu0 %4718
        %4784 = vrot.lane.b32.xlu0 %v1105, 36
        %v4785 = vpop.permute.xlu0 %4784
        %4786 = vrot.lane.b32.xlu0 %v1106, 36
        %v4787 = vpop.permute.xlu0 %4786
        %4788 = vrot.lane.b32.xlu0 %v1107, 36
        %v4789 = vpop.permute.xlu0 %4788
        %4790 = vrot.lane.b32.xlu0 %v1108, 36
        %v4791 = vpop.permute.xlu0 %4790
        %4792 = vrot.lane.b32.xlu0 %v1109, 36
        %v4793 = vpop.permute.xlu0 %4792
        %4794 = vrot.lane.b32.xlu0 %v1110, 36
        %v4795 = vpop.permute.xlu0 %4794
        %4796 = vrot.lane.b32.xlu0 %v1111, 36
        %v4797 = vpop.permute.xlu0 %4796
        %4798 = vrot.lane.b32.xlu0 %v1112, 36
        %v4799 = vpop.permute.xlu0 %4798
        %4800 = vrot.lane.b32.xlu0 %v1113, 36
        %v4801 = vpop.permute.xlu0 %4800
        %4802 = vrot.lane.b32.xlu0 %v1114, 36
        %v4803 = vpop.permute.xlu0 %4802
        %4804 = vrot.lane.b32.xlu0 %v1115, 36
        %v4805 = vpop.permute.xlu0 %4804
        %4806 = vrot.lane.b32.xlu0 %v1116, 36
        %v4807 = vpop.permute.xlu0 %4806
        %4808 = vrot.lane.b32.xlu0 %v1117, 36
        %v4809 = vpop.permute.xlu0 %4808
        %4810 = vrot.lane.b32.xlu0 %v1118, 36
        %v4811 = vpop.permute.xlu0 %4810
        %4812 = vrot.lane.b32.xlu0 %v1119, 36
        %v4813 = vpop.permute.xlu0 %4812
        %4814 = vrot.lane.b32.xlu0 %v1120, 36
        %v4815 = vpop.permute.xlu0 %4814
        %4816 = vrot.lane.b32.xlu0 %v1121, 36
        %v4817 = vpop.permute.xlu0 %4816
        %4818 = vrot.lane.b32.xlu0 %v1122, 36
        %v4819 = vpop.permute.xlu0 %4818
        %4820 = vrot.lane.b32.xlu0 %v1123, 36
        %v4821 = vpop.permute.xlu0 %4820
        %4822 = vrot.lane.b32.xlu0 %v1124, 36
        %v4823 = vpop.permute.xlu0 %4822
        %4824 = vrot.lane.b32.xlu0 %v1125, 36
        %v4825 = vpop.permute.xlu0 %4824
        %4826 = vrot.lane.b32.xlu0 %v1126, 36
        %v4827 = vpop.permute.xlu0 %4826
        %4828 = vrot.lane.b32.xlu0 %v1127, 36
        %v4829 = vpop.permute.xlu0 %4828
        %4830 = vrot.lane.b32.xlu0 %v1128, 36
        %v4831 = vpop.permute.xlu0 %4830
        %4832 = vrot.lane.b32.xlu0 %v1129, 36
        %v4833 = vpop.permute.xlu0 %4832
        %4834 = vrot.lane.b32.xlu0 %v1130, 36
        %v4835 = vpop.permute.xlu0 %4834
        %4836 = vrot.lane.b32.xlu0 %v1131, 36
        %v4837 = vpop.permute.xlu0 %4836
        %4838 = vrot.lane.b32.xlu0 %v1132, 36
        %v4839 = vpop.permute.xlu0 %4838
        %4840 = vrot.lane.b32.xlu0 %v1133, 36
        %v4841 = vpop.permute.xlu0 %4840
        %4842 = vrot.lane.b32.xlu0 %v1134, 36
        %v4843 = vpop.permute.xlu0 %4842
        %4844 = vrot.lane.b32.xlu0 %v1135, 36
        %v4845 = vpop.permute.xlu0 %4844
        %4846 = vrot.lane.b32.xlu0 %v1136, 36
        %v4847 = vpop.permute.xlu0 %4846
        %4912 = vrot.lane.b32.xlu0 %v1137, 40
        %v4913 = vpop.permute.xlu0 %4912
        %4914 = vrot.lane.b32.xlu0 %v1138, 40
        %v4915 = vpop.permute.xlu0 %4914
        %4916 = vrot.lane.b32.xlu0 %v1139, 40
        %v4917 = vpop.permute.xlu0 %4916
        %4918 = vrot.lane.b32.xlu0 %v1140, 40
        %v4919 = vpop.permute.xlu0 %4918
        %4920 = vrot.lane.b32.xlu0 %v1141, 40
        %v4921 = vpop.permute.xlu0 %4920
        %4922 = vrot.lane.b32.xlu0 %v1142, 40
        %v4923 = vpop.permute.xlu0 %4922
        %4924 = vrot.lane.b32.xlu0 %v1143, 40
        %v4925 = vpop.permute.xlu0 %4924
        %4926 = vrot.lane.b32.xlu0 %v1144, 40
        %v4927 = vpop.permute.xlu0 %4926
        %4928 = vrot.lane.b32.xlu0 %v1145, 40
        %v4929 = vpop.permute.xlu0 %4928
        %4930 = vrot.lane.b32.xlu0 %v1146, 40
        %v4931 = vpop.permute.xlu0 %4930
        %4932 = vrot.lane.b32.xlu0 %v1147, 40
        %v4933 = vpop.permute.xlu0 %4932
        %4934 = vrot.lane.b32.xlu0 %v1148, 40
        %v4935 = vpop.permute.xlu0 %4934
        %4936 = vrot.lane.b32.xlu0 %v1149, 40
        %v4937 = vpop.permute.xlu0 %4936
        %4938 = vrot.lane.b32.xlu0 %v1150, 40
        %v4939 = vpop.permute.xlu0 %4938
        %4940 = vrot.lane.b32.xlu0 %v1151, 40
        %v4941 = vpop.permute.xlu0 %4940
        %4942 = vrot.lane.b32.xlu0 %v1152, 40
        %v4943 = vpop.permute.xlu0 %4942
        %4944 = vrot.lane.b32.xlu0 %v1153, 40
        %v4945 = vpop.permute.xlu0 %4944
        %4946 = vrot.lane.b32.xlu0 %v1154, 40
        %v4947 = vpop.permute.xlu0 %4946
        %4948 = vrot.lane.b32.xlu0 %v1155, 40
        %v4949 = vpop.permute.xlu0 %4948
        %4950 = vrot.lane.b32.xlu0 %v1156, 40
        %v4951 = vpop.permute.xlu0 %4950
        %4952 = vrot.lane.b32.xlu0 %v1157, 40
        %v4953 = vpop.permute.xlu0 %4952
        %4954 = vrot.lane.b32.xlu0 %v1158, 40
        %v4955 = vpop.permute.xlu0 %4954
        %4956 = vrot.lane.b32.xlu0 %v1159, 40
        %v4957 = vpop.permute.xlu0 %4956
        %4958 = vrot.lane.b32.xlu0 %v1160, 40
        %v4959 = vpop.permute.xlu0 %4958
        %4960 = vrot.lane.b32.xlu0 %v1161, 40
        %v4961 = vpop.permute.xlu0 %4960
        %4962 = vrot.lane.b32.xlu0 %v1162, 40
        %v4963 = vpop.permute.xlu0 %4962
        %4964 = vrot.lane.b32.xlu0 %v1163, 40
        %v4965 = vpop.permute.xlu0 %4964
        %4966 = vrot.lane.b32.xlu0 %v1164, 40
        %v4967 = vpop.permute.xlu0 %4966
        %4968 = vrot.lane.b32.xlu0 %v1165, 40
        %v4969 = vpop.permute.xlu0 %4968
        %4970 = vrot.lane.b32.xlu0 %v1166, 40
        %v4971 = vpop.permute.xlu0 %4970
        %4972 = vrot.lane.b32.xlu0 %v1167, 40
        %v4973 = vpop.permute.xlu0 %4972
        %4974 = vrot.lane.b32.xlu0 %v1168, 40
        %v4975 = vpop.permute.xlu0 %4974
        %5040 = vrot.lane.b32.xlu0 %v1169, 44
        %v5041 = vpop.permute.xlu0 %5040
        %5042 = vrot.lane.b32.xlu0 %v1170, 44
        %v5043 = vpop.permute.xlu0 %5042
        %5044 = vrot.lane.b32.xlu0 %v1171, 44
        %v5045 = vpop.permute.xlu0 %5044
        %5046 = vrot.lane.b32.xlu0 %v1172, 44
        %v5047 = vpop.permute.xlu0 %5046
        %5048 = vrot.lane.b32.xlu0 %v1173, 44
        %v5049 = vpop.permute.xlu0 %5048
        %5050 = vrot.lane.b32.xlu0 %v1174, 44
        %v5051 = vpop.permute.xlu0 %5050
        %5052 = vrot.lane.b32.xlu0 %v1175, 44
        %v5053 = vpop.permute.xlu0 %5052
        %5054 = vrot.lane.b32.xlu0 %v1176, 44
        %v5055 = vpop.permute.xlu0 %5054
        %5056 = vrot.lane.b32.xlu0 %v1177, 44
        %v5057 = vpop.permute.xlu0 %5056
        %5058 = vrot.lane.b32.xlu0 %v1178, 44
        %v5059 = vpop.permute.xlu0 %5058
        %5060 = vrot.lane.b32.xlu0 %v1179, 44
        %v5061 = vpop.permute.xlu0 %5060
        %5062 = vrot.lane.b32.xlu0 %v1180, 44
        %v5063 = vpop.permute.xlu0 %5062
        %5064 = vrot.lane.b32.xlu0 %v1181, 44
        %v5065 = vpop.permute.xlu0 %5064
        %5066 = vrot.lane.b32.xlu0 %v1182, 44
        %v5067 = vpop.permute.xlu0 %5066
        %5068 = vrot.lane.b32.xlu0 %v1183, 44
        %v5069 = vpop.permute.xlu0 %5068
        %5070 = vrot.lane.b32.xlu0 %v1184, 44
        %v5071 = vpop.permute.xlu0 %5070
        %5072 = vrot.lane.b32.xlu0 %v1185, 44
        %v5073 = vpop.permute.xlu0 %5072
        %5074 = vrot.lane.b32.xlu0 %v1186, 44
        %v5075 = vpop.permute.xlu0 %5074
        %5076 = vrot.lane.b32.xlu0 %v1187, 44
        %v5077 = vpop.permute.xlu0 %5076
        %5078 = vrot.lane.b32.xlu0 %v1188, 44
        %v5079 = vpop.permute.xlu0 %5078
        %5080 = vrot.lane.b32.xlu0 %v1189, 44
        %v5081 = vpop.permute.xlu0 %5080
        %5082 = vrot.lane.b32.xlu0 %v1190, 44
        %v5083 = vpop.permute.xlu0 %5082
        %5084 = vrot.lane.b32.xlu0 %v1191, 44
        %v5085 = vpop.permute.xlu0 %5084
        %5086 = vrot.lane.b32.xlu0 %v1192, 44
        %v5087 = vpop.permute.xlu0 %5086
        %5088 = vrot.lane.b32.xlu0 %v1193, 44
        %v5089 = vpop.permute.xlu0 %5088
        %5090 = vrot.lane.b32.xlu0 %v1194, 44
        %v5091 = vpop.permute.xlu0 %5090
        %5092 = vrot.lane.b32.xlu0 %v1195, 44
        %v5093 = vpop.permute.xlu0 %5092
        %5094 = vrot.lane.b32.xlu0 %v1196, 44
        %v5095 = vpop.permute.xlu0 %5094
        %5096 = vrot.lane.b32.xlu0 %v1197, 44
        %v5097 = vpop.permute.xlu0 %5096
        %5098 = vrot.lane.b32.xlu0 %v1198, 44
        %v5099 = vpop.permute.xlu0 %5098
        %5100 = vrot.lane.b32.xlu0 %v1199, 44
        %v5101 = vpop.permute.xlu0 %5100
        %5102 = vrot.lane.b32.xlu0 %v1200, 44
        %v5103 = vpop.permute.xlu0 %5102
        %5168 = vrot.lane.b32.xlu0 %v1201, 48
        %v5169 = vpop.permute.xlu0 %5168
        %5170 = vrot.lane.b32.xlu0 %v1202, 48
        %v5171 = vpop.permute.xlu0 %5170
        %5172 = vrot.lane.b32.xlu0 %v1203, 48
        %v5173 = vpop.permute.xlu0 %5172
        %5174 = vrot.lane.b32.xlu0 %v1204, 48
        %v5175 = vpop.permute.xlu0 %5174
        %5176 = vrot.lane.b32.xlu0 %v1205, 48
        %v5177 = vpop.permute.xlu0 %5176
        %5178 = vrot.lane.b32.xlu0 %v1206, 48
        %v5179 = vpop.permute.xlu0 %5178
        %5180 = vrot.lane.b32.xlu0 %v1207, 48
        %v5181 = vpop.permute.xlu0 %5180
        %5182 = vrot.lane.b32.xlu0 %v1208, 48
        %v5183 = vpop.permute.xlu0 %5182
        %5184 = vrot.lane.b32.xlu0 %v1209, 48
        %v5185 = vpop.permute.xlu0 %5184
        %5186 = vrot.lane.b32.xlu0 %v1210, 48
        %v5187 = vpop.permute.xlu0 %5186
        %5188 = vrot.lane.b32.xlu0 %v1211, 48
        %v5189 = vpop.permute.xlu0 %5188
        %5190 = vrot.lane.b32.xlu0 %v1212, 48
        %v5191 = vpop.permute.xlu0 %5190
        %5192 = vrot.lane.b32.xlu0 %v1213, 48
        %v5193 = vpop.permute.xlu0 %5192
        %5194 = vrot.lane.b32.xlu0 %v1214, 48
        %v5195 = vpop.permute.xlu0 %5194
        %5196 = vrot.lane.b32.xlu0 %v1215, 48
        %v5197 = vpop.permute.xlu0 %5196
        %5198 = vrot.lane.b32.xlu0 %v1216, 48
        %v5199 = vpop.permute.xlu0 %5198
        %5200 = vrot.lane.b32.xlu0 %v1217, 48
        %v5201 = vpop.permute.xlu0 %5200
        %5202 = vrot.lane.b32.xlu0 %v1218, 48
        %v5203 = vpop.permute.xlu0 %5202
        %5204 = vrot.lane.b32.xlu0 %v1219, 48
        %v5205 = vpop.permute.xlu0 %5204
        %5206 = vrot.lane.b32.xlu0 %v1220, 48
        %v5207 = vpop.permute.xlu0 %5206
        %5208 = vrot.lane.b32.xlu0 %v1221, 48
        %v5209 = vpop.permute.xlu0 %5208
        %5210 = vrot.lane.b32.xlu0 %v1222, 48
        %v5211 = vpop.permute.xlu0 %5210
        %5212 = vrot.lane.b32.xlu0 %v1223, 48
        %v5213 = vpop.permute.xlu0 %5212
        %5214 = vrot.lane.b32.xlu0 %v1224, 48
        %v5215 = vpop.permute.xlu0 %5214
        %5216 = vrot.lane.b32.xlu0 %v1225, 48
        %v5217 = vpop.permute.xlu0 %5216
        %5218 = vrot.lane.b32.xlu0 %v1226, 48
        %v5219 = vpop.permute.xlu0 %5218
        %5220 = vrot.lane.b32.xlu0 %v1227, 48
        %v5221 = vpop.permute.xlu0 %5220
        %5222 = vrot.lane.b32.xlu0 %v1228, 48
        %v5223 = vpop.permute.xlu0 %5222
        %5224 = vrot.lane.b32.xlu0 %v1229, 48
        %v5225 = vpop.permute.xlu0 %5224
        %5226 = vrot.lane.b32.xlu0 %v1230, 48
        %v5227 = vpop.permute.xlu0 %5226
        %5228 = vrot.lane.b32.xlu0 %v1231, 48
        %v5229 = vpop.permute.xlu0 %5228
        %5230 = vrot.lane.b32.xlu0 %v1232, 48
        %v5231 = vpop.permute.xlu0 %5230
        %5280 = vrot.lane.b32.xlu0 %v1170, 52
        %v5281 = vpop.permute.xlu0 %5280
        %5282 = vrot.lane.b32.xlu0 %v1233, 52
        %v5283 = vpop.permute.xlu0 %5282
        %5284 = vrot.lane.b32.xlu0 %v1172, 52
        %v5285 = vpop.permute.xlu0 %5284
        %5286 = vrot.lane.b32.xlu0 %v1234, 52
        %v5287 = vpop.permute.xlu0 %5286
        %5288 = vrot.lane.b32.xlu0 %v1174, 52
        %v5289 = vpop.permute.xlu0 %5288
        %5290 = vrot.lane.b32.xlu0 %v1235, 52
        %v5291 = vpop.permute.xlu0 %5290
        %5292 = vrot.lane.b32.xlu0 %v1176, 52
        %v5293 = vpop.permute.xlu0 %5292
        %5294 = vrot.lane.b32.xlu0 %v1236, 52
        %v5295 = vpop.permute.xlu0 %5294
        %5296 = vrot.lane.b32.xlu0 %v1178, 52
        %v5297 = vpop.permute.xlu0 %5296
        %5298 = vrot.lane.b32.xlu0 %v1237, 52
        %v5299 = vpop.permute.xlu0 %5298
        %5300 = vrot.lane.b32.xlu0 %v1180, 52
        %v5301 = vpop.permute.xlu0 %5300
        %5302 = vrot.lane.b32.xlu0 %v1238, 52
        %v5303 = vpop.permute.xlu0 %5302
        %5304 = vrot.lane.b32.xlu0 %v1182, 52
        %v5305 = vpop.permute.xlu0 %5304
        %5306 = vrot.lane.b32.xlu0 %v1239, 52
        %v5307 = vpop.permute.xlu0 %5306
        %5308 = vrot.lane.b32.xlu0 %v1184, 52
        %v5309 = vpop.permute.xlu0 %5308
        %5310 = vrot.lane.b32.xlu0 %v1240, 52
        %v5311 = vpop.permute.xlu0 %5310
        %5312 = vrot.lane.b32.xlu0 %v1186, 52
        %v5313 = vpop.permute.xlu0 %5312
        %5314 = vrot.lane.b32.xlu0 %v1241, 52
        %v5315 = vpop.permute.xlu0 %5314
        %5316 = vrot.lane.b32.xlu0 %v1188, 52
        %v5317 = vpop.permute.xlu0 %5316
        %5318 = vrot.lane.b32.xlu0 %v1242, 52
        %v5319 = vpop.permute.xlu0 %5318
        %5320 = vrot.lane.b32.xlu0 %v1190, 52
        %v5321 = vpop.permute.xlu0 %5320
        %5322 = vrot.lane.b32.xlu0 %v1243, 52
        %v5323 = vpop.permute.xlu0 %5322
        %5324 = vrot.lane.b32.xlu0 %v1192, 52
        %v5325 = vpop.permute.xlu0 %5324
        %5326 = vrot.lane.b32.xlu0 %v1244, 52
        %v5327 = vpop.permute.xlu0 %5326
        %5328 = vrot.lane.b32.xlu0 %v1194, 52
        %v5329 = vpop.permute.xlu0 %5328
        %5330 = vrot.lane.b32.xlu0 %v1245, 52
        %v5331 = vpop.permute.xlu0 %5330
        %5332 = vrot.lane.b32.xlu0 %v1196, 52
        %v5333 = vpop.permute.xlu0 %5332
        %5334 = vrot.lane.b32.xlu0 %v1246, 52
        %v5335 = vpop.permute.xlu0 %5334
        %5336 = vrot.lane.b32.xlu0 %v1198, 52
        %v5337 = vpop.permute.xlu0 %5336
        %5338 = vrot.lane.b32.xlu0 %v1247, 52
        %v5339 = vpop.permute.xlu0 %5338
        %5340 = vrot.lane.b32.xlu0 %v1200, 52
        %v5341 = vpop.permute.xlu0 %5340
        %5342 = vrot.lane.b32.xlu0 %v1248, 52
        %v5343 = vpop.permute.xlu0 %5342
        %5408 = vrot.lane.b32.xlu0 %v1249, 56
        %v5409 = vpop.permute.xlu0 %5408
        %5410 = vrot.lane.b32.xlu0 %v1250, 56
        %v5411 = vpop.permute.xlu0 %5410
        %5412 = vrot.lane.b32.xlu0 %v1251, 56
        %v5413 = vpop.permute.xlu0 %5412
        %5414 = vrot.lane.b32.xlu0 %v1252, 56
        %v5415 = vpop.permute.xlu0 %5414
        %5416 = vrot.lane.b32.xlu0 %v1253, 56
        %v5417 = vpop.permute.xlu0 %5416
        %5418 = vrot.lane.b32.xlu0 %v1254, 56
        %v5419 = vpop.permute.xlu0 %5418
        %5420 = vrot.lane.b32.xlu0 %v1255, 56
        %v5421 = vpop.permute.xlu0 %5420
        %5422 = vrot.lane.b32.xlu0 %v1256, 56
        %v5423 = vpop.permute.xlu0 %5422
        %5424 = vrot.lane.b32.xlu0 %v1257, 56
        %v5425 = vpop.permute.xlu0 %5424
        %5426 = vrot.lane.b32.xlu0 %v1258, 56
        %v5427 = vpop.permute.xlu0 %5426
        %5428 = vrot.lane.b32.xlu0 %v1259, 56
        %v5429 = vpop.permute.xlu0 %5428
        %5430 = vrot.lane.b32.xlu0 %v1260, 56
        %v5431 = vpop.permute.xlu0 %5430
        %5432 = vrot.lane.b32.xlu0 %v1261, 56
        %v5433 = vpop.permute.xlu0 %5432
        %5434 = vrot.lane.b32.xlu0 %v1262, 56
        %v5435 = vpop.permute.xlu0 %5434
        %5436 = vrot.lane.b32.xlu0 %v1263, 56
        %v5437 = vpop.permute.xlu0 %5436
        %5438 = vrot.lane.b32.xlu0 %v1264, 56
        %v5439 = vpop.permute.xlu0 %5438
        %5440 = vrot.lane.b32.xlu0 %v1265, 56
        %v5441 = vpop.permute.xlu0 %5440
        %5442 = vrot.lane.b32.xlu0 %v1266, 56
        %v5443 = vpop.permute.xlu0 %5442
        %5444 = vrot.lane.b32.xlu0 %v1267, 56
        %v5445 = vpop.permute.xlu0 %5444
        %5446 = vrot.lane.b32.xlu0 %v1268, 56
        %v5447 = vpop.permute.xlu0 %5446
        %5448 = vrot.lane.b32.xlu0 %v1269, 56
        %v5449 = vpop.permute.xlu0 %5448
        %5450 = vrot.lane.b32.xlu0 %v1270, 56
        %v5451 = vpop.permute.xlu0 %5450
        %5452 = vrot.lane.b32.xlu0 %v1271, 56
        %v5453 = vpop.permute.xlu0 %5452
        %5454 = vrot.lane.b32.xlu0 %v1272, 56
        %v5455 = vpop.permute.xlu0 %5454
        %5456 = vrot.lane.b32.xlu0 %v1273, 56
        %v5457 = vpop.permute.xlu0 %5456
        %5458 = vrot.lane.b32.xlu0 %v1274, 56
        %v5459 = vpop.permute.xlu0 %5458
        %5460 = vrot.lane.b32.xlu0 %v1275, 56
        %v5461 = vpop.permute.xlu0 %5460
        %5462 = vrot.lane.b32.xlu0 %v1276, 56
        %v5463 = vpop.permute.xlu0 %5462
        %5464 = vrot.lane.b32.xlu0 %v1277, 56
        %v5465 = vpop.permute.xlu0 %5464
        %5466 = vrot.lane.b32.xlu0 %v1278, 56
        %v5467 = vpop.permute.xlu0 %5466
        %5468 = vrot.lane.b32.xlu0 %v1279, 56
        %v5469 = vpop.permute.xlu0 %5468
        %5470 = vrot.lane.b32.xlu0 %v1280, 56
        %v5471 = vpop.permute.xlu0 %5470
        %5504 = vrot.lane.b32.xlu0 %v492, 60
        %v5505 = vpop.permute.xlu0 %5504
        %5506 = vrot.lane.b32.xlu0 %v493, 60
        %v5507 = vpop.permute.xlu0 %5506
        %5508 = vrot.lane.b32.xlu0 %v494, 60
        %v5509 = vpop.permute.xlu0 %5508
        %5510 = vrot.lane.b32.xlu0 %v495, 60
        %v5511 = vpop.permute.xlu0 %5510
        %5512 = vrot.lane.b32.xlu0 %v496, 60
        %v5513 = vpop.permute.xlu0 %5512
        %5514 = vrot.lane.b32.xlu0 %v497, 60
        %v5515 = vpop.permute.xlu0 %5514
        %5516 = vrot.lane.b32.xlu0 %v498, 60
        %v5517 = vpop.permute.xlu0 %5516
        %5518 = vrot.lane.b32.xlu0 %v499, 60
        %v5519 = vpop.permute.xlu0 %5518
        %5520 = vrot.lane.b32.xlu0 %v500, 60
        %v5521 = vpop.permute.xlu0 %5520
        %5522 = vrot.lane.b32.xlu0 %v501, 60
        %v5523 = vpop.permute.xlu0 %5522
        %5524 = vrot.lane.b32.xlu0 %v502, 60
        %v5525 = vpop.permute.xlu0 %5524
        %5526 = vrot.lane.b32.xlu0 %v503, 60
        %v5527 = vpop.permute.xlu0 %5526
        %5528 = vrot.lane.b32.xlu0 %v504, 60
        %v5529 = vpop.permute.xlu0 %5528
        %5530 = vrot.lane.b32.xlu0 %v505, 60
        %v5531 = vpop.permute.xlu0 %5530
        %5532 = vrot.lane.b32.xlu0 %v506, 60
        %v5533 = vpop.permute.xlu0 %5532
        %5534 = vrot.lane.b32.xlu0 %v507, 60
        %v5535 = vpop.permute.xlu0 %5534
        %5536 = vrot.lane.b32.xlu0 %v508, 60
        %v5537 = vpop.permute.xlu0 %5536
        %5538 = vrot.lane.b32.xlu0 %v509, 60
        %v5539 = vpop.permute.xlu0 %5538
        %5540 = vrot.lane.b32.xlu0 %v510, 60
        %v5541 = vpop.permute.xlu0 %5540
        %5542 = vrot.lane.b32.xlu0 %v511, 60
        %v5543 = vpop.permute.xlu0 %5542
        %5544 = vrot.lane.b32.xlu0 %v512, 60
        %v5545 = vpop.permute.xlu0 %5544
        %5546 = vrot.lane.b32.xlu0 %v513, 60
        %v5547 = vpop.permute.xlu0 %5546
        %5548 = vrot.lane.b32.xlu0 %v514, 60
        %v5549 = vpop.permute.xlu0 %5548
        %5550 = vrot.lane.b32.xlu0 %v515, 60
        %v5551 = vpop.permute.xlu0 %5550
        %5552 = vrot.lane.b32.xlu0 %v516, 60
        %v5553 = vpop.permute.xlu0 %5552
        %5554 = vrot.lane.b32.xlu0 %v517, 60
        %v5555 = vpop.permute.xlu0 %5554
        %5556 = vrot.lane.b32.xlu0 %v518, 60
        %v5557 = vpop.permute.xlu0 %5556
        %5558 = vrot.lane.b32.xlu0 %v519, 60
        %v5559 = vpop.permute.xlu0 %5558
        %5560 = vrot.lane.b32.xlu0 %v520, 60
        %v5561 = vpop.permute.xlu0 %5560
        %5562 = vrot.lane.b32.xlu0 %v521, 60
        %v5563 = vpop.permute.xlu0 %5562
        %5564 = vrot.lane.b32.xlu0 %v522, 60
        %v5565 = vpop.permute.xlu0 %5564
        %5566 = vrot.lane.b32.xlu0 %v523, 60
        %v5567 = vpop.permute.xlu0 %5566
        %v5600 = vsel %vm223, %v847, %v3793
        %v5601 = vsel %vm223, %v848, %v3795
        %v5602 = vsel %vm223, %v849, %v3797
        %v5603 = vsel %vm223, %v850, %v3799
        %v5604 = vsel %vm223, %v851, %v3801
        %v5605 = vsel %vm223, %v852, %v3803
        %v5606 = vsel %vm223, %v853, %v3805
        %v5607 = vsel %vm223, %v854, %v3807
        %v5608 = vsel %vm223, %v855, %v3809
        %v5609 = vsel %vm223, %v856, %v3811
        %v5610 = vsel %vm223, %v857, %v3813
        %v5611 = vsel %vm223, %v858, %v3815
        %v5612 = vsel %vm223, %v859, %v3817
        %v5613 = vsel %vm223, %v860, %v3819
        %v5614 = vsel %vm223, %v861, %v3821
        %v5615 = vsel %vm223, %v862, %v3823
        %v5616 = vsel %vm223, %v863, %v3825
        %v5617 = vsel %vm223, %v864, %v3827
        %v5618 = vsel %vm223, %v865, %v3829
        %v5619 = vsel %vm223, %v866, %v3831
        %v5620 = vsel %vm223, %v867, %v3833
        %v5621 = vsel %vm223, %v868, %v3835
        %v5622 = vsel %vm223, %v869, %v3837
        %v5623 = vsel %vm223, %v870, %v3839
        %v5624 = vsel %vm223, %v871, %v3841
        %v5625 = vsel %vm223, %v872, %v3843
        %v5626 = vsel %vm223, %v873, %v3845
        %v5627 = vsel %vm223, %v874, %v3847
        %v5628 = vsel %vm223, %v875, %v3849
        %v5629 = vsel %vm223, %v876, %v3851
        %v5630 = vsel %vm223, %v877, %v3853
        %v5631 = vsel %vm223, %v878, %v3855
        %v5632 = vsel %vm3298, %v5600, %v3921
        %v5633 = vsel %vm3298, %v5601, %v3923
        %v5634 = vsel %vm3298, %v5602, %v3925
        %v5635 = vsel %vm3298, %v5603, %v3927
        %v5636 = vsel %vm3298, %v5604, %v3929
        %v5637 = vsel %vm3298, %v5605, %v3931
        %v5638 = vsel %vm3298, %v5606, %v3933
        %v5639 = vsel %vm3298, %v5607, %v3935
        %v5640 = vsel %vm3298, %v5608, %v3937
        %v5641 = vsel %vm3298, %v5609, %v3939
        %v5642 = vsel %vm3298, %v5610, %v3941
        %v5643 = vsel %vm3298, %v5611, %v3943
        %v5644 = vsel %vm3298, %v5612, %v3945
        %v5645 = vsel %vm3298, %v5613, %v3947
        %v5646 = vsel %vm3298, %v5614, %v3949
        %v5647 = vsel %vm3298, %v5615, %v3951
        %v5648 = vsel %vm3298, %v5616, %v3953
        %v5649 = vsel %vm3298, %v5617, %v3955
        %v5650 = vsel %vm3298, %v5618, %v3957
        %v5651 = vsel %vm3298, %v5619, %v3959
        %v5652 = vsel %vm3298, %v5620, %v3961
        %v5653 = vsel %vm3298, %v5621, %v3963
        %v5654 = vsel %vm3298, %v5622, %v3965
        %v5655 = vsel %vm3298, %v5623, %v3967
        %v5656 = vsel %vm3298, %v5624, %v3969
        %v5657 = vsel %vm3298, %v5625, %v3971
        %v5658 = vsel %vm3298, %v5626, %v3973
        %v5659 = vsel %vm3298, %v5627, %v3975
        %v5660 = vsel %vm3298, %v5628, %v3977
        %v5661 = vsel %vm3298, %v5629, %v3979
        %v5662 = vsel %vm3298, %v5630, %v3981
        %v5663 = vsel %vm3298, %v5631, %v3983
        %v5664 = vsel %vm3331, %v5632, %v4049
        %v5665 = vsel %vm3331, %v5633, %v4051
        %v5666 = vsel %vm3331, %v5634, %v4053
        %v5667 = vsel %vm3331, %v5635, %v4055
        %v5668 = vsel %vm3331, %v5636, %v4057
        %v5669 = vsel %vm3331, %v5637, %v4059
        %v5670 = vsel %vm3331, %v5638, %v4061
        %v5671 = vsel %vm3331, %v5639, %v4063
        %v5672 = vsel %vm3331, %v5640, %v4065
        %v5673 = vsel %vm3331, %v5641, %v4067
        %v5674 = vsel %vm3331, %v5642, %v4069
        %v5675 = vsel %vm3331, %v5643, %v4071
        %v5676 = vsel %vm3331, %v5644, %v4073
        %v5677 = vsel %vm3331, %v5645, %v4075
        %v5678 = vsel %vm3331, %v5646, %v4077
        %v5679 = vsel %vm3331, %v5647, %v4079
        %v5680 = vsel %vm3331, %v5648, %v4081
        %v5681 = vsel %vm3331, %v5649, %v4083
        %v5682 = vsel %vm3331, %v5650, %v4085
        %v5683 = vsel %vm3331, %v5651, %v4087
        %v5684 = vsel %vm3331, %v5652, %v4089
        %v5685 = vsel %vm3331, %v5653, %v4091
        %v5686 = vsel %vm3331, %v5654, %v4093
        %v5687 = vsel %vm3331, %v5655, %v4095
        %v5688 = vsel %vm3331, %v5656, %v4097
        %v5689 = vsel %vm3331, %v5657, %v4099
        %v5690 = vsel %vm3331, %v5658, %v4101
        %v5691 = vsel %vm3331, %v5659, %v4103
        %v5692 = vsel %vm3331, %v5660, %v4105
        %v5693 = vsel %vm3331, %v5661, %v4107
        %v5694 = vsel %vm3331, %v5662, %v4109
        %v5695 = vsel %vm3331, %v5663, %v4111
        %v5696 = vsel %vm3364, %v5664, %v4177
        %v5697 = vsel %vm3364, %v5665, %v4179
        %v5698 = vsel %vm3364, %v5666, %v4181
        %v5699 = vsel %vm3364, %v5667, %v4183
        %v5700 = vsel %vm3364, %v5668, %v4185
        %v5701 = vsel %vm3364, %v5669, %v4187
        %v5702 = vsel %vm3364, %v5670, %v4189
        %v5703 = vsel %vm3364, %v5671, %v4191
        %v5704 = vsel %vm3364, %v5672, %v4193
        %v5705 = vsel %vm3364, %v5673, %v4195
        %v5706 = vsel %vm3364, %v5674, %v4197
        %v5707 = vsel %vm3364, %v5675, %v4199
        %v5708 = vsel %vm3364, %v5676, %v4201
        %v5709 = vsel %vm3364, %v5677, %v4203
        %v5710 = vsel %vm3364, %v5678, %v4205
        %v5711 = vsel %vm3364, %v5679, %v4207
        %v5712 = vsel %vm3364, %v5680, %v4209
        %v5713 = vsel %vm3364, %v5681, %v4211
        %v5714 = vsel %vm3364, %v5682, %v4213
        %v5715 = vsel %vm3364, %v5683, %v4215
        %v5716 = vsel %vm3364, %v5684, %v4217
        %v5717 = vsel %vm3364, %v5685, %v4219
        %v5718 = vsel %vm3364, %v5686, %v4221
        %v5719 = vsel %vm3364, %v5687, %v4223
        %v5720 = vsel %vm3364, %v5688, %v4225
        %v5721 = vsel %vm3364, %v5689, %v4227
        %v5722 = vsel %vm3364, %v5690, %v4229
        %v5723 = vsel %vm3364, %v5691, %v4231
        %v5724 = vsel %vm3364, %v5692, %v4233
        %v5725 = vsel %vm3364, %v5693, %v4235
        %v5726 = vsel %vm3364, %v5694, %v4237
        %v5727 = vsel %vm3364, %v5695, %v4239
        %v5728 = vsel %vm3397, %v5696, %v4305
        %v5729 = vsel %vm3397, %v5697, %v4307
        %v5730 = vsel %vm3397, %v5698, %v4309
        %v5731 = vsel %vm3397, %v5699, %v4311
        %v5732 = vsel %vm3397, %v5700, %v4313
        %v5733 = vsel %vm3397, %v5701, %v4315
        %v5734 = vsel %vm3397, %v5702, %v4317
        %v5735 = vsel %vm3397, %v5703, %v4319
        %v5736 = vsel %vm3397, %v5704, %v4321
        %v5737 = vsel %vm3397, %v5705, %v4323
        %v5738 = vsel %vm3397, %v5706, %v4325
        %v5739 = vsel %vm3397, %v5707, %v4327
        %v5740 = vsel %vm3397, %v5708, %v4329
        %v5741 = vsel %vm3397, %v5709, %v4331
        %v5742 = vsel %vm3397, %v5710, %v4333
        %v5743 = vsel %vm3397, %v5711, %v4335
        %v5744 = vsel %vm3397, %v5712, %v4337
        %v5745 = vsel %vm3397, %v5713, %v4339
        %v5746 = vsel %vm3397, %v5714, %v4341
        %v5747 = vsel %vm3397, %v5715, %v4343
        %v5748 = vsel %vm3397, %v5716, %v4345
        %v5749 = vsel %vm3397, %v5717, %v4347
        %v5750 = vsel %vm3397, %v5718, %v4349
        %v5751 = vsel %vm3397, %v5719, %v4351
        %v5752 = vsel %vm3397, %v5720, %v4353
        %v5753 = vsel %vm3397, %v5721, %v4355
        %v5754 = vsel %vm3397, %v5722, %v4357
        %v5755 = vsel %vm3397, %v5723, %v4359
        %v5756 = vsel %vm3397, %v5724, %v4361
        %v5757 = vsel %vm3397, %v5725, %v4363
        %v5758 = vsel %vm3397, %v5726, %v4365
        %v5759 = vsel %vm3397, %v5727, %v4367
        %v5760 = vsel %vm3430, %v5728, %v4401
        %v5761 = vsel %vm3430, %v5729, %v4403
        %v5762 = vsel %vm3430, %v5730, %v4405
        %v5763 = vsel %vm3430, %v5731, %v4407
        %v5764 = vsel %vm3430, %v5732, %v4409
        %v5765 = vsel %vm3430, %v5733, %v4411
        %v5766 = vsel %vm3430, %v5734, %v4413
        %v5767 = vsel %vm3430, %v5735, %v4415
        %v5768 = vsel %vm3430, %v5736, %v4417
        %v5769 = vsel %vm3430, %v5737, %v4419
        %v5770 = vsel %vm3430, %v5738, %v4421
        %v5771 = vsel %vm3430, %v5739, %v4423
        %v5772 = vsel %vm3430, %v5740, %v4425
        %v5773 = vsel %vm3430, %v5741, %v4427
        %v5774 = vsel %vm3430, %v5742, %v4429
        %v5775 = vsel %vm3430, %v5743, %v4431
        %v5776 = vsel %vm3430, %v5744, %v4433
        %v5777 = vsel %vm3430, %v5745, %v4435
        %v5778 = vsel %vm3430, %v5746, %v4437
        %v5779 = vsel %vm3430, %v5747, %v4439
        %v5780 = vsel %vm3430, %v5748, %v4441
        %v5781 = vsel %vm3430, %v5749, %v4443
        %v5782 = vsel %vm3430, %v5750, %v4445
        %v5783 = vsel %vm3430, %v5751, %v4447
        %v5784 = vsel %vm3430, %v5752, %v4449
        %v5785 = vsel %vm3430, %v5753, %v4451
        %v5786 = vsel %vm3430, %v5754, %v4453
        %v5787 = vsel %vm3430, %v5755, %v4455
        %v5788 = vsel %vm3430, %v5756, %v4457
        %v5789 = vsel %vm3430, %v5757, %v4459
        %v5790 = vsel %vm3430, %v5758, %v4461
        %v5791 = vsel %vm3430, %v5759, %v4463
        %v5792 = vsel %vm3463, %v5760, %v4529
        %v5793 = vsel %vm3463, %v5761, %v4531
        %v5794 = vsel %vm3463, %v5762, %v4533
        %v5795 = vsel %vm3463, %v5763, %v4535
        %v5796 = vsel %vm3463, %v5764, %v4537
        %v5797 = vsel %vm3463, %v5765, %v4539
        %v5798 = vsel %vm3463, %v5766, %v4541
        %v5799 = vsel %vm3463, %v5767, %v4543
        %v5800 = vsel %vm3463, %v5768, %v4545
        %v5801 = vsel %vm3463, %v5769, %v4547
        %v5802 = vsel %vm3463, %v5770, %v4549
        %v5803 = vsel %vm3463, %v5771, %v4551
        %v5804 = vsel %vm3463, %v5772, %v4553
        %v5805 = vsel %vm3463, %v5773, %v4555
        %v5806 = vsel %vm3463, %v5774, %v4557
        %v5807 = vsel %vm3463, %v5775, %v4559
        %v5808 = vsel %vm3463, %v5776, %v4561
        %v5809 = vsel %vm3463, %v5777, %v4563
        %v5810 = vsel %vm3463, %v5778, %v4565
        %v5811 = vsel %vm3463, %v5779, %v4567
        %v5812 = vsel %vm3463, %v5780, %v4569
        %v5813 = vsel %vm3463, %v5781, %v4571
        %v5814 = vsel %vm3463, %v5782, %v4573
        %v5815 = vsel %vm3463, %v5783, %v4575
        %v5816 = vsel %vm3463, %v5784, %v4577
        %v5817 = vsel %vm3463, %v5785, %v4579
        %v5818 = vsel %vm3463, %v5786, %v4581
        %v5819 = vsel %vm3463, %v5787, %v4583
        %v5820 = vsel %vm3463, %v5788, %v4585
        %v5821 = vsel %vm3463, %v5789, %v4587
        %v5822 = vsel %vm3463, %v5790, %v4589
        %v5823 = vsel %vm3463, %v5791, %v4591
        %v5824 = vsel %vm3496, %v5792, %v4657
        %v5825 = vsel %vm3496, %v5793, %v4659
        %v5826 = vsel %vm3496, %v5794, %v4661
        %v5827 = vsel %vm3496, %v5795, %v4663
        %v5828 = vsel %vm3496, %v5796, %v4665
        %v5829 = vsel %vm3496, %v5797, %v4667
        %v5830 = vsel %vm3496, %v5798, %v4669
        %v5831 = vsel %vm3496, %v5799, %v4671
        %v5832 = vsel %vm3496, %v5800, %v4673
        %v5833 = vsel %vm3496, %v5801, %v4675
        %v5834 = vsel %vm3496, %v5802, %v4677
        %v5835 = vsel %vm3496, %v5803, %v4679
        %v5836 = vsel %vm3496, %v5804, %v4681
        %v5837 = vsel %vm3496, %v5805, %v4683
        %v5838 = vsel %vm3496, %v5806, %v4685
        %v5839 = vsel %vm3496, %v5807, %v4687
        %v5840 = vsel %vm3496, %v5808, %v4689
        %v5841 = vsel %vm3496, %v5809, %v4691
        %v5842 = vsel %vm3496, %v5810, %v4693
        %v5843 = vsel %vm3496, %v5811, %v4695
        %v5844 = vsel %vm3496, %v5812, %v4697
        %v5845 = vsel %vm3496, %v5813, %v4699
        %v5846 = vsel %vm3496, %v5814, %v4701
        %v5847 = vsel %vm3496, %v5815, %v4703
        %v5848 = vsel %vm3496, %v5816, %v4705
        %v5849 = vsel %vm3496, %v5817, %v4707
        %v5850 = vsel %vm3496, %v5818, %v4709
        %v5851 = vsel %vm3496, %v5819, %v4711
        %v5852 = vsel %vm3496, %v5820, %v4713
        %v5853 = vsel %vm3496, %v5821, %v4715
        %v5854 = vsel %vm3496, %v5822, %v4717
        %v5855 = vsel %vm3496, %v5823, %v4719
        %v5856 = vsel %vm3529, %v5824, %v4785
        %v5857 = vsel %vm3529, %v5825, %v4787
        %v5858 = vsel %vm3529, %v5826, %v4789
        %v5859 = vsel %vm3529, %v5827, %v4791
        %v5860 = vsel %vm3529, %v5828, %v4793
        %v5861 = vsel %vm3529, %v5829, %v4795
        %v5862 = vsel %vm3529, %v5830, %v4797
        %v5863 = vsel %vm3529, %v5831, %v4799
        %v5864 = vsel %vm3529, %v5832, %v4801
        %v5865 = vsel %vm3529, %v5833, %v4803
        %v5866 = vsel %vm3529, %v5834, %v4805
        %v5867 = vsel %vm3529, %v5835, %v4807
        %v5868 = vsel %vm3529, %v5836, %v4809
        %v5869 = vsel %vm3529, %v5837, %v4811
        %v5870 = vsel %vm3529, %v5838, %v4813
        %v5871 = vsel %vm3529, %v5839, %v4815
        %v5872 = vsel %vm3529, %v5840, %v4817
        %v5873 = vsel %vm3529, %v5841, %v4819
        %v5874 = vsel %vm3529, %v5842, %v4821
        %v5875 = vsel %vm3529, %v5843, %v4823
        %v5876 = vsel %vm3529, %v5844, %v4825
        %v5877 = vsel %vm3529, %v5845, %v4827
        %v5878 = vsel %vm3529, %v5846, %v4829
        %v5879 = vsel %vm3529, %v5847, %v4831
        %v5880 = vsel %vm3529, %v5848, %v4833
        %v5881 = vsel %vm3529, %v5849, %v4835
        %v5882 = vsel %vm3529, %v5850, %v4837
        %v5883 = vsel %vm3529, %v5851, %v4839
        %v5884 = vsel %vm3529, %v5852, %v4841
        %v5885 = vsel %vm3529, %v5853, %v4843
        %v5886 = vsel %vm3529, %v5854, %v4845
        %v5887 = vsel %vm3529, %v5855, %v4847
        %v5888 = vsel %vm3562, %v5856, %v4913
        %v5889 = vsel %vm3562, %v5857, %v4915
        %v5890 = vsel %vm3562, %v5858, %v4917
        %v5891 = vsel %vm3562, %v5859, %v4919
        %v5892 = vsel %vm3562, %v5860, %v4921
        %v5893 = vsel %vm3562, %v5861, %v4923
        %v5894 = vsel %vm3562, %v5862, %v4925
        %v5895 = vsel %vm3562, %v5863, %v4927
        %v5896 = vsel %vm3562, %v5864, %v4929
        %v5897 = vsel %vm3562, %v5865, %v4931
        %v5898 = vsel %vm3562, %v5866, %v4933
        %v5899 = vsel %vm3562, %v5867, %v4935
        %v5900 = vsel %vm3562, %v5868, %v4937
        %v5901 = vsel %vm3562, %v5869, %v4939
        %v5902 = vsel %vm3562, %v5870, %v4941
        %v5903 = vsel %vm3562, %v5871, %v4943
        %v5904 = vsel %vm3562, %v5872, %v4945
        %v5905 = vsel %vm3562, %v5873, %v4947
        %v5906 = vsel %vm3562, %v5874, %v4949
        %v5907 = vsel %vm3562, %v5875, %v4951
        %v5908 = vsel %vm3562, %v5876, %v4953
        %v5909 = vsel %vm3562, %v5877, %v4955
        %v5910 = vsel %vm3562, %v5878, %v4957
        %v5911 = vsel %vm3562, %v5879, %v4959
        %v5912 = vsel %vm3562, %v5880, %v4961
        %v5913 = vsel %vm3562, %v5881, %v4963
        %v5914 = vsel %vm3562, %v5882, %v4965
        %v5915 = vsel %vm3562, %v5883, %v4967
        %v5916 = vsel %vm3562, %v5884, %v4969
        %v5917 = vsel %vm3562, %v5885, %v4971
        %v5918 = vsel %vm3562, %v5886, %v4973
        %v5919 = vsel %vm3562, %v5887, %v4975
        %v5920 = vsel %vm3595, %v5888, %v5041
        %v5921 = vsel %vm3595, %v5889, %v5043
        %v5922 = vsel %vm3595, %v5890, %v5045
        %v5923 = vsel %vm3595, %v5891, %v5047
        %v5924 = vsel %vm3595, %v5892, %v5049
        %v5925 = vsel %vm3595, %v5893, %v5051
        %v5926 = vsel %vm3595, %v5894, %v5053
        %v5927 = vsel %vm3595, %v5895, %v5055
        %v5928 = vsel %vm3595, %v5896, %v5057
        %v5929 = vsel %vm3595, %v5897, %v5059
        %v5930 = vsel %vm3595, %v5898, %v5061
        %v5931 = vsel %vm3595, %v5899, %v5063
        %v5932 = vsel %vm3595, %v5900, %v5065
        %v5933 = vsel %vm3595, %v5901, %v5067
        %v5934 = vsel %vm3595, %v5902, %v5069
        %v5935 = vsel %vm3595, %v5903, %v5071
        %v5936 = vsel %vm3595, %v5904, %v5073
        %v5937 = vsel %vm3595, %v5905, %v5075
        %v5938 = vsel %vm3595, %v5906, %v5077
        %v5939 = vsel %vm3595, %v5907, %v5079
        %v5940 = vsel %vm3595, %v5908, %v5081
        %v5941 = vsel %vm3595, %v5909, %v5083
        %v5942 = vsel %vm3595, %v5910, %v5085
        %v5943 = vsel %vm3595, %v5911, %v5087
        %v5944 = vsel %vm3595, %v5912, %v5089
        %v5945 = vsel %vm3595, %v5913, %v5091
        %v5946 = vsel %vm3595, %v5914, %v5093
        %v5947 = vsel %vm3595, %v5915, %v5095
        %v5948 = vsel %vm3595, %v5916, %v5097
        %v5949 = vsel %vm3595, %v5917, %v5099
        %v5950 = vsel %vm3595, %v5918, %v5101
        %v5951 = vsel %vm3595, %v5919, %v5103
        %v5952 = vsel %vm3628, %v5920, %v5169
        %v5953 = vsel %vm3628, %v5921, %v5171
        %v5954 = vsel %vm3628, %v5922, %v5173
        %v5955 = vsel %vm3628, %v5923, %v5175
        %v5956 = vsel %vm3628, %v5924, %v5177
        %v5957 = vsel %vm3628, %v5925, %v5179
        %v5958 = vsel %vm3628, %v5926, %v5181
        %v5959 = vsel %vm3628, %v5927, %v5183
        %v5960 = vsel %vm3628, %v5928, %v5185
        %v5961 = vsel %vm3628, %v5929, %v5187
        %v5962 = vsel %vm3628, %v5930, %v5189
        %v5963 = vsel %vm3628, %v5931, %v5191
        %v5964 = vsel %vm3628, %v5932, %v5193
        %v5965 = vsel %vm3628, %v5933, %v5195
        %v5966 = vsel %vm3628, %v5934, %v5197
        %v5967 = vsel %vm3628, %v5935, %v5199
        %v5968 = vsel %vm3628, %v5936, %v5201
        %v5969 = vsel %vm3628, %v5937, %v5203
        %v5970 = vsel %vm3628, %v5938, %v5205
        %v5971 = vsel %vm3628, %v5939, %v5207
        %v5972 = vsel %vm3628, %v5940, %v5209
        %v5973 = vsel %vm3628, %v5941, %v5211
        %v5974 = vsel %vm3628, %v5942, %v5213
        %v5975 = vsel %vm3628, %v5943, %v5215
        %v5976 = vsel %vm3628, %v5944, %v5217
        %v5977 = vsel %vm3628, %v5945, %v5219
        %v5978 = vsel %vm3628, %v5946, %v5221
        %v5979 = vsel %vm3628, %v5947, %v5223
        %v5980 = vsel %vm3628, %v5948, %v5225
        %v5981 = vsel %vm3628, %v5949, %v5227
        %v5982 = vsel %vm3628, %v5950, %v5229
        %v5983 = vsel %vm3628, %v5951, %v5231
        %v5984 = vsel %vm3661, %v5952, %v5281
        %v5985 = vsel %vm3661, %v5953, %v5283
        %v5986 = vsel %vm3661, %v5954, %v5285
        %v5987 = vsel %vm3661, %v5955, %v5287
        %v5988 = vsel %vm3661, %v5956, %v5289
        %v5989 = vsel %vm3661, %v5957, %v5291
        %v5990 = vsel %vm3661, %v5958, %v5293
        %v5991 = vsel %vm3661, %v5959, %v5295
        %v5992 = vsel %vm3661, %v5960, %v5297
        %v5993 = vsel %vm3661, %v5961, %v5299
        %v5994 = vsel %vm3661, %v5962, %v5301
        %v5995 = vsel %vm3661, %v5963, %v5303
        %v5996 = vsel %vm3661, %v5964, %v5305
        %v5997 = vsel %vm3661, %v5965, %v5307
        %v5998 = vsel %vm3661, %v5966, %v5309
        %v5999 = vsel %vm3661, %v5967, %v5311
        %v6000 = vsel %vm3661, %v5968, %v5313
        %v6001 = vsel %vm3661, %v5969, %v5315
        %v6002 = vsel %vm3661, %v5970, %v5317
        %v6003 = vsel %vm3661, %v5971, %v5319
        %v6004 = vsel %vm3661, %v5972, %v5321
        %v6005 = vsel %vm3661, %v5973, %v5323
        %v6006 = vsel %vm3661, %v5974, %v5325
        %v6007 = vsel %vm3661, %v5975, %v5327
        %v6008 = vsel %vm3661, %v5976, %v5329
        %v6009 = vsel %vm3661, %v5977, %v5331
        %v6010 = vsel %vm3661, %v5978, %v5333
        %v6011 = vsel %vm3661, %v5979, %v5335
        %v6012 = vsel %vm3661, %v5980, %v5337
        %v6013 = vsel %vm3661, %v5981, %v5339
        %v6014 = vsel %vm3661, %v5982, %v5341
        %v6015 = vsel %vm3661, %v5983, %v5343
        %v6016 = vsel %vm3694, %v5984, %v5409
        %v6017 = vsel %vm3694, %v5985, %v5411
        %v6018 = vsel %vm3694, %v5986, %v5413
        %v6019 = vsel %vm3694, %v5987, %v5415
        %v6020 = vsel %vm3694, %v5988, %v5417
        %v6021 = vsel %vm3694, %v5989, %v5419
        %v6022 = vsel %vm3694, %v5990, %v5421
        %v6023 = vsel %vm3694, %v5991, %v5423
        %v6024 = vsel %vm3694, %v5992, %v5425
        %v6025 = vsel %vm3694, %v5993, %v5427
        %v6026 = vsel %vm3694, %v5994, %v5429
        %v6027 = vsel %vm3694, %v5995, %v5431
        %v6028 = vsel %vm3694, %v5996, %v5433
        %v6029 = vsel %vm3694, %v5997, %v5435
        %v6030 = vsel %vm3694, %v5998, %v5437
        %v6031 = vsel %vm3694, %v5999, %v5439
        %v6032 = vsel %vm3694, %v6000, %v5441
        %v6033 = vsel %vm3694, %v6001, %v5443
        %v6034 = vsel %vm3694, %v6002, %v5445
        %v6035 = vsel %vm3694, %v6003, %v5447
        %v6036 = vsel %vm3694, %v6004, %v5449
        %v6037 = vsel %vm3694, %v6005, %v5451
        %v6038 = vsel %vm3694, %v6006, %v5453
        %v6039 = vsel %vm3694, %v6007, %v5455
        %v6040 = vsel %vm3694, %v6008, %v5457
        %v6041 = vsel %vm3694, %v6009, %v5459
        %v6042 = vsel %vm3694, %v6010, %v5461
        %v6043 = vsel %vm3694, %v6011, %v5463
        %v6044 = vsel %vm3694, %v6012, %v5465
        %v6045 = vsel %vm3694, %v6013, %v5467
        %v6046 = vsel %vm3694, %v6014, %v5469
        %v6047 = vsel %vm3694, %v6015, %v5471
        %v6048 = vsel %vm3727, %v6016, %v5505
        %v6049 = vsel %vm3727, %v6017, %v5507
        %v6050 = vsel %vm3727, %v6018, %v5509
        %v6051 = vsel %vm3727, %v6019, %v5511
        %v6052 = vsel %vm3727, %v6020, %v5513
        %v6053 = vsel %vm3727, %v6021, %v5515
        %v6054 = vsel %vm3727, %v6022, %v5517
        %v6055 = vsel %vm3727, %v6023, %v5519
        %v6056 = vsel %vm3727, %v6024, %v5521
        %v6057 = vsel %vm3727, %v6025, %v5523
        %v6058 = vsel %vm3727, %v6026, %v5525
        %v6059 = vsel %vm3727, %v6027, %v5527
        %v6060 = vsel %vm3727, %v6028, %v5529
        %v6061 = vsel %vm3727, %v6029, %v5531
        %v6062 = vsel %vm3727, %v6030, %v5533
        %v6063 = vsel %vm3727, %v6031, %v5535
        %v6064 = vsel %vm3727, %v6032, %v5537
        %v6065 = vsel %vm3727, %v6033, %v5539
        %v6066 = vsel %vm3727, %v6034, %v5541
        %v6067 = vsel %vm3727, %v6035, %v5543
        %v6068 = vsel %vm3727, %v6036, %v5545
        %v6069 = vsel %vm3727, %v6037, %v5547
        %v6070 = vsel %vm3727, %v6038, %v5549
        %v6071 = vsel %vm3727, %v6039, %v5551
        %v6072 = vsel %vm3727, %v6040, %v5553
        %v6073 = vsel %vm3727, %v6041, %v5555
        %v6074 = vsel %vm3727, %v6042, %v5557
        %v6075 = vsel %vm3727, %v6043, %v5559
        %v6076 = vsel %vm3727, %v6044, %v5561
        %v6077 = vsel %vm3727, %v6045, %v5563
        %v6078 = vsel %vm3727, %v6046, %v5565
        %v6079 = vsel %vm3727, %v6047, %v5567
        %6112 = vrot.lane.b32.xlu0 %v1298, 4
        %v6113 = vpop.permute.xlu0 %6112
        %6114 = vrot.lane.b32.xlu0 %v1299, 4
        %v6115 = vpop.permute.xlu0 %6114
        %6116 = vrot.lane.b32.xlu0 %v1300, 4
        %v6117 = vpop.permute.xlu0 %6116
        %6118 = vrot.lane.b32.xlu0 %v1301, 4
        %v6119 = vpop.permute.xlu0 %6118
        %6120 = vrot.lane.b32.xlu0 %v1302, 4
        %v6121 = vpop.permute.xlu0 %6120
        %6122 = vrot.lane.b32.xlu0 %v1303, 4
        %v6123 = vpop.permute.xlu0 %6122
        %6124 = vrot.lane.b32.xlu0 %v1304, 4
        %v6125 = vpop.permute.xlu0 %6124
        %6126 = vrot.lane.b32.xlu0 %v1305, 4
        %v6127 = vpop.permute.xlu0 %6126
        %6128 = vrot.lane.b32.xlu0 %v1306, 4
        %v6129 = vpop.permute.xlu0 %6128
        %6130 = vrot.lane.b32.xlu0 %v1307, 4
        %v6131 = vpop.permute.xlu0 %6130
        %6132 = vrot.lane.b32.xlu0 %v1308, 4
        %v6133 = vpop.permute.xlu0 %6132
        %6134 = vrot.lane.b32.xlu0 %v1309, 4
        %v6135 = vpop.permute.xlu0 %6134
        %6136 = vrot.lane.b32.xlu0 %v1310, 4
        %v6137 = vpop.permute.xlu0 %6136
        %6138 = vrot.lane.b32.xlu0 %v1311, 4
        %v6139 = vpop.permute.xlu0 %6138
        %6140 = vrot.lane.b32.xlu0 %v1312, 4
        %v6141 = vpop.permute.xlu0 %6140
        %6142 = vrot.lane.b32.xlu0 %v1313, 4
        %v6143 = vpop.permute.xlu0 %6142
        %6144 = vrot.lane.b32.xlu0 %v1314, 4
        %v6145 = vpop.permute.xlu0 %6144
        %6146 = vrot.lane.b32.xlu0 %v1315, 4
        %v6147 = vpop.permute.xlu0 %6146
        %6148 = vrot.lane.b32.xlu0 %v1316, 4
        %v6149 = vpop.permute.xlu0 %6148
        %6150 = vrot.lane.b32.xlu0 %v1317, 4
        %v6151 = vpop.permute.xlu0 %6150
        %6152 = vrot.lane.b32.xlu0 %v1318, 4
        %v6153 = vpop.permute.xlu0 %6152
        %6154 = vrot.lane.b32.xlu0 %v1319, 4
        %v6155 = vpop.permute.xlu0 %6154
        %6156 = vrot.lane.b32.xlu0 %v1320, 4
        %v6157 = vpop.permute.xlu0 %6156
        %6158 = vrot.lane.b32.xlu0 %v1321, 4
        %v6159 = vpop.permute.xlu0 %6158
        %6160 = vrot.lane.b32.xlu0 %v1322, 4
        %v6161 = vpop.permute.xlu0 %6160
        %6162 = vrot.lane.b32.xlu0 %v1323, 4
        %v6163 = vpop.permute.xlu0 %6162
        %6164 = vrot.lane.b32.xlu0 %v1324, 4
        %v6165 = vpop.permute.xlu0 %6164
        %6166 = vrot.lane.b32.xlu0 %v1325, 4
        %v6167 = vpop.permute.xlu0 %6166
        %6168 = vrot.lane.b32.xlu0 %v1326, 4
        %v6169 = vpop.permute.xlu0 %6168
        %6170 = vrot.lane.b32.xlu0 %v1327, 4
        %v6171 = vpop.permute.xlu0 %6170
        %6172 = vrot.lane.b32.xlu0 %v1328, 4
        %v6173 = vpop.permute.xlu0 %6172
        %6174 = vrot.lane.b32.xlu0 %v1329, 4
        %v6175 = vpop.permute.xlu0 %6174
        %6240 = vrot.lane.b32.xlu0 %v1330, 8
        %v6241 = vpop.permute.xlu0 %6240
        %6242 = vrot.lane.b32.xlu0 %v1331, 8
        %v6243 = vpop.permute.xlu0 %6242
        %6244 = vrot.lane.b32.xlu0 %v1332, 8
        %v6245 = vpop.permute.xlu0 %6244
        %6246 = vrot.lane.b32.xlu0 %v1333, 8
        %v6247 = vpop.permute.xlu0 %6246
        %6248 = vrot.lane.b32.xlu0 %v1334, 8
        %v6249 = vpop.permute.xlu0 %6248
        %6250 = vrot.lane.b32.xlu0 %v1335, 8
        %v6251 = vpop.permute.xlu0 %6250
        %6252 = vrot.lane.b32.xlu0 %v1336, 8
        %v6253 = vpop.permute.xlu0 %6252
        %6254 = vrot.lane.b32.xlu0 %v1337, 8
        %v6255 = vpop.permute.xlu0 %6254
        %6256 = vrot.lane.b32.xlu0 %v1338, 8
        %v6257 = vpop.permute.xlu0 %6256
        %6258 = vrot.lane.b32.xlu0 %v1339, 8
        %v6259 = vpop.permute.xlu0 %6258
        %6260 = vrot.lane.b32.xlu0 %v1340, 8
        %v6261 = vpop.permute.xlu0 %6260
        %6262 = vrot.lane.b32.xlu0 %v1341, 8
        %v6263 = vpop.permute.xlu0 %6262
        %6264 = vrot.lane.b32.xlu0 %v1342, 8
        %v6265 = vpop.permute.xlu0 %6264
        %6266 = vrot.lane.b32.xlu0 %v1343, 8
        %v6267 = vpop.permute.xlu0 %6266
        %6268 = vrot.lane.b32.xlu0 %v1344, 8
        %v6269 = vpop.permute.xlu0 %6268
        %6270 = vrot.lane.b32.xlu0 %v1345, 8
        %v6271 = vpop.permute.xlu0 %6270
        %6272 = vrot.lane.b32.xlu0 %v1346, 8
        %v6273 = vpop.permute.xlu0 %6272
        %6274 = vrot.lane.b32.xlu0 %v1347, 8
        %v6275 = vpop.permute.xlu0 %6274
        %6276 = vrot.lane.b32.xlu0 %v1348, 8
        %v6277 = vpop.permute.xlu0 %6276
        %6278 = vrot.lane.b32.xlu0 %v1349, 8
        %v6279 = vpop.permute.xlu0 %6278
        %6280 = vrot.lane.b32.xlu0 %v1350, 8
        %v6281 = vpop.permute.xlu0 %6280
        %6282 = vrot.lane.b32.xlu0 %v1351, 8
        %v6283 = vpop.permute.xlu0 %6282
        %6284 = vrot.lane.b32.xlu0 %v1352, 8
        %v6285 = vpop.permute.xlu0 %6284
        %6286 = vrot.lane.b32.xlu0 %v1353, 8
        %v6287 = vpop.permute.xlu0 %6286
        %6288 = vrot.lane.b32.xlu0 %v1354, 8
        %v6289 = vpop.permute.xlu0 %6288
        %6290 = vrot.lane.b32.xlu0 %v1355, 8
        %v6291 = vpop.permute.xlu0 %6290
        %6292 = vrot.lane.b32.xlu0 %v1356, 8
        %v6293 = vpop.permute.xlu0 %6292
        %6294 = vrot.lane.b32.xlu0 %v1357, 8
        %v6295 = vpop.permute.xlu0 %6294
        %6296 = vrot.lane.b32.xlu0 %v1358, 8
        %v6297 = vpop.permute.xlu0 %6296
        %6298 = vrot.lane.b32.xlu0 %v1359, 8
        %v6299 = vpop.permute.xlu0 %6298
        %6300 = vrot.lane.b32.xlu0 %v1360, 8
        %v6301 = vpop.permute.xlu0 %6300
        %6302 = vrot.lane.b32.xlu0 %v1361, 8
        %v6303 = vpop.permute.xlu0 %6302
        %6352 = vrot.lane.b32.xlu0 %v1299, 12
        %v6353 = vpop.permute.xlu0 %6352
        %6354 = vrot.lane.b32.xlu0 %v1362, 12
        %v6355 = vpop.permute.xlu0 %6354
        %6356 = vrot.lane.b32.xlu0 %v1301, 12
        %v6357 = vpop.permute.xlu0 %6356
        %6358 = vrot.lane.b32.xlu0 %v1363, 12
        %v6359 = vpop.permute.xlu0 %6358
        %6360 = vrot.lane.b32.xlu0 %v1303, 12
        %v6361 = vpop.permute.xlu0 %6360
        %6362 = vrot.lane.b32.xlu0 %v1364, 12
        %v6363 = vpop.permute.xlu0 %6362
        %6364 = vrot.lane.b32.xlu0 %v1305, 12
        %v6365 = vpop.permute.xlu0 %6364
        %6366 = vrot.lane.b32.xlu0 %v1365, 12
        %v6367 = vpop.permute.xlu0 %6366
        %6368 = vrot.lane.b32.xlu0 %v1307, 12
        %v6369 = vpop.permute.xlu0 %6368
        %6370 = vrot.lane.b32.xlu0 %v1366, 12
        %v6371 = vpop.permute.xlu0 %6370
        %6372 = vrot.lane.b32.xlu0 %v1309, 12
        %v6373 = vpop.permute.xlu0 %6372
        %6374 = vrot.lane.b32.xlu0 %v1367, 12
        %v6375 = vpop.permute.xlu0 %6374
        %6376 = vrot.lane.b32.xlu0 %v1311, 12
        %v6377 = vpop.permute.xlu0 %6376
        %6378 = vrot.lane.b32.xlu0 %v1368, 12
        %v6379 = vpop.permute.xlu0 %6378
        %6380 = vrot.lane.b32.xlu0 %v1313, 12
        %v6381 = vpop.permute.xlu0 %6380
        %6382 = vrot.lane.b32.xlu0 %v1369, 12
        %v6383 = vpop.permute.xlu0 %6382
        %6384 = vrot.lane.b32.xlu0 %v1315, 12
        %v6385 = vpop.permute.xlu0 %6384
        %6386 = vrot.lane.b32.xlu0 %v1370, 12
        %v6387 = vpop.permute.xlu0 %6386
        %6388 = vrot.lane.b32.xlu0 %v1317, 12
        %v6389 = vpop.permute.xlu0 %6388
        %6390 = vrot.lane.b32.xlu0 %v1371, 12
        %v6391 = vpop.permute.xlu0 %6390
        %6392 = vrot.lane.b32.xlu0 %v1319, 12
        %v6393 = vpop.permute.xlu0 %6392
        %6394 = vrot.lane.b32.xlu0 %v1372, 12
        %v6395 = vpop.permute.xlu0 %6394
        %6396 = vrot.lane.b32.xlu0 %v1321, 12
        %v6397 = vpop.permute.xlu0 %6396
        %6398 = vrot.lane.b32.xlu0 %v1373, 12
        %v6399 = vpop.permute.xlu0 %6398
        %6400 = vrot.lane.b32.xlu0 %v1323, 12
        %v6401 = vpop.permute.xlu0 %6400
        %6402 = vrot.lane.b32.xlu0 %v1374, 12
        %v6403 = vpop.permute.xlu0 %6402
        %6404 = vrot.lane.b32.xlu0 %v1325, 12
        %v6405 = vpop.permute.xlu0 %6404
        %6406 = vrot.lane.b32.xlu0 %v1375, 12
        %v6407 = vpop.permute.xlu0 %6406
        %6408 = vrot.lane.b32.xlu0 %v1327, 12
        %v6409 = vpop.permute.xlu0 %6408
        %6410 = vrot.lane.b32.xlu0 %v1376, 12
        %v6411 = vpop.permute.xlu0 %6410
        %6412 = vrot.lane.b32.xlu0 %v1329, 12
        %v6413 = vpop.permute.xlu0 %6412
        %6414 = vrot.lane.b32.xlu0 %v1377, 12
        %v6415 = vpop.permute.xlu0 %6414
        %v6448 = vsel %vm223, %v1250, %v6113
        %v6449 = vsel %vm223, %v1281, %v6115
        %v6450 = vsel %vm223, %v1252, %v6117
        %v6451 = vsel %vm223, %v1282, %v6119
        %v6452 = vsel %vm223, %v1254, %v6121
        %v6453 = vsel %vm223, %v1283, %v6123
        %v6454 = vsel %vm223, %v1256, %v6125
        %v6455 = vsel %vm223, %v1284, %v6127
        %v6456 = vsel %vm223, %v1258, %v6129
        %v6457 = vsel %vm223, %v1285, %v6131
        %v6458 = vsel %vm223, %v1260, %v6133
        %v6459 = vsel %vm223, %v1286, %v6135
        %v6460 = vsel %vm223, %v1262, %v6137
        %v6461 = vsel %vm223, %v1287, %v6139
        %v6462 = vsel %vm223, %v1264, %v6141
        %v6463 = vsel %vm223, %v1288, %v6143
        %v6464 = vsel %vm223, %v1266, %v6145
        %v6465 = vsel %vm223, %v1289, %v6147
        %v6466 = vsel %vm223, %v1268, %v6149
        %v6467 = vsel %vm223, %v1290, %v6151
        %v6468 = vsel %vm223, %v1270, %v6153
        %v6469 = vsel %vm223, %v1291, %v6155
        %v6470 = vsel %vm223, %v1272, %v6157
        %v6471 = vsel %vm223, %v1292, %v6159
        %v6472 = vsel %vm223, %v1274, %v6161
        %v6473 = vsel %vm223, %v1293, %v6163
        %v6474 = vsel %vm223, %v1276, %v6165
        %v6475 = vsel %vm223, %v1294, %v6167
        %v6476 = vsel %vm223, %v1278, %v6169
        %v6477 = vsel %vm223, %v1295, %v6171
        %v6478 = vsel %vm223, %v1280, %v6173
        %v6479 = vsel %vm223, %v1296, %v6175
        %v6480 = vsel %vm3298, %v6448, %v6241
        %v6481 = vsel %vm3298, %v6449, %v6243
        %v6482 = vsel %vm3298, %v6450, %v6245
        %v6483 = vsel %vm3298, %v6451, %v6247
        %v6484 = vsel %vm3298, %v6452, %v6249
        %v6485 = vsel %vm3298, %v6453, %v6251
        %v6486 = vsel %vm3298, %v6454, %v6253
        %v6487 = vsel %vm3298, %v6455, %v6255
        %v6488 = vsel %vm3298, %v6456, %v6257
        %v6489 = vsel %vm3298, %v6457, %v6259
        %v6490 = vsel %vm3298, %v6458, %v6261
        %v6491 = vsel %vm3298, %v6459, %v6263
        %v6492 = vsel %vm3298, %v6460, %v6265
        %v6493 = vsel %vm3298, %v6461, %v6267
        %v6494 = vsel %vm3298, %v6462, %v6269
        %v6495 = vsel %vm3298, %v6463, %v6271
        %v6496 = vsel %vm3298, %v6464, %v6273
        %v6497 = vsel %vm3298, %v6465, %v6275
        %v6498 = vsel %vm3298, %v6466, %v6277
        %v6499 = vsel %vm3298, %v6467, %v6279
        %v6500 = vsel %vm3298, %v6468, %v6281
        %v6501 = vsel %vm3298, %v6469, %v6283
        %v6502 = vsel %vm3298, %v6470, %v6285
        %v6503 = vsel %vm3298, %v6471, %v6287
        %v6504 = vsel %vm3298, %v6472, %v6289
        %v6505 = vsel %vm3298, %v6473, %v6291
        %v6506 = vsel %vm3298, %v6474, %v6293
        %v6507 = vsel %vm3298, %v6475, %v6295
        %v6508 = vsel %vm3298, %v6476, %v6297
        %v6509 = vsel %vm3298, %v6477, %v6299
        %v6510 = vsel %vm3298, %v6478, %v6301
        %v6511 = vsel %vm3298, %v6479, %v6303
        %v6512 = vsel %vm3331, %v6480, %v6353
        %v6513 = vsel %vm3331, %v6481, %v6355
        %v6514 = vsel %vm3331, %v6482, %v6357
        %v6515 = vsel %vm3331, %v6483, %v6359
        %v6516 = vsel %vm3331, %v6484, %v6361
        %v6517 = vsel %vm3331, %v6485, %v6363
        %v6518 = vsel %vm3331, %v6486, %v6365
        %v6519 = vsel %vm3331, %v6487, %v6367
        %v6520 = vsel %vm3331, %v6488, %v6369
        %v6521 = vsel %vm3331, %v6489, %v6371
        %v6522 = vsel %vm3331, %v6490, %v6373
        %v6523 = vsel %vm3331, %v6491, %v6375
        %v6524 = vsel %vm3331, %v6492, %v6377
        %v6525 = vsel %vm3331, %v6493, %v6379
        %v6526 = vsel %vm3331, %v6494, %v6381
        %v6527 = vsel %vm3331, %v6495, %v6383
        %v6528 = vsel %vm3331, %v6496, %v6385
        %v6529 = vsel %vm3331, %v6497, %v6387
        %v6530 = vsel %vm3331, %v6498, %v6389
        %v6531 = vsel %vm3331, %v6499, %v6391
        %v6532 = vsel %vm3331, %v6500, %v6393
        %v6533 = vsel %vm3331, %v6501, %v6395
        %v6534 = vsel %vm3331, %v6502, %v6397
        %v6535 = vsel %vm3331, %v6503, %v6399
        %v6536 = vsel %vm3331, %v6504, %v6401
        %v6537 = vsel %vm3331, %v6505, %v6403
        %v6538 = vsel %vm3331, %v6506, %v6405
        %v6539 = vsel %vm3331, %v6507, %v6407
        %v6540 = vsel %vm3331, %v6508, %v6409
        %v6541 = vsel %vm3331, %v6509, %v6411
        %v6542 = vsel %vm3331, %v6510, %v6413
        %v6543 = vsel %vm3331, %v6511, %v6415
        %6576 = vrot.lane.b32.xlu0 %v6048, 64
        %v6577 = vpop.permute.xlu0 %6576
        %6578 = vrot.lane.b32.xlu0 %v6049, 64
        %v6579 = vpop.permute.xlu0 %6578
        %6580 = vrot.lane.b32.xlu0 %v6050, 64
        %v6581 = vpop.permute.xlu0 %6580
        %6582 = vrot.lane.b32.xlu0 %v6051, 64
        %v6583 = vpop.permute.xlu0 %6582
        %6584 = vrot.lane.b32.xlu0 %v6052, 64
        %v6585 = vpop.permute.xlu0 %6584
        %6586 = vrot.lane.b32.xlu0 %v6053, 64
        %v6587 = vpop.permute.xlu0 %6586
        %6588 = vrot.lane.b32.xlu0 %v6054, 64
        %v6589 = vpop.permute.xlu0 %6588
        %6590 = vrot.lane.b32.xlu0 %v6055, 64
        %v6591 = vpop.permute.xlu0 %6590
        %6592 = vrot.lane.b32.xlu0 %v6056, 64
        %v6593 = vpop.permute.xlu0 %6592
        %6594 = vrot.lane.b32.xlu0 %v6057, 64
        %v6595 = vpop.permute.xlu0 %6594
        %6596 = vrot.lane.b32.xlu0 %v6058, 64
        %v6597 = vpop.permute.xlu0 %6596
        %6598 = vrot.lane.b32.xlu0 %v6059, 64
        %v6599 = vpop.permute.xlu0 %6598
        %6600 = vrot.lane.b32.xlu0 %v6060, 64
        %v6601 = vpop.permute.xlu0 %6600
        %6602 = vrot.lane.b32.xlu0 %v6061, 64
        %v6603 = vpop.permute.xlu0 %6602
        %6604 = vrot.lane.b32.xlu0 %v6062, 64
        %v6605 = vpop.permute.xlu0 %6604
        %6606 = vrot.lane.b32.xlu0 %v6063, 64
        %v6607 = vpop.permute.xlu0 %6606
        %6608 = vrot.lane.b32.xlu0 %v6064, 64
        %v6609 = vpop.permute.xlu0 %6608
        %6610 = vrot.lane.b32.xlu0 %v6065, 64
        %v6611 = vpop.permute.xlu0 %6610
        %6612 = vrot.lane.b32.xlu0 %v6066, 64
        %v6613 = vpop.permute.xlu0 %6612
        %6614 = vrot.lane.b32.xlu0 %v6067, 64
        %v6615 = vpop.permute.xlu0 %6614
        %6616 = vrot.lane.b32.xlu0 %v6068, 64
        %v6617 = vpop.permute.xlu0 %6616
        %6618 = vrot.lane.b32.xlu0 %v6069, 64
        %v6619 = vpop.permute.xlu0 %6618
        %6620 = vrot.lane.b32.xlu0 %v6070, 64
        %v6621 = vpop.permute.xlu0 %6620
        %6622 = vrot.lane.b32.xlu0 %v6071, 64
        %v6623 = vpop.permute.xlu0 %6622
        %6624 = vrot.lane.b32.xlu0 %v6072, 64
        %v6625 = vpop.permute.xlu0 %6624
        %6626 = vrot.lane.b32.xlu0 %v6073, 64
        %v6627 = vpop.permute.xlu0 %6626
        %6628 = vrot.lane.b32.xlu0 %v6074, 64
        %v6629 = vpop.permute.xlu0 %6628
        %6630 = vrot.lane.b32.xlu0 %v6075, 64
        %v6631 = vpop.permute.xlu0 %6630
        %6632 = vrot.lane.b32.xlu0 %v6076, 64
        %v6633 = vpop.permute.xlu0 %6632
        %6634 = vrot.lane.b32.xlu0 %v6077, 64
        %v6635 = vpop.permute.xlu0 %6634
        %6636 = vrot.lane.b32.xlu0 %v6078, 64
        %v6637 = vpop.permute.xlu0 %6636
        %6638 = vrot.lane.b32.xlu0 %v6079, 64
        %v6639 = vpop.permute.xlu0 %6638
        %vm6672 = vcmask 523264
        %v6673 = vsel %vm6672, %v3728, %v6577
        %v6674 = vsel %vm6672, %v3729, %v6579
        %v6675 = vsel %vm6672, %v3730, %v6581
        %v6676 = vsel %vm6672, %v3731, %v6583
        %v6677 = vsel %vm6672, %v3732, %v6585
        %v6678 = vsel %vm6672, %v3733, %v6587
        %v6679 = vsel %vm6672, %v3734, %v6589
        %v6680 = vsel %vm6672, %v3735, %v6591
        %v6681 = vsel %vm6672, %v3736, %v6593
        %v6682 = vsel %vm6672, %v3737, %v6595
        %v6683 = vsel %vm6672, %v3738, %v6597
        %v6684 = vsel %vm6672, %v3739, %v6599
        %v6685 = vsel %vm6672, %v3740, %v6601
        %v6686 = vsel %vm6672, %v3741, %v6603
        %v6687 = vsel %vm6672, %v3742, %v6605
        %v6688 = vsel %vm6672, %v3743, %v6607
        %v6689 = vsel %vm6672, %v3744, %v6609
        %v6690 = vsel %vm6672, %v3745, %v6611
        %v6691 = vsel %vm6672, %v3746, %v6613
        %v6692 = vsel %vm6672, %v3747, %v6615
        %v6693 = vsel %vm6672, %v3748, %v6617
        %v6694 = vsel %vm6672, %v3749, %v6619
        %v6695 = vsel %vm6672, %v3750, %v6621
        %v6696 = vsel %vm6672, %v3751, %v6623
        %v6697 = vsel %vm6672, %v3752, %v6625
        %v6698 = vsel %vm6672, %v3753, %v6627
        %v6699 = vsel %vm6672, %v3754, %v6629
        %v6700 = vsel %vm6672, %v3755, %v6631
        %v6701 = vsel %vm6672, %v3756, %v6633
        %v6702 = vsel %vm6672, %v3757, %v6635
        %v6703 = vsel %vm6672, %v3758, %v6637
        %v6704 = vsel %vm6672, %v3759, %v6639
        %v6705 = vld [vmem:[%s1] sm:$0xff]
        %v6706 = vld [vmem:[%s1 + $0x8] sm:$0xff]
        %v6707 = vld [vmem:[%s1 + $0x10] sm:$0xff]
        %v6708 = vld [vmem:[%s1 + $0x18] sm:$0xff]
        %v6709 = vld [vmem:[%s1 + $0x20] sm:$0xff]
        %v6710 = vld [vmem:[%s1 + $0x28] sm:$0xff]
        %v6711 = vld [vmem:[%s1 + $0x30] sm:$0xff]
        %v6712 = vld [vmem:[%s1 + $0x38] sm:$0xff]
        %v6713 = vld [vmem:[%s1 + $0x40] sm:$0xff]
        %v6714 = vld [vmem:[%s1 + $0x48] sm:$0xff]
        %v6715 = vld [vmem:[%s1 + $0x50] sm:$0xff]
        %v6716 = vld [vmem:[%s1 + $0x58] sm:$0xff]
        %v6717 = vld [vmem:[%s1 + $0x60] sm:$0xff]
        %v6718 = vld [vmem:[%s1 + $0x68] sm:$0xff]
        %v6719 = vld [vmem:[%s1 + $0x70] sm:$0xff]
        %v6720 = vld [vmem:[%s1 + $0x78] sm:$0xff]
        %v6721 = vld [vmem:[%s1 + $0x80] sm:$0xff]
        %v6722 = vld [vmem:[%s1 + $0x88] sm:$0xff]
        %v6723 = vld [vmem:[%s2] sm:$0x1]
        %v6725 = vlaneseq
        %v6726 = vshrl.u32 %v6725, 7
        %v6727 = vsub.s32 0, %v6726
        %v6728 = vrot.slane %v6723, %v6727
        %v6731 = vsel %vm3364, %v6512, 0
        %v6734 = vsel %vm3364, %v6513, 0
        %v6737 = vsel %vm3364, %v6514, 0
        %v6740 = vsel %vm3364, %v6515, 0
        %v6743 = vsel %vm3364, %v6516, 0
        %v6746 = vsel %vm3364, %v6517, 0
        %v6749 = vsel %vm3364, %v6518, 0
        %v6752 = vsel %vm3364, %v6519, 0
        %v6755 = vsel %vm3364, %v6520, 0
        %v6758 = vsel %vm3364, %v6521, 0
        %v6761 = vsel %vm3364, %v6522, 0
        %v6764 = vsel %vm3364, %v6523, 0
        %v6767 = vsel %vm3364, %v6524, 0
        %v6770 = vsel %vm3364, %v6525, 0
        %v6773 = vsel %vm3364, %v6526, 0
        %v6776 = vsel %vm3364, %v6527, 0
        %v6779 = vsel %vm3364, %v6528, 0
        %v6782 = vsel %vm3364, %v6529, 0
        %v6785 = vsel %vm3364, %v6530, 0
        %v6788 = vsel %vm3364, %v6531, 0
        %v6791 = vsel %vm3364, %v6532, 0
        %v6794 = vsel %vm3364, %v6533, 0
        %v6797 = vsel %vm3364, %v6534, 0
        %v6800 = vsel %vm3364, %v6535, 0
        %v6803 = vsel %vm3364, %v6536, 0
        %v6806 = vsel %vm3364, %v6537, 0
        %v6809 = vsel %vm3364, %v6538, 0
        %v6812 = vsel %vm3364, %v6539, 0
        %v6815 = vsel %vm3364, %v6540, 0
        %v6818 = vsel %vm3364, %v6541, 0
        %v6821 = vsel %vm3364, %v6542, 0
        %v6824 = vsel %vm3364, %v6543, 0
        %6826 = vmatprep.subr.mxu0 0.0
        %6827 = vmatpush1.msra.mxu0 %v6705
        %6828 = vmatprep.subr.mxu0 0.0
        %6829 = vmatpush1.msra.mxu0 %v6706
        %6830 = vmatprep.subr.mxu0 0.0
        %6831 = vmatpush1.msra.mxu0 %v6707
        %6832 = vmatprep.subr.mxu0 0.0
        %6833 = vmatpush1.msra.mxu0 %v6708
        %6834 = vmatprep.subr.mxu0 0.0
        %6835 = vmatpush1.msra.mxu0 %v6709
        %6836 = vmatprep.subr.mxu0 0.0
        %6837 = vmatpush1.msra.mxu0 %v6710
        %6838 = vmatprep.subr.mxu0 0.0
        %6839 = vmatpush1.msra.mxu0 %v6711
        %6840 = vmatprep.subr.mxu0 0.0
        %6841 = vmatpush1.msra.mxu0 %v6712
        %6842 = vmatprep.subr.mxu0 0.0
        %6843 = vmatpush1.msra.mxu0 %v6713
        %6844 = vmatprep.subr.mxu0 0.0
        %6845 = vmatpush1.msra.mxu0 %v6714
        %6846 = vmatprep.subr.mxu0 0.0
        %6847 = vmatpush1.msra.mxu0 %v6715
        %6848 = vmatprep.subr.mxu0 0.0
        %6849 = vmatpush1.msra.mxu0 %v6716
        %6850 = vmatprep.subr.mxu0 0.0
        %6851 = vmatpush1.msra.mxu0 %v6717
        %6852 = vmatprep.subr.mxu0 0.0
        %6853 = vmatpush1.msra.mxu0 %v6718
        %6854 = vmatprep.subr.mxu0 0.0
        %6855 = vmatpush1.msra.mxu0 %v6719
        %6856 = vmatprep.subr.mxu0 0.0
        %6857 = vmatpush1.msra.mxu0 %v6720
        %6858 = vmatprep.subr.mxu0 0.0
        %6859 = vmatpush1.msra.mxu0 %v6721
        %6860 = vmatprep.subr.mxu0 0.0
        %6861 = vmatpush1.msra.mxu0 %v6722
        %6862 = vmatprep.subr.mxu0 0.0
        %6863 = vmatpush1.msra.mxu0 0.0
        %6864 = vmatprep.subr.mxu0 0.0
        %6865 = vmatpush1.msra.mxu0 0.0
        %6866 = vmatprep.subr.mxu0 0.0
        %6867 = vmatpush1.msra.mxu0 0.0
        %6868 = vmatprep.subr.mxu0 0.0
        %6869 = vmatpush1.msra.mxu0 0.0
        %6870 = vmatprep.subr.mxu0 0.0
        %6871 = vmatpush1.msra.mxu0 0.0
        %6872 = vmatprep.subr.mxu0 0.0
        %6873 = vmatpush1.msra.mxu0 0.0
        %6874 = vmatprep.subr.mxu0 0.0
        %6875 = vmatpush1.msra.mxu0 0.0
        %6876 = vmatprep.subr.mxu0 0.0
        %6877 = vmatpush1.msra.mxu0 0.0
        %6878 = vmatprep.subr.mxu0 0.0
        %6879 = vmatpush1.msra.mxu0 0.0
        %6880 = vmatprep.subr.mxu0 0.0
        %6881 = vmatpush1.msra.mxu0 0.0
        %6882 = vmatprep.subr.mxu0 0.0
        %6883 = vmatpush1.msra.mxu0 0.0
        %6884 = vmatprep.subr.mxu0 0.0
        %6885 = vmatpush1.msra.mxu0 0.0
        %6886 = vmatprep.subr.mxu0 0.0
        %6887 = vmatpush1.msra.mxu0 0.0
        %6888 = vmatprep.subr.mxu0 0.0
        %6889 = vmatpush1.msra.mxu0 0.0
        %6890 = vmatprep.mubr.f32.mxu0 %v6731
        %6891 = vmatmul.mubr.f32.gmra.mrb[0].mxu0 %v6673
        %v6892 = vpop.f32.mrb[0].mxu0
        %v6893 = vadd.f32 %v6728, %v6892
        %v6894 = vpop.f32.mrb[0].mxu0
        %6895 = vmatprep.mubr.f32.mxu0 %v6734
        %6896 = vmatmul.mubr.f32.gmra.mrb[0].mxu0 %v6674
        %v6897 = vpop.f32.mrb[0].mxu0
        %v6898 = vadd.f32 %v6728, %v6897
        %v6899 = vpop.f32.mrb[0].mxu0
        %6900 = vmatprep.mubr.f32.mxu0 %v6737
        %6901 = vmatmul.mubr.f32.gmra.mrb[0].mxu0 %v6675
        %v6902 = vpop.f32.mrb[0].mxu0
        %v6903 = vadd.f32 %v6728, %v6902
        %v6904 = vpop.f32.mrb[0].mxu0
        %6905 = vmatprep.mubr.f32.mxu0 %v6740
        %6906 = vmatmul.mubr.f32.gmra.mrb[0].mxu0 %v6676
        %v6907 = vpop.f32.mrb[0].mxu0
        %v6908 = vadd.f32 %v6728, %v6907
        %v6909 = vpop.f32.mrb[0].mxu0
        %6910 = vmatprep.mubr.f32.mxu0 %v6743
        %6911 = vmatmul.mubr.f32.gmra.mrb[0].mxu0 %v6677
        %v6912 = vpop.f32.mrb[0].mxu0
        %v6913 = vadd.f32 %v6728, %v6912
        %v6914 = vpop.f32.mrb[0].mxu0
        %6915 = vmatprep.mubr.f32.mxu0 %v6746
        %6916 = vmatmul.mubr.f32.gmra.mrb[0].mxu0 %v6678
        %v6917 = vpop.f32.mrb[0].mxu0
        %v6918 = vadd.f32 %v6728, %v6917
        %v6919 = vpop.f32.mrb[0].mxu0
        %6920 = vmatprep.mubr.f32.mxu0 %v6749
        %6921 = vmatmul.mubr.f32.gmra.mrb[0].mxu0 %v6679
        %v6922 = vpop.f32.mrb[0].mxu0
        %v6923 = vadd.f32 %v6728, %v6922
        %v6924 = vpop.f32.mrb[0].mxu0
        %6925 = vmatprep.mubr.f32.mxu0 %v6752
        %6926 = vmatmul.mubr.f32.gmra.mrb[0].mxu0 %v6680
        %v6927 = vpop.f32.mrb[0].mxu0
        %v6928 = vadd.f32 %v6728, %v6927
        %v6929 = vpop.f32.mrb[0].mxu0
        %6930 = vmatprep.mubr.f32.mxu0 %v6755
        %6931 = vmatmul.mubr.f32.gmra.mrb[0].mxu0 %v6681
        %v6932 = vpop.f32.mrb[0].mxu0
        %v6933 = vadd.f32 %v6728, %v6932
        %v6934 = vpop.f32.mrb[0].mxu0
        %6935 = vmatprep.mubr.f32.mxu0 %v6758
        %6936 = vmatmul.mubr.f32.gmra.mrb[0].mxu0 %v6682
        %v6937 = vpop.f32.mrb[0].mxu0
        %v6938 = vadd.f32 %v6728, %v6937
        %v6939 = vpop.f32.mrb[0].mxu0
        %6940 = vmatprep.mubr.f32.mxu0 %v6761
        %6941 = vmatmul.mubr.f32.gmra.mrb[0].mxu0 %v6683
        %v6942 = vpop.f32.mrb[0].mxu0
        %v6943 = vadd.f32 %v6728, %v6942
        %v6944 = vpop.f32.mrb[0].mxu0
        %6945 = vmatprep.mubr.f32.mxu0 %v6764
        %6946 = vmatmul.mubr.f32.gmra.mrb[0].mxu0 %v6684
        %v6947 = vpop.f32.mrb[0].mxu0
        %v6948 = vadd.f32 %v6728, %v6947
        %v6949 = vpop.f32.mrb[0].mxu0
        %6950 = vmatprep.mubr.f32.mxu0 %v6767
        %6951 = vmatmul.mubr.f32.gmra.mrb[0].mxu0 %v6685
        %v6952 = vpop.f32.mrb[0].mxu0
        %v6953 = vadd.f32 %v6728, %v6952
        %v6954 = vpop.f32.mrb[0].mxu0
        %6955 = vmatprep.mubr.f32.mxu0 %v6770
        %6956 = vmatmul.mubr.f32.gmra.mrb[0].mxu0 %v6686
        %v6957 = vpop.f32.mrb[0].mxu0
        %v6958 = vadd.f32 %v6728, %v6957
        %v6959 = vpop.f32.mrb[0].mxu0
        %6960 = vmatprep.mubr.f32.mxu0 %v6773
        %6961 = vmatmul.mubr.f32.gmra.mrb[0].mxu0 %v6687
        %v6962 = vpop.f32.mrb[0].mxu0
        %v6963 = vadd.f32 %v6728, %v6962
        %v6964 = vpop.f32.mrb[0].mxu0
        %6965 = vmatprep.mubr.f32.mxu0 %v6776
        %6966 = vmatmul.mubr.f32.gmra.mrb[0].mxu0 %v6688
        %v6967 = vpop.f32.mrb[0].mxu0
        %v6968 = vadd.f32 %v6728, %v6967
        %v6969 = vpop.f32.mrb[0].mxu0
        %6970 = vmatprep.mubr.f32.mxu0 %v6779
        %6971 = vmatmul.mubr.f32.gmra.mrb[0].mxu0 %v6689
        %v6972 = vpop.f32.mrb[0].mxu0
        %v6973 = vadd.f32 %v6728, %v6972
        %v6974 = vpop.f32.mrb[0].mxu0
        %6975 = vmatprep.mubr.f32.mxu0 %v6782
        %6976 = vmatmul.mubr.f32.gmra.mrb[0].mxu0 %v6690
        %v6977 = vpop.f32.mrb[0].mxu0
        %v6978 = vadd.f32 %v6728, %v6977
        %v6979 = vpop.f32.mrb[0].mxu0
        %6980 = vmatprep.mubr.f32.mxu0 %v6785
        %6981 = vmatmul.mubr.f32.gmra.mrb[0].mxu0 %v6691
        %v6982 = vpop.f32.mrb[0].mxu0
        %v6983 = vadd.f32 %v6728, %v6982
        %v6984 = vpop.f32.mrb[0].mxu0
        %6985 = vmatprep.mubr.f32.mxu0 %v6788
        %6986 = vmatmul.mubr.f32.gmra.mrb[0].mxu0 %v6692
        %v6987 = vpop.f32.mrb[0].mxu0
        %v6988 = vadd.f32 %v6728, %v6987
        %v6989 = vpop.f32.mrb[0].mxu0
        %6990 = vmatprep.mubr.f32.mxu0 %v6791
        %6991 = vmatmul.mubr.f32.gmra.mrb[0].mxu0 %v6693
        %v6992 = vpop.f32.mrb[0].mxu0
        %v6993 = vadd.f32 %v6728, %v6992
        %v6994 = vpop.f32.mrb[0].mxu0
        %6995 = vmatprep.mubr.f32.mxu0 %v6794
        %6996 = vmatmul.mubr.f32.gmra.mrb[0].mxu0 %v6694
        %v6997 = vpop.f32.mrb[0].mxu0
        %v6998 = vadd.f32 %v6728, %v6997
        %v6999 = vpop.f32.mrb[0].mxu0
        %7000 = vmatprep.mubr.f32.mxu0 %v6797
        %7001 = vmatmul.mubr.f32.gmra.mrb[0].mxu0 %v6695
        %v7002 = vpop.f32.mrb[0].mxu0
        %v7003 = vadd.f32 %v6728, %v7002
        %v7004 = vpop.f32.mrb[0].mxu0
        %7005 = vmatprep.mubr.f32.mxu0 %v6800
        %7006 = vmatmul.mubr.f32.gmra.mrb[0].mxu0 %v6696
        %v7007 = vpop.f32.mrb[0].mxu0
        %v7008 = vadd.f32 %v6728, %v7007
        %v7009 = vpop.f32.mrb[0].mxu0
        %7010 = vmatprep.mubr.f32.mxu0 %v6803
        %7011 = vmatmul.mubr.f32.gmra.mrb[0].mxu0 %v6697
        %v7012 = vpop.f32.mrb[0].mxu0
        %v7013 = vadd.f32 %v6728, %v7012
        %v7014 = vpop.f32.mrb[0].mxu0
        %7015 = vmatprep.mubr.f32.mxu0 %v6806
        %7016 = vmatmul.mubr.f32.gmra.mrb[0].mxu0 %v6698
        %v7017 = vpop.f32.mrb[0].mxu0
        %v7018 = vadd.f32 %v6728, %v7017
        %v7019 = vpop.f32.mrb[0].mxu0
        %7020 = vmatprep.mubr.f32.mxu0 %v6809
        %7021 = vmatmul.mubr.f32.gmra.mrb[0].mxu0 %v6699
        %v7022 = vpop.f32.mrb[0].mxu0
        %v7023 = vadd.f32 %v6728, %v7022
        %v7024 = vpop.f32.mrb[0].mxu0
        %7025 = vmatprep.mubr.f32.mxu0 %v6812
        %7026 = vmatmul.mubr.f32.gmra.mrb[0].mxu0 %v6700
        %v7027 = vpop.f32.mrb[0].mxu0
        %v7028 = vadd.f32 %v6728, %v7027
        %v7029 = vpop.f32.mrb[0].mxu0
        %7030 = vmatprep.mubr.f32.mxu0 %v6815
        %7031 = vmatmul.mubr.f32.gmra.mrb[0].mxu0 %v6701
        %v7032 = vpop.f32.mrb[0].mxu0
        %v7033 = vadd.f32 %v6728, %v7032
        %v7034 = vpop.f32.mrb[0].mxu0
        %7035 = vmatprep.mubr.f32.mxu0 %v6818
        %7036 = vmatmul.mubr.f32.gmra.mrb[0].mxu0 %v6702
        %v7037 = vpop.f32.mrb[0].mxu0
        %v7038 = vadd.f32 %v6728, %v7037
        %v7039 = vpop.f32.mrb[0].mxu0
        %7040 = vmatprep.mubr.f32.mxu0 %v6821
        %7041 = vmatmul.mubr.f32.gmra.mrb[0].mxu0 %v6703
        %v7042 = vpop.f32.mrb[0].mxu0
        %v7043 = vadd.f32 %v6728, %v7042
        %v7044 = vpop.f32.mrb[0].mxu0
        %7045 = vmatprep.mubr.f32.mxu0 %v6824
        %7046 = vmatmul.mubr.f32.gmra.mrb[0].mxu0 %v6704
        %v7047 = vpop.f32.mrb[0].mxu0
        %v7048 = vadd.f32 %v6728, %v7047
        %v7049 = vpop.f32.mrb[0].mxu0
        %7050 = vdwg.mxu0
        %v7051 = vmul.f32 %v6893, 0.1
        %v7052 = vmul.f32 %v6898, 0.1
        %v7053 = vmul.f32 %v6903, 0.1
        %v7054 = vmul.f32 %v6908, 0.1
        %v7055 = vmul.f32 %v6913, 0.1
        %v7056 = vmul.f32 %v6918, 0.1
        %v7057 = vmul.f32 %v6923, 0.1
        %v7058 = vmul.f32 %v6928, 0.1
        %v7059 = vmul.f32 %v6933, 0.1
        %v7060 = vmul.f32 %v6938, 0.1
        %v7061 = vmul.f32 %v6943, 0.1
        %v7062 = vmul.f32 %v6948, 0.1
        %v7063 = vmul.f32 %v6953, 0.1
        %v7064 = vmul.f32 %v6958, 0.1
        %v7065 = vmul.f32 %v6963, 0.1
        %v7066 = vmul.f32 %v6968, 0.1
        %v7067 = vmul.f32 %v6973, 0.1
        %v7068 = vmul.f32 %v6978, 0.1
        %v7069 = vmul.f32 %v6983, 0.1
        %v7070 = vmul.f32 %v6988, 0.1
        %v7071 = vmul.f32 %v6993, 0.1
        %v7072 = vmul.f32 %v6998, 0.1
        %v7073 = vmul.f32 %v7003, 0.1
        %v7074 = vmul.f32 %v7008, 0.1
        %v7075 = vmul.f32 %v7013, 0.1
        %v7076 = vmul.f32 %v7018, 0.1
        %v7077 = vmul.f32 %v7023, 0.1
        %v7078 = vmul.f32 %v7028, 0.1
        %v7079 = vmul.f32 %v7033, 0.1
        %v7080 = vmul.f32 %v7038, 0.1
        %v7081 = vmul.f32 %v7043, 0.1
        %v7082 = vmul.f32 %v7048, 0.1
        %v7083 = vmax.f32 %v6893, %v7051
        %v7084 = vmax.f32 %v6898, %v7052
        %v7085 = vmax.f32 %v6903, %v7053
        %v7086 = vmax.f32 %v6908, %v7054
        %v7087 = vmax.f32 %v6913, %v7055
        %v7088 = vmax.f32 %v6918, %v7056
        %v7089 = vmax.f32 %v6923, %v7057
        %v7090 = vmax.f32 %v6928, %v7058
        %v7091 = vmax.f32 %v6933, %v7059
        %v7092 = vmax.f32 %v6938, %v7060
        %v7093 = vmax.f32 %v6943, %v7061
        %v7094 = vmax.f32 %v6948, %v7062
        %v7095 = vmax.f32 %v6953, %v7063
        %v7096 = vmax.f32 %v6958, %v7064
        %v7097 = vmax.f32 %v6963, %v7065
        %v7098 = vmax.f32 %v6968, %v7066
        %v7099 = vmax.f32 %v6973, %v7067
        %v7100 = vmax.f32 %v6978, %v7068
        %v7101 = vmax.f32 %v6983, %v7069
        %v7102 = vmax.f32 %v6988, %v7070
        %v7103 = vmax.f32 %v6993, %v7071
        %v7104 = vmax.f32 %v6998, %v7072
        %v7105 = vmax.f32 %v7003, %v7073
        %v7106 = vmax.f32 %v7008, %v7074
        %v7107 = vmax.f32 %v7013, %v7075
        %v7108 = vmax.f32 %v7018, %v7076
        %v7109 = vmax.f32 %v7023, %v7077
        %v7110 = vmax.f32 %v7028, %v7078
        %v7111 = vmax.f32 %v7033, %v7079
        %v7112 = vmax.f32 %v7038, %v7080
        %v7113 = vmax.f32 %v7043, %v7081
        %v7114 = vmax.f32 %v7048, %v7082
        %7115 = vst.msk [vmem:[#allocation3] sm:$0xff] %vm3364, 0.0
        %7116 = vst.msk [vmem:[#allocation3 + $0x8] sm:$0xff] %vm3364, 0.0
        %vm7117 = vcmask 123904
        %7118 = vst.msk [vmem:[#allocation3 + $0x10] sm:$0x3] %vm7117, 0.0
        %s7119 = scalar_lea.vmem [#allocation3], 408
        %7120 = vst.msk [vmem:[%s7119] sm:$0xff] %vm3364, 0.0
        %7121 = vst.msk [vmem:[%s7119 + $0x8] sm:$0xff] %vm3364, 0.0
        %7122 = vst.msk [vmem:[%s7119 + $0x10] sm:$0x3] %vm7117, 0.0
        %vm7123 = vcmask 122880
        %7124 = vst.msk [vmem:[#allocation3] sm:$0x1] %vm7123, 0.0
        %7125 = vst.msk [vmem:[#allocation3 + $0x18] sm:$0x1] %vm7123, 0.0
        %7126 = vst.msk [vmem:[#allocation3 + $0x30] sm:$0x1] %vm7123, 0.0
        %7127 = vst.msk [vmem:[#allocation3 + $0x48] sm:$0x1] %vm7123, 0.0
        %7128 = vst.msk [vmem:[#allocation3 + $0x60] sm:$0x1] %vm7123, 0.0
        %7129 = vst.msk [vmem:[#allocation3 + $0x78] sm:$0x1] %vm7123, 0.0
        %7130 = vst.msk [vmem:[#allocation3 + $0x90] sm:$0x1] %vm7123, 0.0
        %7131 = vst.msk [vmem:[#allocation3 + $0xa8] sm:$0x1] %vm7123, 0.0
        %7132 = vst.msk [vmem:[#allocation3 + $0xc0] sm:$0x1] %vm7123, 0.0
        %7133 = vst.msk [vmem:[#allocation3 + $0xd8] sm:$0x1] %vm7123, 0.0
        %7134 = vst.msk [vmem:[#allocation3 + $0xf0] sm:$0x1] %vm7123, 0.0
        %7135 = vst.msk [vmem:[#allocation3 + $0x108] sm:$0x1] %vm7123, 0.0
        %7136 = vst.msk [vmem:[#allocation3 + $0x120] sm:$0x1] %vm7123, 0.0
        %7137 = vst.msk [vmem:[#allocation3 + $0x138] sm:$0x1] %vm7123, 0.0
        %7138 = vst.msk [vmem:[#allocation3 + $0x150] sm:$0x1] %vm7123, 0.0
        %7139 = vst.msk [vmem:[#allocation3 + $0x168] sm:$0x1] %vm7123, 0.0
        %7140 = vst.msk [vmem:[#allocation3 + $0x180] sm:$0x1] %vm7123, 0.0
        %7141 = vst.msk [vmem:[#allocation3 + $0x198] sm:$0x1] %vm7123, 0.0
        %7142 = vst.msk [vmem:[#allocation3 + $0x11] sm:$0x1] %vm7123, 0.0
        %7143 = vst.msk [vmem:[#allocation3 + $0x29] sm:$0x1] %vm7123, 0.0
        %7144 = vst.msk [vmem:[#allocation3 + $0x41] sm:$0x1] %vm7123, 0.0
        %7145 = vst.msk [vmem:[#allocation3 + $0x59] sm:$0x1] %vm7123, 0.0
        %7146 = vst.msk [vmem:[#allocation3 + $0x71] sm:$0x1] %vm7123, 0.0
        %7147 = vst.msk [vmem:[#allocation3 + $0x89] sm:$0x1] %vm7123, 0.0
        %7148 = vst.msk [vmem:[#allocation3 + $0xa1] sm:$0x1] %vm7123, 0.0
        %7149 = vst.msk [vmem:[#allocation3 + $0xb9] sm:$0x1] %vm7123, 0.0
        %7150 = vst.msk [vmem:[#allocation3 + $0xd1] sm:$0x1] %vm7123, 0.0
        %7151 = vst.msk [vmem:[#allocation3 + $0xe9] sm:$0x1] %vm7123, 0.0
        %7152 = vst.msk [vmem:[#allocation3 + $0x101] sm:$0x1] %vm7123, 0.0
        %7153 = vst.msk [vmem:[#allocation3 + $0x119] sm:$0x1] %vm7123, 0.0
        %7154 = vst.msk [vmem:[#allocation3 + $0x131] sm:$0x1] %vm7123, 0.0
        %7155 = vst.msk [vmem:[#allocation3 + $0x149] sm:$0x1] %vm7123, 0.0
        %7156 = vst.msk [vmem:[#allocation3 + $0x161] sm:$0x1] %vm7123, 0.0
        %7157 = vst.msk [vmem:[#allocation3 + $0x179] sm:$0x1] %vm7123, 0.0
        %7158 = vst.msk [vmem:[#allocation3 + $0x191] sm:$0x1] %vm7123, 0.0
        %7159 = vst.msk [vmem:[#allocation3 + $0x1a9] sm:$0x1] %vm7123, 0.0
        %s7160 = scalar_lea.vmem [#allocation3], 24
        %7161 = vst.msk [vmem:[%s7160 + $0x1] sm:$0xff] %vm3364, %v7083
        %7162 = vst.msk [vmem:[%s7160 + $0x9] sm:$0xff] %vm3364, %v7084
        %7163 = vst.msk [vmem:[%s7160 + $0x19] sm:$0xff] %vm3364, %v7085
        %7164 = vst.msk [vmem:[%s7160 + $0x21] sm:$0xff] %vm3364, %v7086
        %7165 = vst.msk [vmem:[%s7160 + $0x31] sm:$0xff] %vm3364, %v7087
        %7166 = vst.msk [vmem:[%s7160 + $0x39] sm:$0xff] %vm3364, %v7088
        %7167 = vst.msk [vmem:[%s7160 + $0x49] sm:$0xff] %vm3364, %v7089
        %7168 = vst.msk [vmem:[%s7160 + $0x51] sm:$0xff] %vm3364, %v7090
        %7169 = vst.msk [vmem:[%s7160 + $0x61] sm:$0xff] %vm3364, %v7091
        %7170 = vst.msk [vmem:[%s7160 + $0x69] sm:$0xff] %vm3364, %v7092
        %7171 = vst.msk [vmem:[%s7160 + $0x79] sm:$0xff] %vm3364, %v7093
        %7172 = vst.msk [vmem:[%s7160 + $0x81] sm:$0xff] %vm3364, %v7094
        %7173 = vst.msk [vmem:[%s7160 + $0x91] sm:$0xff] %vm3364, %v7095
        %7174 = vst.msk [vmem:[%s7160 + $0x99] sm:$0xff] %vm3364, %v7096
        %7175 = vst.msk [vmem:[%s7160 + $0xa9] sm:$0xff] %vm3364, %v7097
        %7176 = vst.msk [vmem:[%s7160 + $0xb1] sm:$0xff] %vm3364, %v7098
        %7177 = vst.msk [vmem:[%s7160 + $0xc1] sm:$0xff] %vm3364, %v7099
        %7178 = vst.msk [vmem:[%s7160 + $0xc9] sm:$0xff] %vm3364, %v7100
        %7179 = vst.msk [vmem:[%s7160 + $0xd9] sm:$0xff] %vm3364, %v7101
        %7180 = vst.msk [vmem:[%s7160 + $0xe1] sm:$0xff] %vm3364, %v7102
        %7181 = vst.msk [vmem:[%s7160 + $0xf1] sm:$0xff] %vm3364, %v7103
        %7182 = vst.msk [vmem:[%s7160 + $0xf9] sm:$0xff] %vm3364, %v7104
        %7183 = vst.msk [vmem:[%s7160 + $0x109] sm:$0xff] %vm3364, %v7105
        %7184 = vst.msk [vmem:[%s7160 + $0x111] sm:$0xff] %vm3364, %v7106
        %7185 = vst.msk [vmem:[%s7160 + $0x121] sm:$0xff] %vm3364, %v7107
        %7186 = vst.msk [vmem:[%s7160 + $0x129] sm:$0xff] %vm3364, %v7108
        %7187 = vst.msk [vmem:[%s7160 + $0x139] sm:$0xff] %vm3364, %v7109
        %7188 = vst.msk [vmem:[%s7160 + $0x141] sm:$0xff] %vm3364, %v7110
        %7189 = vst.msk [vmem:[%s7160 + $0x151] sm:$0xff] %vm3364, %v7111
        %7190 = vst.msk [vmem:[%s7160 + $0x159] sm:$0xff] %vm3364, %v7112
        %7191 = vst.msk [vmem:[%s7160 + $0x169] sm:$0xff] %vm3364, %v7113
        %7192 = vst.msk [vmem:[%s7160 + $0x171] sm:$0xff] %vm3364, %v7114
        %v7193 = vld [vmem:[#allocation3] sm:$0xff]
        %v7194 = vld [vmem:[#allocation3 + $0x8] sm:$0xff]
        %v7195 = vld [vmem:[#allocation3 + $0x18] sm:$0xff]
        %v7196 = vld [vmem:[#allocation3 + $0x20] sm:$0xff]
        %v7197 = vld [vmem:[#allocation3 + $0x30] sm:$0xff]
        %v7198 = vld [vmem:[#allocation3 + $0x38] sm:$0xff]
        %v7199 = vld [vmem:[#allocation3 + $0x48] sm:$0xff]
        %v7200 = vld [vmem:[#allocation3 + $0x50] sm:$0xff]
        %v7201 = vld [vmem:[#allocation3 + $0x60] sm:$0xff]
        %v7202 = vld [vmem:[#allocation3 + $0x68] sm:$0xff]
        %v7203 = vld [vmem:[#allocation3 + $0x78] sm:$0xff]
        %v7204 = vld [vmem:[#allocation3 + $0x80] sm:$0xff]
        %v7205 = vld [vmem:[#allocation3 + $0x90] sm:$0xff]
        %v7206 = vld [vmem:[#allocation3 + $0x98] sm:$0xff]
        %v7207 = vld [vmem:[#allocation3 + $0xa8] sm:$0xff]
        %v7208 = vld [vmem:[#allocation3 + $0xb0] sm:$0xff]
        %v7209 = vld [vmem:[#allocation3 + $0xc0] sm:$0xff]
        %v7210 = vld [vmem:[#allocation3 + $0xc8] sm:$0xff]
        %v7211 = vld [vmem:[#allocation3 + $0xd8] sm:$0xff]
        %v7212 = vld [vmem:[#allocation3 + $0xe0] sm:$0xff]
        %v7213 = vld [vmem:[#allocation3 + $0xf0] sm:$0xff]
        %v7214 = vld [vmem:[#allocation3 + $0xf8] sm:$0xff]
        %v7215 = vld [vmem:[#allocation3 + $0x108] sm:$0xff]
        %v7216 = vld [vmem:[#allocation3 + $0x110] sm:$0xff]
        %v7217 = vld [vmem:[#allocation3 + $0x120] sm:$0xff]
        %v7218 = vld [vmem:[#allocation3 + $0x128] sm:$0xff]
        %v7219 = vld [vmem:[#allocation3 + $0x138] sm:$0xff]
        %v7220 = vld [vmem:[#allocation3 + $0x140] sm:$0xff]
        %v7221 = vld [vmem:[#allocation3 + $0x150] sm:$0xff]
        %v7222 = vld [vmem:[#allocation3 + $0x158] sm:$0xff]
        %v7223 = vld [vmem:[#allocation3 + $0x168] sm:$0xff]
        %v7224 = vld [vmem:[#allocation3 + $0x170] sm:$0xff]
        %v7225 = vld [vmem:[#allocation3 + $0x1] sm:$0xff]
        %v7226 = vld [vmem:[#allocation3 + $0x9] sm:$0xff]
        %v7227 = vld [vmem:[#allocation3 + $0x19] sm:$0xff]
        %v7228 = vld [vmem:[#allocation3 + $0x21] sm:$0xff]
        %v7229 = vld [vmem:[#allocation3 + $0x31] sm:$0xff]
        %v7230 = vld [vmem:[#allocation3 + $0x39] sm:$0xff]
        %v7231 = vld [vmem:[#allocation3 + $0x49] sm:$0xff]
        %v7232 = vld [vmem:[#allocation3 + $0x51] sm:$0xff]
        %v7233 = vld [vmem:[#allocation3 + $0x61] sm:$0xff]
        %v7234 = vld [vmem:[#allocation3 + $0x69] sm:$0xff]
        %v7235 = vld [vmem:[#allocation3 + $0x79] sm:$0xff]
        %v7236 = vld [vmem:[#allocation3 + $0x81] sm:$0xff]
        %v7237 = vld [vmem:[#allocation3 + $0x91] sm:$0xff]
        %v7238 = vld [vmem:[#allocation3 + $0x99] sm:$0xff]
        %v7239 = vld [vmem:[#allocation3 + $0xa9] sm:$0xff]
        %v7240 = vld [vmem:[#allocation3 + $0xb1] sm:$0xff]
        %v7241 = vld [vmem:[#allocation3 + $0xc1] sm:$0xff]
        %v7242 = vld [vmem:[#allocation3 + $0xc9] sm:$0xff]
        %v7243 = vld [vmem:[#allocation3 + $0xd9] sm:$0xff]
        %v7244 = vld [vmem:[#allocation3 + $0xe1] sm:$0xff]
        %v7245 = vld [vmem:[#allocation3 + $0xf1] sm:$0xff]
        %v7246 = vld [vmem:[#allocation3 + $0xf9] sm:$0xff]
        %v7247 = vld [vmem:[#allocation3 + $0x109] sm:$0xff]
        %v7248 = vld [vmem:[#allocation3 + $0x111] sm:$0xff]
        %v7249 = vld [vmem:[#allocation3 + $0x121] sm:$0xff]
        %v7250 = vld [vmem:[#allocation3 + $0x129] sm:$0xff]
        %v7251 = vld [vmem:[#allocation3 + $0x139] sm:$0xff]
        %v7252 = vld [vmem:[#allocation3 + $0x141] sm:$0xff]
        %v7253 = vld [vmem:[#allocation3 + $0x151] sm:$0xff]
        %v7254 = vld [vmem:[#allocation3 + $0x159] sm:$0xff]
        %v7255 = vld [vmem:[#allocation3 + $0x169] sm:$0xff]
        %v7256 = vld [vmem:[#allocation3 + $0x171] sm:$0xff]
        %v7257 = vld [vmem:[#allocation3 + $0x2] sm:$0xff]
        %v7258 = vld [vmem:[#allocation3 + $0xa] sm:$0xff]
        %v7259 = vld [vmem:[#allocation3 + $0x1a] sm:$0xff]
        %v7260 = vld [vmem:[#allocation3 + $0x22] sm:$0xff]
        %v7261 = vld [vmem:[#allocation3 + $0x32] sm:$0xff]
        %v7262 = vld [vmem:[#allocation3 + $0x3a] sm:$0xff]
        %v7263 = vld [vmem:[#allocation3 + $0x4a] sm:$0xff]
        %v7264 = vld [vmem:[#allocation3 + $0x52] sm:$0xff]
        %v7265 = vld [vmem:[#allocation3 + $0x62] sm:$0xff]
        %v7266 = vld [vmem:[#allocation3 + $0x6a] sm:$0xff]
        %v7267 = vld [vmem:[#allocation3 + $0x7a] sm:$0xff]
        %v7268 = vld [vmem:[#allocation3 + $0x82] sm:$0xff]
        %v7269 = vld [vmem:[#allocation3 + $0x92] sm:$0xff]
        %v7270 = vld [vmem:[#allocation3 + $0x9a] sm:$0xff]
        %v7271 = vld [vmem:[#allocation3 + $0xaa] sm:$0xff]
        %v7272 = vld [vmem:[#allocation3 + $0xb2] sm:$0xff]
        %v7273 = vld [vmem:[#allocation3 + $0xc2] sm:$0xff]
        %v7274 = vld [vmem:[#allocation3 + $0xca] sm:$0xff]
        %v7275 = vld [vmem:[#allocation3 + $0xda] sm:$0xff]
        %v7276 = vld [vmem:[#allocation3 + $0xe2] sm:$0xff]
        %v7277 = vld [vmem:[#allocation3 + $0xf2] sm:$0xff]
        %v7278 = vld [vmem:[#allocation3 + $0xfa] sm:$0xff]
        %v7279 = vld [vmem:[#allocation3 + $0x10a] sm:$0xff]
        %v7280 = vld [vmem:[#allocation3 + $0x112] sm:$0xff]
        %v7281 = vld [vmem:[#allocation3 + $0x122] sm:$0xff]
        %v7282 = vld [vmem:[#allocation3 + $0x12a] sm:$0xff]
        %v7283 = vld [vmem:[#allocation3 + $0x13a] sm:$0xff]
        %v7284 = vld [vmem:[#allocation3 + $0x142] sm:$0xff]
        %v7285 = vld [vmem:[#allocation3 + $0x152] sm:$0xff]
        %v7286 = vld [vmem:[#allocation3 + $0x15a] sm:$0xff]
        %v7287 = vld [vmem:[#allocation3 + $0x16a] sm:$0xff]
        %v7288 = vld [vmem:[#allocation3 + $0x172] sm:$0xff]
        %v7289 = vld [vmem:[%s7160] sm:$0xff]
        %v7290 = vld [vmem:[%s7160 + $0x8] sm:$0xff]
        %v7291 = vld [vmem:[%s7160 + $0x18] sm:$0xff]
        %v7292 = vld [vmem:[%s7160 + $0x20] sm:$0xff]
        %v7293 = vld [vmem:[%s7160 + $0x30] sm:$0xff]
        %v7294 = vld [vmem:[%s7160 + $0x38] sm:$0xff]
        %v7295 = vld [vmem:[%s7160 + $0x48] sm:$0xff]
        %v7296 = vld [vmem:[%s7160 + $0x50] sm:$0xff]
        %v7297 = vld [vmem:[%s7160 + $0x60] sm:$0xff]
        %v7298 = vld [vmem:[%s7160 + $0x68] sm:$0xff]
        %v7299 = vld [vmem:[%s7160 + $0x78] sm:$0xff]
        %v7300 = vld [vmem:[%s7160 + $0x80] sm:$0xff]
        %v7301 = vld [vmem:[%s7160 + $0x90] sm:$0xff]
        %v7302 = vld [vmem:[%s7160 + $0x98] sm:$0xff]
        %v7303 = vld [vmem:[%s7160 + $0xa8] sm:$0xff]
        %v7304 = vld [vmem:[%s7160 + $0xb0] sm:$0xff]
        %v7305 = vld [vmem:[%s7160 + $0xc0] sm:$0xff]
        %v7306 = vld [vmem:[%s7160 + $0xc8] sm:$0xff]
        %v7307 = vld [vmem:[%s7160 + $0xd8] sm:$0xff]
        %v7308 = vld [vmem:[%s7160 + $0xe0] sm:$0xff]
        %v7309 = vld [vmem:[%s7160 + $0xf0] sm:$0xff]
        %v7310 = vld [vmem:[%s7160 + $0xf8] sm:$0xff]
        %v7311 = vld [vmem:[%s7160 + $0x108] sm:$0xff]
        %v7312 = vld [vmem:[%s7160 + $0x110] sm:$0xff]
        %v7313 = vld [vmem:[%s7160 + $0x120] sm:$0xff]
        %v7314 = vld [vmem:[%s7160 + $0x128] sm:$0xff]
        %v7315 = vld [vmem:[%s7160 + $0x138] sm:$0xff]
        %v7316 = vld [vmem:[%s7160 + $0x140] sm:$0xff]
        %v7317 = vld [vmem:[%s7160 + $0x150] sm:$0xff]
        %v7318 = vld [vmem:[%s7160 + $0x158] sm:$0xff]
        %v7319 = vld [vmem:[%s7160 + $0x168] sm:$0xff]
        %v7320 = vld [vmem:[%s7160 + $0x170] sm:$0xff]
        %v7321 = vld [vmem:[%s7160 + $0x1] sm:$0xff]
        %v7322 = vld [vmem:[%s7160 + $0x9] sm:$0xff]
        %v7323 = vld [vmem:[%s7160 + $0x19] sm:$0xff]
        %v7324 = vld [vmem:[%s7160 + $0x21] sm:$0xff]
        %v7325 = vld [vmem:[%s7160 + $0x31] sm:$0xff]
        %v7326 = vld [vmem:[%s7160 + $0x39] sm:$0xff]
        %v7327 = vld [vmem:[%s7160 + $0x49] sm:$0xff]
        %v7328 = vld [vmem:[%s7160 + $0x51] sm:$0xff]
        %v7329 = vld [vmem:[%s7160 + $0x61] sm:$0xff]
        %v7330 = vld [vmem:[%s7160 + $0x69] sm:$0xff]
        %v7331 = vld [vmem:[%s7160 + $0x79] sm:$0xff]
        %v7332 = vld [vmem:[%s7160 + $0x81] sm:$0xff]
        %v7333 = vld [vmem:[%s7160 + $0x91] sm:$0xff]
        %v7334 = vld [vmem:[%s7160 + $0x99] sm:$0xff]
        %v7335 = vld [vmem:[%s7160 + $0xa9] sm:$0xff]
        %v7336 = vld [vmem:[%s7160 + $0xb1] sm:$0xff]
        %v7337 = vld [vmem:[%s7160 + $0xc1] sm:$0xff]
        %v7338 = vld [vmem:[%s7160 + $0xc9] sm:$0xff]
        %v7339 = vld [vmem:[%s7160 + $0xd9] sm:$0xff]
        %v7340 = vld [vmem:[%s7160 + $0xe1] sm:$0xff]
        %v7341 = vld [vmem:[%s7160 + $0xf1] sm:$0xff]
        %v7342 = vld [vmem:[%s7160 + $0xf9] sm:$0xff]
        %v7343 = vld [vmem:[%s7160 + $0x109] sm:$0xff]
        %v7344 = vld [vmem:[%s7160 + $0x111] sm:$0xff]
        %v7345 = vld [vmem:[%s7160 + $0x121] sm:$0xff]
        %v7346 = vld [vmem:[%s7160 + $0x129] sm:$0xff]
        %v7347 = vld [vmem:[%s7160 + $0x139] sm:$0xff]
        %v7348 = vld [vmem:[%s7160 + $0x141] sm:$0xff]
        %v7349 = vld [vmem:[%s7160 + $0x151] sm:$0xff]
        %v7350 = vld [vmem:[%s7160 + $0x159] sm:$0xff]
        %v7351 = vld [vmem:[%s7160 + $0x169] sm:$0xff]
        %v7352 = vld [vmem:[%s7160 + $0x171] sm:$0xff]
        %v7353 = vld [vmem:[%s7160 + $0x2] sm:$0xff]
        %v7354 = vld [vmem:[%s7160 + $0xa] sm:$0xff]
        %v7355 = vld [vmem:[%s7160 + $0x1a] sm:$0xff]
        %v7356 = vld [vmem:[%s7160 + $0x22] sm:$0xff]
        %v7357 = vld [vmem:[%s7160 + $0x32] sm:$0xff]
        %v7358 = vld [vmem:[%s7160 + $0x3a] sm:$0xff]
        %v7359 = vld [vmem:[%s7160 + $0x4a] sm:$0xff]
        %v7360 = vld [vmem:[%s7160 + $0x52] sm:$0xff]
        %v7361 = vld [vmem:[%s7160 + $0x62] sm:$0xff]
        %v7362 = vld [vmem:[%s7160 + $0x6a] sm:$0xff]
        %v7363 = vld [vmem:[%s7160 + $0x7a] sm:$0xff]
        %v7364 = vld [vmem:[%s7160 + $0x82] sm:$0xff]
        %v7365 = vld [vmem:[%s7160 + $0x92] sm:$0xff]
        %v7366 = vld [vmem:[%s7160 + $0x9a] sm:$0xff]
        %v7367 = vld [vmem:[%s7160 + $0xaa] sm:$0xff]
        %v7368 = vld [vmem:[%s7160 + $0xb2] sm:$0xff]
        %v7369 = vld [vmem:[%s7160 + $0xc2] sm:$0xff]
        %v7370 = vld [vmem:[%s7160 + $0xca] sm:$0xff]
        %v7371 = vld [vmem:[%s7160 + $0xda] sm:$0xff]
        %v7372 = vld [vmem:[%s7160 + $0xe2] sm:$0xff]
        %v7373 = vld [vmem:[%s7160 + $0xf2] sm:$0xff]
        %v7374 = vld [vmem:[%s7160 + $0xfa] sm:$0xff]
        %v7375 = vld [vmem:[%s7160 + $0x10a] sm:$0xff]
        %v7376 = vld [vmem:[%s7160 + $0x112] sm:$0xff]
        %v7377 = vld [vmem:[%s7160 + $0x122] sm:$0xff]
        %v7378 = vld [vmem:[%s7160 + $0x12a] sm:$0xff]
        %v7379 = vld [vmem:[%s7160 + $0x13a] sm:$0xff]
        %v7380 = vld [vmem:[%s7160 + $0x142] sm:$0xff]
        %v7381 = vld [vmem:[%s7160 + $0x152] sm:$0xff]
        %v7382 = vld [vmem:[%s7160 + $0x15a] sm:$0xff]
        %v7383 = vld [vmem:[%s7160 + $0x16a] sm:$0xff]
        %v7384 = vld [vmem:[%s7160 + $0x172] sm:$0xff]
        %s7385 = scalar_lea.vmem [#allocation3], 48
        %v7386 = vld [vmem:[%s7385] sm:$0xff]
        %v7387 = vld [vmem:[%s7385 + $0x8] sm:$0xff]
        %v7388 = vld [vmem:[%s7385 + $0x18] sm:$0xff]
        %v7389 = vld [vmem:[%s7385 + $0x20] sm:$0xff]
        %v7390 = vld [vmem:[%s7385 + $0x30] sm:$0xff]
        %v7391 = vld [vmem:[%s7385 + $0x38] sm:$0xff]
        %v7392 = vld [vmem:[%s7385 + $0x48] sm:$0xff]
        %v7393 = vld [vmem:[%s7385 + $0x50] sm:$0xff]
        %v7394 = vld [vmem:[%s7385 + $0x60] sm:$0xff]
        %v7395 = vld [vmem:[%s7385 + $0x68] sm:$0xff]
        %v7396 = vld [vmem:[%s7385 + $0x78] sm:$0xff]
        %v7397 = vld [vmem:[%s7385 + $0x80] sm:$0xff]
        %v7398 = vld [vmem:[%s7385 + $0x90] sm:$0xff]
        %v7399 = vld [vmem:[%s7385 + $0x98] sm:$0xff]
        %v7400 = vld [vmem:[%s7385 + $0xa8] sm:$0xff]
        %v7401 = vld [vmem:[%s7385 + $0xb0] sm:$0xff]
        %v7402 = vld [vmem:[%s7385 + $0xc0] sm:$0xff]
        %v7403 = vld [vmem:[%s7385 + $0xc8] sm:$0xff]
        %v7404 = vld [vmem:[%s7385 + $0xd8] sm:$0xff]
        %v7405 = vld [vmem:[%s7385 + $0xe0] sm:$0xff]
        %v7406 = vld [vmem:[%s7385 + $0xf0] sm:$0xff]
        %v7407 = vld [vmem:[%s7385 + $0xf8] sm:$0xff]
        %v7408 = vld [vmem:[%s7385 + $0x108] sm:$0xff]
        %v7409 = vld [vmem:[%s7385 + $0x110] sm:$0xff]
        %v7410 = vld [vmem:[%s7385 + $0x120] sm:$0xff]
        %v7411 = vld [vmem:[%s7385 + $0x128] sm:$0xff]
        %v7412 = vld [vmem:[%s7385 + $0x138] sm:$0xff]
        %v7413 = vld [vmem:[%s7385 + $0x140] sm:$0xff]
        %v7414 = vld [vmem:[%s7385 + $0x150] sm:$0xff]
        %v7415 = vld [vmem:[%s7385 + $0x158] sm:$0xff]
        %v7416 = vld [vmem:[%s7385 + $0x168] sm:$0xff]
        %v7417 = vld [vmem:[%s7385 + $0x170] sm:$0xff]
        %v7418 = vld [vmem:[%s7385 + $0x1] sm:$0xff]
        %v7419 = vld [vmem:[%s7385 + $0x9] sm:$0xff]
        %v7420 = vld [vmem:[%s7385 + $0x19] sm:$0xff]
        %v7421 = vld [vmem:[%s7385 + $0x21] sm:$0xff]
        %v7422 = vld [vmem:[%s7385 + $0x31] sm:$0xff]
        %v7423 = vld [vmem:[%s7385 + $0x39] sm:$0xff]
        %v7424 = vld [vmem:[%s7385 + $0x49] sm:$0xff]
        %v7425 = vld [vmem:[%s7385 + $0x51] sm:$0xff]
        %v7426 = vld [vmem:[%s7385 + $0x61] sm:$0xff]
        %v7427 = vld [vmem:[%s7385 + $0x69] sm:$0xff]
        %v7428 = vld [vmem:[%s7385 + $0x79] sm:$0xff]
        %v7429 = vld [vmem:[%s7385 + $0x81] sm:$0xff]
        %v7430 = vld [vmem:[%s7385 + $0x91] sm:$0xff]
        %v7431 = vld [vmem:[%s7385 + $0x99] sm:$0xff]
        %v7432 = vld [vmem:[%s7385 + $0xa9] sm:$0xff]
        %v7433 = vld [vmem:[%s7385 + $0xb1] sm:$0xff]
        %v7434 = vld [vmem:[%s7385 + $0xc1] sm:$0xff]
        %v7435 = vld [vmem:[%s7385 + $0xc9] sm:$0xff]
        %v7436 = vld [vmem:[%s7385 + $0xd9] sm:$0xff]
        %v7437 = vld [vmem:[%s7385 + $0xe1] sm:$0xff]
        %v7438 = vld [vmem:[%s7385 + $0xf1] sm:$0xff]
        %v7439 = vld [vmem:[%s7385 + $0xf9] sm:$0xff]
        %v7440 = vld [vmem:[%s7385 + $0x109] sm:$0xff]
        %v7441 = vld [vmem:[%s7385 + $0x111] sm:$0xff]
        %v7442 = vld [vmem:[%s7385 + $0x121] sm:$0xff]
        %v7443 = vld [vmem:[%s7385 + $0x129] sm:$0xff]
        %v7444 = vld [vmem:[%s7385 + $0x139] sm:$0xff]
        %v7445 = vld [vmem:[%s7385 + $0x141] sm:$0xff]
        %v7446 = vld [vmem:[%s7385 + $0x151] sm:$0xff]
        %v7447 = vld [vmem:[%s7385 + $0x159] sm:$0xff]
        %v7448 = vld [vmem:[%s7385 + $0x169] sm:$0xff]
        %v7449 = vld [vmem:[%s7385 + $0x171] sm:$0xff]
        %v7450 = vld [vmem:[%s7385 + $0x2] sm:$0xff]
        %v7451 = vld [vmem:[%s7385 + $0xa] sm:$0xff]
        %v7452 = vld [vmem:[%s7385 + $0x1a] sm:$0xff]
        %v7453 = vld [vmem:[%s7385 + $0x22] sm:$0xff]
        %v7454 = vld [vmem:[%s7385 + $0x32] sm:$0xff]
        %v7455 = vld [vmem:[%s7385 + $0x3a] sm:$0xff]
        %v7456 = vld [vmem:[%s7385 + $0x4a] sm:$0xff]
        %v7457 = vld [vmem:[%s7385 + $0x52] sm:$0xff]
        %v7458 = vld [vmem:[%s7385 + $0x62] sm:$0xff]
        %v7459 = vld [vmem:[%s7385 + $0x6a] sm:$0xff]
        %v7460 = vld [vmem:[%s7385 + $0x7a] sm:$0xff]
        %v7461 = vld [vmem:[%s7385 + $0x82] sm:$0xff]
        %v7462 = vld [vmem:[%s7385 + $0x92] sm:$0xff]
        %v7463 = vld [vmem:[%s7385 + $0x9a] sm:$0xff]
        %v7464 = vld [vmem:[%s7385 + $0xaa] sm:$0xff]
        %v7465 = vld [vmem:[%s7385 + $0xb2] sm:$0xff]
        %v7466 = vld [vmem:[%s7385 + $0xc2] sm:$0xff]
        %v7467 = vld [vmem:[%s7385 + $0xca] sm:$0xff]
        %v7468 = vld [vmem:[%s7385 + $0xda] sm:$0xff]
        %v7469 = vld [vmem:[%s7385 + $0xe2] sm:$0xff]
        %v7470 = vld [vmem:[%s7385 + $0xf2] sm:$0xff]
        %v7471 = vld [vmem:[%s7385 + $0xfa] sm:$0xff]
        %v7472 = vld [vmem:[%s7385 + $0x10a] sm:$0xff]
        %v7473 = vld [vmem:[%s7385 + $0x112] sm:$0xff]
        %v7474 = vld [vmem:[%s7385 + $0x122] sm:$0xff]
        %v7475 = vld [vmem:[%s7385 + $0x12a] sm:$0xff]
        %v7476 = vld [vmem:[%s7385 + $0x13a] sm:$0xff]
        %v7477 = vld [vmem:[%s7385 + $0x142] sm:$0xff]
        %v7478 = vld [vmem:[%s7385 + $0x152] sm:$0xff]
        %v7479 = vld [vmem:[%s7385 + $0x15a] sm:$0xff]
        %v7480 = vld [vmem:[%s7385 + $0x16a] sm:$0xff]
        %v7481 = vld [vmem:[%s7385 + $0x172] sm:$0xff]
        %7514 = vrot.lane.b32.xlu0 %v7225, 16
        %v7515 = vpop.permute.xlu0 %7514
        %7516 = vrot.lane.b32.xlu0 %v7226, 16
        %v7517 = vpop.permute.xlu0 %7516
        %7518 = vrot.lane.b32.xlu0 %v7227, 16
        %v7519 = vpop.permute.xlu0 %7518
        %7520 = vrot.lane.b32.xlu0 %v7228, 16
        %v7521 = vpop.permute.xlu0 %7520
        %7522 = vrot.lane.b32.xlu0 %v7229, 16
        %v7523 = vpop.permute.xlu0 %7522
        %7524 = vrot.lane.b32.xlu0 %v7230, 16
        %v7525 = vpop.permute.xlu0 %7524
        %7526 = vrot.lane.b32.xlu0 %v7231, 16
        %v7527 = vpop.permute.xlu0 %7526
        %7528 = vrot.lane.b32.xlu0 %v7232, 16
        %v7529 = vpop.permute.xlu0 %7528
        %7530 = vrot.lane.b32.xlu0 %v7233, 16
        %v7531 = vpop.permute.xlu0 %7530
        %7532 = vrot.lane.b32.xlu0 %v7234, 16
        %v7533 = vpop.permute.xlu0 %7532
        %7534 = vrot.lane.b32.xlu0 %v7235, 16
        %v7535 = vpop.permute.xlu0 %7534
        %7536 = vrot.lane.b32.xlu0 %v7236, 16
        %v7537 = vpop.permute.xlu0 %7536
        %7538 = vrot.lane.b32.xlu0 %v7237, 16
        %v7539 = vpop.permute.xlu0 %7538
        %7540 = vrot.lane.b32.xlu0 %v7238, 16
        %v7541 = vpop.permute.xlu0 %7540
        %7542 = vrot.lane.b32.xlu0 %v7239, 16
        %v7543 = vpop.permute.xlu0 %7542
        %7544 = vrot.lane.b32.xlu0 %v7240, 16
        %v7545 = vpop.permute.xlu0 %7544
        %7546 = vrot.lane.b32.xlu0 %v7241, 16
        %v7547 = vpop.permute.xlu0 %7546
        %7548 = vrot.lane.b32.xlu0 %v7242, 16
        %v7549 = vpop.permute.xlu0 %7548
        %7550 = vrot.lane.b32.xlu0 %v7243, 16
        %v7551 = vpop.permute.xlu0 %7550
        %7552 = vrot.lane.b32.xlu0 %v7244, 16
        %v7553 = vpop.permute.xlu0 %7552
        %7554 = vrot.lane.b32.xlu0 %v7245, 16
        %v7555 = vpop.permute.xlu0 %7554
        %7556 = vrot.lane.b32.xlu0 %v7246, 16
        %v7557 = vpop.permute.xlu0 %7556
        %7558 = vrot.lane.b32.xlu0 %v7247, 16
        %v7559 = vpop.permute.xlu0 %7558
        %7560 = vrot.lane.b32.xlu0 %v7248, 16
        %v7561 = vpop.permute.xlu0 %7560
        %7562 = vrot.lane.b32.xlu0 %v7249, 16
        %v7563 = vpop.permute.xlu0 %7562
        %7564 = vrot.lane.b32.xlu0 %v7250, 16
        %v7565 = vpop.permute.xlu0 %7564
        %7566 = vrot.lane.b32.xlu0 %v7251, 16
        %v7567 = vpop.permute.xlu0 %7566
        %7568 = vrot.lane.b32.xlu0 %v7252, 16
        %v7569 = vpop.permute.xlu0 %7568
        %7570 = vrot.lane.b32.xlu0 %v7253, 16
        %v7571 = vpop.permute.xlu0 %7570
        %7572 = vrot.lane.b32.xlu0 %v7254, 16
        %v7573 = vpop.permute.xlu0 %7572
        %7574 = vrot.lane.b32.xlu0 %v7255, 16
        %v7575 = vpop.permute.xlu0 %7574
        %7576 = vrot.lane.b32.xlu0 %v7256, 16
        %v7577 = vpop.permute.xlu0 %7576
        %7642 = vrot.lane.b32.xlu0 %v7257, 32
        %v7643 = vpop.permute.xlu0 %7642
        %7644 = vrot.lane.b32.xlu0 %v7258, 32
        %v7645 = vpop.permute.xlu0 %7644
        %7646 = vrot.lane.b32.xlu0 %v7259, 32
        %v7647 = vpop.permute.xlu0 %7646
        %7648 = vrot.lane.b32.xlu0 %v7260, 32
        %v7649 = vpop.permute.xlu0 %7648
        %7650 = vrot.lane.b32.xlu0 %v7261, 32
        %v7651 = vpop.permute.xlu0 %7650
        %7652 = vrot.lane.b32.xlu0 %v7262, 32
        %v7653 = vpop.permute.xlu0 %7652
        %7654 = vrot.lane.b32.xlu0 %v7263, 32
        %v7655 = vpop.permute.xlu0 %7654
        %7656 = vrot.lane.b32.xlu0 %v7264, 32
        %v7657 = vpop.permute.xlu0 %7656
        %7658 = vrot.lane.b32.xlu0 %v7265, 32
        %v7659 = vpop.permute.xlu0 %7658
        %7660 = vrot.lane.b32.xlu0 %v7266, 32
        %v7661 = vpop.permute.xlu0 %7660
        %7662 = vrot.lane.b32.xlu0 %v7267, 32
        %v7663 = vpop.permute.xlu0 %7662
        %7664 = vrot.lane.b32.xlu0 %v7268, 32
        %v7665 = vpop.permute.xlu0 %7664
        %7666 = vrot.lane.b32.xlu0 %v7269, 32
        %v7667 = vpop.permute.xlu0 %7666
        %7668 = vrot.lane.b32.xlu0 %v7270, 32
        %v7669 = vpop.permute.xlu0 %7668
        %7670 = vrot.lane.b32.xlu0 %v7271, 32
        %v7671 = vpop.permute.xlu0 %7670
        %7672 = vrot.lane.b32.xlu0 %v7272, 32
        %v7673 = vpop.permute.xlu0 %7672
        %7674 = vrot.lane.b32.xlu0 %v7273, 32
        %v7675 = vpop.permute.xlu0 %7674
        %7676 = vrot.lane.b32.xlu0 %v7274, 32
        %v7677 = vpop.permute.xlu0 %7676
        %7678 = vrot.lane.b32.xlu0 %v7275, 32
        %v7679 = vpop.permute.xlu0 %7678
        %7680 = vrot.lane.b32.xlu0 %v7276, 32
        %v7681 = vpop.permute.xlu0 %7680
        %7682 = vrot.lane.b32.xlu0 %v7277, 32
        %v7683 = vpop.permute.xlu0 %7682
        %7684 = vrot.lane.b32.xlu0 %v7278, 32
        %v7685 = vpop.permute.xlu0 %7684
        %7686 = vrot.lane.b32.xlu0 %v7279, 32
        %v7687 = vpop.permute.xlu0 %7686
        %7688 = vrot.lane.b32.xlu0 %v7280, 32
        %v7689 = vpop.permute.xlu0 %7688
        %7690 = vrot.lane.b32.xlu0 %v7281, 32
        %v7691 = vpop.permute.xlu0 %7690
        %7692 = vrot.lane.b32.xlu0 %v7282, 32
        %v7693 = vpop.permute.xlu0 %7692
        %7694 = vrot.lane.b32.xlu0 %v7283, 32
        %v7695 = vpop.permute.xlu0 %7694
        %7696 = vrot.lane.b32.xlu0 %v7284, 32
        %v7697 = vpop.permute.xlu0 %7696
        %7698 = vrot.lane.b32.xlu0 %v7285, 32
        %v7699 = vpop.permute.xlu0 %7698
        %7700 = vrot.lane.b32.xlu0 %v7286, 32
        %v7701 = vpop.permute.xlu0 %7700
        %7702 = vrot.lane.b32.xlu0 %v7287, 32
        %v7703 = vpop.permute.xlu0 %7702
        %7704 = vrot.lane.b32.xlu0 %v7288, 32
        %v7705 = vpop.permute.xlu0 %7704
        %7770 = vrot.lane.b32.xlu0 %v7289, 48
        %v7771 = vpop.permute.xlu0 %7770
        %7772 = vrot.lane.b32.xlu0 %v7290, 48
        %v7773 = vpop.permute.xlu0 %7772
        %7774 = vrot.lane.b32.xlu0 %v7291, 48
        %v7775 = vpop.permute.xlu0 %7774
        %7776 = vrot.lane.b32.xlu0 %v7292, 48
        %v7777 = vpop.permute.xlu0 %7776
        %7778 = vrot.lane.b32.xlu0 %v7293, 48
        %v7779 = vpop.permute.xlu0 %7778
        %7780 = vrot.lane.b32.xlu0 %v7294, 48
        %v7781 = vpop.permute.xlu0 %7780
        %7782 = vrot.lane.b32.xlu0 %v7295, 48
        %v7783 = vpop.permute.xlu0 %7782
        %7784 = vrot.lane.b32.xlu0 %v7296, 48
        %v7785 = vpop.permute.xlu0 %7784
        %7786 = vrot.lane.b32.xlu0 %v7297, 48
        %v7787 = vpop.permute.xlu0 %7786
        %7788 = vrot.lane.b32.xlu0 %v7298, 48
        %v7789 = vpop.permute.xlu0 %7788
        %7790 = vrot.lane.b32.xlu0 %v7299, 48
        %v7791 = vpop.permute.xlu0 %7790
        %7792 = vrot.lane.b32.xlu0 %v7300, 48
        %v7793 = vpop.permute.xlu0 %7792
        %7794 = vrot.lane.b32.xlu0 %v7301, 48
        %v7795 = vpop.permute.xlu0 %7794
        %7796 = vrot.lane.b32.xlu0 %v7302, 48
        %v7797 = vpop.permute.xlu0 %7796
        %7798 = vrot.lane.b32.xlu0 %v7303, 48
        %v7799 = vpop.permute.xlu0 %7798
        %7800 = vrot.lane.b32.xlu0 %v7304, 48
        %v7801 = vpop.permute.xlu0 %7800
        %7802 = vrot.lane.b32.xlu0 %v7305, 48
        %v7803 = vpop.permute.xlu0 %7802
        %7804 = vrot.lane.b32.xlu0 %v7306, 48
        %v7805 = vpop.permute.xlu0 %7804
        %7806 = vrot.lane.b32.xlu0 %v7307, 48
        %v7807 = vpop.permute.xlu0 %7806
        %7808 = vrot.lane.b32.xlu0 %v7308, 48
        %v7809 = vpop.permute.xlu0 %7808
        %7810 = vrot.lane.b32.xlu0 %v7309, 48
        %v7811 = vpop.permute.xlu0 %7810
        %7812 = vrot.lane.b32.xlu0 %v7310, 48
        %v7813 = vpop.permute.xlu0 %7812
        %7814 = vrot.lane.b32.xlu0 %v7311, 48
        %v7815 = vpop.permute.xlu0 %7814
        %7816 = vrot.lane.b32.xlu0 %v7312, 48
        %v7817 = vpop.permute.xlu0 %7816
        %7818 = vrot.lane.b32.xlu0 %v7313, 48
        %v7819 = vpop.permute.xlu0 %7818
        %7820 = vrot.lane.b32.xlu0 %v7314, 48
        %v7821 = vpop.permute.xlu0 %7820
        %7822 = vrot.lane.b32.xlu0 %v7315, 48
        %v7823 = vpop.permute.xlu0 %7822
        %7824 = vrot.lane.b32.xlu0 %v7316, 48
        %v7825 = vpop.permute.xlu0 %7824
        %7826 = vrot.lane.b32.xlu0 %v7317, 48
        %v7827 = vpop.permute.xlu0 %7826
        %7828 = vrot.lane.b32.xlu0 %v7318, 48
        %v7829 = vpop.permute.xlu0 %7828
        %7830 = vrot.lane.b32.xlu0 %v7319, 48
        %v7831 = vpop.permute.xlu0 %7830
        %7832 = vrot.lane.b32.xlu0 %v7320, 48
        %v7833 = vpop.permute.xlu0 %7832
        %7898 = vrot.lane.b32.xlu0 %v7321, 64
        %v7899 = vpop.permute.xlu0 %7898
        %7900 = vrot.lane.b32.xlu0 %v7322, 64
        %v7901 = vpop.permute.xlu0 %7900
        %7902 = vrot.lane.b32.xlu0 %v7323, 64
        %v7903 = vpop.permute.xlu0 %7902
        %7904 = vrot.lane.b32.xlu0 %v7324, 64
        %v7905 = vpop.permute.xlu0 %7904
        %7906 = vrot.lane.b32.xlu0 %v7325, 64
        %v7907 = vpop.permute.xlu0 %7906
        %7908 = vrot.lane.b32.xlu0 %v7326, 64
        %v7909 = vpop.permute.xlu0 %7908
        %7910 = vrot.lane.b32.xlu0 %v7327, 64
        %v7911 = vpop.permute.xlu0 %7910
        %7912 = vrot.lane.b32.xlu0 %v7328, 64
        %v7913 = vpop.permute.xlu0 %7912
        %7914 = vrot.lane.b32.xlu0 %v7329, 64
        %v7915 = vpop.permute.xlu0 %7914
        %7916 = vrot.lane.b32.xlu0 %v7330, 64
        %v7917 = vpop.permute.xlu0 %7916
        %7918 = vrot.lane.b32.xlu0 %v7331, 64
        %v7919 = vpop.permute.xlu0 %7918
        %7920 = vrot.lane.b32.xlu0 %v7332, 64
        %v7921 = vpop.permute.xlu0 %7920
        %7922 = vrot.lane.b32.xlu0 %v7333, 64
        %v7923 = vpop.permute.xlu0 %7922
        %7924 = vrot.lane.b32.xlu0 %v7334, 64
        %v7925 = vpop.permute.xlu0 %7924
        %7926 = vrot.lane.b32.xlu0 %v7335, 64
        %v7927 = vpop.permute.xlu0 %7926
        %7928 = vrot.lane.b32.xlu0 %v7336, 64
        %v7929 = vpop.permute.xlu0 %7928
        %7930 = vrot.lane.b32.xlu0 %v7337, 64
        %v7931 = vpop.permute.xlu0 %7930
        %7932 = vrot.lane.b32.xlu0 %v7338, 64
        %v7933 = vpop.permute.xlu0 %7932
        %7934 = vrot.lane.b32.xlu0 %v7339, 64
        %v7935 = vpop.permute.xlu0 %7934
        %7936 = vrot.lane.b32.xlu0 %v7340, 64
        %v7937 = vpop.permute.xlu0 %7936
        %7938 = vrot.lane.b32.xlu0 %v7341, 64
        %v7939 = vpop.permute.xlu0 %7938
        %7940 = vrot.lane.b32.xlu0 %v7342, 64
        %v7941 = vpop.permute.xlu0 %7940
        %7942 = vrot.lane.b32.xlu0 %v7343, 64
        %v7943 = vpop.permute.xlu0 %7942
        %7944 = vrot.lane.b32.xlu0 %v7344, 64
        %v7945 = vpop.permute.xlu0 %7944
        %7946 = vrot.lane.b32.xlu0 %v7345, 64
        %v7947 = vpop.permute.xlu0 %7946
        %7948 = vrot.lane.b32.xlu0 %v7346, 64
        %v7949 = vpop.permute.xlu0 %7948
        %7950 = vrot.lane.b32.xlu0 %v7347, 64
        %v7951 = vpop.permute.xlu0 %7950
        %7952 = vrot.lane.b32.xlu0 %v7348, 64
        %v7953 = vpop.permute.xlu0 %7952
        %7954 = vrot.lane.b32.xlu0 %v7349, 64
        %v7955 = vpop.permute.xlu0 %7954
        %7956 = vrot.lane.b32.xlu0 %v7350, 64
        %v7957 = vpop.permute.xlu0 %7956
        %7958 = vrot.lane.b32.xlu0 %v7351, 64
        %v7959 = vpop.permute.xlu0 %7958
        %7960 = vrot.lane.b32.xlu0 %v7352, 64
        %v7961 = vpop.permute.xlu0 %7960
        %8026 = vrot.lane.b32.xlu0 %v7353, 80
        %v8027 = vpop.permute.xlu0 %8026
        %8028 = vrot.lane.b32.xlu0 %v7354, 80
        %v8029 = vpop.permute.xlu0 %8028
        %8030 = vrot.lane.b32.xlu0 %v7355, 80
        %v8031 = vpop.permute.xlu0 %8030
        %8032 = vrot.lane.b32.xlu0 %v7356, 80
        %v8033 = vpop.permute.xlu0 %8032
        %8034 = vrot.lane.b32.xlu0 %v7357, 80
        %v8035 = vpop.permute.xlu0 %8034
        %8036 = vrot.lane.b32.xlu0 %v7358, 80
        %v8037 = vpop.permute.xlu0 %8036
        %8038 = vrot.lane.b32.xlu0 %v7359, 80
        %v8039 = vpop.permute.xlu0 %8038
        %8040 = vrot.lane.b32.xlu0 %v7360, 80
        %v8041 = vpop.permute.xlu0 %8040
        %8042 = vrot.lane.b32.xlu0 %v7361, 80
        %v8043 = vpop.permute.xlu0 %8042
        %8044 = vrot.lane.b32.xlu0 %v7362, 80
        %v8045 = vpop.permute.xlu0 %8044
        %8046 = vrot.lane.b32.xlu0 %v7363, 80
        %v8047 = vpop.permute.xlu0 %8046
        %8048 = vrot.lane.b32.xlu0 %v7364, 80
        %v8049 = vpop.permute.xlu0 %8048
        %8050 = vrot.lane.b32.xlu0 %v7365, 80
        %v8051 = vpop.permute.xlu0 %8050
        %8052 = vrot.lane.b32.xlu0 %v7366, 80
        %v8053 = vpop.permute.xlu0 %8052
        %8054 = vrot.lane.b32.xlu0 %v7367, 80
        %v8055 = vpop.permute.xlu0 %8054
        %8056 = vrot.lane.b32.xlu0 %v7368, 80
        %v8057 = vpop.permute.xlu0 %8056
        %8058 = vrot.lane.b32.xlu0 %v7369, 80
        %v8059 = vpop.permute.xlu0 %8058
        %8060 = vrot.lane.b32.xlu0 %v7370, 80
        %v8061 = vpop.permute.xlu0 %8060
        %8062 = vrot.lane.b32.xlu0 %v7371, 80
        %v8063 = vpop.permute.xlu0 %8062
        %8064 = vrot.lane.b32.xlu0 %v7372, 80
        %v8065 = vpop.permute.xlu0 %8064
        %8066 = vrot.lane.b32.xlu0 %v7373, 80
        %v8067 = vpop.permute.xlu0 %8066
        %8068 = vrot.lane.b32.xlu0 %v7374, 80
        %v8069 = vpop.permute.xlu0 %8068
        %8070 = vrot.lane.b32.xlu0 %v7375, 80
        %v8071 = vpop.permute.xlu0 %8070
        %8072 = vrot.lane.b32.xlu0 %v7376, 80
        %v8073 = vpop.permute.xlu0 %8072
        %8074 = vrot.lane.b32.xlu0 %v7377, 80
        %v8075 = vpop.permute.xlu0 %8074
        %8076 = vrot.lane.b32.xlu0 %v7378, 80
        %v8077 = vpop.permute.xlu0 %8076
        %8078 = vrot.lane.b32.xlu0 %v7379, 80
        %v8079 = vpop.permute.xlu0 %8078
        %8080 = vrot.lane.b32.xlu0 %v7380, 80
        %v8081 = vpop.permute.xlu0 %8080
        %8082 = vrot.lane.b32.xlu0 %v7381, 80
        %v8083 = vpop.permute.xlu0 %8082
        %8084 = vrot.lane.b32.xlu0 %v7382, 80
        %v8085 = vpop.permute.xlu0 %8084
        %8086 = vrot.lane.b32.xlu0 %v7383, 80
        %v8087 = vpop.permute.xlu0 %8086
        %8088 = vrot.lane.b32.xlu0 %v7384, 80
        %v8089 = vpop.permute.xlu0 %8088
        %8154 = vrot.lane.b32.xlu0 %v7386, 96
        %v8155 = vpop.permute.xlu0 %8154
        %8156 = vrot.lane.b32.xlu0 %v7387, 96
        %v8157 = vpop.permute.xlu0 %8156
        %8158 = vrot.lane.b32.xlu0 %v7388, 96
        %v8159 = vpop.permute.xlu0 %8158
        %8160 = vrot.lane.b32.xlu0 %v7389, 96
        %v8161 = vpop.permute.xlu0 %8160
        %8162 = vrot.lane.b32.xlu0 %v7390, 96
        %v8163 = vpop.permute.xlu0 %8162
        %8164 = vrot.lane.b32.xlu0 %v7391, 96
        %v8165 = vpop.permute.xlu0 %8164
        %8166 = vrot.lane.b32.xlu0 %v7392, 96
        %v8167 = vpop.permute.xlu0 %8166
        %8168 = vrot.lane.b32.xlu0 %v7393, 96
        %v8169 = vpop.permute.xlu0 %8168
        %8170 = vrot.lane.b32.xlu0 %v7394, 96
        %v8171 = vpop.permute.xlu0 %8170
        %8172 = vrot.lane.b32.xlu0 %v7395, 96
        %v8173 = vpop.permute.xlu0 %8172
        %8174 = vrot.lane.b32.xlu0 %v7396, 96
        %v8175 = vpop.permute.xlu0 %8174
        %8176 = vrot.lane.b32.xlu0 %v7397, 96
        %v8177 = vpop.permute.xlu0 %8176
        %8178 = vrot.lane.b32.xlu0 %v7398, 96
        %v8179 = vpop.permute.xlu0 %8178
        %8180 = vrot.lane.b32.xlu0 %v7399, 96
        %v8181 = vpop.permute.xlu0 %8180
        %8182 = vrot.lane.b32.xlu0 %v7400, 96
        %v8183 = vpop.permute.xlu0 %8182
        %8184 = vrot.lane.b32.xlu0 %v7401, 96
        %v8185 = vpop.permute.xlu0 %8184
        %8186 = vrot.lane.b32.xlu0 %v7402, 96
        %v8187 = vpop.permute.xlu0 %8186
        %8188 = vrot.lane.b32.xlu0 %v7403, 96
        %v8189 = vpop.permute.xlu0 %8188
        %8190 = vrot.lane.b32.xlu0 %v7404, 96
        %v8191 = vpop.permute.xlu0 %8190
        %8192 = vrot.lane.b32.xlu0 %v7405, 96
        %v8193 = vpop.permute.xlu0 %8192
        %8194 = vrot.lane.b32.xlu0 %v7406, 96
        %v8195 = vpop.permute.xlu0 %8194
        %8196 = vrot.lane.b32.xlu0 %v7407, 96
        %v8197 = vpop.permute.xlu0 %8196
        %8198 = vrot.lane.b32.xlu0 %v7408, 96
        %v8199 = vpop.permute.xlu0 %8198
        %8200 = vrot.lane.b32.xlu0 %v7409, 96
        %v8201 = vpop.permute.xlu0 %8200
        %8202 = vrot.lane.b32.xlu0 %v7410, 96
        %v8203 = vpop.permute.xlu0 %8202
        %8204 = vrot.lane.b32.xlu0 %v7411, 96
        %v8205 = vpop.permute.xlu0 %8204
        %8206 = vrot.lane.b32.xlu0 %v7412, 96
        %v8207 = vpop.permute.xlu0 %8206
        %8208 = vrot.lane.b32.xlu0 %v7413, 96
        %v8209 = vpop.permute.xlu0 %8208
        %8210 = vrot.lane.b32.xlu0 %v7414, 96
        %v8211 = vpop.permute.xlu0 %8210
        %8212 = vrot.lane.b32.xlu0 %v7415, 96
        %v8213 = vpop.permute.xlu0 %8212
        %8214 = vrot.lane.b32.xlu0 %v7416, 96
        %v8215 = vpop.permute.xlu0 %8214
        %8216 = vrot.lane.b32.xlu0 %v7417, 96
        %v8217 = vpop.permute.xlu0 %8216
        %8282 = vrot.lane.b32.xlu0 %v7418, 112
        %v8283 = vpop.permute.xlu0 %8282
        %8284 = vrot.lane.b32.xlu0 %v7419, 112
        %v8285 = vpop.permute.xlu0 %8284
        %8286 = vrot.lane.b32.xlu0 %v7420, 112
        %v8287 = vpop.permute.xlu0 %8286
        %8288 = vrot.lane.b32.xlu0 %v7421, 112
        %v8289 = vpop.permute.xlu0 %8288
        %8290 = vrot.lane.b32.xlu0 %v7422, 112
        %v8291 = vpop.permute.xlu0 %8290
        %8292 = vrot.lane.b32.xlu0 %v7423, 112
        %v8293 = vpop.permute.xlu0 %8292
        %8294 = vrot.lane.b32.xlu0 %v7424, 112
        %v8295 = vpop.permute.xlu0 %8294
        %8296 = vrot.lane.b32.xlu0 %v7425, 112
        %v8297 = vpop.permute.xlu0 %8296
        %8298 = vrot.lane.b32.xlu0 %v7426, 112
        %v8299 = vpop.permute.xlu0 %8298
        %8300 = vrot.lane.b32.xlu0 %v7427, 112
        %v8301 = vpop.permute.xlu0 %8300
        %8302 = vrot.lane.b32.xlu0 %v7428, 112
        %v8303 = vpop.permute.xlu0 %8302
        %8304 = vrot.lane.b32.xlu0 %v7429, 112
        %v8305 = vpop.permute.xlu0 %8304
        %8306 = vrot.lane.b32.xlu0 %v7430, 112
        %v8307 = vpop.permute.xlu0 %8306
        %8308 = vrot.lane.b32.xlu0 %v7431, 112
        %v8309 = vpop.permute.xlu0 %8308
        %8310 = vrot.lane.b32.xlu0 %v7432, 112
        %v8311 = vpop.permute.xlu0 %8310
        %8312 = vrot.lane.b32.xlu0 %v7433, 112
        %v8313 = vpop.permute.xlu0 %8312
        %8314 = vrot.lane.b32.xlu0 %v7434, 112
        %v8315 = vpop.permute.xlu0 %8314
        %8316 = vrot.lane.b32.xlu0 %v7435, 112
        %v8317 = vpop.permute.xlu0 %8316
        %8318 = vrot.lane.b32.xlu0 %v7436, 112
        %v8319 = vpop.permute.xlu0 %8318
        %8320 = vrot.lane.b32.xlu0 %v7437, 112
        %v8321 = vpop.permute.xlu0 %8320
        %8322 = vrot.lane.b32.xlu0 %v7438, 112
        %v8323 = vpop.permute.xlu0 %8322
        %8324 = vrot.lane.b32.xlu0 %v7439, 112
        %v8325 = vpop.permute.xlu0 %8324
        %8326 = vrot.lane.b32.xlu0 %v7440, 112
        %v8327 = vpop.permute.xlu0 %8326
        %8328 = vrot.lane.b32.xlu0 %v7441, 112
        %v8329 = vpop.permute.xlu0 %8328
        %8330 = vrot.lane.b32.xlu0 %v7442, 112
        %v8331 = vpop.permute.xlu0 %8330
        %8332 = vrot.lane.b32.xlu0 %v7443, 112
        %v8333 = vpop.permute.xlu0 %8332
        %8334 = vrot.lane.b32.xlu0 %v7444, 112
        %v8335 = vpop.permute.xlu0 %8334
        %8336 = vrot.lane.b32.xlu0 %v7445, 112
        %v8337 = vpop.permute.xlu0 %8336
        %8338 = vrot.lane.b32.xlu0 %v7446, 112
        %v8339 = vpop.permute.xlu0 %8338
        %8340 = vrot.lane.b32.xlu0 %v7447, 112
        %v8341 = vpop.permute.xlu0 %8340
        %8342 = vrot.lane.b32.xlu0 %v7448, 112
        %v8343 = vpop.permute.xlu0 %8342
        %8344 = vrot.lane.b32.xlu0 %v7449, 112
        %v8345 = vpop.permute.xlu0 %8344
        %v8378 = vsel %vm3364, %v7193, %v7515
        %v8379 = vsel %vm3364, %v7194, %v7517
        %v8380 = vsel %vm3364, %v7195, %v7519
        %v8381 = vsel %vm3364, %v7196, %v7521
        %v8382 = vsel %vm3364, %v7197, %v7523
        %v8383 = vsel %vm3364, %v7198, %v7525
        %v8384 = vsel %vm3364, %v7199, %v7527
        %v8385 = vsel %vm3364, %v7200, %v7529
        %v8386 = vsel %vm3364, %v7201, %v7531
        %v8387 = vsel %vm3364, %v7202, %v7533
        %v8388 = vsel %vm3364, %v7203, %v7535
        %v8389 = vsel %vm3364, %v7204, %v7537
        %v8390 = vsel %vm3364, %v7205, %v7539
        %v8391 = vsel %vm3364, %v7206, %v7541
        %v8392 = vsel %vm3364, %v7207, %v7543
        %v8393 = vsel %vm3364, %v7208, %v7545
        %v8394 = vsel %vm3364, %v7209, %v7547
        %v8395 = vsel %vm3364, %v7210, %v7549
        %v8396 = vsel %vm3364, %v7211, %v7551
        %v8397 = vsel %vm3364, %v7212, %v7553
        %v8398 = vsel %vm3364, %v7213, %v7555
        %v8399 = vsel %vm3364, %v7214, %v7557
        %v8400 = vsel %vm3364, %v7215, %v7559
        %v8401 = vsel %vm3364, %v7216, %v7561
        %v8402 = vsel %vm3364, %v7217, %v7563
        %v8403 = vsel %vm3364, %v7218, %v7565
        %v8404 = vsel %vm3364, %v7219, %v7567
        %v8405 = vsel %vm3364, %v7220, %v7569
        %v8406 = vsel %vm3364, %v7221, %v7571
        %v8407 = vsel %vm3364, %v7222, %v7573
        %v8408 = vsel %vm3364, %v7223, %v7575
        %v8409 = vsel %vm3364, %v7224, %v7577
        %v8410 = vsel %vm3496, %v8378, %v7643
        %v8411 = vsel %vm3496, %v8379, %v7645
        %v8412 = vsel %vm3496, %v8380, %v7647
        %v8413 = vsel %vm3496, %v8381, %v7649
        %v8414 = vsel %vm3496, %v8382, %v7651
        %v8415 = vsel %vm3496, %v8383, %v7653
        %v8416 = vsel %vm3496, %v8384, %v7655
        %v8417 = vsel %vm3496, %v8385, %v7657
        %v8418 = vsel %vm3496, %v8386, %v7659
        %v8419 = vsel %vm3496, %v8387, %v7661
        %v8420 = vsel %vm3496, %v8388, %v7663
        %v8421 = vsel %vm3496, %v8389, %v7665
        %v8422 = vsel %vm3496, %v8390, %v7667
        %v8423 = vsel %vm3496, %v8391, %v7669
        %v8424 = vsel %vm3496, %v8392, %v7671
        %v8425 = vsel %vm3496, %v8393, %v7673
        %v8426 = vsel %vm3496, %v8394, %v7675
        %v8427 = vsel %vm3496, %v8395, %v7677
        %v8428 = vsel %vm3496, %v8396, %v7679
        %v8429 = vsel %vm3496, %v8397, %v7681
        %v8430 = vsel %vm3496, %v8398, %v7683
        %v8431 = vsel %vm3496, %v8399, %v7685
        %v8432 = vsel %vm3496, %v8400, %v7687
        %v8433 = vsel %vm3496, %v8401, %v7689
        %v8434 = vsel %vm3496, %v8402, %v7691
        %v8435 = vsel %vm3496, %v8403, %v7693
        %v8436 = vsel %vm3496, %v8404, %v7695
        %v8437 = vsel %vm3496, %v8405, %v7697
        %v8438 = vsel %vm3496, %v8406, %v7699
        %v8439 = vsel %vm3496, %v8407, %v7701
        %v8440 = vsel %vm3496, %v8408, %v7703
        %v8441 = vsel %vm3496, %v8409, %v7705
        %v8442 = vsel %vm3628, %v8410, %v7771
        %v8443 = vsel %vm3628, %v8411, %v7773
        %v8444 = vsel %vm3628, %v8412, %v7775
        %v8445 = vsel %vm3628, %v8413, %v7777
        %v8446 = vsel %vm3628, %v8414, %v7779
        %v8447 = vsel %vm3628, %v8415, %v7781
        %v8448 = vsel %vm3628, %v8416, %v7783
        %v8449 = vsel %vm3628, %v8417, %v7785
        %v8450 = vsel %vm3628, %v8418, %v7787
        %v8451 = vsel %vm3628, %v8419, %v7789
        %v8452 = vsel %vm3628, %v8420, %v7791
        %v8453 = vsel %vm3628, %v8421, %v7793
        %v8454 = vsel %vm3628, %v8422, %v7795
        %v8455 = vsel %vm3628, %v8423, %v7797
        %v8456 = vsel %vm3628, %v8424, %v7799
        %v8457 = vsel %vm3628, %v8425, %v7801
        %v8458 = vsel %vm3628, %v8426, %v7803
        %v8459 = vsel %vm3628, %v8427, %v7805
        %v8460 = vsel %vm3628, %v8428, %v7807
        %v8461 = vsel %vm3628, %v8429, %v7809
        %v8462 = vsel %vm3628, %v8430, %v7811
        %v8463 = vsel %vm3628, %v8431, %v7813
        %v8464 = vsel %vm3628, %v8432, %v7815
        %v8465 = vsel %vm3628, %v8433, %v7817
        %v8466 = vsel %vm3628, %v8434, %v7819
        %v8467 = vsel %vm3628, %v8435, %v7821
        %v8468 = vsel %vm3628, %v8436, %v7823
        %v8469 = vsel %vm3628, %v8437, %v7825
        %v8470 = vsel %vm3628, %v8438, %v7827
        %v8471 = vsel %vm3628, %v8439, %v7829
        %v8472 = vsel %vm3628, %v8440, %v7831
        %v8473 = vsel %vm3628, %v8441, %v7833
        %v8474 = vsel %vm6672, %v8442, %v7899
        %v8475 = vsel %vm6672, %v8443, %v7901
        %v8476 = vsel %vm6672, %v8444, %v7903
        %v8477 = vsel %vm6672, %v8445, %v7905
        %v8478 = vsel %vm6672, %v8446, %v7907
        %v8479 = vsel %vm6672, %v8447, %v7909
        %v8480 = vsel %vm6672, %v8448, %v7911
        %v8481 = vsel %vm6672, %v8449, %v7913
        %v8482 = vsel %vm6672, %v8450, %v7915
        %v8483 = vsel %vm6672, %v8451, %v7917
        %v8484 = vsel %vm6672, %v8452, %v7919
        %v8485 = vsel %vm6672, %v8453, %v7921
        %v8486 = vsel %vm6672, %v8454, %v7923
        %v8487 = vsel %vm6672, %v8455, %v7925
        %v8488 = vsel %vm6672, %v8456, %v7927
        %v8489 = vsel %vm6672, %v8457, %v7929
        %v8490 = vsel %vm6672, %v8458, %v7931
        %v8491 = vsel %vm6672, %v8459, %v7933
        %v8492 = vsel %vm6672, %v8460, %v7935
        %v8493 = vsel %vm6672, %v8461, %v7937
        %v8494 = vsel %vm6672, %v8462, %v7939
        %v8495 = vsel %vm6672, %v8463, %v7941
        %v8496 = vsel %vm6672, %v8464, %v7943
        %v8497 = vsel %vm6672, %v8465, %v7945
        %v8498 = vsel %vm6672, %v8466, %v7947
        %v8499 = vsel %vm6672, %v8467, %v7949
        %v8500 = vsel %vm6672, %v8468, %v7951
        %v8501 = vsel %vm6672, %v8469, %v7953
        %v8502 = vsel %vm6672, %v8470, %v7955
        %v8503 = vsel %vm6672, %v8471, %v7957
        %v8504 = vsel %vm6672, %v8472, %v7959
        %v8505 = vsel %vm6672, %v8473, %v7961
        %vm8506 = vcmask 654336
        %v8507 = vsel %vm8506, %v8474, %v8027
        %v8508 = vsel %vm8506, %v8475, %v8029
        %v8509 = vsel %vm8506, %v8476, %v8031
        %v8510 = vsel %vm8506, %v8477, %v8033
        %v8511 = vsel %vm8506, %v8478, %v8035
        %v8512 = vsel %vm8506, %v8479, %v8037
        %v8513 = vsel %vm8506, %v8480, %v8039
        %v8514 = vsel %vm8506, %v8481, %v8041
        %v8515 = vsel %vm8506, %v8482, %v8043
        %v8516 = vsel %vm8506, %v8483, %v8045
        %v8517 = vsel %vm8506, %v8484, %v8047
        %v8518 = vsel %vm8506, %v8485, %v8049
        %v8519 = vsel %vm8506, %v8486, %v8051
        %v8520 = vsel %vm8506, %v8487, %v8053
        %v8521 = vsel %vm8506, %v8488, %v8055
        %v8522 = vsel %vm8506, %v8489, %v8057
        %v8523 = vsel %vm8506, %v8490, %v8059
        %v8524 = vsel %vm8506, %v8491, %v8061
        %v8525 = vsel %vm8506, %v8492, %v8063
        %v8526 = vsel %vm8506, %v8493, %v8065
        %v8527 = vsel %vm8506, %v8494, %v8067
        %v8528 = vsel %vm8506, %v8495, %v8069
        %v8529 = vsel %vm8506, %v8496, %v8071
        %v8530 = vsel %vm8506, %v8497, %v8073
        %v8531 = vsel %vm8506, %v8498, %v8075
        %v8532 = vsel %vm8506, %v8499, %v8077
        %v8533 = vsel %vm8506, %v8500, %v8079
        %v8534 = vsel %vm8506, %v8501, %v8081
        %v8535 = vsel %vm8506, %v8502, %v8083
        %v8536 = vsel %vm8506, %v8503, %v8085
        %v8537 = vsel %vm8506, %v8504, %v8087
        %v8538 = vsel %vm8506, %v8505, %v8089
        %vm8539 = vcmask 785408
        %v8540 = vsel %vm8539, %v8507, %v8155
        %v8541 = vsel %vm8539, %v8508, %v8157
        %v8542 = vsel %vm8539, %v8509, %v8159
        %v8543 = vsel %vm8539, %v8510, %v8161
        %v8544 = vsel %vm8539, %v8511, %v8163
        %v8545 = vsel %vm8539, %v8512, %v8165
        %v8546 = vsel %vm8539, %v8513, %v8167
        %v8547 = vsel %vm8539, %v8514, %v8169
        %v8548 = vsel %vm8539, %v8515, %v8171
        %v8549 = vsel %vm8539, %v8516, %v8173
        %v8550 = vsel %vm8539, %v8517, %v8175
        %v8551 = vsel %vm8539, %v8518, %v8177
        %v8552 = vsel %vm8539, %v8519, %v8179
        %v8553 = vsel %vm8539, %v8520, %v8181
        %v8554 = vsel %vm8539, %v8521, %v8183
        %v8555 = vsel %vm8539, %v8522, %v8185
        %v8556 = vsel %vm8539, %v8523, %v8187
        %v8557 = vsel %vm8539, %v8524, %v8189
        %v8558 = vsel %vm8539, %v8525, %v8191
        %v8559 = vsel %vm8539, %v8526, %v8193
        %v8560 = vsel %vm8539, %v8527, %v8195
        %v8561 = vsel %vm8539, %v8528, %v8197
        %v8562 = vsel %vm8539, %v8529, %v8199
        %v8563 = vsel %vm8539, %v8530, %v8201
        %v8564 = vsel %vm8539, %v8531, %v8203
        %v8565 = vsel %vm8539, %v8532, %v8205
        %v8566 = vsel %vm8539, %v8533, %v8207
        %v8567 = vsel %vm8539, %v8534, %v8209
        %v8568 = vsel %vm8539, %v8535, %v8211
        %v8569 = vsel %vm8539, %v8536, %v8213
        %v8570 = vsel %vm8539, %v8537, %v8215
        %v8571 = vsel %vm8539, %v8538, %v8217
        %vm8572 = vcmask 916480
        %v8573 = vsel %vm8572, %v8540, %v8283
        %v8574 = vsel %vm8572, %v8541, %v8285
        %v8575 = vsel %vm8572, %v8542, %v8287
        %v8576 = vsel %vm8572, %v8543, %v8289
        %v8577 = vsel %vm8572, %v8544, %v8291
        %v8578 = vsel %vm8572, %v8545, %v8293
        %v8579 = vsel %vm8572, %v8546, %v8295
        %v8580 = vsel %vm8572, %v8547, %v8297
        %v8581 = vsel %vm8572, %v8548, %v8299
        %v8582 = vsel %vm8572, %v8549, %v8301
        %v8583 = vsel %vm8572, %v8550, %v8303
        %v8584 = vsel %vm8572, %v8551, %v8305
        %v8585 = vsel %vm8572, %v8552, %v8307
        %v8586 = vsel %vm8572, %v8553, %v8309
        %v8587 = vsel %vm8572, %v8554, %v8311
        %v8588 = vsel %vm8572, %v8555, %v8313
        %v8589 = vsel %vm8572, %v8556, %v8315
        %v8590 = vsel %vm8572, %v8557, %v8317
        %v8591 = vsel %vm8572, %v8558, %v8319
        %v8592 = vsel %vm8572, %v8559, %v8321
        %v8593 = vsel %vm8572, %v8560, %v8323
        %v8594 = vsel %vm8572, %v8561, %v8325
        %v8595 = vsel %vm8572, %v8562, %v8327
        %v8596 = vsel %vm8572, %v8563, %v8329
        %v8597 = vsel %vm8572, %v8564, %v8331
        %v8598 = vsel %vm8572, %v8565, %v8333
        %v8599 = vsel %vm8572, %v8566, %v8335
        %v8600 = vsel %vm8572, %v8567, %v8337
        %v8601 = vsel %vm8572, %v8568, %v8339
        %v8602 = vsel %vm8572, %v8569, %v8341
        %v8603 = vsel %vm8572, %v8570, %v8343
        %v8604 = vsel %vm8572, %v8571, %v8345
        %v8605 = vld [vmem:[%s3] sm:$0xff]
        %v8606 = vld [vmem:[%s3 + $0x8] sm:$0xff]
        %v8607 = vld [vmem:[%s3 + $0x10] sm:$0xff]
        %v8608 = vld [vmem:[%s3 + $0x18] sm:$0xff]
        %v8609 = vld [vmem:[%s3 + $0x20] sm:$0xff]
        %v8610 = vld [vmem:[%s3 + $0x28] sm:$0xff]
        %v8611 = vld [vmem:[%s3 + $0x30] sm:$0xff]
        %v8612 = vld [vmem:[%s3 + $0x38] sm:$0xff]
        %v8613 = vld [vmem:[%s3 + $0x40] sm:$0xff]
        %v8614 = vld [vmem:[%s3 + $0x48] sm:$0xff]
        %v8615 = vld [vmem:[%s3 + $0x50] sm:$0xff]
        %v8616 = vld [vmem:[%s3 + $0x58] sm:$0xff]
        %v8617 = vld [vmem:[%s3 + $0x60] sm:$0xff]
        %v8618 = vld [vmem:[%s3 + $0x68] sm:$0xff]
        %v8619 = vld [vmem:[%s3 + $0x70] sm:$0xff]
        %v8620 = vld [vmem:[%s3 + $0x78] sm:$0xff]
        %v8621 = vld [vmem:[%s3 + $0x80] sm:$0xff]
        %v8622 = vld [vmem:[%s3 + $0x88] sm:$0xff]
        %v8623 = vld [vmem:[%s330 + $0x4] sm:$0xff]
        %v8624 = vld [vmem:[%s330 + $0xc] sm:$0xff]
        %v8625 = vld [vmem:[%s330 + $0x1c] sm:$0xff]
        %v8626 = vld [vmem:[%s330 + $0x24] sm:$0xff]
        %v8627 = vld [vmem:[%s330 + $0x34] sm:$0xff]
        %v8628 = vld [vmem:[%s330 + $0x3c] sm:$0xff]
        %v8629 = vld [vmem:[%s330 + $0x4c] sm:$0xff]
        %v8630 = vld [vmem:[%s330 + $0x54] sm:$0xff]
        %v8631 = vld [vmem:[%s330 + $0x64] sm:$0xff]
        %v8632 = vld [vmem:[%s330 + $0x6c] sm:$0xff]
        %v8633 = vld [vmem:[%s330 + $0x7c] sm:$0xff]
        %v8634 = vld [vmem:[%s330 + $0x84] sm:$0xff]
        %v8635 = vld [vmem:[%s330 + $0x94] sm:$0xff]
        %v8636 = vld [vmem:[%s330 + $0x9c] sm:$0xff]
        %v8637 = vld [vmem:[%s330 + $0xac] sm:$0xff]
        %v8638 = vld [vmem:[%s330 + $0xb4] sm:$0xff]
        %v8639 = vld [vmem:[%s330 + $0xc4] sm:$0xff]
        %v8640 = vld [vmem:[%s330 + $0xcc] sm:$0xff]
        %v8641 = vld [vmem:[%s330 + $0xdc] sm:$0xff]
        %v8642 = vld [vmem:[%s330 + $0xe4] sm:$0xff]
        %v8643 = vld [vmem:[%s330 + $0xf4] sm:$0xff]
        %v8644 = vld [vmem:[%s330 + $0xfc] sm:$0xff]
        %v8645 = vld [vmem:[%s330 + $0x10c] sm:$0xff]
        %v8646 = vld [vmem:[%s330 + $0x114] sm:$0xff]
        %v8647 = vld [vmem:[%s330 + $0x124] sm:$0xff]
        %v8648 = vld [vmem:[%s330 + $0x12c] sm:$0xff]
        %v8649 = vld [vmem:[%s330 + $0x13c] sm:$0xff]
        %v8650 = vld [vmem:[%s330 + $0x144] sm:$0xff]
        %v8651 = vld [vmem:[%s330 + $0x154] sm:$0xff]
        %v8652 = vld [vmem:[%s330 + $0x15c] sm:$0xff]
        %v8653 = vld [vmem:[%s330 + $0x16c] sm:$0xff]
        %v8654 = vld [vmem:[%s330 + $0x174] sm:$0xff]
        %v8655 = vld [vmem:[%s4] sm:$0x1]
        %v8657 = vlaneseq
        %v8658 = vshrl.u32 %v8657, 7
        %v8659 = vsub.s32 0, %v8658
        %v8660 = vrot.slane %v8655, %v8659
        %v8663 = vsel %vm3364, %v7450, 0
        %v8666 = vsel %vm3364, %v7451, 0
        %v8669 = vsel %vm3364, %v7452, 0
        %v8672 = vsel %vm3364, %v7453, 0
        %v8675 = vsel %vm3364, %v7454, 0
        %v8678 = vsel %vm3364, %v7455, 0
        %v8681 = vsel %vm3364, %v7456, 0
        %v8684 = vsel %vm3364, %v7457, 0
        %v8687 = vsel %vm3364, %v7458, 0
        %v8690 = vsel %vm3364, %v7459, 0
        %v8693 = vsel %vm3364, %v7460, 0
        %v8696 = vsel %vm3364, %v7461, 0
        %v8699 = vsel %vm3364, %v7462, 0
        %v8702 = vsel %vm3364, %v7463, 0
        %v8705 = vsel %vm3364, %v7464, 0
        %v8708 = vsel %vm3364, %v7465, 0
        %v8711 = vsel %vm3364, %v7466, 0
        %v8714 = vsel %vm3364, %v7467, 0
        %v8717 = vsel %vm3364, %v7468, 0
        %v8720 = vsel %vm3364, %v7469, 0
        %v8723 = vsel %vm3364, %v7470, 0
        %v8726 = vsel %vm3364, %v7471, 0
        %v8729 = vsel %vm3364, %v7472, 0
        %v8732 = vsel %vm3364, %v7473, 0
        %v8735 = vsel %vm3364, %v7474, 0
        %v8738 = vsel %vm3364, %v7475, 0
        %v8741 = vsel %vm3364, %v7476, 0
        %v8744 = vsel %vm3364, %v7477, 0
        %v8747 = vsel %vm3364, %v7478, 0
        %v8750 = vsel %vm3364, %v7479, 0
        %v8753 = vsel %vm3364, %v7480, 0
        %v8756 = vsel %vm3364, %v7481, 0
        %8758 = vmatprep.subr.mxu0 0.0
        %8759 = vmatpush1.msra.mxu0 %v8605
        %8760 = vmatprep.subr.mxu0 0.0
        %8761 = vmatpush1.msra.mxu0 %v8606
        %8762 = vmatprep.subr.mxu0 0.0
        %8763 = vmatpush1.msra.mxu0 %v8607
        %8764 = vmatprep.subr.mxu0 0.0
        %8765 = vmatpush1.msra.mxu0 %v8608
        %8766 = vmatprep.subr.mxu0 0.0
        %8767 = vmatpush1.msra.mxu0 %v8609
        %8768 = vmatprep.subr.mxu0 0.0
        %8769 = vmatpush1.msra.mxu0 %v8610
        %8770 = vmatprep.subr.mxu0 0.0
        %8771 = vmatpush1.msra.mxu0 %v8611
        %8772 = vmatprep.subr.mxu0 0.0
        %8773 = vmatpush1.msra.mxu0 %v8612
        %8774 = vmatprep.subr.mxu0 0.0
        %8775 = vmatpush1.msra.mxu0 %v8613
        %8776 = vmatprep.subr.mxu0 0.0
        %8777 = vmatpush1.msra.mxu0 %v8614
        %8778 = vmatprep.subr.mxu0 0.0
        %8779 = vmatpush1.msra.mxu0 %v8615
        %8780 = vmatprep.subr.mxu0 0.0
        %8781 = vmatpush1.msra.mxu0 %v8616
        %8782 = vmatprep.subr.mxu0 0.0
        %8783 = vmatpush1.msra.mxu0 %v8617
        %8784 = vmatprep.subr.mxu0 0.0
        %8785 = vmatpush1.msra.mxu0 %v8618
        %8786 = vmatprep.subr.mxu0 0.0
        %8787 = vmatpush1.msra.mxu0 %v8619
        %8788 = vmatprep.subr.mxu0 0.0
        %8789 = vmatpush1.msra.mxu0 %v8620
        %8790 = vmatprep.subr.mxu0 0.0
        %8791 = vmatpush1.msra.mxu0 %v8621
        %8792 = vmatprep.subr.mxu0 0.0
        %8793 = vmatpush1.msra.mxu0 %v8622
        %8794 = vmatprep.subr.mxu0 0.0
        %8795 = vmatpush1.msra.mxu0 0.0
        %8796 = vmatprep.subr.mxu0 0.0
        %8797 = vmatpush1.msra.mxu0 0.0
        %8798 = vmatprep.subr.mxu0 0.0
        %8799 = vmatpush1.msra.mxu0 0.0
        %8800 = vmatprep.subr.mxu0 0.0
        %8801 = vmatpush1.msra.mxu0 0.0
        %8802 = vmatprep.subr.mxu0 0.0
        %8803 = vmatpush1.msra.mxu0 0.0
        %8804 = vmatprep.subr.mxu0 0.0
        %8805 = vmatpush1.msra.mxu0 0.0
        %8806 = vmatprep.subr.mxu0 0.0
        %8807 = vmatpush1.msra.mxu0 0.0
        %8808 = vmatprep.subr.mxu0 0.0
        %8809 = vmatpush1.msra.mxu0 0.0
        %8810 = vmatprep.subr.mxu0 0.0
        %8811 = vmatpush1.msra.mxu0 0.0
        %8812 = vmatprep.subr.mxu0 0.0
        %8813 = vmatpush1.msra.mxu0 0.0
        %8814 = vmatprep.subr.mxu0 0.0
        %8815 = vmatpush1.msra.mxu0 0.0
        %8816 = vmatprep.subr.mxu0 0.0
        %8817 = vmatpush1.msra.mxu0 0.0
        %8818 = vmatprep.subr.mxu0 0.0
        %8819 = vmatpush1.msra.mxu0 0.0
        %8820 = vmatprep.subr.mxu0 0.0
        %8821 = vmatpush1.msra.mxu0 0.0
        %8822 = vmatprep.mubr.f32.mxu0 %v8663
        %8823 = vmatmul.mubr.f32.gmra.mrb[0].mxu0 %v8573
        %v8824 = vpop.f32.mrb[0].mxu0
        %v8825 = vadd.f32 %v8660, %v8824
        %v8826 = vpop.f32.mrb[0].mxu0
        %8827 = vmatprep.mubr.f32.mxu0 %v8666
        %8828 = vmatmul.mubr.f32.gmra.mrb[0].mxu0 %v8574
        %v8829 = vpop.f32.mrb[0].mxu0
        %v8830 = vadd.f32 %v8660, %v8829
        %v8831 = vpop.f32.mrb[0].mxu0
        %8832 = vmatprep.mubr.f32.mxu0 %v8669
        %8833 = vmatmul.mubr.f32.gmra.mrb[0].mxu0 %v8575
        %v8834 = vpop.f32.mrb[0].mxu0
        %v8835 = vadd.f32 %v8660, %v8834
        %v8836 = vpop.f32.mrb[0].mxu0
        %8837 = vmatprep.mubr.f32.mxu0 %v8672
        %8838 = vmatmul.mubr.f32.gmra.mrb[0].mxu0 %v8576
        %v8839 = vpop.f32.mrb[0].mxu0
        %v8840 = vadd.f32 %v8660, %v8839
        %v8841 = vpop.f32.mrb[0].mxu0
        %8842 = vmatprep.mubr.f32.mxu0 %v8675
        %8843 = vmatmul.mubr.f32.gmra.mrb[0].mxu0 %v8577
        %v8844 = vpop.f32.mrb[0].mxu0
        %v8845 = vadd.f32 %v8660, %v8844
        %v8846 = vpop.f32.mrb[0].mxu0
        %8847 = vmatprep.mubr.f32.mxu0 %v8678
        %8848 = vmatmul.mubr.f32.gmra.mrb[0].mxu0 %v8578
        %v8849 = vpop.f32.mrb[0].mxu0
        %v8850 = vadd.f32 %v8660, %v8849
        %v8851 = vpop.f32.mrb[0].mxu0
        %8852 = vmatprep.mubr.f32.mxu0 %v8681
        %8853 = vmatmul.mubr.f32.gmra.mrb[0].mxu0 %v8579
        %v8854 = vpop.f32.mrb[0].mxu0
        %v8855 = vadd.f32 %v8660, %v8854
        %v8856 = vpop.f32.mrb[0].mxu0
        %8857 = vmatprep.mubr.f32.mxu0 %v8684
        %8858 = vmatmul.mubr.f32.gmra.mrb[0].mxu0 %v8580
        %v8859 = vpop.f32.mrb[0].mxu0
        %v8860 = vadd.f32 %v8660, %v8859
        %v8861 = vpop.f32.mrb[0].mxu0
        %8862 = vmatprep.mubr.f32.mxu0 %v8687
        %8863 = vmatmul.mubr.f32.gmra.mrb[0].mxu0 %v8581
        %v8864 = vpop.f32.mrb[0].mxu0
        %v8865 = vadd.f32 %v8660, %v8864
        %v8866 = vpop.f32.mrb[0].mxu0
        %8867 = vmatprep.mubr.f32.mxu0 %v8690
        %8868 = vmatmul.mubr.f32.gmra.mrb[0].mxu0 %v8582
        %v8869 = vpop.f32.mrb[0].mxu0
        %v8870 = vadd.f32 %v8660, %v8869
        %v8871 = vpop.f32.mrb[0].mxu0
        %8872 = vmatprep.mubr.f32.mxu0 %v8693
        %8873 = vmatmul.mubr.f32.gmra.mrb[0].mxu0 %v8583
        %v8874 = vpop.f32.mrb[0].mxu0
        %v8875 = vadd.f32 %v8660, %v8874
        %v8876 = vpop.f32.mrb[0].mxu0
        %8877 = vmatprep.mubr.f32.mxu0 %v8696
        %8878 = vmatmul.mubr.f32.gmra.mrb[0].mxu0 %v8584
        %v8879 = vpop.f32.mrb[0].mxu0
        %v8880 = vadd.f32 %v8660, %v8879
        %v8881 = vpop.f32.mrb[0].mxu0
        %8882 = vmatprep.mubr.f32.mxu0 %v8699
        %8883 = vmatmul.mubr.f32.gmra.mrb[0].mxu0 %v8585
        %v8884 = vpop.f32.mrb[0].mxu0
        %v8885 = vadd.f32 %v8660, %v8884
        %v8886 = vpop.f32.mrb[0].mxu0
        %8887 = vmatprep.mubr.f32.mxu0 %v8702
        %8888 = vmatmul.mubr.f32.gmra.mrb[0].mxu0 %v8586
        %v8889 = vpop.f32.mrb[0].mxu0
        %v8890 = vadd.f32 %v8660, %v8889
        %v8891 = vpop.f32.mrb[0].mxu0
        %8892 = vmatprep.mubr.f32.mxu0 %v8705
        %8893 = vmatmul.mubr.f32.gmra.mrb[0].mxu0 %v8587
        %v8894 = vpop.f32.mrb[0].mxu0
        %v8895 = vadd.f32 %v8660, %v8894
        %v8896 = vpop.f32.mrb[0].mxu0
        %8897 = vmatprep.mubr.f32.mxu0 %v8708
        %8898 = vmatmul.mubr.f32.gmra.mrb[0].mxu0 %v8588
        %v8899 = vpop.f32.mrb[0].mxu0
        %v8900 = vadd.f32 %v8660, %v8899
        %v8901 = vpop.f32.mrb[0].mxu0
        %8902 = vmatprep.mubr.f32.mxu0 %v8711
        %8903 = vmatmul.mubr.f32.gmra.mrb[0].mxu0 %v8589
        %v8904 = vpop.f32.mrb[0].mxu0
        %v8905 = vadd.f32 %v8660, %v8904
        %v8906 = vpop.f32.mrb[0].mxu0
        %8907 = vmatprep.mubr.f32.mxu0 %v8714
        %8908 = vmatmul.mubr.f32.gmra.mrb[0].mxu0 %v8590
        %v8909 = vpop.f32.mrb[0].mxu0
        %v8910 = vadd.f32 %v8660, %v8909
        %v8911 = vpop.f32.mrb[0].mxu0
        %8912 = vmatprep.mubr.f32.mxu0 %v8717
        %8913 = vmatmul.mubr.f32.gmra.mrb[0].mxu0 %v8591
        %v8914 = vpop.f32.mrb[0].mxu0
        %v8915 = vadd.f32 %v8660, %v8914
        %v8916 = vpop.f32.mrb[0].mxu0
        %8917 = vmatprep.mubr.f32.mxu0 %v8720
        %8918 = vmatmul.mubr.f32.gmra.mrb[0].mxu0 %v8592
        %v8919 = vpop.f32.mrb[0].mxu0
        %v8920 = vadd.f32 %v8660, %v8919
        %v8921 = vpop.f32.mrb[0].mxu0
        %8922 = vmatprep.mubr.f32.mxu0 %v8723
        %8923 = vmatmul.mubr.f32.gmra.mrb[0].mxu0 %v8593
        %v8924 = vpop.f32.mrb[0].mxu0
        %v8925 = vadd.f32 %v8660, %v8924
        %v8926 = vpop.f32.mrb[0].mxu0
        %8927 = vmatprep.mubr.f32.mxu0 %v8726
        %8928 = vmatmul.mubr.f32.gmra.mrb[0].mxu0 %v8594
        %v8929 = vpop.f32.mrb[0].mxu0
        %v8930 = vadd.f32 %v8660, %v8929
        %v8931 = vpop.f32.mrb[0].mxu0
        %8932 = vmatprep.mubr.f32.mxu0 %v8729
        %8933 = vmatmul.mubr.f32.gmra.mrb[0].mxu0 %v8595
        %v8934 = vpop.f32.mrb[0].mxu0
        %v8935 = vadd.f32 %v8660, %v8934
        %v8936 = vpop.f32.mrb[0].mxu0
        %8937 = vmatprep.mubr.f32.mxu0 %v8732
        %8938 = vmatmul.mubr.f32.gmra.mrb[0].mxu0 %v8596
        %v8939 = vpop.f32.mrb[0].mxu0
        %v8940 = vadd.f32 %v8660, %v8939
        %v8941 = vpop.f32.mrb[0].mxu0
        %8942 = vmatprep.mubr.f32.mxu0 %v8735
        %8943 = vmatmul.mubr.f32.gmra.mrb[0].mxu0 %v8597
        %v8944 = vpop.f32.mrb[0].mxu0
        %v8945 = vadd.f32 %v8660, %v8944
        %v8946 = vpop.f32.mrb[0].mxu0
        %8947 = vmatprep.mubr.f32.mxu0 %v8738
        %8948 = vmatmul.mubr.f32.gmra.mrb[0].mxu0 %v8598
        %v8949 = vpop.f32.mrb[0].mxu0
        %v8950 = vadd.f32 %v8660, %v8949
        %v8951 = vpop.f32.mrb[0].mxu0
        %8952 = vmatprep.mubr.f32.mxu0 %v8741
        %8953 = vmatmul.mubr.f32.gmra.mrb[0].mxu0 %v8599
        %v8954 = vpop.f32.mrb[0].mxu0
        %v8955 = vadd.f32 %v8660, %v8954
        %v8956 = vpop.f32.mrb[0].mxu0
        %8957 = vmatprep.mubr.f32.mxu0 %v8744
        %8958 = vmatmul.mubr.f32.gmra.mrb[0].mxu0 %v8600
        %v8959 = vpop.f32.mrb[0].mxu0
        %v8960 = vadd.f32 %v8660, %v8959
        %v8961 = vpop.f32.mrb[0].mxu0
        %8962 = vmatprep.mubr.f32.mxu0 %v8747
        %8963 = vmatmul.mubr.f32.gmra.mrb[0].mxu0 %v8601
        %v8964 = vpop.f32.mrb[0].mxu0
        %v8965 = vadd.f32 %v8660, %v8964
        %v8966 = vpop.f32.mrb[0].mxu0
        %8967 = vmatprep.mubr.f32.mxu0 %v8750
        %8968 = vmatmul.mubr.f32.gmra.mrb[0].mxu0 %v8602
        %v8969 = vpop.f32.mrb[0].mxu0
        %v8970 = vadd.f32 %v8660, %v8969
        %v8971 = vpop.f32.mrb[0].mxu0
        %8972 = vmatprep.mubr.f32.mxu0 %v8753
        %8973 = vmatmul.mubr.f32.gmra.mrb[0].mxu0 %v8603
        %v8974 = vpop.f32.mrb[0].mxu0
        %v8975 = vadd.f32 %v8660, %v8974
        %v8976 = vpop.f32.mrb[0].mxu0
        %8977 = vmatprep.mubr.f32.mxu0 %v8756
        %8978 = vmatmul.mubr.f32.gmra.mrb[0].mxu0 %v8604
        %v8979 = vpop.f32.mrb[0].mxu0
        %v8980 = vadd.f32 %v8660, %v8979
        %v8981 = vpop.f32.mrb[0].mxu0
        %8982 = vdwg.mxu0
        %v8983 = vadd.f32 %v8825, %v8623
        %v8984 = vadd.f32 %v8830, %v8624
        %v8985 = vadd.f32 %v8835, %v8625
        %v8986 = vadd.f32 %v8840, %v8626
        %v8987 = vadd.f32 %v8845, %v8627
        %v8988 = vadd.f32 %v8850, %v8628
        %v8989 = vadd.f32 %v8855, %v8629
        %v8990 = vadd.f32 %v8860, %v8630
        %v8991 = vadd.f32 %v8865, %v8631
        %v8992 = vadd.f32 %v8870, %v8632
        %v8993 = vadd.f32 %v8875, %v8633
        %v8994 = vadd.f32 %v8880, %v8634
        %v8995 = vadd.f32 %v8885, %v8635
        %v8996 = vadd.f32 %v8890, %v8636
        %v8997 = vadd.f32 %v8895, %v8637
        %v8998 = vadd.f32 %v8900, %v8638
        %v8999 = vadd.f32 %v8905, %v8639
        %v9000 = vadd.f32 %v8910, %v8640
        %v9001 = vadd.f32 %v8915, %v8641
        %v9002 = vadd.f32 %v8920, %v8642
        %v9003 = vadd.f32 %v8925, %v8643
        %v9004 = vadd.f32 %v8930, %v8644
        %v9005 = vadd.f32 %v8935, %v8645
        %v9006 = vadd.f32 %v8940, %v8646
        %v9007 = vadd.f32 %v8945, %v8647
        %v9008 = vadd.f32 %v8950, %v8648
        %v9009 = vadd.f32 %v8955, %v8649
        %v9010 = vadd.f32 %v8960, %v8650
        %v9011 = vadd.f32 %v8965, %v8651
        %v9012 = vadd.f32 %v8970, %v8652
        %v9013 = vadd.f32 %v8975, %v8653
        %v9014 = vadd.f32 %v8980, %v8654
        %v9031 = vrot.slane %v8985, 7
        %vm9032 = vcmask 1041409
        %v9033 = vsel %vm9032, %v9031, %v8983
        %v9034 = vrot.slane %v8987, 6
        %vm9035 = vcmask 1042434
        %v9036 = vsel %vm9035, %v9034, %v9033
        %v9037 = vrot.slane %v8989, 5
        %vm9038 = vcmask 1043459
        %v9039 = vsel %vm9038, %v9037, %v9036
        %v9040 = vrot.slane %v8991, 4
        %vm9041 = vcmask 1044484
        %v9042 = vsel %vm9041, %v9040, %v9039
        %v9043 = vrot.slane %v8993, 3
        %vm9044 = vcmask 1045509
        %v9045 = vsel %vm9044, %v9043, %v9042
        %v9046 = vrot.slane %v8995, 2
        %vm9047 = vcmask 1046534
        %v9048 = vsel %vm9047, %v9046, %v9045
        %v9049 = vrot.slane %v8997, 1
        %vm9050 = vcmask 1047559
        %v9051 = vsel %vm9050, %v9049, %v9048
        %v9052 = vrot.slane %v9001, 7
        %v9053 = vsel %vm9032, %v9052, %v8999
        %v9054 = vrot.slane %v9003, 6
        %v9055 = vsel %vm9035, %v9054, %v9053
        %v9056 = vrot.slane %v9005, 5
        %v9057 = vsel %vm9038, %v9056, %v9055
        %v9058 = vrot.slane %v9007, 4
        %v9059 = vsel %vm9041, %v9058, %v9057
        %v9060 = vrot.slane %v9009, 3
        %v9061 = vsel %vm9044, %v9060, %v9059
        %v9062 = vrot.slane %v9011, 2
        %v9063 = vsel %vm9047, %v9062, %v9061
        %v9064 = vrot.slane %v9013, 1
        %v9065 = vsel %vm9050, %v9064, %v9063
        %v9068 = vrot.slane %v8983, 1
        %v9069 = vsel %vm9032, %v8985, %v9068
        %v9070 = vrot.slane %v8987, 7
        %v9071 = vsel %vm9035, %v9070, %v9069
        %v9072 = vrot.slane %v8989, 6
        %v9073 = vsel %vm9038, %v9072, %v9071
        %v9074 = vrot.slane %v8991, 5
        %v9075 = vsel %vm9041, %v9074, %v9073
        %v9076 = vrot.slane %v8993, 4
        %v9077 = vsel %vm9044, %v9076, %v9075
        %v9078 = vrot.slane %v8995, 3
        %v9079 = vsel %vm9047, %v9078, %v9077
        %v9080 = vrot.slane %v8997, 2
        %v9081 = vsel %vm9050, %v9080, %v9079
        %v9082 = vrot.slane %v8999, 1
        %v9083 = vsel %vm9032, %v9001, %v9082
        %v9084 = vrot.slane %v9003, 7
        %v9085 = vsel %vm9035, %v9084, %v9083
        %v9086 = vrot.slane %v9005, 6
        %v9087 = vsel %vm9038, %v9086, %v9085
        %v9088 = vrot.slane %v9007, 5
        %v9089 = vsel %vm9041, %v9088, %v9087
        %v9090 = vrot.slane %v9009, 4
        %v9091 = vsel %vm9044, %v9090, %v9089
        %v9092 = vrot.slane %v9011, 3
        %v9093 = vsel %vm9047, %v9092, %v9091
        %v9094 = vrot.slane %v9013, 2
        %v9095 = vsel %vm9050, %v9094, %v9093
        %9096 = vrot.lane.b32.xlu0 %v9081, 4
        %v9097 = vpop.permute.xlu0 %9096
        %9098 = vrot.lane.b32.xlu0 %v9095, 4
        %v9099 = vpop.permute.xlu0 %9098
        %v9102 = vrot.slane %v8983, 2
        %v9103 = vrot.slane %v8985, 1
        %v9104 = vsel %vm9032, %v9103, %v9102
        %v9105 = vsel %vm9035, %v8987, %v9104
        %v9106 = vrot.slane %v8989, 7
        %v9107 = vsel %vm9038, %v9106, %v9105
        %v9108 = vrot.slane %v8991, 6
        %v9109 = vsel %vm9041, %v9108, %v9107
        %v9110 = vrot.slane %v8993, 5
        %v9111 = vsel %vm9044, %v9110, %v9109
        %v9112 = vrot.slane %v8995, 4
        %v9113 = vsel %vm9047, %v9112, %v9111
        %v9114 = vrot.slane %v8997, 3
        %v9115 = vsel %vm9050, %v9114, %v9113
        %v9116 = vrot.slane %v8999, 2
        %v9117 = vrot.slane %v9001, 1
        %v9118 = vsel %vm9032, %v9117, %v9116
        %v9119 = vsel %vm9035, %v9003, %v9118
        %v9120 = vrot.slane %v9005, 7
        %v9121 = vsel %vm9038, %v9120, %v9119
        %v9122 = vrot.slane %v9007, 6
        %v9123 = vsel %vm9041, %v9122, %v9121
        %v9124 = vrot.slane %v9009, 5
        %v9125 = vsel %vm9044, %v9124, %v9123
        %v9126 = vrot.slane %v9011, 4
        %v9127 = vsel %vm9047, %v9126, %v9125
        %v9128 = vrot.slane %v9013, 3
        %v9129 = vsel %vm9050, %v9128, %v9127
        %9130 = vrot.lane.b32.xlu0 %v9115, 8
        %v9131 = vpop.permute.xlu0 %9130
        %9132 = vrot.lane.b32.xlu0 %v9129, 8
        %v9133 = vpop.permute.xlu0 %9132
        %v9136 = vrot.slane %v8983, 3
        %v9137 = vrot.slane %v8985, 2
        %v9138 = vsel %vm9032, %v9137, %v9136
        %v9139 = vrot.slane %v8987, 1
        %v9140 = vsel %vm9035, %v9139, %v9138
        %v9141 = vsel %vm9038, %v8989, %v9140
        %v9142 = vrot.slane %v8991, 7
        %v9143 = vsel %vm9041, %v9142, %v9141
        %v9144 = vrot.slane %v8993, 6
        %v9145 = vsel %vm9044, %v9144, %v9143
        %v9146 = vrot.slane %v8995, 5
        %v9147 = vsel %vm9047, %v9146, %v9145
        %v9148 = vrot.slane %v8997, 4
        %v9149 = vsel %vm9050, %v9148, %v9147
        %v9150 = vrot.slane %v8999, 3
        %v9151 = vrot.slane %v9001, 2
        %v9152 = vsel %vm9032, %v9151, %v9150
        %v9153 = vrot.slane %v9003, 1
        %v9154 = vsel %vm9035, %v9153, %v9152
        %v9155 = vsel %vm9038, %v9005, %v9154
        %v9156 = vrot.slane %v9007, 7
        %v9157 = vsel %vm9041, %v9156, %v9155
        %v9158 = vrot.slane %v9009, 6
        %v9159 = vsel %vm9044, %v9158, %v9157
        %v9160 = vrot.slane %v9011, 5
        %v9161 = vsel %vm9047, %v9160, %v9159
        %v9162 = vrot.slane %v9013, 4
        %v9163 = vsel %vm9050, %v9162, %v9161
        %9164 = vrot.lane.b32.xlu0 %v9149, 12
        %v9165 = vpop.permute.xlu0 %9164
        %9166 = vrot.lane.b32.xlu0 %v9163, 12
        %v9167 = vpop.permute.xlu0 %9166
        %v9170 = vrot.slane %v8983, 4
        %v9171 = vrot.slane %v8985, 3
        %v9172 = vsel %vm9032, %v9171, %v9170
        %v9173 = vrot.slane %v8987, 2
        %v9174 = vsel %vm9035, %v9173, %v9172
        %v9175 = vrot.slane %v8989, 1
        %v9176 = vsel %vm9038, %v9175, %v9174
        %v9177 = vsel %vm9041, %v8991, %v9176
        %v9178 = vrot.slane %v8993, 7
        %v9179 = vsel %vm9044, %v9178, %v9177
        %v9180 = vrot.slane %v8995, 6
        %v9181 = vsel %vm9047, %v9180, %v9179
        %v9182 = vrot.slane %v8997, 5
        %v9183 = vsel %vm9050, %v9182, %v9181
        %v9184 = vrot.slane %v8999, 4
        %v9185 = vrot.slane %v9001, 3
        %v9186 = vsel %vm9032, %v9185, %v9184
        %v9187 = vrot.slane %v9003, 2
        %v9188 = vsel %vm9035, %v9187, %v9186
        %v9189 = vrot.slane %v9005, 1
        %v9190 = vsel %vm9038, %v9189, %v9188
        %v9191 = vsel %vm9041, %v9007, %v9190
        %v9192 = vrot.slane %v9009, 7
        %v9193 = vsel %vm9044, %v9192, %v9191
        %v9194 = vrot.slane %v9011, 6
        %v9195 = vsel %vm9047, %v9194, %v9193
        %v9196 = vrot.slane %v9013, 5
        %v9197 = vsel %vm9050, %v9196, %v9195
        %9198 = vrot.lane.b32.xlu0 %v9183, 16
        %v9199 = vpop.permute.xlu0 %9198
        %9200 = vrot.lane.b32.xlu0 %v9197, 16
        %v9201 = vpop.permute.xlu0 %9200
        %v9204 = vrot.slane %v8983, 5
        %v9205 = vrot.slane %v8985, 4
        %v9206 = vsel %vm9032, %v9205, %v9204
        %v9207 = vrot.slane %v8987, 3
        %v9208 = vsel %vm9035, %v9207, %v9206
        %v9209 = vrot.slane %v8989, 2
        %v9210 = vsel %vm9038, %v9209, %v9208
        %v9211 = vrot.slane %v8991, 1
        %v9212 = vsel %vm9041, %v9211, %v9210
        %v9213 = vsel %vm9044, %v8993, %v9212
        %v9214 = vrot.slane %v8995, 7
        %v9215 = vsel %vm9047, %v9214, %v9213
        %v9216 = vrot.slane %v8997, 6
        %v9217 = vsel %vm9050, %v9216, %v9215
        %v9218 = vrot.slane %v8999, 5
        %v9219 = vrot.slane %v9001, 4
        %v9220 = vsel %vm9032, %v9219, %v9218
        %v9221 = vrot.slane %v9003, 3
        %v9222 = vsel %vm9035, %v9221, %v9220
        %v9223 = vrot.slane %v9005, 2
        %v9224 = vsel %vm9038, %v9223, %v9222
        %v9225 = vrot.slane %v9007, 1
        %v9226 = vsel %vm9041, %v9225, %v9224
        %v9227 = vsel %vm9044, %v9009, %v9226
        %v9228 = vrot.slane %v9011, 7
        %v9229 = vsel %vm9047, %v9228, %v9227
        %v9230 = vrot.slane %v9013, 6
        %v9231 = vsel %vm9050, %v9230, %v9229
        %9232 = vrot.lane.b32.xlu0 %v9217, 20
        %v9233 = vpop.permute.xlu0 %9232
        %9234 = vrot.lane.b32.xlu0 %v9231, 20
        %v9235 = vpop.permute.xlu0 %9234
        %v9238 = vrot.slane %v8983, 6
        %v9239 = vrot.slane %v8985, 5
        %v9240 = vsel %vm9032, %v9239, %v9238
        %v9241 = vrot.slane %v8987, 4
        %v9242 = vsel %vm9035, %v9241, %v9240
        %v9243 = vrot.slane %v8989, 3
        %v9244 = vsel %vm9038, %v9243, %v9242
        %v9245 = vrot.slane %v8991, 2
        %v9246 = vsel %vm9041, %v9245, %v9244
        %v9247 = vrot.slane %v8993, 1
        %v9248 = vsel %vm9044, %v9247, %v9246
        %v9249 = vsel %vm9047, %v8995, %v9248
        %v9250 = vrot.slane %v8997, 7
        %v9251 = vsel %vm9050, %v9250, %v9249
        %v9252 = vrot.slane %v8999, 6
        %v9253 = vrot.slane %v9001, 5
        %v9254 = vsel %vm9032, %v9253, %v9252
        %v9255 = vrot.slane %v9003, 4
        %v9256 = vsel %vm9035, %v9255, %v9254
        %v9257 = vrot.slane %v9005, 3
        %v9258 = vsel %vm9038, %v9257, %v9256
        %v9259 = vrot.slane %v9007, 2
        %v9260 = vsel %vm9041, %v9259, %v9258
        %v9261 = vrot.slane %v9009, 1
        %v9262 = vsel %vm9044, %v9261, %v9260
        %v9263 = vsel %vm9047, %v9011, %v9262
        %v9264 = vrot.slane %v9013, 7
        %v9265 = vsel %vm9050, %v9264, %v9263
        %9266 = vrot.lane.b32.xlu0 %v9251, 24
        %v9267 = vpop.permute.xlu0 %9266
        %9268 = vrot.lane.b32.xlu0 %v9265, 24
        %v9269 = vpop.permute.xlu0 %9268
        %v9272 = vrot.slane %v8983, 7
        %v9273 = vrot.slane %v8985, 6
        %v9274 = vsel %vm9032, %v9273, %v9272
        %v9275 = vrot.slane %v8987, 5
        %v9276 = vsel %vm9035, %v9275, %v9274
        %v9277 = vrot.slane %v8989, 4
        %v9278 = vsel %vm9038, %v9277, %v9276
        %v9279 = vrot.slane %v8991, 3
        %v9280 = vsel %vm9041, %v9279, %v9278
        %v9281 = vrot.slane %v8993, 2
        %v9282 = vsel %vm9044, %v9281, %v9280
        %v9283 = vrot.slane %v8995, 1
        %v9284 = vsel %vm9047, %v9283, %v9282
        %v9285 = vsel %vm9050, %v8997, %v9284
        %v9286 = vrot.slane %v8999, 7
        %v9287 = vrot.slane %v9001, 6
        %v9288 = vsel %vm9032, %v9287, %v9286
        %v9289 = vrot.slane %v9003, 5
        %v9290 = vsel %vm9035, %v9289, %v9288
        %v9291 = vrot.slane %v9005, 4
        %v9292 = vsel %vm9038, %v9291, %v9290
        %v9293 = vrot.slane %v9007, 3
        %v9294 = vsel %vm9041, %v9293, %v9292
        %v9295 = vrot.slane %v9009, 2
        %v9296 = vsel %vm9044, %v9295, %v9294
        %v9297 = vrot.slane %v9011, 1
        %v9298 = vsel %vm9047, %v9297, %v9296
        %v9299 = vsel %vm9050, %v9013, %v9298
        %9300 = vrot.lane.b32.xlu0 %v9285, 28
        %v9301 = vpop.permute.xlu0 %9300
        %9302 = vrot.lane.b32.xlu0 %v9299, 28
        %v9303 = vpop.permute.xlu0 %9302
        %v9322 = vrot.slane %v8986, 7
        %v9323 = vsel %vm9032, %v9322, %v8984
        %v9324 = vrot.slane %v8988, 6
        %v9325 = vsel %vm9035, %v9324, %v9323
        %v9326 = vrot.slane %v8990, 5
        %v9327 = vsel %vm9038, %v9326, %v9325
        %v9328 = vrot.slane %v8992, 4
        %v9329 = vsel %vm9041, %v9328, %v9327
        %v9330 = vrot.slane %v8994, 3
        %v9331 = vsel %vm9044, %v9330, %v9329
        %v9332 = vrot.slane %v8996, 2
        %v9333 = vsel %vm9047, %v9332, %v9331
        %v9334 = vrot.slane %v8998, 1
        %v9335 = vsel %vm9050, %v9334, %v9333
        %v9336 = vrot.slane %v9002, 7
        %v9337 = vsel %vm9032, %v9336, %v9000
        %v9338 = vrot.slane %v9004, 6
        %v9339 = vsel %vm9035, %v9338, %v9337
        %v9340 = vrot.slane %v9006, 5
        %v9341 = vsel %vm9038, %v9340, %v9339
        %v9342 = vrot.slane %v9008, 4
        %v9343 = vsel %vm9041, %v9342, %v9341
        %v9344 = vrot.slane %v9010, 3
        %v9345 = vsel %vm9044, %v9344, %v9343
        %v9346 = vrot.slane %v9012, 2
        %v9347 = vsel %vm9047, %v9346, %v9345
        %v9348 = vrot.slane %v9014, 1
        %v9349 = vsel %vm9050, %v9348, %v9347
        %9350 = vrot.lane.b32.xlu0 %v9335, 32
        %v9351 = vpop.permute.xlu0 %9350
        %9352 = vrot.lane.b32.xlu0 %v9349, 32
        %v9353 = vpop.permute.xlu0 %9352
        %v9356 = vrot.slane %v8984, 1
        %v9357 = vsel %vm9032, %v8986, %v9356
        %v9358 = vrot.slane %v8988, 7
        %v9359 = vsel %vm9035, %v9358, %v9357
        %v9360 = vrot.slane %v8990, 6
        %v9361 = vsel %vm9038, %v9360, %v9359
        %v9362 = vrot.slane %v8992, 5
        %v9363 = vsel %vm9041, %v9362, %v9361
        %v9364 = vrot.slane %v8994, 4
        %v9365 = vsel %vm9044, %v9364, %v9363
        %v9366 = vrot.slane %v8996, 3
        %v9367 = vsel %vm9047, %v9366, %v9365
        %v9368 = vrot.slane %v8998, 2
        %v9369 = vsel %vm9050, %v9368, %v9367
        %v9370 = vrot.slane %v9000, 1
        %v9371 = vsel %vm9032, %v9002, %v9370
        %v9372 = vrot.slane %v9004, 7
        %v9373 = vsel %vm9035, %v9372, %v9371
        %v9374 = vrot.slane %v9006, 6
        %v9375 = vsel %vm9038, %v9374, %v9373
        %v9376 = vrot.slane %v9008, 5
        %v9377 = vsel %vm9041, %v9376, %v9375
        %v9378 = vrot.slane %v9010, 4
        %v9379 = vsel %vm9044, %v9378, %v9377
        %v9380 = vrot.slane %v9012, 3
        %v9381 = vsel %vm9047, %v9380, %v9379
        %v9382 = vrot.slane %v9014, 2
        %v9383 = vsel %vm9050, %v9382, %v9381
        %9384 = vrot.lane.b32.xlu0 %v9369, 36
        %v9385 = vpop.permute.xlu0 %9384
        %9386 = vrot.lane.b32.xlu0 %v9383, 36
        %v9387 = vpop.permute.xlu0 %9386
        %v9390 = vrot.slane %v8984, 2
        %v9391 = vrot.slane %v8986, 1
        %v9392 = vsel %vm9032, %v9391, %v9390
        %v9393 = vsel %vm9035, %v8988, %v9392
        %v9394 = vrot.slane %v8990, 7
        %v9395 = vsel %vm9038, %v9394, %v9393
        %v9396 = vrot.slane %v8992, 6
        %v9397 = vsel %vm9041, %v9396, %v9395
        %v9398 = vrot.slane %v8994, 5
        %v9399 = vsel %vm9044, %v9398, %v9397
        %v9400 = vrot.slane %v8996, 4
        %v9401 = vsel %vm9047, %v9400, %v9399
        %v9402 = vrot.slane %v8998, 3
        %v9403 = vsel %vm9050, %v9402, %v9401
        %v9404 = vrot.slane %v9000, 2
        %v9405 = vrot.slane %v9002, 1
        %v9406 = vsel %vm9032, %v9405, %v9404
        %v9407 = vsel %vm9035, %v9004, %v9406
        %v9408 = vrot.slane %v9006, 7
        %v9409 = vsel %vm9038, %v9408, %v9407
        %v9410 = vrot.slane %v9008, 6
        %v9411 = vsel %vm9041, %v9410, %v9409
        %v9412 = vrot.slane %v9010, 5
        %v9413 = vsel %vm9044, %v9412, %v9411
        %v9414 = vrot.slane %v9012, 4
        %v9415 = vsel %vm9047, %v9414, %v9413
        %v9416 = vrot.slane %v9014, 3
        %v9417 = vsel %vm9050, %v9416, %v9415
        %9418 = vrot.lane.b32.xlu0 %v9403, 40
        %v9419 = vpop.permute.xlu0 %9418
        %9420 = vrot.lane.b32.xlu0 %v9417, 40
        %v9421 = vpop.permute.xlu0 %9420
        %v9424 = vrot.slane %v8984, 3
        %v9425 = vrot.slane %v8986, 2
        %v9426 = vsel %vm9032, %v9425, %v9424
        %v9427 = vrot.slane %v8988, 1
        %v9428 = vsel %vm9035, %v9427, %v9426
        %v9429 = vsel %vm9038, %v8990, %v9428
        %v9430 = vrot.slane %v8992, 7
        %v9431 = vsel %vm9041, %v9430, %v9429
        %v9432 = vrot.slane %v8994, 6
        %v9433 = vsel %vm9044, %v9432, %v9431
        %v9434 = vrot.slane %v8996, 5
        %v9435 = vsel %vm9047, %v9434, %v9433
        %v9436 = vrot.slane %v8998, 4
        %v9437 = vsel %vm9050, %v9436, %v9435
        %v9438 = vrot.slane %v9000, 3
        %v9439 = vrot.slane %v9002, 2
        %v9440 = vsel %vm9032, %v9439, %v9438
        %v9441 = vrot.slane %v9004, 1
        %v9442 = vsel %vm9035, %v9441, %v9440
        %v9443 = vsel %vm9038, %v9006, %v9442
        %v9444 = vrot.slane %v9008, 7
        %v9445 = vsel %vm9041, %v9444, %v9443
        %v9446 = vrot.slane %v9010, 6
        %v9447 = vsel %vm9044, %v9446, %v9445
        %v9448 = vrot.slane %v9012, 5
        %v9449 = vsel %vm9047, %v9448, %v9447
        %v9450 = vrot.slane %v9014, 4
        %v9451 = vsel %vm9050, %v9450, %v9449
        %9452 = vrot.lane.b32.xlu0 %v9437, 44
        %v9453 = vpop.permute.xlu0 %9452
        %9454 = vrot.lane.b32.xlu0 %v9451, 44
        %v9455 = vpop.permute.xlu0 %9454
        %v9458 = vrot.slane %v8984, 4
        %v9459 = vrot.slane %v8986, 3
        %v9460 = vsel %vm9032, %v9459, %v9458
        %v9461 = vrot.slane %v8988, 2
        %v9462 = vsel %vm9035, %v9461, %v9460
        %v9463 = vrot.slane %v8990, 1
        %v9464 = vsel %vm9038, %v9463, %v9462
        %v9465 = vsel %vm9041, %v8992, %v9464
        %v9466 = vrot.slane %v8994, 7
        %v9467 = vsel %vm9044, %v9466, %v9465
        %v9468 = vrot.slane %v8996, 6
        %v9469 = vsel %vm9047, %v9468, %v9467
        %v9470 = vrot.slane %v8998, 5
        %v9471 = vsel %vm9050, %v9470, %v9469
        %v9472 = vrot.slane %v9000, 4
        %v9473 = vrot.slane %v9002, 3
        %v9474 = vsel %vm9032, %v9473, %v9472
        %v9475 = vrot.slane %v9004, 2
        %v9476 = vsel %vm9035, %v9475, %v9474
        %v9477 = vrot.slane %v9006, 1
        %v9478 = vsel %vm9038, %v9477, %v9476
        %v9479 = vsel %vm9041, %v9008, %v9478
        %v9480 = vrot.slane %v9010, 7
        %v9481 = vsel %vm9044, %v9480, %v9479
        %v9482 = vrot.slane %v9012, 6
        %v9483 = vsel %vm9047, %v9482, %v9481
        %v9484 = vrot.slane %v9014, 5
        %v9485 = vsel %vm9050, %v9484, %v9483
        %9486 = vrot.lane.b32.xlu0 %v9471, 48
        %v9487 = vpop.permute.xlu0 %9486
        %9488 = vrot.lane.b32.xlu0 %v9485, 48
        %v9489 = vpop.permute.xlu0 %9488
        %v9492 = vrot.slane %v8984, 5
        %v9493 = vrot.slane %v8986, 4
        %v9494 = vsel %vm9032, %v9493, %v9492
        %v9495 = vrot.slane %v8988, 3
        %v9496 = vsel %vm9035, %v9495, %v9494
        %v9497 = vrot.slane %v8990, 2
        %v9498 = vsel %vm9038, %v9497, %v9496
        %v9499 = vrot.slane %v8992, 1
        %v9500 = vsel %vm9041, %v9499, %v9498
        %v9501 = vsel %vm9044, %v8994, %v9500
        %v9502 = vrot.slane %v8996, 7
        %v9503 = vsel %vm9047, %v9502, %v9501
        %v9504 = vrot.slane %v8998, 6
        %v9505 = vsel %vm9050, %v9504, %v9503
        %v9506 = vrot.slane %v9000, 5
        %v9507 = vrot.slane %v9002, 4
        %v9508 = vsel %vm9032, %v9507, %v9506
        %v9509 = vrot.slane %v9004, 3
        %v9510 = vsel %vm9035, %v9509, %v9508
        %v9511 = vrot.slane %v9006, 2
        %v9512 = vsel %vm9038, %v9511, %v9510
        %v9513 = vrot.slane %v9008, 1
        %v9514 = vsel %vm9041, %v9513, %v9512
        %v9515 = vsel %vm9044, %v9010, %v9514
        %v9516 = vrot.slane %v9012, 7
        %v9517 = vsel %vm9047, %v9516, %v9515
        %v9518 = vrot.slane %v9014, 6
        %v9519 = vsel %vm9050, %v9518, %v9517
        %9520 = vrot.lane.b32.xlu0 %v9505, 52
        %v9521 = vpop.permute.xlu0 %9520
        %9522 = vrot.lane.b32.xlu0 %v9519, 52
        %v9523 = vpop.permute.xlu0 %9522
        %v9526 = vrot.slane %v8984, 6
        %v9527 = vrot.slane %v8986, 5
        %v9528 = vsel %vm9032, %v9527, %v9526
        %v9529 = vrot.slane %v8988, 4
        %v9530 = vsel %vm9035, %v9529, %v9528
        %v9531 = vrot.slane %v8990, 3
        %v9532 = vsel %vm9038, %v9531, %v9530
        %v9533 = vrot.slane %v8992, 2
        %v9534 = vsel %vm9041, %v9533, %v9532
        %v9535 = vrot.slane %v8994, 1
        %v9536 = vsel %vm9044, %v9535, %v9534
        %v9537 = vsel %vm9047, %v8996, %v9536
        %v9538 = vrot.slane %v8998, 7
        %v9539 = vsel %vm9050, %v9538, %v9537
        %v9540 = vrot.slane %v9000, 6
        %v9541 = vrot.slane %v9002, 5
        %v9542 = vsel %vm9032, %v9541, %v9540
        %v9543 = vrot.slane %v9004, 4
        %v9544 = vsel %vm9035, %v9543, %v9542
        %v9545 = vrot.slane %v9006, 3
        %v9546 = vsel %vm9038, %v9545, %v9544
        %v9547 = vrot.slane %v9008, 2
        %v9548 = vsel %vm9041, %v9547, %v9546
        %v9549 = vrot.slane %v9010, 1
        %v9550 = vsel %vm9044, %v9549, %v9548
        %v9551 = vsel %vm9047, %v9012, %v9550
        %v9552 = vrot.slane %v9014, 7
        %v9553 = vsel %vm9050, %v9552, %v9551
        %9554 = vrot.lane.b32.xlu0 %v9539, 56
        %v9555 = vpop.permute.xlu0 %9554
        %9556 = vrot.lane.b32.xlu0 %v9553, 56
        %v9557 = vpop.permute.xlu0 %9556
        %v9560 = vrot.slane %v8984, 7
        %v9561 = vrot.slane %v8986, 6
        %v9562 = vsel %vm9032, %v9561, %v9560
        %v9563 = vrot.slane %v8988, 5
        %v9564 = vsel %vm9035, %v9563, %v9562
        %v9565 = vrot.slane %v8990, 4
        %v9566 = vsel %vm9038, %v9565, %v9564
        %v9567 = vrot.slane %v8992, 3
        %v9568 = vsel %vm9041, %v9567, %v9566
        %v9569 = vrot.slane %v8994, 2
        %v9570 = vsel %vm9044, %v9569, %v9568
        %v9571 = vrot.slane %v8996, 1
        %v9572 = vsel %vm9047, %v9571, %v9570
        %v9573 = vsel %vm9050, %v8998, %v9572
        %v9574 = vrot.slane %v9000, 7
        %v9575 = vrot.slane %v9002, 6
        %v9576 = vsel %vm9032, %v9575, %v9574
        %v9577 = vrot.slane %v9004, 5
        %v9578 = vsel %vm9035, %v9577, %v9576
        %v9579 = vrot.slane %v9006, 4
        %v9580 = vsel %vm9038, %v9579, %v9578
        %v9581 = vrot.slane %v9008, 3
        %v9582 = vsel %vm9041, %v9581, %v9580
        %v9583 = vrot.slane %v9010, 2
        %v9584 = vsel %vm9044, %v9583, %v9582
        %v9585 = vrot.slane %v9012, 1
        %v9586 = vsel %vm9047, %v9585, %v9584
        %v9587 = vsel %vm9050, %v9014, %v9586
        %9588 = vrot.lane.b32.xlu0 %v9573, 60
        %v9589 = vpop.permute.xlu0 %9588
        %9590 = vrot.lane.b32.xlu0 %v9587, 60
        %v9591 = vpop.permute.xlu0 %9590
        %v9594 = vsel %vm223, %v9051, %v9097
        %v9595 = vsel %vm223, %v9065, %v9099
        %v9596 = vsel %vm3298, %v9594, %v9131
        %v9597 = vsel %vm3298, %v9595, %v9133
        %v9598 = vsel %vm3331, %v9596, %v9165
        %v9599 = vsel %vm3331, %v9597, %v9167
        %v9600 = vsel %vm3364, %v9598, %v9199
        %v9601 = vsel %vm3364, %v9599, %v9201
        %v9602 = vsel %vm3397, %v9600, %v9233
        %v9603 = vsel %vm3397, %v9601, %v9235
        %v9604 = vsel %vm3430, %v9602, %v9267
        %v9605 = vsel %vm3430, %v9603, %v9269
        %v9606 = vsel %vm3463, %v9604, %v9301
        %v9607 = vsel %vm3463, %v9605, %v9303
        %v9608 = vsel %vm3496, %v9606, %v9351
        %v9609 = vsel %vm3496, %v9607, %v9353
        %v9610 = vsel %vm3529, %v9608, %v9385
        %v9611 = vsel %vm3529, %v9609, %v9387
        %v9612 = vsel %vm3562, %v9610, %v9419
        %v9613 = vsel %vm3562, %v9611, %v9421
        %v9614 = vsel %vm3595, %v9612, %v9453
        %v9615 = vsel %vm3595, %v9613, %v9455
        %v9616 = vsel %vm3628, %v9614, %v9487
        %v9617 = vsel %vm3628, %v9615, %v9489
        %v9618 = vsel %vm3661, %v9616, %v9521
        %v9619 = vsel %vm3661, %v9617, %v9523
        %v9620 = vsel %vm3694, %v9618, %v9555
        %v9621 = vsel %vm3694, %v9619, %v9557
        %v9622 = vsel %vm3727, %v9620, %v9589
        %v9623 = vsel %vm3727, %v9621, %v9591
        %9624 = vst.msk [vmem:[%s217] sm:$0xff] %vm6672, %v9622
        %9625 = vst.msk [vmem:[%s217 + $0x8] sm:$0xff] %vm6672, %v9623
        %s9626 = sand.u32 %s137, 1
        %s9627 = scalar_lea.sflag [#allocation5], %s9626
        %s9628 = sand.u32 %s137, 1
        %s9629 = smul.addr %s9628, 16
        %s9630 = scalar_lea.vmem [#allocation4], %s9629
        // Predicated region
        $region41: #{tpu_custom_call.1} parent=39 // pred_check
          %p9631 = pneg %p147
        $region42: #{tpu_custom_call.1} parent=39 // pred_check_branch
          %9633 = sbr.rel (%p9631) target = $region44
        $region43: #{tpu_custom_call.1} parent=39 // pred_region
          %s9635 = ssub.s32 256, 256
          %9636 = vsyncadd %s9627, %s9635
          %s9637 = smul.addr %s19, 2
          %s9638 = smul.addr %s9637, 128
          %s9639 = scalar_lea.hbm %s5, %s9638
          %s9640 = sshll.u32 %s9630, 4
          %s9641 = int_to_ptr.vmem [resolvable:$true] %s9640
          %9646 = dma.vmem_to_hbm [thread:$0]  %s9641, 256, %s9639, %s9627, 128, 128, 8
        $region44: #{tpu_custom_call.1} parent=39 // pred_fallthru
          _
      $region40: #{tpu_custom_call.1} parent=5 // pred_fallthru
        _
      %p9647 = scmp.le.s32.totalorder 2, %s14
      // Predicated region
      $region45: #{tpu_custom_call.1} parent=5 // pred_check
        %p9648 = pneg %p9647
      $region46: #{tpu_custom_call.1} parent=5 // pred_check_branch
        %9650 = sbr.rel (%p9648) target = $region48
      $region47: #{tpu_custom_call.1} parent=5 // pred_region
        %s9651 = ssub.s32 %s14, 2
        // Predicated region
        $region49: #{tpu_custom_call.1} parent=47 // pred_check
          %p9652 = pneg %p153
        $region50: #{tpu_custom_call.1} parent=47 // pred_check_branch
          %9654 = sbr.rel (%p9652) target = $region52
        $region51: #{tpu_custom_call.1} parent=47 // pred_region
          %s9655 = sand.u32 %s138, 1
          %s9656 = scalar_lea.sflag [#allocation5], %s9655
          %s9657 = sand.u32 %s138, 1
          %s9658 = smul.addr %s9657, 16
          %s9659 = scalar_lea.vmem [#allocation4], %s9658
          %9660 = dma.done %s9656, 256
        $region52: #{tpu_custom_call.1} parent=47 // pred_fallthru
          _
      $region48: #{tpu_custom_call.1} parent=5 // pred_fallthru
        _
    $region6: #{tpu_custom_call.1} parent=1 // loop_footer
      %s18 = sadd.s32 1, %s14
    $region7: #{tpu_custom_call.1} parent=1 // loop_footer_branch
      %13 = sbr.rel target = $region3
    $region8: #{tpu_custom_call.1} parent=1 // loop_exit
      _
    %9661 = vsyncpa [#allocation5], 1
    %s9662 = scalar_lea.sflag [#allocation5], 1
    %9663 = vsyncpa %s9662, 1

</llo_original>
